<compile_context>
chip_gen: v7x
topology: tpu7x:2x2x1
jax: 0.10.0
libtpu: 0.0.40
codegen_flags: <defaults>
</compile_context>

<pallas_src>
import functools

import numpy as np
import jax
import jax.numpy as jnp
from jax import lax
from jax.experimental import pallas as pl
from jax.experimental.pallas import tpu as pltpu


# ----------------------------------------------------------------------------
# Host-side helpers: bilinear interpolation matrices & per-scale operators
# ----------------------------------------------------------------------------
def _bilinear_matrix(in_size, out_size):
    """A (out,in) with A @ v == F.interpolate(v, out, mode='bilinear',
    align_corners=False) along one axis (PyTorch half-pixel rule)."""
    A = np.zeros((out_size, in_size), dtype=np.float64)
    scale = in_size / out_size
    for i in range(out_size):
        src = scale * (i + 0.5) - 0.5
        if src < 0.0:
            src = 0.0
        i0 = int(np.floor(src))
        i1 = i0 + 1 if i0 < in_size - 1 else i0
        lam = float(src - i0)
        A[i, i0] += 1.0 - lam
        A[i, i1] += lam
    return A


@functools.lru_cache(maxsize=None)
def _build_scale_operators(spatial, kernel_size, stride, padding,
                           n_scales_small=5, n_scales_big=3,
                           angle_range=2.0 * np.pi / 3.0, base=1.26):
    """Returns L (S,K,Oo,H) float64, angles (S,), output_size, and the raw
    (aup_pad, adn) matrices per scale (for the plain-JAX reference).
    Cached: weight-free, depends only on static geometry."""
    n = n_scales_small + n_scales_big
    log_scales = np.linspace(-n_scales_small + 1, n_scales_big, n)
    scales = base ** log_scales
    angles = log_scales * angle_range / (n - 1)
    # NOTE: module's own formula for the final interpolate target
    # (coincides with the conv formula only for stride == 1, which we assert).
    output_size = (spatial + 1 + padding * 2 - kernel_size) // stride
    L = np.zeros((n, kernel_size, output_size, spatial), np.float64)
    raw = []
    for si, s in enumerate(scales):
        size = int(round(float(spatial * s)))
        aup = _bilinear_matrix(spatial, size)                       # (size, spatial)
        sp = size + 2 * padding
        aup_pad = np.zeros((sp, spatial), np.float64)
        aup_pad[padding:padding + size] = aup                       # fold conv zero padding
        sc = (sp - kernel_size) // stride + 1                       # conv output size
        adn = _bilinear_matrix(sc, output_size)                     # (output_size, sc)
        for k in range(kernel_size):
            L[si, k] = adn @ aup_pad[k:k + sc, :]                   # (Oo, H)
        raw.append((aup_pad, adn))
    return L, angles, output_size, raw


# ----------------------------------------------------------------------------
# Fused Pallas kernel: NB batch elements, all scales, max/angle/ReLU epilogue
# ----------------------------------------------------------------------------
def _fused_scale_conv_kernel(x_ref, l_ref, nf_ref, *refs,
                             nb, oo, k, cinw, cos_tab, sin_tab, with_stacked):
    # x_ref  : (NB, H, Cin*W)           bf16, one batch block
    # l_ref  : (S*K*Oo, H)              bf16, row order (s, ki, i)   [grid-invariant]
    # nf_ref : (S, K*Cin*W, Cout*Oo)    bf16, weight-folded ops      [grid-invariant]
    # outputs: cos_ref, sin_ref (NB*Oo, Cout*Oo) f32 [, st_ref (S, NB*Oo, Cout*Oo) f32]
    # scratch: v2_ref (S, NB*Oo, K*Cin*W) bf16 ; best_ref f32 ; idx_ref int32
    if with_stacked:
        cos_ref, sin_ref, st_ref, v2_ref, best_ref, idx_ref = refs
    else:
        cos_ref, sin_ref, v2_ref, best_ref, idx_ref = refs
        st_ref = None

    n_scales = len(cos_tab)
    K = k

    lmat = l_ref[...]                                               # (S*K*Oo, H), resident

    # ---- stage 1: one MXU dot per batch element covers all S*K left operators;
    #      per-(s,ki) blocks are stacked into the scratch so stage 2 sees
    #      M = NB*Oo and contraction depth K*Cin*W.
    for b in range(nb):
        vb = jnp.dot(lmat, x_ref[b],
                     preferred_element_type=jnp.float32)            # (S*K*Oo, Cin*W) f32
        vb = vb.astype(v2_ref.dtype)                                # -> bf16 for stage 2
        for s in range(n_scales):
            r0 = s * K * oo
            for ki in range(K):
                v2_ref[s, b * oo:(b + 1) * oo, ki * cinw:(ki + 1) * cinw] = (
                    vb[r0 + ki * oo: r0 + (ki + 1) * oo, :])

    # ---- stage 2: one 192-deep MXU dot per scale (lane-dense 128-wide output),
    #      fused running max / argmax (best & idx in VMEM scratch -> low vreg pressure).
    for s in range(n_scales):
        acc = jnp.dot(v2_ref[s], nf_ref[s],
                      preferred_element_type=jnp.float32)           # (NB*Oo, Cout*Oo) f32
        if st_ref is not None:
            st_ref[s] = acc                                         # optional per-scale dump
        if s == 0:
            best_ref[...] = acc
            idx_ref[...] = jnp.zeros_like(idx_ref)
        else:
            prev = best_ref[...]
            take = acc > prev          # strict ">" -> first maximal scale wins (torch.max ties)
            best_ref[...] = jnp.where(take, acc, prev)
            idx_ref[...] = jnp.where(take, s, idx_ref[...])

    # ---- epilogue: relu(max) * cos/sin(angle[argmax]) via a short select chain.
    r = jnp.maximum(best_ref[...], 0.0)                             # F.relu
    idx = idx_ref[...]
    cosv = jnp.full_like(r, cos_tab[0])
    sinv = jnp.full_like(r, sin_tab[0])
    for s in range(1, n_scales):
        sel = idx == s
        cosv = jnp.where(sel, cos_tab[s], cosv)
        sinv = jnp.where(sel, sin_tab[s], sinv)
    cos_ref[...] = r * cosv
    sin_ref[...] = r * sinv


# ----------------------------------------------------------------------------
# Forward pass of ScaleConvScalar
# ----------------------------------------------------------------------------
def scale_conv_scalar_forward(x, weight, *, kernel_size, stride=1, padding=0,
                              n_scales_small=5, n_scales_big=3,
                              angle_range=2.0 * np.pi / 3.0, base=1.26,
                              batch_block=None, return_intermediate=False):
    N, Cin, H, W = x.shape
    assert H == W, "module uses x.shape[-1] for both spatial dims; square input assumed"
    assert stride == 1, "only stride=1 implemented"  # TODO(synk): general stride
    Cout = weight.shape[0]
    K = kernel_size

    L, angles, Oo, _ = _build_scale_operators(
        W, K, stride, padding, n_scales_small, n_scales_big, angle_range, base)
    S = L.shape[0]
    CinW = Cin * W
    CoutOo = Cout * Oo

    # Weight-free left operators, row order (s, ki, i): resident in VMEM, bf16.
    l_arr = jnp.asarray(L.reshape(S * K * Oo, H), dtype=jnp.bfloat16)       # (384, 16)

    # Weight-folded right operators, folded ON DEVICE so weight may be traced / grad'ed:
    #   Nfold[s, ki*CinW + c*W + w, o*Oo + j] = sum_kj weight[o,c,ki,kj] * L[s,kj,j,w]
    l_f32 = jnp.asarray(L, dtype=jnp.float32)                               # (S, K, Oo, H)
    nfold = jnp.einsum('ocab,sbjw->sacwoj', weight.astype(jnp.float32), l_f32,
                       precision=lax.Precision.HIGHEST)                     # (S,K,Cin,W,Cout,Oo)
    nf_arr = nfold.reshape(S, K * CinW, CoutOo).astype(jnp.bfloat16)        # (8, 192, 128)

    # Batch block: NB*Oo is the M of the dominant matmul (fill 128 on v5e, 256 on v6e/v7x).
    if batch_block is None:
        try:
            kind = jax.devices()[0].device_kind.lower()
        except Exception:
            kind = ""
        nb_target = 16 if ("v6" in kind or "v7" in kind) else 8
        batch_block = min(nb_target, ((N + 7) // 8) * 8)
    NB = max(1, int(batch_block))
    Npad = ((N + NB - 1) // NB) * NB

    # Activations: (N, Cin, H, W) -> (Npad, H, Cin*W) bf16 so stage 1 contracts over H.
    # (Cheap; for large N this transpose should be fused into the caller's jit.)
    xr = jnp.transpose(x, (0, 2, 1, 3)).reshape(N, H, CinW).astype(jnp.bfloat16)
    if Npad != N:
        xr = jnp.pad(xr, ((0, Npad - N), (0, 0), (0, 0)))   # zero rows -> zero outputs, sliced off

    cos_tab = tuple(float(np.cos(a)) for a in angles)
    sin_tab = tuple(float(np.sin(a)) for a in angles)

    kernel = functools.partial(_fused_scale_conv_kernel, nb=NB, oo=Oo, k=K, cinw=CinW,
                               cos_tab=cos_tab, sin_tab=sin_tab,
                               with_stacked=return_intermediate)

    out_shape = [jax.ShapeDtypeStruct((Npad * Oo, CoutOo), jnp.float32),
                 jax.ShapeDtypeStruct((Npad * Oo, CoutOo), jnp.float32)]
    out_specs = [pl.BlockSpec((NB * Oo, CoutOo), lambda n: (n, 0)),
                 pl.BlockSpec((NB * Oo, CoutOo), lambda n: (n, 0))]
    if return_intermediate:
        out_shape.append(jax.ShapeDtypeStruct((S, Npad * Oo, CoutOo), jnp.float32))
        out_specs.append(pl.BlockSpec((S, NB * Oo, CoutOo), lambda n: (0, n, 0)))

    outs = pl.pallas_call(
        kernel,
        out_shape=tuple(out_shape),
        grid=(Npad // NB,),
        in_specs=[
            pl.BlockSpec((NB, H, CinW), lambda n: (n, 0, 0)),
            # grid-invariant operands: stay resident across all grid steps
            # (single-buffering them would save ~0.4 MiB VMEM; not needed at this footprint)
            pl.BlockSpec((S * K * Oo, H), lambda n: (0, 0)),
            pl.BlockSpec((S, K * CinW, CoutOo), lambda n: (0, 0, 0)),
        ],
        out_specs=tuple(out_specs),
        scratch_shapes=[
            pltpu.VMEM((S, NB * Oo, K * CinW), jnp.bfloat16),   # stage-2 LHS (stacked V)
            pltpu.VMEM((NB * Oo, CoutOo), jnp.float32),         # running max
            pltpu.VMEM((NB * Oo, CoutOo), jnp.int32),           # running argmax
        ],
        # batch-block axis is independent -> 2-TensorCore chips split it
        compiler_params=pltpu.CompilerParams(dimension_semantics=("parallel",)),
    )(xr, l_arr, nf_arr)

    # kernel layout is [b*Oo + i, o*Oo + j]; rearrange to the module's (N, Cout, Oo, Oo).
    cosv = outs[0].reshape(Npad, Oo, Cout, Oo)[:N].transpose(0, 2, 1, 3)
    sinv = outs[1].reshape(Npad, Oo, Cout, Oo)[:N].transpose(0, 2, 1, 3)
    if return_intermediate:
        stacked = outs[2].reshape(S, Npad, Oo, Cout, Oo)[:, :N].transpose(0, 1, 3, 2, 4)
        return cosv, sinv, stacked                              # (S, N, Cout, Oo, Oo)
    return cosv, sinv


# ----------------------------------------------------------------------------
# Plain-JAX references for sanity checking
# ----------------------------------------------------------------------------
def _conv_scale_ref(x, weight, aup_pad, adn):
    hp = jax.lax.Precision.HIGHEST
    a = jnp.asarray(aup_pad, jnp.float32)
    d = jnp.asarray(adn, jnp.float32)
    xu = jnp.einsum('ah,nchw->ncaw', a, x, precision=hp)
    xu = jnp.einsum('bw,ncaw->ncab', a, xu, precision=hp)
    y = lax.conv_general_dilated(xu, weight, (1, 1), 'VALID',
                                 dimension_numbers=('NCHW', 'OIHW', 'NCHW'),
                                 precision=hp)
    o = jnp.einsum('ai,noij->noaj', d, y, precision=hp)
    o = jnp.einsum('bj,noaj->noab', d, o, precision=hp)
    return o


def _max_angle_ref(stacked, angles):
    vals = jnp.max(stacked, axis=0)
    args = jnp.argmax(stacked, axis=0)
    ang = jnp.asarray(angles, jnp.float32)[args]
    r = jax.nn.relu(vals)
    return r * jnp.cos(ang), r * jnp.sin(ang)


# ----------------------------------------------------------------------------
if __name__ == "__main__":
    key = jax.random.PRNGKey(0)
    kx, kw = jax.random.split(key)

    N, Cin, Cout, K, H = 2, 4, 8, 3, 16
    stride, padding = 1, 1

    x = jax.random.normal(kx, (N, Cin, H, H), dtype=jnp.float32)
    # kaiming_uniform_(a=sqrt(5)) -> U(-1/sqrt(fan_in), 1/sqrt(fan_in))
    fan_in = Cin * K * K
    bound = float(1.0 / np.sqrt(fan_in))
    weight = jax.random.uniform(kw, (Cout, Cin, K, K), jnp.float32, -bound, bound)

    # debug path (also dumps the per-scale stacked values)
    cosv, sinv, stacked = scale_conv_scalar_forward(
        x, weight, kernel_size=K, stride=stride, padding=padding,
        return_intermediate=True)
    jax.block_until_ready((cosv, sinv, stacked))

    # production path (no intermediate output / HBM traffic)
    cosv2, sinv2 = scale_conv_scalar_forward(
        x, weight, kernel_size=K, stride=stride, padding=padding)
    jax.block_until_ready((cosv2, sinv2))

    # sanity check 1: per-scale resize->conv->resize against a plain-JAX f32 reference
    # built from the same interpolation matrices (bf16 MXU operands -> 2e-2 tolerance).
    _, angles, _, raw = _build_scale_operators(H, K, stride, padding)
    stacked_ref = jnp.stack(
        [_conv_scale_ref(x, weight, aup, adn) for (aup, adn) in raw], axis=0)
    np.testing.assert_allclose(np.asarray(stacked), np.asarray(stacked_ref),
                               rtol=2e-2, atol=2e-2)

    # sanity check 2: max/angle/ReLU epilogue against a jnp reference fed with the
    # kernel's own per-scale values (tie-breaking exactly reproducible this way).
    cos_ref, sin_ref = _max_angle_ref(stacked, angles)
    np.testing.assert_allclose(np.asarray(cosv), np.asarray(cos_ref), rtol=1e-4, atol=1e-4)
    np.testing.assert_allclose(np.asarray(sinv), np.asarray(sin_ref), rtol=1e-4, atol=1e-4)

    # sanity check 3: production path matches the debug path
    np.testing.assert_allclose(np.asarray(cosv2), np.asarray(cosv), rtol=0, atol=1e-6)
    np.testing.assert_allclose(np.asarray(sinv2), np.asarray(sinv), rtol=0, atol=1e-6)

    print("KERNEL_OK")
</pallas_src>

<mosaic_0001>
module attributes {stable_mosaic.version = 11 : i64} {
  func.func @_fused_scale_conv_kernel(%arg0: i32, %arg1: memref<8x16x64xbf16, #tpu.memory_space<vmem>>, %arg2: memref<384x16xbf16, #tpu.memory_space<vmem>>, %arg3: memref<8x192x128xbf16, #tpu.memory_space<vmem>>, %arg4: memref<128x128xf32, #tpu.memory_space<vmem>>, %arg5: memref<128x128xf32, #tpu.memory_space<vmem>>, %arg6: memref<8x128x128xf32, #tpu.memory_space<vmem>>, %arg7: memref<8x128x192xbf16, #tpu.memory_space<vmem>>, %arg8: memref<128x128xf32, #tpu.memory_space<vmem>>, %arg9: memref<128x128xi32, #tpu.memory_space<vmem>>) attributes {dimension_semantics = [#tpu.dimension_semantics<parallel>], iteration_bounds = array<i64: 1>, scalar_prefetch = 0 : i64, scratch_operands = 3 : i64, tpu.core_type = #tpu.core_type<tc>, window_params = [{transform_indices = @transform_0, window_bounds = array<i64: 8, 16, 64>}, {pipeline_mode = #tpu.pipeline_mode<synchronous>, transform_indices = @transform_1, window_bounds = array<i64: 384, 16>}, {pipeline_mode = #tpu.pipeline_mode<synchronous>, transform_indices = @transform_2, window_bounds = array<i64: 8, 192, 128>}, {transform_indices = @transform_3, window_bounds = array<i64: 128, 128>}, {transform_indices = @transform_4, window_bounds = array<i64: 128, 128>}, {transform_indices = @transform_5, window_bounds = array<i64: 8, 128, 128>}]} {
    %c0 = arith.constant 0 : index
    %c0_0 = arith.constant 0 : index
    %0 = vector.load %arg2[%c0, %c0_0] : memref<384x16xbf16, #tpu.memory_space<vmem>>, vector<384x16xbf16>
    %c0_1 = arith.constant 0 : index
    %c0_2 = arith.constant 0 : index
    %c0_3 = arith.constant 0 : index
    %1 = vector.load %arg1[%c0_1, %c0_2, %c0_3] : memref<8x16x64xbf16, #tpu.memory_space<vmem>>, vector<1x16x64xbf16>
    %2 = vector.shape_cast %1 : vector<1x16x64xbf16> to vector<16x64xbf16>
    %cst = arith.constant dense<0.000000e+00> : vector<384x64xf32>
    %3 = tpu.matmul %0, %2, %cst {dimension_numbers = #tpu.dot_dimension_numbers<[1], [0], [0], [1], [0, 0, 1, 1], [], []>} : vector<384x16xbf16>, vector<16x64xbf16>, vector<384x64xf32> -> vector<384x64xf32>
    %4 = arith.truncf %3 : vector<384x64xf32> to vector<384x64xbf16>
    %5 = vector.extract_strided_slice %4 {offsets = [0, 0], sizes = [16, 64], strides = [1, 1]} : vector<384x64xbf16> to vector<16x64xbf16>
    %c0_4 = arith.constant 0 : index
    %c0_5 = arith.constant 0 : index
    %c0_6 = arith.constant 0 : index
    %6 = vector.load %arg7[%c0_4, %c0_5, %c0_6] : memref<8x128x192xbf16, #tpu.memory_space<vmem>>, vector<1x16x64xbf16>
    %7 = vector.shape_cast %6 : vector<1x16x64xbf16> to vector<16x64xbf16>
    %8 = vector.shape_cast %5 : vector<16x64xbf16> to vector<1x16x64xbf16>
    tpu.vector_store %arg7[%c0_4, %c0_5, %c0_6], %8 {strides = array<i32>} : memref<8x128x192xbf16, #tpu.memory_space<vmem>>, vector<1x16x64xbf16>,
    %9 = vector.extract_strided_slice %4 {offsets = [16, 0], sizes = [16, 64], strides = [1, 1]} : vector<384x64xbf16> to vector<16x64xbf16>
    %c0_7 = arith.constant 0 : index
    %c0_8 = arith.constant 0 : index
    %c64 = arith.constant 64 : index
    %10 = vector.load %arg7[%c0_7, %c0_8, %c64] : memref<8x128x192xbf16, #tpu.memory_space<vmem>>, vector<1x16x64xbf16>
    %11 = vector.shape_cast %10 : vector<1x16x64xbf16> to vector<16x64xbf16>
    %12 = vector.shape_cast %9 : vector<16x64xbf16> to vector<1x16x64xbf16>
    tpu.vector_store %arg7[%c0_7, %c0_8, %c64], %12 {strides = array<i32>} : memref<8x128x192xbf16, #tpu.memory_space<vmem>>, vector<1x16x64xbf16>,
    %13 = vector.extract_strided_slice %4 {offsets = [32, 0], sizes = [16, 64], strides = [1, 1]} : vector<384x64xbf16> to vector<16x64xbf16>
    %c0_9 = arith.constant 0 : index
    %c0_10 = arith.constant 0 : index
    %c128 = arith.constant 128 : index
    %14 = vector.load %arg7[%c0_9, %c0_10, %c128] : memref<8x128x192xbf16, #tpu.memory_space<vmem>>, vector<1x16x64xbf16>
    %15 = vector.shape_cast %14 : vector<1x16x64xbf16> to vector<16x64xbf16>
    %16 = vector.shape_cast %13 : vector<16x64xbf16> to vector<1x16x64xbf16>
    tpu.vector_store %arg7[%c0_9, %c0_10, %c128], %16 {strides = array<i32>} : memref<8x128x192xbf16, #tpu.memory_space<vmem>>, vector<1x16x64xbf16>,
    %17 = vector.extract_strided_slice %4 {offsets = [48, 0], sizes = [16, 64], strides = [1, 1]} : vector<384x64xbf16> to vector<16x64xbf16>
    %c1 = arith.constant 1 : index
    %c0_11 = arith.constant 0 : index
    %c0_12 = arith.constant 0 : index
    %18 = vector.load %arg7[%c1, %c0_11, %c0_12] : memref<8x128x192xbf16, #tpu.memory_space<vmem>>, vector<1x16x64xbf16>
    %19 = vector.shape_cast %18 : vector<1x16x64xbf16> to vector<16x64xbf16>
    %20 = vector.shape_cast %17 : vector<16x64xbf16> to vector<1x16x64xbf16>
    tpu.vector_store %arg7[%c1, %c0_11, %c0_12], %20 {strides = array<i32>} : memref<8x128x192xbf16, #tpu.memory_space<vmem>>, vector<1x16x64xbf16>,
    %21 = vector.extract_strided_slice %4 {offsets = [64, 0], sizes = [16, 64], strides = [1, 1]} : vector<384x64xbf16> to vector<16x64xbf16>
    %c1_13 = arith.constant 1 : index
    %c0_14 = arith.constant 0 : index
    %c64_15 = arith.constant 64 : index
    %22 = vector.load %arg7[%c1_13, %c0_14, %c64_15] : memref<8x128x192xbf16, #tpu.memory_space<vmem>>, vector<1x16x64xbf16>
    %23 = vector.shape_cast %22 : vector<1x16x64xbf16> to vector<16x64xbf16>
    %24 = vector.shape_cast %21 : vector<16x64xbf16> to vector<1x16x64xbf16>
    tpu.vector_store %arg7[%c1_13, %c0_14, %c64_15], %24 {strides = array<i32>} : memref<8x128x192xbf16, #tpu.memory_space<vmem>>, vector<1x16x64xbf16>,
    %25 = vector.extract_strided_slice %4 {offsets = [80, 0], sizes = [16, 64], strides = [1, 1]} : vector<384x64xbf16> to vector<16x64xbf16>
    %c1_16 = arith.constant 1 : index
    %c0_17 = arith.constant 0 : index
    %c128_18 = arith.constant 128 : index
    %26 = vector.load %arg7[%c1_16, %c0_17, %c128_18] : memref<8x128x192xbf16, #tpu.memory_space<vmem>>, vector<1x16x64xbf16>
    %27 = vector.shape_cast %26 : vector<1x16x64xbf16> to vector<16x64xbf16>
    %28 = vector.shape_cast %25 : vector<16x64xbf16> to vector<1x16x64xbf16>
    tpu.vector_store %arg7[%c1_16, %c0_17, %c128_18], %28 {strides = array<i32>} : memref<8x128x192xbf16, #tpu.memory_space<vmem>>, vector<1x16x64xbf16>,
    %29 = vector.extract_strided_slice %4 {offsets = [96, 0], sizes = [16, 64], strides = [1, 1]} : vector<384x64xbf16> to vector<16x64xbf16>
    %c2 = arith.constant 2 : index
    %c0_19 = arith.constant 0 : index
    %c0_20 = arith.constant 0 : index
    %30 = vector.load %arg7[%c2, %c0_19, %c0_20] : memref<8x128x192xbf16, #tpu.memory_space<vmem>>, vector<1x16x64xbf16>
    %31 = vector.shape_cast %30 : vector<1x16x64xbf16> to vector<16x64xbf16>
    %32 = vector.shape_cast %29 : vector<16x64xbf16> to vector<1x16x64xbf16>
    tpu.vector_store %arg7[%c2, %c0_19, %c0_20], %32 {strides = array<i32>} : memref<8x128x192xbf16, #tpu.memory_space<vmem>>, vector<1x16x64xbf16>,
    %33 = vector.extract_strided_slice %4 {offsets = [112, 0], sizes = [16, 64], strides = [1, 1]} : vector<384x64xbf16> to vector<16x64xbf16>
    %c2_21 = arith.constant 2 : index
    %c0_22 = arith.constant 0 : index
    %c64_23 = arith.constant 64 : index
    %34 = vector.load %arg7[%c2_21, %c0_22, %c64_23] : memref<8x128x192xbf16, #tpu.memory_space<vmem>>, vector<1x16x64xbf16>
    %35 = vector.shape_cast %34 : vector<1x16x64xbf16> to vector<16x64xbf16>
    %36 = vector.shape_cast %33 : vector<16x64xbf16> to vector<1x16x64xbf16>
    tpu.vector_store %arg7[%c2_21, %c0_22, %c64_23], %36 {strides = array<i32>} : memref<8x128x192xbf16, #tpu.memory_space<vmem>>, vector<1x16x64xbf16>,
    %37 = vector.extract_strided_slice %4 {offsets = [128, 0], sizes = [16, 64], strides = [1, 1]} : vector<384x64xbf16> to vector<16x64xbf16>
    %c2_24 = arith.constant 2 : index
    %c0_25 = arith.constant 0 : index
    %c128_26 = arith.constant 128 : index
    %38 = vector.load %arg7[%c2_24, %c0_25, %c128_26] : memref<8x128x192xbf16, #tpu.memory_space<vmem>>, vector<1x16x64xbf16>
    %39 = vector.shape_cast %38 : vector<1x16x64xbf16> to vector<16x64xbf16>
    %40 = vector.shape_cast %37 : vector<16x64xbf16> to vector<1x16x64xbf16>
    tpu.vector_store %arg7[%c2_24, %c0_25, %c128_26], %40 {strides = array<i32>} : memref<8x128x192xbf16, #tpu.memory_space<vmem>>, vector<1x16x64xbf16>,
    %41 = vector.extract_strided_slice %4 {offsets = [144, 0], sizes = [16, 64], strides = [1, 1]} : vector<384x64xbf16> to vector<16x64xbf16>
    %c3 = arith.constant 3 : index
    %c0_27 = arith.constant 0 : index
    %c0_28 = arith.constant 0 : index
    %42 = vector.load %arg7[%c3, %c0_27, %c0_28] : memref<8x128x192xbf16, #tpu.memory_space<vmem>>, vector<1x16x64xbf16>
    %43 = vector.shape_cast %42 : vector<1x16x64xbf16> to vector<16x64xbf16>
    %44 = vector.shape_cast %41 : vector<16x64xbf16> to vector<1x16x64xbf16>
    tpu.vector_store %arg7[%c3, %c0_27, %c0_28], %44 {strides = array<i32>} : memref<8x128x192xbf16, #tpu.memory_space<vmem>>, vector<1x16x64xbf16>,
    %45 = vector.extract_strided_slice %4 {offsets = [160, 0], sizes = [16, 64], strides = [1, 1]} : vector<384x64xbf16> to vector<16x64xbf16>
    %c3_29 = arith.constant 3 : index
    %c0_30 = arith.constant 0 : index
    %c64_31 = arith.constant 64 : index
    %46 = vector.load %arg7[%c3_29, %c0_30, %c64_31] : memref<8x128x192xbf16, #tpu.memory_space<vmem>>, vector<1x16x64xbf16>
    %47 = vector.shape_cast %46 : vector<1x16x64xbf16> to vector<16x64xbf16>
    %48 = vector.shape_cast %45 : vector<16x64xbf16> to vector<1x16x64xbf16>
    tpu.vector_store %arg7[%c3_29, %c0_30, %c64_31], %48 {strides = array<i32>} : memref<8x128x192xbf16, #tpu.memory_space<vmem>>, vector<1x16x64xbf16>,
    %49 = vector.extract_strided_slice %4 {offsets = [176, 0], sizes = [16, 64], strides = [1, 1]} : vector<384x64xbf16> to vector<16x64xbf16>
    %c3_32 = arith.constant 3 : index
    %c0_33 = arith.constant 0 : index
    %c128_34 = arith.constant 128 : index
    %50 = vector.load %arg7[%c3_32, %c0_33, %c128_34] : memref<8x128x192xbf16, #tpu.memory_space<vmem>>, vector<1x16x64xbf16>
    %51 = vector.shape_cast %50 : vector<1x16x64xbf16> to vector<16x64xbf16>
    %52 = vector.shape_cast %49 : vector<16x64xbf16> to vector<1x16x64xbf16>
    tpu.vector_store %arg7[%c3_32, %c0_33, %c128_34], %52 {strides = array<i32>} : memref<8x128x192xbf16, #tpu.memory_space<vmem>>, vector<1x16x64xbf16>,
    %53 = vector.extract_strided_slice %4 {offsets = [192, 0], sizes = [16, 64], strides = [1, 1]} : vector<384x64xbf16> to vector<16x64xbf16>
    %c4 = arith.constant 4 : index
    %c0_35 = arith.constant 0 : index
    %c0_36 = arith.constant 0 : index
    %54 = vector.load %arg7[%c4, %c0_35, %c0_36] : memref<8x128x192xbf16, #tpu.memory_space<vmem>>, vector<1x16x64xbf16>
    %55 = vector.shape_cast %54 : vector<1x16x64xbf16> to vector<16x64xbf16>
    %56 = vector.shape_cast %53 : vector<16x64xbf16> to vector<1x16x64xbf16>
    tpu.vector_store %arg7[%c4, %c0_35, %c0_36], %56 {strides = array<i32>} : memref<8x128x192xbf16, #tpu.memory_space<vmem>>, vector<1x16x64xbf16>,
    %57 = vector.extract_strided_slice %4 {offsets = [208, 0], sizes = [16, 64], strides = [1, 1]} : vector<384x64xbf16> to vector<16x64xbf16>
    %c4_37 = arith.constant 4 : index
    %c0_38 = arith.constant 0 : index
    %c64_39 = arith.constant 64 : index
    %58 = vector.load %arg7[%c4_37, %c0_38, %c64_39] : memref<8x128x192xbf16, #tpu.memory_space<vmem>>, vector<1x16x64xbf16>
    %59 = vector.shape_cast %58 : vector<1x16x64xbf16> to vector<16x64xbf16>
    %60 = vector.shape_cast %57 : vector<16x64xbf16> to vector<1x16x64xbf16>
    tpu.vector_store %arg7[%c4_37, %c0_38, %c64_39], %60 {strides = array<i32>} : memref<8x128x192xbf16, #tpu.memory_space<vmem>>, vector<1x16x64xbf16>,
    %61 = vector.extract_strided_slice %4 {offsets = [224, 0], sizes = [16, 64], strides = [1, 1]} : vector<384x64xbf16> to vector<16x64xbf16>
    %c4_40 = arith.constant 4 : index
    %c0_41 = arith.constant 0 : index
    %c128_42 = arith.constant 128 : index
    %62 = vector.load %arg7[%c4_40, %c0_41, %c128_42] : memref<8x128x192xbf16, #tpu.memory_space<vmem>>, vector<1x16x64xbf16>
    %63 = vector.shape_cast %62 : vector<1x16x64xbf16> to vector<16x64xbf16>
    %64 = vector.shape_cast %61 : vector<16x64xbf16> to vector<1x16x64xbf16>
    tpu.vector_store %arg7[%c4_40, %c0_41, %c128_42], %64 {strides = array<i32>} : memref<8x128x192xbf16, #tpu.memory_space<vmem>>, vector<1x16x64xbf16>,
    %65 = vector.extract_strided_slice %4 {offsets = [240, 0], sizes = [16, 64], strides = [1, 1]} : vector<384x64xbf16> to vector<16x64xbf16>
    %c5 = arith.constant 5 : index
    %c0_43 = arith.constant 0 : index
    %c0_44 = arith.constant 0 : index
    %66 = vector.load %arg7[%c5, %c0_43, %c0_44] : memref<8x128x192xbf16, #tpu.memory_space<vmem>>, vector<1x16x64xbf16>
    %67 = vector.shape_cast %66 : vector<1x16x64xbf16> to vector<16x64xbf16>
    %68 = vector.shape_cast %65 : vector<16x64xbf16> to vector<1x16x64xbf16>
    tpu.vector_store %arg7[%c5, %c0_43, %c0_44], %68 {strides = array<i32>} : memref<8x128x192xbf16, #tpu.memory_space<vmem>>, vector<1x16x64xbf16>,
    %69 = vector.extract_strided_slice %4 {offsets = [256, 0], sizes = [16, 64], strides = [1, 1]} : vector<384x64xbf16> to vector<16x64xbf16>
    %c5_45 = arith.constant 5 : index
    %c0_46 = arith.constant 0 : index
    %c64_47 = arith.constant 64 : index
    %70 = vector.load %arg7[%c5_45, %c0_46, %c64_47] : memref<8x128x192xbf16, #tpu.memory_space<vmem>>, vector<1x16x64xbf16>
    %71 = vector.shape_cast %70 : vector<1x16x64xbf16> to vector<16x64xbf16>
    %72 = vector.shape_cast %69 : vector<16x64xbf16> to vector<1x16x64xbf16>
    tpu.vector_store %arg7[%c5_45, %c0_46, %c64_47], %72 {strides = array<i32>} : memref<8x128x192xbf16, #tpu.memory_space<vmem>>, vector<1x16x64xbf16>,
    %73 = vector.extract_strided_slice %4 {offsets = [272, 0], sizes = [16, 64], strides = [1, 1]} : vector<384x64xbf16> to vector<16x64xbf16>
    %c5_48 = arith.constant 5 : index
    %c0_49 = arith.constant 0 : index
    %c128_50 = arith.constant 128 : index
    %74 = vector.load %arg7[%c5_48, %c0_49, %c128_50] : memref<8x128x192xbf16, #tpu.memory_space<vmem>>, vector<1x16x64xbf16>
    %75 = vector.shape_cast %74 : vector<1x16x64xbf16> to vector<16x64xbf16>
    %76 = vector.shape_cast %73 : vector<16x64xbf16> to vector<1x16x64xbf16>
    tpu.vector_store %arg7[%c5_48, %c0_49, %c128_50], %76 {strides = array<i32>} : memref<8x128x192xbf16, #tpu.memory_space<vmem>>, vector<1x16x64xbf16>,
    %77 = vector.extract_strided_slice %4 {offsets = [288, 0], sizes = [16, 64], strides = [1, 1]} : vector<384x64xbf16> to vector<16x64xbf16>
    %c6 = arith.constant 6 : index
    %c0_51 = arith.constant 0 : index
    %c0_52 = arith.constant 0 : index
    %78 = vector.load %arg7[%c6, %c0_51, %c0_52] : memref<8x128x192xbf16, #tpu.memory_space<vmem>>, vector<1x16x64xbf16>
    %79 = vector.shape_cast %78 : vector<1x16x64xbf16> to vector<16x64xbf16>
    %80 = vector.shape_cast %77 : vector<16x64xbf16> to vector<1x16x64xbf16>
    tpu.vector_store %arg7[%c6, %c0_51, %c0_52], %80 {strides = array<i32>} : memref<8x128x192xbf16, #tpu.memory_space<vmem>>, vector<1x16x64xbf16>,
    %81 = vector.extract_strided_slice %4 {offsets = [304, 0], sizes = [16, 64], strides = [1, 1]} : vector<384x64xbf16> to vector<16x64xbf16>
    %c6_53 = arith.constant 6 : index
    %c0_54 = arith.constant 0 : index
    %c64_55 = arith.constant 64 : index
    %82 = vector.load %arg7[%c6_53, %c0_54, %c64_55] : memref<8x128x192xbf16, #tpu.memory_space<vmem>>, vector<1x16x64xbf16>
    %83 = vector.shape_cast %82 : vector<1x16x64xbf16> to vector<16x64xbf16>
    %84 = vector.shape_cast %81 : vector<16x64xbf16> to vector<1x16x64xbf16>
    tpu.vector_store %arg7[%c6_53, %c0_54, %c64_55], %84 {strides = array<i32>} : memref<8x128x192xbf16, #tpu.memory_space<vmem>>, vector<1x16x64xbf16>,
    %85 = vector.extract_strided_slice %4 {offsets = [320, 0], sizes = [16, 64], strides = [1, 1]} : vector<384x64xbf16> to vector<16x64xbf16>
    %c6_56 = arith.constant 6 : index
    %c0_57 = arith.constant 0 : index
    %c128_58 = arith.constant 128 : index
    %86 = vector.load %arg7[%c6_56, %c0_57, %c128_58] : memref<8x128x192xbf16, #tpu.memory_space<vmem>>, vector<1x16x64xbf16>
    %87 = vector.shape_cast %86 : vector<1x16x64xbf16> to vector<16x64xbf16>
    %88 = vector.shape_cast %85 : vector<16x64xbf16> to vector<1x16x64xbf16>
    tpu.vector_store %arg7[%c6_56, %c0_57, %c128_58], %88 {strides = array<i32>} : memref<8x128x192xbf16, #tpu.memory_space<vmem>>, vector<1x16x64xbf16>,
    %89 = vector.extract_strided_slice %4 {offsets = [336, 0], sizes = [16, 64], strides = [1, 1]} : vector<384x64xbf16> to vector<16x64xbf16>
    %c7 = arith.constant 7 : index
    %c0_59 = arith.constant 0 : index
    %c0_60 = arith.constant 0 : index
    %90 = vector.load %arg7[%c7, %c0_59, %c0_60] : memref<8x128x192xbf16, #tpu.memory_space<vmem>>, vector<1x16x64xbf16>
    %91 = vector.shape_cast %90 : vector<1x16x64xbf16> to vector<16x64xbf16>
    %92 = vector.shape_cast %89 : vector<16x64xbf16> to vector<1x16x64xbf16>
    tpu.vector_store %arg7[%c7, %c0_59, %c0_60], %92 {strides = array<i32>} : memref<8x128x192xbf16, #tpu.memory_space<vmem>>, vector<1x16x64xbf16>,
    %93 = vector.extract_strided_slice %4 {offsets = [352, 0], sizes = [16, 64], strides = [1, 1]} : vector<384x64xbf16> to vector<16x64xbf16>
    %c7_61 = arith.constant 7 : index
    %c0_62 = arith.constant 0 : index
    %c64_63 = arith.constant 64 : index
    %94 = vector.load %arg7[%c7_61, %c0_62, %c64_63] : memref<8x128x192xbf16, #tpu.memory_space<vmem>>, vector<1x16x64xbf16>
    %95 = vector.shape_cast %94 : vector<1x16x64xbf16> to vector<16x64xbf16>
    %96 = vector.shape_cast %93 : vector<16x64xbf16> to vector<1x16x64xbf16>
    tpu.vector_store %arg7[%c7_61, %c0_62, %c64_63], %96 {strides = array<i32>} : memref<8x128x192xbf16, #tpu.memory_space<vmem>>, vector<1x16x64xbf16>,
    %97 = vector.extract_strided_slice %4 {offsets = [368, 0], sizes = [16, 64], strides = [1, 1]} : vector<384x64xbf16> to vector<16x64xbf16>
    %c7_64 = arith.constant 7 : index
    %c0_65 = arith.constant 0 : index
    %c128_66 = arith.constant 128 : index
    %98 = vector.load %arg7[%c7_64, %c0_65, %c128_66] : memref<8x128x192xbf16, #tpu.memory_space<vmem>>, vector<1x16x64xbf16>
    %99 = vector.shape_cast %98 : vector<1x16x64xbf16> to vector<16x64xbf16>
    %100 = vector.shape_cast %97 : vector<16x64xbf16> to vector<1x16x64xbf16>
    tpu.vector_store %arg7[%c7_64, %c0_65, %c128_66], %100 {strides = array<i32>} : memref<8x128x192xbf16, #tpu.memory_space<vmem>>, vector<1x16x64xbf16>,
    %c1_67 = arith.constant 1 : index
    %c0_68 = arith.constant 0 : index
    %c0_69 = arith.constant 0 : index
    %101 = vector.load %arg1[%c1_67, %c0_68, %c0_69] : memref<8x16x64xbf16, #tpu.memory_space<vmem>>, vector<1x16x64xbf16>
    %102 = vector.shape_cast %101 : vector<1x16x64xbf16> to vector<16x64xbf16>
    %cst_70 = arith.constant dense<0.000000e+00> : vector<384x64xf32>
    %103 = tpu.matmul %0, %102, %cst_70 {dimension_numbers = #tpu.dot_dimension_numbers<[1], [0], [0], [1], [0, 0, 1, 1], [], []>} : vector<384x16xbf16>, vector<16x64xbf16>, vector<384x64xf32> -> vector<384x64xf32>
    %104 = arith.truncf %103 : vector<384x64xf32> to vector<384x64xbf16>
    %105 = vector.extract_strided_slice %104 {offsets = [0, 0], sizes = [16, 64], strides = [1, 1]} : vector<384x64xbf16> to vector<16x64xbf16>
    %c0_71 = arith.constant 0 : index
    %c16 = arith.constant 16 : index
    %c0_72 = arith.constant 0 : index
    %106 = vector.load %arg7[%c0_71, %c16, %c0_72] : memref<8x128x192xbf16, #tpu.memory_space<vmem>>, vector<1x16x64xbf16>
    %107 = vector.shape_cast %106 : vector<1x16x64xbf16> to vector<16x64xbf16>
    %108 = vector.shape_cast %105 : vector<16x64xbf16> to vector<1x16x64xbf16>
    tpu.vector_store %arg7[%c0_71, %c16, %c0_72], %108 {strides = array<i32>} : memref<8x128x192xbf16, #tpu.memory_space<vmem>>, vector<1x16x64xbf16>,
    %109 = vector.extract_strided_slice %104 {offsets = [16, 0], sizes = [16, 64], strides = [1, 1]} : vector<384x64xbf16> to vector<16x64xbf16>
    %c0_73 = arith.constant 0 : index
    %c16_74 = arith.constant 16 : index
    %c64_75 = arith.constant 64 : index
    %110 = vector.load %arg7[%c0_73, %c16_74, %c64_75] : memref<8x128x192xbf16, #tpu.memory_space<vmem>>, vector<1x16x64xbf16>
    %111 = vector.shape_cast %110 : vector<1x16x64xbf16> to vector<16x64xbf16>
    %112 = vector.shape_cast %109 : vector<16x64xbf16> to vector<1x16x64xbf16>
    tpu.vector_store %arg7[%c0_73, %c16_74, %c64_75], %112 {strides = array<i32>} : memref<8x128x192xbf16, #tpu.memory_space<vmem>>, vector<1x16x64xbf16>,
    %113 = vector.extract_strided_slice %104 {offsets = [32, 0], sizes = [16, 64], strides = [1, 1]} : vector<384x64xbf16> to vector<16x64xbf16>
    %c0_76 = arith.constant 0 : index
    %c16_77 = arith.constant 16 : index
    %c128_78 = arith.constant 128 : index
    %114 = vector.load %arg7[%c0_76, %c16_77, %c128_78] : memref<8x128x192xbf16, #tpu.memory_space<vmem>>, vector<1x16x64xbf16>
    %115 = vector.shape_cast %114 : vector<1x16x64xbf16> to vector<16x64xbf16>
    %116 = vector.shape_cast %113 : vector<16x64xbf16> to vector<1x16x64xbf16>
    tpu.vector_store %arg7[%c0_76, %c16_77, %c128_78], %116 {strides = array<i32>} : memref<8x128x192xbf16, #tpu.memory_space<vmem>>, vector<1x16x64xbf16>,
    %117 = vector.extract_strided_slice %104 {offsets = [48, 0], sizes = [16, 64], strides = [1, 1]} : vector<384x64xbf16> to vector<16x64xbf16>
    %c1_79 = arith.constant 1 : index
    %c16_80 = arith.constant 16 : index
    %c0_81 = arith.constant 0 : index
    %118 = vector.load %arg7[%c1_79, %c16_80, %c0_81] : memref<8x128x192xbf16, #tpu.memory_space<vmem>>, vector<1x16x64xbf16>
    %119 = vector.shape_cast %118 : vector<1x16x64xbf16> to vector<16x64xbf16>
    %120 = vector.shape_cast %117 : vector<16x64xbf16> to vector<1x16x64xbf16>
    tpu.vector_store %arg7[%c1_79, %c16_80, %c0_81], %120 {strides = array<i32>} : memref<8x128x192xbf16, #tpu.memory_space<vmem>>, vector<1x16x64xbf16>,
    %121 = vector.extract_strided_slice %104 {offsets = [64, 0], sizes = [16, 64], strides = [1, 1]} : vector<384x64xbf16> to vector<16x64xbf16>
    %c1_82 = arith.constant 1 : index
    %c16_83 = arith.constant 16 : index
    %c64_84 = arith.constant 64 : index
    %122 = vector.load %arg7[%c1_82, %c16_83, %c64_84] : memref<8x128x192xbf16, #tpu.memory_space<vmem>>, vector<1x16x64xbf16>
    %123 = vector.shape_cast %122 : vector<1x16x64xbf16> to vector<16x64xbf16>
    %124 = vector.shape_cast %121 : vector<16x64xbf16> to vector<1x16x64xbf16>
    tpu.vector_store %arg7[%c1_82, %c16_83, %c64_84], %124 {strides = array<i32>} : memref<8x128x192xbf16, #tpu.memory_space<vmem>>, vector<1x16x64xbf16>,
    %125 = vector.extract_strided_slice %104 {offsets = [80, 0], sizes = [16, 64], strides = [1, 1]} : vector<384x64xbf16> to vector<16x64xbf16>
    %c1_85 = arith.constant 1 : index
    %c16_86 = arith.constant 16 : index
    %c128_87 = arith.constant 128 : index
    %126 = vector.load %arg7[%c1_85, %c16_86, %c128_87] : memref<8x128x192xbf16, #tpu.memory_space<vmem>>, vector<1x16x64xbf16>
    %127 = vector.shape_cast %126 : vector<1x16x64xbf16> to vector<16x64xbf16>
    %128 = vector.shape_cast %125 : vector<16x64xbf16> to vector<1x16x64xbf16>
    tpu.vector_store %arg7[%c1_85, %c16_86, %c128_87], %128 {strides = array<i32>} : memref<8x128x192xbf16, #tpu.memory_space<vmem>>, vector<1x16x64xbf16>,
    %129 = vector.extract_strided_slice %104 {offsets = [96, 0], sizes = [16, 64], strides = [1, 1]} : vector<384x64xbf16> to vector<16x64xbf16>
    %c2_88 = arith.constant 2 : index
    %c16_89 = arith.constant 16 : index
    %c0_90 = arith.constant 0 : index
    %130 = vector.load %arg7[%c2_88, %c16_89, %c0_90] : memref<8x128x192xbf16, #tpu.memory_space<vmem>>, vector<1x16x64xbf16>
    %131 = vector.shape_cast %130 : vector<1x16x64xbf16> to vector<16x64xbf16>
    %132 = vector.shape_cast %129 : vector<16x64xbf16> to vector<1x16x64xbf16>
    tpu.vector_store %arg7[%c2_88, %c16_89, %c0_90], %132 {strides = array<i32>} : memref<8x128x192xbf16, #tpu.memory_space<vmem>>, vector<1x16x64xbf16>,
    %133 = vector.extract_strided_slice %104 {offsets = [112, 0], sizes = [16, 64], strides = [1, 1]} : vector<384x64xbf16> to vector<16x64xbf16>
    %c2_91 = arith.constant 2 : index
    %c16_92 = arith.constant 16 : index
    %c64_93 = arith.constant 64 : index
    %134 = vector.load %arg7[%c2_91, %c16_92, %c64_93] : memref<8x128x192xbf16, #tpu.memory_space<vmem>>, vector<1x16x64xbf16>
    %135 = vector.shape_cast %134 : vector<1x16x64xbf16> to vector<16x64xbf16>
    %136 = vector.shape_cast %133 : vector<16x64xbf16> to vector<1x16x64xbf16>
    tpu.vector_store %arg7[%c2_91, %c16_92, %c64_93], %136 {strides = array<i32>} : memref<8x128x192xbf16, #tpu.memory_space<vmem>>, vector<1x16x64xbf16>,
    %137 = vector.extract_strided_slice %104 {offsets = [128, 0], sizes = [16, 64], strides = [1, 1]} : vector<384x64xbf16> to vector<16x64xbf16>
    %c2_94 = arith.constant 2 : index
    %c16_95 = arith.constant 16 : index
    %c128_96 = arith.constant 128 : index
    %138 = vector.load %arg7[%c2_94, %c16_95, %c128_96] : memref<8x128x192xbf16, #tpu.memory_space<vmem>>, vector<1x16x64xbf16>
    %139 = vector.shape_cast %138 : vector<1x16x64xbf16> to vector<16x64xbf16>
    %140 = vector.shape_cast %137 : vector<16x64xbf16> to vector<1x16x64xbf16>
    tpu.vector_store %arg7[%c2_94, %c16_95, %c128_96], %140 {strides = array<i32>} : memref<8x128x192xbf16, #tpu.memory_space<vmem>>, vector<1x16x64xbf16>,
    %141 = vector.extract_strided_slice %104 {offsets = [144, 0], sizes = [16, 64], strides = [1, 1]} : vector<384x64xbf16> to vector<16x64xbf16>
    %c3_97 = arith.constant 3 : index
    %c16_98 = arith.constant 16 : index
    %c0_99 = arith.constant 0 : index
    %142 = vector.load %arg7[%c3_97, %c16_98, %c0_99] : memref<8x128x192xbf16, #tpu.memory_space<vmem>>, vector<1x16x64xbf16>
    %143 = vector.shape_cast %142 : vector<1x16x64xbf16> to vector<16x64xbf16>
    %144 = vector.shape_cast %141 : vector<16x64xbf16> to vector<1x16x64xbf16>
    tpu.vector_store %arg7[%c3_97, %c16_98, %c0_99], %144 {strides = array<i32>} : memref<8x128x192xbf16, #tpu.memory_space<vmem>>, vector<1x16x64xbf16>,
    %145 = vector.extract_strided_slice %104 {offsets = [160, 0], sizes = [16, 64], strides = [1, 1]} : vector<384x64xbf16> to vector<16x64xbf16>
    %c3_100 = arith.constant 3 : index
    %c16_101 = arith.constant 16 : index
    %c64_102 = arith.constant 64 : index
    %146 = vector.load %arg7[%c3_100, %c16_101, %c64_102] : memref<8x128x192xbf16, #tpu.memory_space<vmem>>, vector<1x16x64xbf16>
    %147 = vector.shape_cast %146 : vector<1x16x64xbf16> to vector<16x64xbf16>
    %148 = vector.shape_cast %145 : vector<16x64xbf16> to vector<1x16x64xbf16>
    tpu.vector_store %arg7[%c3_100, %c16_101, %c64_102], %148 {strides = array<i32>} : memref<8x128x192xbf16, #tpu.memory_space<vmem>>, vector<1x16x64xbf16>,
    %149 = vector.extract_strided_slice %104 {offsets = [176, 0], sizes = [16, 64], strides = [1, 1]} : vector<384x64xbf16> to vector<16x64xbf16>
    %c3_103 = arith.constant 3 : index
    %c16_104 = arith.constant 16 : index
    %c128_105 = arith.constant 128 : index
    %150 = vector.load %arg7[%c3_103, %c16_104, %c128_105] : memref<8x128x192xbf16, #tpu.memory_space<vmem>>, vector<1x16x64xbf16>
    %151 = vector.shape_cast %150 : vector<1x16x64xbf16> to vector<16x64xbf16>
    %152 = vector.shape_cast %149 : vector<16x64xbf16> to vector<1x16x64xbf16>
    tpu.vector_store %arg7[%c3_103, %c16_104, %c128_105], %152 {strides = array<i32>} : memref<8x128x192xbf16, #tpu.memory_space<vmem>>, vector<1x16x64xbf16>,
    %153 = vector.extract_strided_slice %104 {offsets = [192, 0], sizes = [16, 64], strides = [1, 1]} : vector<384x64xbf16> to vector<16x64xbf16>
    %c4_106 = arith.constant 4 : index
    %c16_107 = arith.constant 16 : index
    %c0_108 = arith.constant 0 : index
    %154 = vector.load %arg7[%c4_106, %c16_107, %c0_108] : memref<8x128x192xbf16, #tpu.memory_space<vmem>>, vector<1x16x64xbf16>
    %155 = vector.shape_cast %154 : vector<1x16x64xbf16> to vector<16x64xbf16>
    %156 = vector.shape_cast %153 : vector<16x64xbf16> to vector<1x16x64xbf16>
    tpu.vector_store %arg7[%c4_106, %c16_107, %c0_108], %156 {strides = array<i32>} : memref<8x128x192xbf16, #tpu.memory_space<vmem>>, vector<1x16x64xbf16>,
    %157 = vector.extract_strided_slice %104 {offsets = [208, 0], sizes = [16, 64], strides = [1, 1]} : vector<384x64xbf16> to vector<16x64xbf16>
    %c4_109 = arith.constant 4 : index
    %c16_110 = arith.constant 16 : index
    %c64_111 = arith.constant 64 : index
    %158 = vector.load %arg7[%c4_109, %c16_110, %c64_111] : memref<8x128x192xbf16, #tpu.memory_space<vmem>>, vector<1x16x64xbf16>
    %159 = vector.shape_cast %158 : vector<1x16x64xbf16> to vector<16x64xbf16>
    %160 = vector.shape_cast %157 : vector<16x64xbf16> to vector<1x16x64xbf16>
    tpu.vector_store %arg7[%c4_109, %c16_110, %c64_111], %160 {strides = array<i32>} : memref<8x128x192xbf16, #tpu.memory_space<vmem>>, vector<1x16x64xbf16>,
    %161 = vector.extract_strided_slice %104 {offsets = [224, 0], sizes = [16, 64], strides = [1, 1]} : vector<384x64xbf16> to vector<16x64xbf16>
    %c4_112 = arith.constant 4 : index
    %c16_113 = arith.constant 16 : index
    %c128_114 = arith.constant 128 : index
    %162 = vector.load %arg7[%c4_112, %c16_113, %c128_114] : memref<8x128x192xbf16, #tpu.memory_space<vmem>>, vector<1x16x64xbf16>
    %163 = vector.shape_cast %162 : vector<1x16x64xbf16> to vector<16x64xbf16>
    %164 = vector.shape_cast %161 : vector<16x64xbf16> to vector<1x16x64xbf16>
    tpu.vector_store %arg7[%c4_112, %c16_113, %c128_114], %164 {strides = array<i32>} : memref<8x128x192xbf16, #tpu.memory_space<vmem>>, vector<1x16x64xbf16>,
    %165 = vector.extract_strided_slice %104 {offsets = [240, 0], sizes = [16, 64], strides = [1, 1]} : vector<384x64xbf16> to vector<16x64xbf16>
    %c5_115 = arith.constant 5 : index
    %c16_116 = arith.constant 16 : index
    %c0_117 = arith.constant 0 : index
    %166 = vector.load %arg7[%c5_115, %c16_116, %c0_117] : memref<8x128x192xbf16, #tpu.memory_space<vmem>>, vector<1x16x64xbf16>
    %167 = vector.shape_cast %166 : vector<1x16x64xbf16> to vector<16x64xbf16>
    %168 = vector.shape_cast %165 : vector<16x64xbf16> to vector<1x16x64xbf16>
    tpu.vector_store %arg7[%c5_115, %c16_116, %c0_117], %168 {strides = array<i32>} : memref<8x128x192xbf16, #tpu.memory_space<vmem>>, vector<1x16x64xbf16>,
    %169 = vector.extract_strided_slice %104 {offsets = [256, 0], sizes = [16, 64], strides = [1, 1]} : vector<384x64xbf16> to vector<16x64xbf16>
    %c5_118 = arith.constant 5 : index
    %c16_119 = arith.constant 16 : index
    %c64_120 = arith.constant 64 : index
    %170 = vector.load %arg7[%c5_118, %c16_119, %c64_120] : memref<8x128x192xbf16, #tpu.memory_space<vmem>>, vector<1x16x64xbf16>
    %171 = vector.shape_cast %170 : vector<1x16x64xbf16> to vector<16x64xbf16>
    %172 = vector.shape_cast %169 : vector<16x64xbf16> to vector<1x16x64xbf16>
    tpu.vector_store %arg7[%c5_118, %c16_119, %c64_120], %172 {strides = array<i32>} : memref<8x128x192xbf16, #tpu.memory_space<vmem>>, vector<1x16x64xbf16>,
    %173 = vector.extract_strided_slice %104 {offsets = [272, 0], sizes = [16, 64], strides = [1, 1]} : vector<384x64xbf16> to vector<16x64xbf16>
    %c5_121 = arith.constant 5 : index
    %c16_122 = arith.constant 16 : index
    %c128_123 = arith.constant 128 : index
    %174 = vector.load %arg7[%c5_121, %c16_122, %c128_123] : memref<8x128x192xbf16, #tpu.memory_space<vmem>>, vector<1x16x64xbf16>
    %175 = vector.shape_cast %174 : vector<1x16x64xbf16> to vector<16x64xbf16>
    %176 = vector.shape_cast %173 : vector<16x64xbf16> to vector<1x16x64xbf16>
    tpu.vector_store %arg7[%c5_121, %c16_122, %c128_123], %176 {strides = array<i32>} : memref<8x128x192xbf16, #tpu.memory_space<vmem>>, vector<1x16x64xbf16>,
    %177 = vector.extract_strided_slice %104 {offsets = [288, 0], sizes = [16, 64], strides = [1, 1]} : vector<384x64xbf16> to vector<16x64xbf16>
    %c6_124 = arith.constant 6 : index
    %c16_125 = arith.constant 16 : index
    %c0_126 = arith.constant 0 : index
    %178 = vector.load %arg7[%c6_124, %c16_125, %c0_126] : memref<8x128x192xbf16, #tpu.memory_space<vmem>>, vector<1x16x64xbf16>
    %179 = vector.shape_cast %178 : vector<1x16x64xbf16> to vector<16x64xbf16>
    %180 = vector.shape_cast %177 : vector<16x64xbf16> to vector<1x16x64xbf16>
    tpu.vector_store %arg7[%c6_124, %c16_125, %c0_126], %180 {strides = array<i32>} : memref<8x128x192xbf16, #tpu.memory_space<vmem>>, vector<1x16x64xbf16>,
    %181 = vector.extract_strided_slice %104 {offsets = [304, 0], sizes = [16, 64], strides = [1, 1]} : vector<384x64xbf16> to vector<16x64xbf16>
    %c6_127 = arith.constant 6 : index
    %c16_128 = arith.constant 16 : index
    %c64_129 = arith.constant 64 : index
    %182 = vector.load %arg7[%c6_127, %c16_128, %c64_129] : memref<8x128x192xbf16, #tpu.memory_space<vmem>>, vector<1x16x64xbf16>
    %183 = vector.shape_cast %182 : vector<1x16x64xbf16> to vector<16x64xbf16>
    %184 = vector.shape_cast %181 : vector<16x64xbf16> to vector<1x16x64xbf16>
    tpu.vector_store %arg7[%c6_127, %c16_128, %c64_129], %184 {strides = array<i32>} : memref<8x128x192xbf16, #tpu.memory_space<vmem>>, vector<1x16x64xbf16>,
    %185 = vector.extract_strided_slice %104 {offsets = [320, 0], sizes = [16, 64], strides = [1, 1]} : vector<384x64xbf16> to vector<16x64xbf16>
    %c6_130 = arith.constant 6 : index
    %c16_131 = arith.constant 16 : index
    %c128_132 = arith.constant 128 : index
    %186 = vector.load %arg7[%c6_130, %c16_131, %c128_132] : memref<8x128x192xbf16, #tpu.memory_space<vmem>>, vector<1x16x64xbf16>
    %187 = vector.shape_cast %186 : vector<1x16x64xbf16> to vector<16x64xbf16>
    %188 = vector.shape_cast %185 : vector<16x64xbf16> to vector<1x16x64xbf16>
    tpu.vector_store %arg7[%c6_130, %c16_131, %c128_132], %188 {strides = array<i32>} : memref<8x128x192xbf16, #tpu.memory_space<vmem>>, vector<1x16x64xbf16>,
    %189 = vector.extract_strided_slice %104 {offsets = [336, 0], sizes = [16, 64], strides = [1, 1]} : vector<384x64xbf16> to vector<16x64xbf16>
    %c7_133 = arith.constant 7 : index
    %c16_134 = arith.constant 16 : index
    %c0_135 = arith.constant 0 : index
    %190 = vector.load %arg7[%c7_133, %c16_134, %c0_135] : memref<8x128x192xbf16, #tpu.memory_space<vmem>>, vector<1x16x64xbf16>
    %191 = vector.shape_cast %190 : vector<1x16x64xbf16> to vector<16x64xbf16>
    %192 = vector.shape_cast %189 : vector<16x64xbf16> to vector<1x16x64xbf16>
    tpu.vector_store %arg7[%c7_133, %c16_134, %c0_135], %192 {strides = array<i32>} : memref<8x128x192xbf16, #tpu.memory_space<vmem>>, vector<1x16x64xbf16>,
    %193 = vector.extract_strided_slice %104 {offsets = [352, 0], sizes = [16, 64], strides = [1, 1]} : vector<384x64xbf16> to vector<16x64xbf16>
    %c7_136 = arith.constant 7 : index
    %c16_137 = arith.constant 16 : index
    %c64_138 = arith.constant 64 : index
    %194 = vector.load %arg7[%c7_136, %c16_137, %c64_138] : memref<8x128x192xbf16, #tpu.memory_space<vmem>>, vector<1x16x64xbf16>
    %195 = vector.shape_cast %194 : vector<1x16x64xbf16> to vector<16x64xbf16>
    %196 = vector.shape_cast %193 : vector<16x64xbf16> to vector<1x16x64xbf16>
    tpu.vector_store %arg7[%c7_136, %c16_137, %c64_138], %196 {strides = array<i32>} : memref<8x128x192xbf16, #tpu.memory_space<vmem>>, vector<1x16x64xbf16>,
    %197 = vector.extract_strided_slice %104 {offsets = [368, 0], sizes = [16, 64], strides = [1, 1]} : vector<384x64xbf16> to vector<16x64xbf16>
    %c7_139 = arith.constant 7 : index
    %c16_140 = arith.constant 16 : index
    %c128_141 = arith.constant 128 : index
    %198 = vector.load %arg7[%c7_139, %c16_140, %c128_141] : memref<8x128x192xbf16, #tpu.memory_space<vmem>>, vector<1x16x64xbf16>
    %199 = vector.shape_cast %198 : vector<1x16x64xbf16> to vector<16x64xbf16>
    %200 = vector.shape_cast %197 : vector<16x64xbf16> to vector<1x16x64xbf16>
    tpu.vector_store %arg7[%c7_139, %c16_140, %c128_141], %200 {strides = array<i32>} : memref<8x128x192xbf16, #tpu.memory_space<vmem>>, vector<1x16x64xbf16>,
    %c2_142 = arith.constant 2 : index
    %c0_143 = arith.constant 0 : index
    %c0_144 = arith.constant 0 : index
    %201 = vector.load %arg1[%c2_142, %c0_143, %c0_144] : memref<8x16x64xbf16, #tpu.memory_space<vmem>>, vector<1x16x64xbf16>
    %202 = vector.shape_cast %201 : vector<1x16x64xbf16> to vector<16x64xbf16>
    %cst_145 = arith.constant dense<0.000000e+00> : vector<384x64xf32>
    %203 = tpu.matmul %0, %202, %cst_145 {dimension_numbers = #tpu.dot_dimension_numbers<[1], [0], [0], [1], [0, 0, 1, 1], [], []>} : vector<384x16xbf16>, vector<16x64xbf16>, vector<384x64xf32> -> vector<384x64xf32>
    %204 = arith.truncf %203 : vector<384x64xf32> to vector<384x64xbf16>
    %205 = vector.extract_strided_slice %204 {offsets = [0, 0], sizes = [16, 64], strides = [1, 1]} : vector<384x64xbf16> to vector<16x64xbf16>
    %c0_146 = arith.constant 0 : index
    %c32 = arith.constant 32 : index
    %c0_147 = arith.constant 0 : index
    %206 = vector.load %arg7[%c0_146, %c32, %c0_147] : memref<8x128x192xbf16, #tpu.memory_space<vmem>>, vector<1x16x64xbf16>
    %207 = vector.shape_cast %206 : vector<1x16x64xbf16> to vector<16x64xbf16>
    %208 = vector.shape_cast %205 : vector<16x64xbf16> to vector<1x16x64xbf16>
    tpu.vector_store %arg7[%c0_146, %c32, %c0_147], %208 {strides = array<i32>} : memref<8x128x192xbf16, #tpu.memory_space<vmem>>, vector<1x16x64xbf16>,
    %209 = vector.extract_strided_slice %204 {offsets = [16, 0], sizes = [16, 64], strides = [1, 1]} : vector<384x64xbf16> to vector<16x64xbf16>
    %c0_148 = arith.constant 0 : index
    %c32_149 = arith.constant 32 : index
    %c64_150 = arith.constant 64 : index
    %210 = vector.load %arg7[%c0_148, %c32_149, %c64_150] : memref<8x128x192xbf16, #tpu.memory_space<vmem>>, vector<1x16x64xbf16>
    %211 = vector.shape_cast %210 : vector<1x16x64xbf16> to vector<16x64xbf16>
    %212 = vector.shape_cast %209 : vector<16x64xbf16> to vector<1x16x64xbf16>
    tpu.vector_store %arg7[%c0_148, %c32_149, %c64_150], %212 {strides = array<i32>} : memref<8x128x192xbf16, #tpu.memory_space<vmem>>, vector<1x16x64xbf16>,
    %213 = vector.extract_strided_slice %204 {offsets = [32, 0], sizes = [16, 64], strides = [1, 1]} : vector<384x64xbf16> to vector<16x64xbf16>
    %c0_151 = arith.constant 0 : index
    %c32_152 = arith.constant 32 : index
    %c128_153 = arith.constant 128 : index
    %214 = vector.load %arg7[%c0_151, %c32_152, %c128_153] : memref<8x128x192xbf16, #tpu.memory_space<vmem>>, vector<1x16x64xbf16>
    %215 = vector.shape_cast %214 : vector<1x16x64xbf16> to vector<16x64xbf16>
    %216 = vector.shape_cast %213 : vector<16x64xbf16> to vector<1x16x64xbf16>
    tpu.vector_store %arg7[%c0_151, %c32_152, %c128_153], %216 {strides = array<i32>} : memref<8x128x192xbf16, #tpu.memory_space<vmem>>, vector<1x16x64xbf16>,
    %217 = vector.extract_strided_slice %204 {offsets = [48, 0], sizes = [16, 64], strides = [1, 1]} : vector<384x64xbf16> to vector<16x64xbf16>
    %c1_154 = arith.constant 1 : index
    %c32_155 = arith.constant 32 : index
    %c0_156 = arith.constant 0 : index
    %218 = vector.load %arg7[%c1_154, %c32_155, %c0_156] : memref<8x128x192xbf16, #tpu.memory_space<vmem>>, vector<1x16x64xbf16>
    %219 = vector.shape_cast %218 : vector<1x16x64xbf16> to vector<16x64xbf16>
    %220 = vector.shape_cast %217 : vector<16x64xbf16> to vector<1x16x64xbf16>
    tpu.vector_store %arg7[%c1_154, %c32_155, %c0_156], %220 {strides = array<i32>} : memref<8x128x192xbf16, #tpu.memory_space<vmem>>, vector<1x16x64xbf16>,
    %221 = vector.extract_strided_slice %204 {offsets = [64, 0], sizes = [16, 64], strides = [1, 1]} : vector<384x64xbf16> to vector<16x64xbf16>
    %c1_157 = arith.constant 1 : index
    %c32_158 = arith.constant 32 : index
    %c64_159 = arith.constant 64 : index
    %222 = vector.load %arg7[%c1_157, %c32_158, %c64_159] : memref<8x128x192xbf16, #tpu.memory_space<vmem>>, vector<1x16x64xbf16>
    %223 = vector.shape_cast %222 : vector<1x16x64xbf16> to vector<16x64xbf16>
    %224 = vector.shape_cast %221 : vector<16x64xbf16> to vector<1x16x64xbf16>
    tpu.vector_store %arg7[%c1_157, %c32_158, %c64_159], %224 {strides = array<i32>} : memref<8x128x192xbf16, #tpu.memory_space<vmem>>, vector<1x16x64xbf16>,
    %225 = vector.extract_strided_slice %204 {offsets = [80, 0], sizes = [16, 64], strides = [1, 1]} : vector<384x64xbf16> to vector<16x64xbf16>
    %c1_160 = arith.constant 1 : index
    %c32_161 = arith.constant 32 : index
    %c128_162 = arith.constant 128 : index
    %226 = vector.load %arg7[%c1_160, %c32_161, %c128_162] : memref<8x128x192xbf16, #tpu.memory_space<vmem>>, vector<1x16x64xbf16>
    %227 = vector.shape_cast %226 : vector<1x16x64xbf16> to vector<16x64xbf16>
    %228 = vector.shape_cast %225 : vector<16x64xbf16> to vector<1x16x64xbf16>
    tpu.vector_store %arg7[%c1_160, %c32_161, %c128_162], %228 {strides = array<i32>} : memref<8x128x192xbf16, #tpu.memory_space<vmem>>, vector<1x16x64xbf16>,
    %229 = vector.extract_strided_slice %204 {offsets = [96, 0], sizes = [16, 64], strides = [1, 1]} : vector<384x64xbf16> to vector<16x64xbf16>
    %c2_163 = arith.constant 2 : index
    %c32_164 = arith.constant 32 : index
    %c0_165 = arith.constant 0 : index
    %230 = vector.load %arg7[%c2_163, %c32_164, %c0_165] : memref<8x128x192xbf16, #tpu.memory_space<vmem>>, vector<1x16x64xbf16>
    %231 = vector.shape_cast %230 : vector<1x16x64xbf16> to vector<16x64xbf16>
    %232 = vector.shape_cast %229 : vector<16x64xbf16> to vector<1x16x64xbf16>
    tpu.vector_store %arg7[%c2_163, %c32_164, %c0_165], %232 {strides = array<i32>} : memref<8x128x192xbf16, #tpu.memory_space<vmem>>, vector<1x16x64xbf16>,
    %233 = vector.extract_strided_slice %204 {offsets = [112, 0], sizes = [16, 64], strides = [1, 1]} : vector<384x64xbf16> to vector<16x64xbf16>
    %c2_166 = arith.constant 2 : index
    %c32_167 = arith.constant 32 : index
    %c64_168 = arith.constant 64 : index
    %234 = vector.load %arg7[%c2_166, %c32_167, %c64_168] : memref<8x128x192xbf16, #tpu.memory_space<vmem>>, vector<1x16x64xbf16>
    %235 = vector.shape_cast %234 : vector<1x16x64xbf16> to vector<16x64xbf16>
    %236 = vector.shape_cast %233 : vector<16x64xbf16> to vector<1x16x64xbf16>
    tpu.vector_store %arg7[%c2_166, %c32_167, %c64_168], %236 {strides = array<i32>} : memref<8x128x192xbf16, #tpu.memory_space<vmem>>, vector<1x16x64xbf16>,
    %237 = vector.extract_strided_slice %204 {offsets = [128, 0], sizes = [16, 64], strides = [1, 1]} : vector<384x64xbf16> to vector<16x64xbf16>
    %c2_169 = arith.constant 2 : index
    %c32_170 = arith.constant 32 : index
    %c128_171 = arith.constant 128 : index
    %238 = vector.load %arg7[%c2_169, %c32_170, %c128_171] : memref<8x128x192xbf16, #tpu.memory_space<vmem>>, vector<1x16x64xbf16>
    %239 = vector.shape_cast %238 : vector<1x16x64xbf16> to vector<16x64xbf16>
    %240 = vector.shape_cast %237 : vector<16x64xbf16> to vector<1x16x64xbf16>
    tpu.vector_store %arg7[%c2_169, %c32_170, %c128_171], %240 {strides = array<i32>} : memref<8x128x192xbf16, #tpu.memory_space<vmem>>, vector<1x16x64xbf16>,
    %241 = vector.extract_strided_slice %204 {offsets = [144, 0], sizes = [16, 64], strides = [1, 1]} : vector<384x64xbf16> to vector<16x64xbf16>
    %c3_172 = arith.constant 3 : index
    %c32_173 = arith.constant 32 : index
    %c0_174 = arith.constant 0 : index
    %242 = vector.load %arg7[%c3_172, %c32_173, %c0_174] : memref<8x128x192xbf16, #tpu.memory_space<vmem>>, vector<1x16x64xbf16>
    %243 = vector.shape_cast %242 : vector<1x16x64xbf16> to vector<16x64xbf16>
    %244 = vector.shape_cast %241 : vector<16x64xbf16> to vector<1x16x64xbf16>
    tpu.vector_store %arg7[%c3_172, %c32_173, %c0_174], %244 {strides = array<i32>} : memref<8x128x192xbf16, #tpu.memory_space<vmem>>, vector<1x16x64xbf16>,
    %245 = vector.extract_strided_slice %204 {offsets = [160, 0], sizes = [16, 64], strides = [1, 1]} : vector<384x64xbf16> to vector<16x64xbf16>
    %c3_175 = arith.constant 3 : index
    %c32_176 = arith.constant 32 : index
    %c64_177 = arith.constant 64 : index
    %246 = vector.load %arg7[%c3_175, %c32_176, %c64_177] : memref<8x128x192xbf16, #tpu.memory_space<vmem>>, vector<1x16x64xbf16>
    %247 = vector.shape_cast %246 : vector<1x16x64xbf16> to vector<16x64xbf16>
    %248 = vector.shape_cast %245 : vector<16x64xbf16> to vector<1x16x64xbf16>
    tpu.vector_store %arg7[%c3_175, %c32_176, %c64_177], %248 {strides = array<i32>} : memref<8x128x192xbf16, #tpu.memory_space<vmem>>, vector<1x16x64xbf16>,
    %249 = vector.extract_strided_slice %204 {offsets = [176, 0], sizes = [16, 64], strides = [1, 1]} : vector<384x64xbf16> to vector<16x64xbf16>
    %c3_178 = arith.constant 3 : index
    %c32_179 = arith.constant 32 : index
    %c128_180 = arith.constant 128 : index
    %250 = vector.load %arg7[%c3_178, %c32_179, %c128_180] : memref<8x128x192xbf16, #tpu.memory_space<vmem>>, vector<1x16x64xbf16>
    %251 = vector.shape_cast %250 : vector<1x16x64xbf16> to vector<16x64xbf16>
    %252 = vector.shape_cast %249 : vector<16x64xbf16> to vector<1x16x64xbf16>
    tpu.vector_store %arg7[%c3_178, %c32_179, %c128_180], %252 {strides = array<i32>} : memref<8x128x192xbf16, #tpu.memory_space<vmem>>, vector<1x16x64xbf16>,
    %253 = vector.extract_strided_slice %204 {offsets = [192, 0], sizes = [16, 64], strides = [1, 1]} : vector<384x64xbf16> to vector<16x64xbf16>
    %c4_181 = arith.constant 4 : index
    %c32_182 = arith.constant 32 : index
    %c0_183 = arith.constant 0 : index
    %254 = vector.load %arg7[%c4_181, %c32_182, %c0_183] : memref<8x128x192xbf16, #tpu.memory_space<vmem>>, vector<1x16x64xbf16>
    %255 = vector.shape_cast %254 : vector<1x16x64xbf16> to vector<16x64xbf16>
    %256 = vector.shape_cast %253 : vector<16x64xbf16> to vector<1x16x64xbf16>
    tpu.vector_store %arg7[%c4_181, %c32_182, %c0_183], %256 {strides = array<i32>} : memref<8x128x192xbf16, #tpu.memory_space<vmem>>, vector<1x16x64xbf16>,
    %257 = vector.extract_strided_slice %204 {offsets = [208, 0], sizes = [16, 64], strides = [1, 1]} : vector<384x64xbf16> to vector<16x64xbf16>
    %c4_184 = arith.constant 4 : index
    %c32_185 = arith.constant 32 : index
    %c64_186 = arith.constant 64 : index
    %258 = vector.load %arg7[%c4_184, %c32_185, %c64_186] : memref<8x128x192xbf16, #tpu.memory_space<vmem>>, vector<1x16x64xbf16>
    %259 = vector.shape_cast %258 : vector<1x16x64xbf16> to vector<16x64xbf16>
    %260 = vector.shape_cast %257 : vector<16x64xbf16> to vector<1x16x64xbf16>
    tpu.vector_store %arg7[%c4_184, %c32_185, %c64_186], %260 {strides = array<i32>} : memref<8x128x192xbf16, #tpu.memory_space<vmem>>, vector<1x16x64xbf16>,
    %261 = vector.extract_strided_slice %204 {offsets = [224, 0], sizes = [16, 64], strides = [1, 1]} : vector<384x64xbf16> to vector<16x64xbf16>
    %c4_187 = arith.constant 4 : index
    %c32_188 = arith.constant 32 : index
    %c128_189 = arith.constant 128 : index
    %262 = vector.load %arg7[%c4_187, %c32_188, %c128_189] : memref<8x128x192xbf16, #tpu.memory_space<vmem>>, vector<1x16x64xbf16>
    %263 = vector.shape_cast %262 : vector<1x16x64xbf16> to vector<16x64xbf16>
    %264 = vector.shape_cast %261 : vector<16x64xbf16> to vector<1x16x64xbf16>
    tpu.vector_store %arg7[%c4_187, %c32_188, %c128_189], %264 {strides = array<i32>} : memref<8x128x192xbf16, #tpu.memory_space<vmem>>, vector<1x16x64xbf16>,
    %265 = vector.extract_strided_slice %204 {offsets = [240, 0], sizes = [16, 64], strides = [1, 1]} : vector<384x64xbf16> to vector<16x64xbf16>
    %c5_190 = arith.constant 5 : index
    %c32_191 = arith.constant 32 : index
    %c0_192 = arith.constant 0 : index
    %266 = vector.load %arg7[%c5_190, %c32_191, %c0_192] : memref<8x128x192xbf16, #tpu.memory_space<vmem>>, vector<1x16x64xbf16>
    %267 = vector.shape_cast %266 : vector<1x16x64xbf16> to vector<16x64xbf16>
    %268 = vector.shape_cast %265 : vector<16x64xbf16> to vector<1x16x64xbf16>
    tpu.vector_store %arg7[%c5_190, %c32_191, %c0_192], %268 {strides = array<i32>} : memref<8x128x192xbf16, #tpu.memory_space<vmem>>, vector<1x16x64xbf16>,
    %269 = vector.extract_strided_slice %204 {offsets = [256, 0], sizes = [16, 64], strides = [1, 1]} : vector<384x64xbf16> to vector<16x64xbf16>
    %c5_193 = arith.constant 5 : index
    %c32_194 = arith.constant 32 : index
    %c64_195 = arith.constant 64 : index
    %270 = vector.load %arg7[%c5_193, %c32_194, %c64_195] : memref<8x128x192xbf16, #tpu.memory_space<vmem>>, vector<1x16x64xbf16>
    %271 = vector.shape_cast %270 : vector<1x16x64xbf16> to vector<16x64xbf16>
    %272 = vector.shape_cast %269 : vector<16x64xbf16> to vector<1x16x64xbf16>
    tpu.vector_store %arg7[%c5_193, %c32_194, %c64_195], %272 {strides = array<i32>} : memref<8x128x192xbf16, #tpu.memory_space<vmem>>, vector<1x16x64xbf16>,
    %273 = vector.extract_strided_slice %204 {offsets = [272, 0], sizes = [16, 64], strides = [1, 1]} : vector<384x64xbf16> to vector<16x64xbf16>
    %c5_196 = arith.constant 5 : index
    %c32_197 = arith.constant 32 : index
    %c128_198 = arith.constant 128 : index
    %274 = vector.load %arg7[%c5_196, %c32_197, %c128_198] : memref<8x128x192xbf16, #tpu.memory_space<vmem>>, vector<1x16x64xbf16>
    %275 = vector.shape_cast %274 : vector<1x16x64xbf16> to vector<16x64xbf16>
    %276 = vector.shape_cast %273 : vector<16x64xbf16> to vector<1x16x64xbf16>
    tpu.vector_store %arg7[%c5_196, %c32_197, %c128_198], %276 {strides = array<i32>} : memref<8x128x192xbf16, #tpu.memory_space<vmem>>, vector<1x16x64xbf16>,
    %277 = vector.extract_strided_slice %204 {offsets = [288, 0], sizes = [16, 64], strides = [1, 1]} : vector<384x64xbf16> to vector<16x64xbf16>
    %c6_199 = arith.constant 6 : index
    %c32_200 = arith.constant 32 : index
    %c0_201 = arith.constant 0 : index
    %278 = vector.load %arg7[%c6_199, %c32_200, %c0_201] : memref<8x128x192xbf16, #tpu.memory_space<vmem>>, vector<1x16x64xbf16>
    %279 = vector.shape_cast %278 : vector<1x16x64xbf16> to vector<16x64xbf16>
    %280 = vector.shape_cast %277 : vector<16x64xbf16> to vector<1x16x64xbf16>
    tpu.vector_store %arg7[%c6_199, %c32_200, %c0_201], %280 {strides = array<i32>} : memref<8x128x192xbf16, #tpu.memory_space<vmem>>, vector<1x16x64xbf16>,
    %281 = vector.extract_strided_slice %204 {offsets = [304, 0], sizes = [16, 64], strides = [1, 1]} : vector<384x64xbf16> to vector<16x64xbf16>
    %c6_202 = arith.constant 6 : index
    %c32_203 = arith.constant 32 : index
    %c64_204 = arith.constant 64 : index
    %282 = vector.load %arg7[%c6_202, %c32_203, %c64_204] : memref<8x128x192xbf16, #tpu.memory_space<vmem>>, vector<1x16x64xbf16>
    %283 = vector.shape_cast %282 : vector<1x16x64xbf16> to vector<16x64xbf16>
    %284 = vector.shape_cast %281 : vector<16x64xbf16> to vector<1x16x64xbf16>
    tpu.vector_store %arg7[%c6_202, %c32_203, %c64_204], %284 {strides = array<i32>} : memref<8x128x192xbf16, #tpu.memory_space<vmem>>, vector<1x16x64xbf16>,
    %285 = vector.extract_strided_slice %204 {offsets = [320, 0], sizes = [16, 64], strides = [1, 1]} : vector<384x64xbf16> to vector<16x64xbf16>
    %c6_205 = arith.constant 6 : index
    %c32_206 = arith.constant 32 : index
    %c128_207 = arith.constant 128 : index
    %286 = vector.load %arg7[%c6_205, %c32_206, %c128_207] : memref<8x128x192xbf16, #tpu.memory_space<vmem>>, vector<1x16x64xbf16>
    %287 = vector.shape_cast %286 : vector<1x16x64xbf16> to vector<16x64xbf16>
    %288 = vector.shape_cast %285 : vector<16x64xbf16> to vector<1x16x64xbf16>
    tpu.vector_store %arg7[%c6_205, %c32_206, %c128_207], %288 {strides = array<i32>} : memref<8x128x192xbf16, #tpu.memory_space<vmem>>, vector<1x16x64xbf16>,
    %289 = vector.extract_strided_slice %204 {offsets = [336, 0], sizes = [16, 64], strides = [1, 1]} : vector<384x64xbf16> to vector<16x64xbf16>
    %c7_208 = arith.constant 7 : index
    %c32_209 = arith.constant 32 : index
    %c0_210 = arith.constant 0 : index
    %290 = vector.load %arg7[%c7_208, %c32_209, %c0_210] : memref<8x128x192xbf16, #tpu.memory_space<vmem>>, vector<1x16x64xbf16>
    %291 = vector.shape_cast %290 : vector<1x16x64xbf16> to vector<16x64xbf16>
    %292 = vector.shape_cast %289 : vector<16x64xbf16> to vector<1x16x64xbf16>
    tpu.vector_store %arg7[%c7_208, %c32_209, %c0_210], %292 {strides = array<i32>} : memref<8x128x192xbf16, #tpu.memory_space<vmem>>, vector<1x16x64xbf16>,
    %293 = vector.extract_strided_slice %204 {offsets = [352, 0], sizes = [16, 64], strides = [1, 1]} : vector<384x64xbf16> to vector<16x64xbf16>
    %c7_211 = arith.constant 7 : index
    %c32_212 = arith.constant 32 : index
    %c64_213 = arith.constant 64 : index
    %294 = vector.load %arg7[%c7_211, %c32_212, %c64_213] : memref<8x128x192xbf16, #tpu.memory_space<vmem>>, vector<1x16x64xbf16>
    %295 = vector.shape_cast %294 : vector<1x16x64xbf16> to vector<16x64xbf16>
    %296 = vector.shape_cast %293 : vector<16x64xbf16> to vector<1x16x64xbf16>
    tpu.vector_store %arg7[%c7_211, %c32_212, %c64_213], %296 {strides = array<i32>} : memref<8x128x192xbf16, #tpu.memory_space<vmem>>, vector<1x16x64xbf16>,
    %297 = vector.extract_strided_slice %204 {offsets = [368, 0], sizes = [16, 64], strides = [1, 1]} : vector<384x64xbf16> to vector<16x64xbf16>
    %c7_214 = arith.constant 7 : index
    %c32_215 = arith.constant 32 : index
    %c128_216 = arith.constant 128 : index
    %298 = vector.load %arg7[%c7_214, %c32_215, %c128_216] : memref<8x128x192xbf16, #tpu.memory_space<vmem>>, vector<1x16x64xbf16>
    %299 = vector.shape_cast %298 : vector<1x16x64xbf16> to vector<16x64xbf16>
    %300 = vector.shape_cast %297 : vector<16x64xbf16> to vector<1x16x64xbf16>
    tpu.vector_store %arg7[%c7_214, %c32_215, %c128_216], %300 {strides = array<i32>} : memref<8x128x192xbf16, #tpu.memory_space<vmem>>, vector<1x16x64xbf16>,
    %c3_217 = arith.constant 3 : index
    %c0_218 = arith.constant 0 : index
    %c0_219 = arith.constant 0 : index
    %301 = vector.load %arg1[%c3_217, %c0_218, %c0_219] : memref<8x16x64xbf16, #tpu.memory_space<vmem>>, vector<1x16x64xbf16>
    %302 = vector.shape_cast %301 : vector<1x16x64xbf16> to vector<16x64xbf16>
    %cst_220 = arith.constant dense<0.000000e+00> : vector<384x64xf32>
    %303 = tpu.matmul %0, %302, %cst_220 {dimension_numbers = #tpu.dot_dimension_numbers<[1], [0], [0], [1], [0, 0, 1, 1], [], []>} : vector<384x16xbf16>, vector<16x64xbf16>, vector<384x64xf32> -> vector<384x64xf32>
    %304 = arith.truncf %303 : vector<384x64xf32> to vector<384x64xbf16>
    %305 = vector.extract_strided_slice %304 {offsets = [0, 0], sizes = [16, 64], strides = [1, 1]} : vector<384x64xbf16> to vector<16x64xbf16>
    %c0_221 = arith.constant 0 : index
    %c48 = arith.constant 48 : index
    %c0_222 = arith.constant 0 : index
    %306 = vector.load %arg7[%c0_221, %c48, %c0_222] : memref<8x128x192xbf16, #tpu.memory_space<vmem>>, vector<1x16x64xbf16>
    %307 = vector.shape_cast %306 : vector<1x16x64xbf16> to vector<16x64xbf16>
    %308 = vector.shape_cast %305 : vector<16x64xbf16> to vector<1x16x64xbf16>
    tpu.vector_store %arg7[%c0_221, %c48, %c0_222], %308 {strides = array<i32>} : memref<8x128x192xbf16, #tpu.memory_space<vmem>>, vector<1x16x64xbf16>,
    %309 = vector.extract_strided_slice %304 {offsets = [16, 0], sizes = [16, 64], strides = [1, 1]} : vector<384x64xbf16> to vector<16x64xbf16>
    %c0_223 = arith.constant 0 : index
    %c48_224 = arith.constant 48 : index
    %c64_225 = arith.constant 64 : index
    %310 = vector.load %arg7[%c0_223, %c48_224, %c64_225] : memref<8x128x192xbf16, #tpu.memory_space<vmem>>, vector<1x16x64xbf16>
    %311 = vector.shape_cast %310 : vector<1x16x64xbf16> to vector<16x64xbf16>
    %312 = vector.shape_cast %309 : vector<16x64xbf16> to vector<1x16x64xbf16>
    tpu.vector_store %arg7[%c0_223, %c48_224, %c64_225], %312 {strides = array<i32>} : memref<8x128x192xbf16, #tpu.memory_space<vmem>>, vector<1x16x64xbf16>,
    %313 = vector.extract_strided_slice %304 {offsets = [32, 0], sizes = [16, 64], strides = [1, 1]} : vector<384x64xbf16> to vector<16x64xbf16>
    %c0_226 = arith.constant 0 : index
    %c48_227 = arith.constant 48 : index
    %c128_228 = arith.constant 128 : index
    %314 = vector.load %arg7[%c0_226, %c48_227, %c128_228] : memref<8x128x192xbf16, #tpu.memory_space<vmem>>, vector<1x16x64xbf16>
    %315 = vector.shape_cast %314 : vector<1x16x64xbf16> to vector<16x64xbf16>
    %316 = vector.shape_cast %313 : vector<16x64xbf16> to vector<1x16x64xbf16>
    tpu.vector_store %arg7[%c0_226, %c48_227, %c128_228], %316 {strides = array<i32>} : memref<8x128x192xbf16, #tpu.memory_space<vmem>>, vector<1x16x64xbf16>,
    %317 = vector.extract_strided_slice %304 {offsets = [48, 0], sizes = [16, 64], strides = [1, 1]} : vector<384x64xbf16> to vector<16x64xbf16>
    %c1_229 = arith.constant 1 : index
    %c48_230 = arith.constant 48 : index
    %c0_231 = arith.constant 0 : index
    %318 = vector.load %arg7[%c1_229, %c48_230, %c0_231] : memref<8x128x192xbf16, #tpu.memory_space<vmem>>, vector<1x16x64xbf16>
    %319 = vector.shape_cast %318 : vector<1x16x64xbf16> to vector<16x64xbf16>
    %320 = vector.shape_cast %317 : vector<16x64xbf16> to vector<1x16x64xbf16>
    tpu.vector_store %arg7[%c1_229, %c48_230, %c0_231], %320 {strides = array<i32>} : memref<8x128x192xbf16, #tpu.memory_space<vmem>>, vector<1x16x64xbf16>,
    %321 = vector.extract_strided_slice %304 {offsets = [64, 0], sizes = [16, 64], strides = [1, 1]} : vector<384x64xbf16> to vector<16x64xbf16>
    %c1_232 = arith.constant 1 : index
    %c48_233 = arith.constant 48 : index
    %c64_234 = arith.constant 64 : index
    %322 = vector.load %arg7[%c1_232, %c48_233, %c64_234] : memref<8x128x192xbf16, #tpu.memory_space<vmem>>, vector<1x16x64xbf16>
    %323 = vector.shape_cast %322 : vector<1x16x64xbf16> to vector<16x64xbf16>
    %324 = vector.shape_cast %321 : vector<16x64xbf16> to vector<1x16x64xbf16>
    tpu.vector_store %arg7[%c1_232, %c48_233, %c64_234], %324 {strides = array<i32>} : memref<8x128x192xbf16, #tpu.memory_space<vmem>>, vector<1x16x64xbf16>,
    %325 = vector.extract_strided_slice %304 {offsets = [80, 0], sizes = [16, 64], strides = [1, 1]} : vector<384x64xbf16> to vector<16x64xbf16>
    %c1_235 = arith.constant 1 : index
    %c48_236 = arith.constant 48 : index
    %c128_237 = arith.constant 128 : index
    %326 = vector.load %arg7[%c1_235, %c48_236, %c128_237] : memref<8x128x192xbf16, #tpu.memory_space<vmem>>, vector<1x16x64xbf16>
    %327 = vector.shape_cast %326 : vector<1x16x64xbf16> to vector<16x64xbf16>
    %328 = vector.shape_cast %325 : vector<16x64xbf16> to vector<1x16x64xbf16>
    tpu.vector_store %arg7[%c1_235, %c48_236, %c128_237], %328 {strides = array<i32>} : memref<8x128x192xbf16, #tpu.memory_space<vmem>>, vector<1x16x64xbf16>,
    %329 = vector.extract_strided_slice %304 {offsets = [96, 0], sizes = [16, 64], strides = [1, 1]} : vector<384x64xbf16> to vector<16x64xbf16>
    %c2_238 = arith.constant 2 : index
    %c48_239 = arith.constant 48 : index
    %c0_240 = arith.constant 0 : index
    %330 = vector.load %arg7[%c2_238, %c48_239, %c0_240] : memref<8x128x192xbf16, #tpu.memory_space<vmem>>, vector<1x16x64xbf16>
    %331 = vector.shape_cast %330 : vector<1x16x64xbf16> to vector<16x64xbf16>
    %332 = vector.shape_cast %329 : vector<16x64xbf16> to vector<1x16x64xbf16>
    tpu.vector_store %arg7[%c2_238, %c48_239, %c0_240], %332 {strides = array<i32>} : memref<8x128x192xbf16, #tpu.memory_space<vmem>>, vector<1x16x64xbf16>,
    %333 = vector.extract_strided_slice %304 {offsets = [112, 0], sizes = [16, 64], strides = [1, 1]} : vector<384x64xbf16> to vector<16x64xbf16>
    %c2_241 = arith.constant 2 : index
    %c48_242 = arith.constant 48 : index
    %c64_243 = arith.constant 64 : index
    %334 = vector.load %arg7[%c2_241, %c48_242, %c64_243] : memref<8x128x192xbf16, #tpu.memory_space<vmem>>, vector<1x16x64xbf16>
    %335 = vector.shape_cast %334 : vector<1x16x64xbf16> to vector<16x64xbf16>
    %336 = vector.shape_cast %333 : vector<16x64xbf16> to vector<1x16x64xbf16>
    tpu.vector_store %arg7[%c2_241, %c48_242, %c64_243], %336 {strides = array<i32>} : memref<8x128x192xbf16, #tpu.memory_space<vmem>>, vector<1x16x64xbf16>,
    %337 = vector.extract_strided_slice %304 {offsets = [128, 0], sizes = [16, 64], strides = [1, 1]} : vector<384x64xbf16> to vector<16x64xbf16>
    %c2_244 = arith.constant 2 : index
    %c48_245 = arith.constant 48 : index
    %c128_246 = arith.constant 128 : index
    %338 = vector.load %arg7[%c2_244, %c48_245, %c128_246] : memref<8x128x192xbf16, #tpu.memory_space<vmem>>, vector<1x16x64xbf16>
    %339 = vector.shape_cast %338 : vector<1x16x64xbf16> to vector<16x64xbf16>
    %340 = vector.shape_cast %337 : vector<16x64xbf16> to vector<1x16x64xbf16>
    tpu.vector_store %arg7[%c2_244, %c48_245, %c128_246], %340 {strides = array<i32>} : memref<8x128x192xbf16, #tpu.memory_space<vmem>>, vector<1x16x64xbf16>,
    %341 = vector.extract_strided_slice %304 {offsets = [144, 0], sizes = [16, 64], strides = [1, 1]} : vector<384x64xbf16> to vector<16x64xbf16>
    %c3_247 = arith.constant 3 : index
    %c48_248 = arith.constant 48 : index
    %c0_249 = arith.constant 0 : index
    %342 = vector.load %arg7[%c3_247, %c48_248, %c0_249] : memref<8x128x192xbf16, #tpu.memory_space<vmem>>, vector<1x16x64xbf16>
    %343 = vector.shape_cast %342 : vector<1x16x64xbf16> to vector<16x64xbf16>
    %344 = vector.shape_cast %341 : vector<16x64xbf16> to vector<1x16x64xbf16>
    tpu.vector_store %arg7[%c3_247, %c48_248, %c0_249], %344 {strides = array<i32>} : memref<8x128x192xbf16, #tpu.memory_space<vmem>>, vector<1x16x64xbf16>,
    %345 = vector.extract_strided_slice %304 {offsets = [160, 0], sizes = [16, 64], strides = [1, 1]} : vector<384x64xbf16> to vector<16x64xbf16>
    %c3_250 = arith.constant 3 : index
    %c48_251 = arith.constant 48 : index
    %c64_252 = arith.constant 64 : index
    %346 = vector.load %arg7[%c3_250, %c48_251, %c64_252] : memref<8x128x192xbf16, #tpu.memory_space<vmem>>, vector<1x16x64xbf16>
    %347 = vector.shape_cast %346 : vector<1x16x64xbf16> to vector<16x64xbf16>
    %348 = vector.shape_cast %345 : vector<16x64xbf16> to vector<1x16x64xbf16>
    tpu.vector_store %arg7[%c3_250, %c48_251, %c64_252], %348 {strides = array<i32>} : memref<8x128x192xbf16, #tpu.memory_space<vmem>>, vector<1x16x64xbf16>,
    %349 = vector.extract_strided_slice %304 {offsets = [176, 0], sizes = [16, 64], strides = [1, 1]} : vector<384x64xbf16> to vector<16x64xbf16>
    %c3_253 = arith.constant 3 : index
    %c48_254 = arith.constant 48 : index
    %c128_255 = arith.constant 128 : index
    %350 = vector.load %arg7[%c3_253, %c48_254, %c128_255] : memref<8x128x192xbf16, #tpu.memory_space<vmem>>, vector<1x16x64xbf16>
    %351 = vector.shape_cast %350 : vector<1x16x64xbf16> to vector<16x64xbf16>
    %352 = vector.shape_cast %349 : vector<16x64xbf16> to vector<1x16x64xbf16>
    tpu.vector_store %arg7[%c3_253, %c48_254, %c128_255], %352 {strides = array<i32>} : memref<8x128x192xbf16, #tpu.memory_space<vmem>>, vector<1x16x64xbf16>,
    %353 = vector.extract_strided_slice %304 {offsets = [192, 0], sizes = [16, 64], strides = [1, 1]} : vector<384x64xbf16> to vector<16x64xbf16>
    %c4_256 = arith.constant 4 : index
    %c48_257 = arith.constant 48 : index
    %c0_258 = arith.constant 0 : index
    %354 = vector.load %arg7[%c4_256, %c48_257, %c0_258] : memref<8x128x192xbf16, #tpu.memory_space<vmem>>, vector<1x16x64xbf16>
    %355 = vector.shape_cast %354 : vector<1x16x64xbf16> to vector<16x64xbf16>
    %356 = vector.shape_cast %353 : vector<16x64xbf16> to vector<1x16x64xbf16>
    tpu.vector_store %arg7[%c4_256, %c48_257, %c0_258], %356 {strides = array<i32>} : memref<8x128x192xbf16, #tpu.memory_space<vmem>>, vector<1x16x64xbf16>,
    %357 = vector.extract_strided_slice %304 {offsets = [208, 0], sizes = [16, 64], strides = [1, 1]} : vector<384x64xbf16> to vector<16x64xbf16>
    %c4_259 = arith.constant 4 : index
    %c48_260 = arith.constant 48 : index
    %c64_261 = arith.constant 64 : index
    %358 = vector.load %arg7[%c4_259, %c48_260, %c64_261] : memref<8x128x192xbf16, #tpu.memory_space<vmem>>, vector<1x16x64xbf16>
    %359 = vector.shape_cast %358 : vector<1x16x64xbf16> to vector<16x64xbf16>
    %360 = vector.shape_cast %357 : vector<16x64xbf16> to vector<1x16x64xbf16>
    tpu.vector_store %arg7[%c4_259, %c48_260, %c64_261], %360 {strides = array<i32>} : memref<8x128x192xbf16, #tpu.memory_space<vmem>>, vector<1x16x64xbf16>,
    %361 = vector.extract_strided_slice %304 {offsets = [224, 0], sizes = [16, 64], strides = [1, 1]} : vector<384x64xbf16> to vector<16x64xbf16>
    %c4_262 = arith.constant 4 : index
    %c48_263 = arith.constant 48 : index
    %c128_264 = arith.constant 128 : index
    %362 = vector.load %arg7[%c4_262, %c48_263, %c128_264] : memref<8x128x192xbf16, #tpu.memory_space<vmem>>, vector<1x16x64xbf16>
    %363 = vector.shape_cast %362 : vector<1x16x64xbf16> to vector<16x64xbf16>
    %364 = vector.shape_cast %361 : vector<16x64xbf16> to vector<1x16x64xbf16>
    tpu.vector_store %arg7[%c4_262, %c48_263, %c128_264], %364 {strides = array<i32>} : memref<8x128x192xbf16, #tpu.memory_space<vmem>>, vector<1x16x64xbf16>,
    %365 = vector.extract_strided_slice %304 {offsets = [240, 0], sizes = [16, 64], strides = [1, 1]} : vector<384x64xbf16> to vector<16x64xbf16>
    %c5_265 = arith.constant 5 : index
    %c48_266 = arith.constant 48 : index
    %c0_267 = arith.constant 0 : index
    %366 = vector.load %arg7[%c5_265, %c48_266, %c0_267] : memref<8x128x192xbf16, #tpu.memory_space<vmem>>, vector<1x16x64xbf16>
    %367 = vector.shape_cast %366 : vector<1x16x64xbf16> to vector<16x64xbf16>
    %368 = vector.shape_cast %365 : vector<16x64xbf16> to vector<1x16x64xbf16>
    tpu.vector_store %arg7[%c5_265, %c48_266, %c0_267], %368 {strides = array<i32>} : memref<8x128x192xbf16, #tpu.memory_space<vmem>>, vector<1x16x64xbf16>,
    %369 = vector.extract_strided_slice %304 {offsets = [256, 0], sizes = [16, 64], strides = [1, 1]} : vector<384x64xbf16> to vector<16x64xbf16>
    %c5_268 = arith.constant 5 : index
    %c48_269 = arith.constant 48 : index
    %c64_270 = arith.constant 64 : index
    %370 = vector.load %arg7[%c5_268, %c48_269, %c64_270] : memref<8x128x192xbf16, #tpu.memory_space<vmem>>, vector<1x16x64xbf16>
    %371 = vector.shape_cast %370 : vector<1x16x64xbf16> to vector<16x64xbf16>
    %372 = vector.shape_cast %369 : vector<16x64xbf16> to vector<1x16x64xbf16>
    tpu.vector_store %arg7[%c5_268, %c48_269, %c64_270], %372 {strides = array<i32>} : memref<8x128x192xbf16, #tpu.memory_space<vmem>>, vector<1x16x64xbf16>,
    %373 = vector.extract_strided_slice %304 {offsets = [272, 0], sizes = [16, 64], strides = [1, 1]} : vector<384x64xbf16> to vector<16x64xbf16>
    %c5_271 = arith.constant 5 : index
    %c48_272 = arith.constant 48 : index
    %c128_273 = arith.constant 128 : index
    %374 = vector.load %arg7[%c5_271, %c48_272, %c128_273] : memref<8x128x192xbf16, #tpu.memory_space<vmem>>, vector<1x16x64xbf16>
    %375 = vector.shape_cast %374 : vector<1x16x64xbf16> to vector<16x64xbf16>
    %376 = vector.shape_cast %373 : vector<16x64xbf16> to vector<1x16x64xbf16>
    tpu.vector_store %arg7[%c5_271, %c48_272, %c128_273], %376 {strides = array<i32>} : memref<8x128x192xbf16, #tpu.memory_space<vmem>>, vector<1x16x64xbf16>,
    %377 = vector.extract_strided_slice %304 {offsets = [288, 0], sizes = [16, 64], strides = [1, 1]} : vector<384x64xbf16> to vector<16x64xbf16>
    %c6_274 = arith.constant 6 : index
    %c48_275 = arith.constant 48 : index
    %c0_276 = arith.constant 0 : index
    %378 = vector.load %arg7[%c6_274, %c48_275, %c0_276] : memref<8x128x192xbf16, #tpu.memory_space<vmem>>, vector<1x16x64xbf16>
    %379 = vector.shape_cast %378 : vector<1x16x64xbf16> to vector<16x64xbf16>
    %380 = vector.shape_cast %377 : vector<16x64xbf16> to vector<1x16x64xbf16>
    tpu.vector_store %arg7[%c6_274, %c48_275, %c0_276], %380 {strides = array<i32>} : memref<8x128x192xbf16, #tpu.memory_space<vmem>>, vector<1x16x64xbf16>,
    %381 = vector.extract_strided_slice %304 {offsets = [304, 0], sizes = [16, 64], strides = [1, 1]} : vector<384x64xbf16> to vector<16x64xbf16>
    %c6_277 = arith.constant 6 : index
    %c48_278 = arith.constant 48 : index
    %c64_279 = arith.constant 64 : index
    %382 = vector.load %arg7[%c6_277, %c48_278, %c64_279] : memref<8x128x192xbf16, #tpu.memory_space<vmem>>, vector<1x16x64xbf16>
    %383 = vector.shape_cast %382 : vector<1x16x64xbf16> to vector<16x64xbf16>
    %384 = vector.shape_cast %381 : vector<16x64xbf16> to vector<1x16x64xbf16>
    tpu.vector_store %arg7[%c6_277, %c48_278, %c64_279], %384 {strides = array<i32>} : memref<8x128x192xbf16, #tpu.memory_space<vmem>>, vector<1x16x64xbf16>,
    %385 = vector.extract_strided_slice %304 {offsets = [320, 0], sizes = [16, 64], strides = [1, 1]} : vector<384x64xbf16> to vector<16x64xbf16>
    %c6_280 = arith.constant 6 : index
    %c48_281 = arith.constant 48 : index
    %c128_282 = arith.constant 128 : index
    %386 = vector.load %arg7[%c6_280, %c48_281, %c128_282] : memref<8x128x192xbf16, #tpu.memory_space<vmem>>, vector<1x16x64xbf16>
    %387 = vector.shape_cast %386 : vector<1x16x64xbf16> to vector<16x64xbf16>
    %388 = vector.shape_cast %385 : vector<16x64xbf16> to vector<1x16x64xbf16>
    tpu.vector_store %arg7[%c6_280, %c48_281, %c128_282], %388 {strides = array<i32>} : memref<8x128x192xbf16, #tpu.memory_space<vmem>>, vector<1x16x64xbf16>,
    %389 = vector.extract_strided_slice %304 {offsets = [336, 0], sizes = [16, 64], strides = [1, 1]} : vector<384x64xbf16> to vector<16x64xbf16>
    %c7_283 = arith.constant 7 : index
    %c48_284 = arith.constant 48 : index
    %c0_285 = arith.constant 0 : index
    %390 = vector.load %arg7[%c7_283, %c48_284, %c0_285] : memref<8x128x192xbf16, #tpu.memory_space<vmem>>, vector<1x16x64xbf16>
    %391 = vector.shape_cast %390 : vector<1x16x64xbf16> to vector<16x64xbf16>
    %392 = vector.shape_cast %389 : vector<16x64xbf16> to vector<1x16x64xbf16>
    tpu.vector_store %arg7[%c7_283, %c48_284, %c0_285], %392 {strides = array<i32>} : memref<8x128x192xbf16, #tpu.memory_space<vmem>>, vector<1x16x64xbf16>,
    %393 = vector.extract_strided_slice %304 {offsets = [352, 0], sizes = [16, 64], strides = [1, 1]} : vector<384x64xbf16> to vector<16x64xbf16>
    %c7_286 = arith.constant 7 : index
    %c48_287 = arith.constant 48 : index
    %c64_288 = arith.constant 64 : index
    %394 = vector.load %arg7[%c7_286, %c48_287, %c64_288] : memref<8x128x192xbf16, #tpu.memory_space<vmem>>, vector<1x16x64xbf16>
    %395 = vector.shape_cast %394 : vector<1x16x64xbf16> to vector<16x64xbf16>
    %396 = vector.shape_cast %393 : vector<16x64xbf16> to vector<1x16x64xbf16>
    tpu.vector_store %arg7[%c7_286, %c48_287, %c64_288], %396 {strides = array<i32>} : memref<8x128x192xbf16, #tpu.memory_space<vmem>>, vector<1x16x64xbf16>,
    %397 = vector.extract_strided_slice %304 {offsets = [368, 0], sizes = [16, 64], strides = [1, 1]} : vector<384x64xbf16> to vector<16x64xbf16>
    %c7_289 = arith.constant 7 : index
    %c48_290 = arith.constant 48 : index
    %c128_291 = arith.constant 128 : index
    %398 = vector.load %arg7[%c7_289, %c48_290, %c128_291] : memref<8x128x192xbf16, #tpu.memory_space<vmem>>, vector<1x16x64xbf16>
    %399 = vector.shape_cast %398 : vector<1x16x64xbf16> to vector<16x64xbf16>
    %400 = vector.shape_cast %397 : vector<16x64xbf16> to vector<1x16x64xbf16>
    tpu.vector_store %arg7[%c7_289, %c48_290, %c128_291], %400 {strides = array<i32>} : memref<8x128x192xbf16, #tpu.memory_space<vmem>>, vector<1x16x64xbf16>,
    %c4_292 = arith.constant 4 : index
    %c0_293 = arith.constant 0 : index
    %c0_294 = arith.constant 0 : index
    %401 = vector.load %arg1[%c4_292, %c0_293, %c0_294] : memref<8x16x64xbf16, #tpu.memory_space<vmem>>, vector<1x16x64xbf16>
    %402 = vector.shape_cast %401 : vector<1x16x64xbf16> to vector<16x64xbf16>
    %cst_295 = arith.constant dense<0.000000e+00> : vector<384x64xf32>
    %403 = tpu.matmul %0, %402, %cst_295 {dimension_numbers = #tpu.dot_dimension_numbers<[1], [0], [0], [1], [0, 0, 1, 1], [], []>} : vector<384x16xbf16>, vector<16x64xbf16>, vector<384x64xf32> -> vector<384x64xf32>
    %404 = arith.truncf %403 : vector<384x64xf32> to vector<384x64xbf16>
    %405 = vector.extract_strided_slice %404 {offsets = [0, 0], sizes = [16, 64], strides = [1, 1]} : vector<384x64xbf16> to vector<16x64xbf16>
    %c0_296 = arith.constant 0 : index
    %c64_297 = arith.constant 64 : index
    %c0_298 = arith.constant 0 : index
    %406 = vector.load %arg7[%c0_296, %c64_297, %c0_298] : memref<8x128x192xbf16, #tpu.memory_space<vmem>>, vector<1x16x64xbf16>
    %407 = vector.shape_cast %406 : vector<1x16x64xbf16> to vector<16x64xbf16>
    %408 = vector.shape_cast %405 : vector<16x64xbf16> to vector<1x16x64xbf16>
    tpu.vector_store %arg7[%c0_296, %c64_297, %c0_298], %408 {strides = array<i32>} : memref<8x128x192xbf16, #tpu.memory_space<vmem>>, vector<1x16x64xbf16>,
    %409 = vector.extract_strided_slice %404 {offsets = [16, 0], sizes = [16, 64], strides = [1, 1]} : vector<384x64xbf16> to vector<16x64xbf16>
    %c0_299 = arith.constant 0 : index
    %c64_300 = arith.constant 64 : index
    %c64_301 = arith.constant 64 : index
    %410 = vector.load %arg7[%c0_299, %c64_300, %c64_301] : memref<8x128x192xbf16, #tpu.memory_space<vmem>>, vector<1x16x64xbf16>
    %411 = vector.shape_cast %410 : vector<1x16x64xbf16> to vector<16x64xbf16>
    %412 = vector.shape_cast %409 : vector<16x64xbf16> to vector<1x16x64xbf16>
    tpu.vector_store %arg7[%c0_299, %c64_300, %c64_301], %412 {strides = array<i32>} : memref<8x128x192xbf16, #tpu.memory_space<vmem>>, vector<1x16x64xbf16>,
    %413 = vector.extract_strided_slice %404 {offsets = [32, 0], sizes = [16, 64], strides = [1, 1]} : vector<384x64xbf16> to vector<16x64xbf16>
    %c0_302 = arith.constant 0 : index
    %c64_303 = arith.constant 64 : index
    %c128_304 = arith.constant 128 : index
    %414 = vector.load %arg7[%c0_302, %c64_303, %c128_304] : memref<8x128x192xbf16, #tpu.memory_space<vmem>>, vector<1x16x64xbf16>
    %415 = vector.shape_cast %414 : vector<1x16x64xbf16> to vector<16x64xbf16>
    %416 = vector.shape_cast %413 : vector<16x64xbf16> to vector<1x16x64xbf16>
    tpu.vector_store %arg7[%c0_302, %c64_303, %c128_304], %416 {strides = array<i32>} : memref<8x128x192xbf16, #tpu.memory_space<vmem>>, vector<1x16x64xbf16>,
    %417 = vector.extract_strided_slice %404 {offsets = [48, 0], sizes = [16, 64], strides = [1, 1]} : vector<384x64xbf16> to vector<16x64xbf16>
    %c1_305 = arith.constant 1 : index
    %c64_306 = arith.constant 64 : index
    %c0_307 = arith.constant 0 : index
    %418 = vector.load %arg7[%c1_305, %c64_306, %c0_307] : memref<8x128x192xbf16, #tpu.memory_space<vmem>>, vector<1x16x64xbf16>
    %419 = vector.shape_cast %418 : vector<1x16x64xbf16> to vector<16x64xbf16>
    %420 = vector.shape_cast %417 : vector<16x64xbf16> to vector<1x16x64xbf16>
    tpu.vector_store %arg7[%c1_305, %c64_306, %c0_307], %420 {strides = array<i32>} : memref<8x128x192xbf16, #tpu.memory_space<vmem>>, vector<1x16x64xbf16>,
    %421 = vector.extract_strided_slice %404 {offsets = [64, 0], sizes = [16, 64], strides = [1, 1]} : vector<384x64xbf16> to vector<16x64xbf16>
    %c1_308 = arith.constant 1 : index
    %c64_309 = arith.constant 64 : index
    %c64_310 = arith.constant 64 : index
    %422 = vector.load %arg7[%c1_308, %c64_309, %c64_310] : memref<8x128x192xbf16, #tpu.memory_space<vmem>>, vector<1x16x64xbf16>
    %423 = vector.shape_cast %422 : vector<1x16x64xbf16> to vector<16x64xbf16>
    %424 = vector.shape_cast %421 : vector<16x64xbf16> to vector<1x16x64xbf16>
    tpu.vector_store %arg7[%c1_308, %c64_309, %c64_310], %424 {strides = array<i32>} : memref<8x128x192xbf16, #tpu.memory_space<vmem>>, vector<1x16x64xbf16>,
    %425 = vector.extract_strided_slice %404 {offsets = [80, 0], sizes = [16, 64], strides = [1, 1]} : vector<384x64xbf16> to vector<16x64xbf16>
    %c1_311 = arith.constant 1 : index
    %c64_312 = arith.constant 64 : index
    %c128_313 = arith.constant 128 : index
    %426 = vector.load %arg7[%c1_311, %c64_312, %c128_313] : memref<8x128x192xbf16, #tpu.memory_space<vmem>>, vector<1x16x64xbf16>
    %427 = vector.shape_cast %426 : vector<1x16x64xbf16> to vector<16x64xbf16>
    %428 = vector.shape_cast %425 : vector<16x64xbf16> to vector<1x16x64xbf16>
    tpu.vector_store %arg7[%c1_311, %c64_312, %c128_313], %428 {strides = array<i32>} : memref<8x128x192xbf16, #tpu.memory_space<vmem>>, vector<1x16x64xbf16>,
    %429 = vector.extract_strided_slice %404 {offsets = [96, 0], sizes = [16, 64], strides = [1, 1]} : vector<384x64xbf16> to vector<16x64xbf16>
    %c2_314 = arith.constant 2 : index
    %c64_315 = arith.constant 64 : index
    %c0_316 = arith.constant 0 : index
    %430 = vector.load %arg7[%c2_314, %c64_315, %c0_316] : memref<8x128x192xbf16, #tpu.memory_space<vmem>>, vector<1x16x64xbf16>
    %431 = vector.shape_cast %430 : vector<1x16x64xbf16> to vector<16x64xbf16>
    %432 = vector.shape_cast %429 : vector<16x64xbf16> to vector<1x16x64xbf16>
    tpu.vector_store %arg7[%c2_314, %c64_315, %c0_316], %432 {strides = array<i32>} : memref<8x128x192xbf16, #tpu.memory_space<vmem>>, vector<1x16x64xbf16>,
    %433 = vector.extract_strided_slice %404 {offsets = [112, 0], sizes = [16, 64], strides = [1, 1]} : vector<384x64xbf16> to vector<16x64xbf16>
    %c2_317 = arith.constant 2 : index
    %c64_318 = arith.constant 64 : index
    %c64_319 = arith.constant 64 : index
    %434 = vector.load %arg7[%c2_317, %c64_318, %c64_319] : memref<8x128x192xbf16, #tpu.memory_space<vmem>>, vector<1x16x64xbf16>
    %435 = vector.shape_cast %434 : vector<1x16x64xbf16> to vector<16x64xbf16>
    %436 = vector.shape_cast %433 : vector<16x64xbf16> to vector<1x16x64xbf16>
    tpu.vector_store %arg7[%c2_317, %c64_318, %c64_319], %436 {strides = array<i32>} : memref<8x128x192xbf16, #tpu.memory_space<vmem>>, vector<1x16x64xbf16>,
    %437 = vector.extract_strided_slice %404 {offsets = [128, 0], sizes = [16, 64], strides = [1, 1]} : vector<384x64xbf16> to vector<16x64xbf16>
    %c2_320 = arith.constant 2 : index
    %c64_321 = arith.constant 64 : index
    %c128_322 = arith.constant 128 : index
    %438 = vector.load %arg7[%c2_320, %c64_321, %c128_322] : memref<8x128x192xbf16, #tpu.memory_space<vmem>>, vector<1x16x64xbf16>
    %439 = vector.shape_cast %438 : vector<1x16x64xbf16> to vector<16x64xbf16>
    %440 = vector.shape_cast %437 : vector<16x64xbf16> to vector<1x16x64xbf16>
    tpu.vector_store %arg7[%c2_320, %c64_321, %c128_322], %440 {strides = array<i32>} : memref<8x128x192xbf16, #tpu.memory_space<vmem>>, vector<1x16x64xbf16>,
    %441 = vector.extract_strided_slice %404 {offsets = [144, 0], sizes = [16, 64], strides = [1, 1]} : vector<384x64xbf16> to vector<16x64xbf16>
    %c3_323 = arith.constant 3 : index
    %c64_324 = arith.constant 64 : index
    %c0_325 = arith.constant 0 : index
    %442 = vector.load %arg7[%c3_323, %c64_324, %c0_325] : memref<8x128x192xbf16, #tpu.memory_space<vmem>>, vector<1x16x64xbf16>
    %443 = vector.shape_cast %442 : vector<1x16x64xbf16> to vector<16x64xbf16>
    %444 = vector.shape_cast %441 : vector<16x64xbf16> to vector<1x16x64xbf16>
    tpu.vector_store %arg7[%c3_323, %c64_324, %c0_325], %444 {strides = array<i32>} : memref<8x128x192xbf16, #tpu.memory_space<vmem>>, vector<1x16x64xbf16>,
    %445 = vector.extract_strided_slice %404 {offsets = [160, 0], sizes = [16, 64], strides = [1, 1]} : vector<384x64xbf16> to vector<16x64xbf16>
    %c3_326 = arith.constant 3 : index
    %c64_327 = arith.constant 64 : index
    %c64_328 = arith.constant 64 : index
    %446 = vector.load %arg7[%c3_326, %c64_327, %c64_328] : memref<8x128x192xbf16, #tpu.memory_space<vmem>>, vector<1x16x64xbf16>
    %447 = vector.shape_cast %446 : vector<1x16x64xbf16> to vector<16x64xbf16>
    %448 = vector.shape_cast %445 : vector<16x64xbf16> to vector<1x16x64xbf16>
    tpu.vector_store %arg7[%c3_326, %c64_327, %c64_328], %448 {strides = array<i32>} : memref<8x128x192xbf16, #tpu.memory_space<vmem>>, vector<1x16x64xbf16>,
    %449 = vector.extract_strided_slice %404 {offsets = [176, 0], sizes = [16, 64], strides = [1, 1]} : vector<384x64xbf16> to vector<16x64xbf16>
    %c3_329 = arith.constant 3 : index
    %c64_330 = arith.constant 64 : index
    %c128_331 = arith.constant 128 : index
    %450 = vector.load %arg7[%c3_329, %c64_330, %c128_331] : memref<8x128x192xbf16, #tpu.memory_space<vmem>>, vector<1x16x64xbf16>
    %451 = vector.shape_cast %450 : vector<1x16x64xbf16> to vector<16x64xbf16>
    %452 = vector.shape_cast %449 : vector<16x64xbf16> to vector<1x16x64xbf16>
    tpu.vector_store %arg7[%c3_329, %c64_330, %c128_331], %452 {strides = array<i32>} : memref<8x128x192xbf16, #tpu.memory_space<vmem>>, vector<1x16x64xbf16>,
    %453 = vector.extract_strided_slice %404 {offsets = [192, 0], sizes = [16, 64], strides = [1, 1]} : vector<384x64xbf16> to vector<16x64xbf16>
    %c4_332 = arith.constant 4 : index
    %c64_333 = arith.constant 64 : index
    %c0_334 = arith.constant 0 : index
    %454 = vector.load %arg7[%c4_332, %c64_333, %c0_334] : memref<8x128x192xbf16, #tpu.memory_space<vmem>>, vector<1x16x64xbf16>
    %455 = vector.shape_cast %454 : vector<1x16x64xbf16> to vector<16x64xbf16>
    %456 = vector.shape_cast %453 : vector<16x64xbf16> to vector<1x16x64xbf16>
    tpu.vector_store %arg7[%c4_332, %c64_333, %c0_334], %456 {strides = array<i32>} : memref<8x128x192xbf16, #tpu.memory_space<vmem>>, vector<1x16x64xbf16>,
    %457 = vector.extract_strided_slice %404 {offsets = [208, 0], sizes = [16, 64], strides = [1, 1]} : vector<384x64xbf16> to vector<16x64xbf16>
    %c4_335 = arith.constant 4 : index
    %c64_336 = arith.constant 64 : index
    %c64_337 = arith.constant 64 : index
    %458 = vector.load %arg7[%c4_335, %c64_336, %c64_337] : memref<8x128x192xbf16, #tpu.memory_space<vmem>>, vector<1x16x64xbf16>
    %459 = vector.shape_cast %458 : vector<1x16x64xbf16> to vector<16x64xbf16>
    %460 = vector.shape_cast %457 : vector<16x64xbf16> to vector<1x16x64xbf16>
    tpu.vector_store %arg7[%c4_335, %c64_336, %c64_337], %460 {strides = array<i32>} : memref<8x128x192xbf16, #tpu.memory_space<vmem>>, vector<1x16x64xbf16>,
    %461 = vector.extract_strided_slice %404 {offsets = [224, 0], sizes = [16, 64], strides = [1, 1]} : vector<384x64xbf16> to vector<16x64xbf16>
    %c4_338 = arith.constant 4 : index
    %c64_339 = arith.constant 64 : index
    %c128_340 = arith.constant 128 : index
    %462 = vector.load %arg7[%c4_338, %c64_339, %c128_340] : memref<8x128x192xbf16, #tpu.memory_space<vmem>>, vector<1x16x64xbf16>
    %463 = vector.shape_cast %462 : vector<1x16x64xbf16> to vector<16x64xbf16>
    %464 = vector.shape_cast %461 : vector<16x64xbf16> to vector<1x16x64xbf16>
    tpu.vector_store %arg7[%c4_338, %c64_339, %c128_340], %464 {strides = array<i32>} : memref<8x128x192xbf16, #tpu.memory_space<vmem>>, vector<1x16x64xbf16>,
    %465 = vector.extract_strided_slice %404 {offsets = [240, 0], sizes = [16, 64], strides = [1, 1]} : vector<384x64xbf16> to vector<16x64xbf16>
    %c5_341 = arith.constant 5 : index
    %c64_342 = arith.constant 64 : index
    %c0_343 = arith.constant 0 : index
    %466 = vector.load %arg7[%c5_341, %c64_342, %c0_343] : memref<8x128x192xbf16, #tpu.memory_space<vmem>>, vector<1x16x64xbf16>
    %467 = vector.shape_cast %466 : vector<1x16x64xbf16> to vector<16x64xbf16>
    %468 = vector.shape_cast %465 : vector<16x64xbf16> to vector<1x16x64xbf16>
    tpu.vector_store %arg7[%c5_341, %c64_342, %c0_343], %468 {strides = array<i32>} : memref<8x128x192xbf16, #tpu.memory_space<vmem>>, vector<1x16x64xbf16>,
    %469 = vector.extract_strided_slice %404 {offsets = [256, 0], sizes = [16, 64], strides = [1, 1]} : vector<384x64xbf16> to vector<16x64xbf16>
    %c5_344 = arith.constant 5 : index
    %c64_345 = arith.constant 64 : index
    %c64_346 = arith.constant 64 : index
    %470 = vector.load %arg7[%c5_344, %c64_345, %c64_346] : memref<8x128x192xbf16, #tpu.memory_space<vmem>>, vector<1x16x64xbf16>
    %471 = vector.shape_cast %470 : vector<1x16x64xbf16> to vector<16x64xbf16>
    %472 = vector.shape_cast %469 : vector<16x64xbf16> to vector<1x16x64xbf16>
    tpu.vector_store %arg7[%c5_344, %c64_345, %c64_346], %472 {strides = array<i32>} : memref<8x128x192xbf16, #tpu.memory_space<vmem>>, vector<1x16x64xbf16>,
    %473 = vector.extract_strided_slice %404 {offsets = [272, 0], sizes = [16, 64], strides = [1, 1]} : vector<384x64xbf16> to vector<16x64xbf16>
    %c5_347 = arith.constant 5 : index
    %c64_348 = arith.constant 64 : index
    %c128_349 = arith.constant 128 : index
    %474 = vector.load %arg7[%c5_347, %c64_348, %c128_349] : memref<8x128x192xbf16, #tpu.memory_space<vmem>>, vector<1x16x64xbf16>
    %475 = vector.shape_cast %474 : vector<1x16x64xbf16> to vector<16x64xbf16>
    %476 = vector.shape_cast %473 : vector<16x64xbf16> to vector<1x16x64xbf16>
    tpu.vector_store %arg7[%c5_347, %c64_348, %c128_349], %476 {strides = array<i32>} : memref<8x128x192xbf16, #tpu.memory_space<vmem>>, vector<1x16x64xbf16>,
    %477 = vector.extract_strided_slice %404 {offsets = [288, 0], sizes = [16, 64], strides = [1, 1]} : vector<384x64xbf16> to vector<16x64xbf16>
    %c6_350 = arith.constant 6 : index
    %c64_351 = arith.constant 64 : index
    %c0_352 = arith.constant 0 : index
    %478 = vector.load %arg7[%c6_350, %c64_351, %c0_352] : memref<8x128x192xbf16, #tpu.memory_space<vmem>>, vector<1x16x64xbf16>
    %479 = vector.shape_cast %478 : vector<1x16x64xbf16> to vector<16x64xbf16>
    %480 = vector.shape_cast %477 : vector<16x64xbf16> to vector<1x16x64xbf16>
    tpu.vector_store %arg7[%c6_350, %c64_351, %c0_352], %480 {strides = array<i32>} : memref<8x128x192xbf16, #tpu.memory_space<vmem>>, vector<1x16x64xbf16>,
    %481 = vector.extract_strided_slice %404 {offsets = [304, 0], sizes = [16, 64], strides = [1, 1]} : vector<384x64xbf16> to vector<16x64xbf16>
    %c6_353 = arith.constant 6 : index
    %c64_354 = arith.constant 64 : index
    %c64_355 = arith.constant 64 : index
    %482 = vector.load %arg7[%c6_353, %c64_354, %c64_355] : memref<8x128x192xbf16, #tpu.memory_space<vmem>>, vector<1x16x64xbf16>
    %483 = vector.shape_cast %482 : vector<1x16x64xbf16> to vector<16x64xbf16>
    %484 = vector.shape_cast %481 : vector<16x64xbf16> to vector<1x16x64xbf16>
    tpu.vector_store %arg7[%c6_353, %c64_354, %c64_355], %484 {strides = array<i32>} : memref<8x128x192xbf16, #tpu.memory_space<vmem>>, vector<1x16x64xbf16>,
    %485 = vector.extract_strided_slice %404 {offsets = [320, 0], sizes = [16, 64], strides = [1, 1]} : vector<384x64xbf16> to vector<16x64xbf16>
    %c6_356 = arith.constant 6 : index
    %c64_357 = arith.constant 64 : index
    %c128_358 = arith.constant 128 : index
    %486 = vector.load %arg7[%c6_356, %c64_357, %c128_358] : memref<8x128x192xbf16, #tpu.memory_space<vmem>>, vector<1x16x64xbf16>
    %487 = vector.shape_cast %486 : vector<1x16x64xbf16> to vector<16x64xbf16>
    %488 = vector.shape_cast %485 : vector<16x64xbf16> to vector<1x16x64xbf16>
    tpu.vector_store %arg7[%c6_356, %c64_357, %c128_358], %488 {strides = array<i32>} : memref<8x128x192xbf16, #tpu.memory_space<vmem>>, vector<1x16x64xbf16>,
    %489 = vector.extract_strided_slice %404 {offsets = [336, 0], sizes = [16, 64], strides = [1, 1]} : vector<384x64xbf16> to vector<16x64xbf16>
    %c7_359 = arith.constant 7 : index
    %c64_360 = arith.constant 64 : index
    %c0_361 = arith.constant 0 : index
    %490 = vector.load %arg7[%c7_359, %c64_360, %c0_361] : memref<8x128x192xbf16, #tpu.memory_space<vmem>>, vector<1x16x64xbf16>
    %491 = vector.shape_cast %490 : vector<1x16x64xbf16> to vector<16x64xbf16>
    %492 = vector.shape_cast %489 : vector<16x64xbf16> to vector<1x16x64xbf16>
    tpu.vector_store %arg7[%c7_359, %c64_360, %c0_361], %492 {strides = array<i32>} : memref<8x128x192xbf16, #tpu.memory_space<vmem>>, vector<1x16x64xbf16>,
    %493 = vector.extract_strided_slice %404 {offsets = [352, 0], sizes = [16, 64], strides = [1, 1]} : vector<384x64xbf16> to vector<16x64xbf16>
    %c7_362 = arith.constant 7 : index
    %c64_363 = arith.constant 64 : index
    %c64_364 = arith.constant 64 : index
    %494 = vector.load %arg7[%c7_362, %c64_363, %c64_364] : memref<8x128x192xbf16, #tpu.memory_space<vmem>>, vector<1x16x64xbf16>
    %495 = vector.shape_cast %494 : vector<1x16x64xbf16> to vector<16x64xbf16>
    %496 = vector.shape_cast %493 : vector<16x64xbf16> to vector<1x16x64xbf16>
    tpu.vector_store %arg7[%c7_362, %c64_363, %c64_364], %496 {strides = array<i32>} : memref<8x128x192xbf16, #tpu.memory_space<vmem>>, vector<1x16x64xbf16>,
    %497 = vector.extract_strided_slice %404 {offsets = [368, 0], sizes = [16, 64], strides = [1, 1]} : vector<384x64xbf16> to vector<16x64xbf16>
    %c7_365 = arith.constant 7 : index
    %c64_366 = arith.constant 64 : index
    %c128_367 = arith.constant 128 : index
    %498 = vector.load %arg7[%c7_365, %c64_366, %c128_367] : memref<8x128x192xbf16, #tpu.memory_space<vmem>>, vector<1x16x64xbf16>
    %499 = vector.shape_cast %498 : vector<1x16x64xbf16> to vector<16x64xbf16>
    %500 = vector.shape_cast %497 : vector<16x64xbf16> to vector<1x16x64xbf16>
    tpu.vector_store %arg7[%c7_365, %c64_366, %c128_367], %500 {strides = array<i32>} : memref<8x128x192xbf16, #tpu.memory_space<vmem>>, vector<1x16x64xbf16>,
    %c5_368 = arith.constant 5 : index
    %c0_369 = arith.constant 0 : index
    %c0_370 = arith.constant 0 : index
    %501 = vector.load %arg1[%c5_368, %c0_369, %c0_370] : memref<8x16x64xbf16, #tpu.memory_space<vmem>>, vector<1x16x64xbf16>
    %502 = vector.shape_cast %501 : vector<1x16x64xbf16> to vector<16x64xbf16>
    %cst_371 = arith.constant dense<0.000000e+00> : vector<384x64xf32>
    %503 = tpu.matmul %0, %502, %cst_371 {dimension_numbers = #tpu.dot_dimension_numbers<[1], [0], [0], [1], [0, 0, 1, 1], [], []>} : vector<384x16xbf16>, vector<16x64xbf16>, vector<384x64xf32> -> vector<384x64xf32>
    %504 = arith.truncf %503 : vector<384x64xf32> to vector<384x64xbf16>
    %505 = vector.extract_strided_slice %504 {offsets = [0, 0], sizes = [16, 64], strides = [1, 1]} : vector<384x64xbf16> to vector<16x64xbf16>
    %c0_372 = arith.constant 0 : index
    %c80 = arith.constant 80 : index
    %c0_373 = arith.constant 0 : index
    %506 = vector.load %arg7[%c0_372, %c80, %c0_373] : memref<8x128x192xbf16, #tpu.memory_space<vmem>>, vector<1x16x64xbf16>
    %507 = vector.shape_cast %506 : vector<1x16x64xbf16> to vector<16x64xbf16>
    %508 = vector.shape_cast %505 : vector<16x64xbf16> to vector<1x16x64xbf16>
    tpu.vector_store %arg7[%c0_372, %c80, %c0_373], %508 {strides = array<i32>} : memref<8x128x192xbf16, #tpu.memory_space<vmem>>, vector<1x16x64xbf16>,
    %509 = vector.extract_strided_slice %504 {offsets = [16, 0], sizes = [16, 64], strides = [1, 1]} : vector<384x64xbf16> to vector<16x64xbf16>
    %c0_374 = arith.constant 0 : index
    %c80_375 = arith.constant 80 : index
    %c64_376 = arith.constant 64 : index
    %510 = vector.load %arg7[%c0_374, %c80_375, %c64_376] : memref<8x128x192xbf16, #tpu.memory_space<vmem>>, vector<1x16x64xbf16>
    %511 = vector.shape_cast %510 : vector<1x16x64xbf16> to vector<16x64xbf16>
    %512 = vector.shape_cast %509 : vector<16x64xbf16> to vector<1x16x64xbf16>
    tpu.vector_store %arg7[%c0_374, %c80_375, %c64_376], %512 {strides = array<i32>} : memref<8x128x192xbf16, #tpu.memory_space<vmem>>, vector<1x16x64xbf16>,
    %513 = vector.extract_strided_slice %504 {offsets = [32, 0], sizes = [16, 64], strides = [1, 1]} : vector<384x64xbf16> to vector<16x64xbf16>
    %c0_377 = arith.constant 0 : index
    %c80_378 = arith.constant 80 : index
    %c128_379 = arith.constant 128 : index
    %514 = vector.load %arg7[%c0_377, %c80_378, %c128_379] : memref<8x128x192xbf16, #tpu.memory_space<vmem>>, vector<1x16x64xbf16>
    %515 = vector.shape_cast %514 : vector<1x16x64xbf16> to vector<16x64xbf16>
    %516 = vector.shape_cast %513 : vector<16x64xbf16> to vector<1x16x64xbf16>
    tpu.vector_store %arg7[%c0_377, %c80_378, %c128_379], %516 {strides = array<i32>} : memref<8x128x192xbf16, #tpu.memory_space<vmem>>, vector<1x16x64xbf16>,
    %517 = vector.extract_strided_slice %504 {offsets = [48, 0], sizes = [16, 64], strides = [1, 1]} : vector<384x64xbf16> to vector<16x64xbf16>
    %c1_380 = arith.constant 1 : index
    %c80_381 = arith.constant 80 : index
    %c0_382 = arith.constant 0 : index
    %518 = vector.load %arg7[%c1_380, %c80_381, %c0_382] : memref<8x128x192xbf16, #tpu.memory_space<vmem>>, vector<1x16x64xbf16>
    %519 = vector.shape_cast %518 : vector<1x16x64xbf16> to vector<16x64xbf16>
    %520 = vector.shape_cast %517 : vector<16x64xbf16> to vector<1x16x64xbf16>
    tpu.vector_store %arg7[%c1_380, %c80_381, %c0_382], %520 {strides = array<i32>} : memref<8x128x192xbf16, #tpu.memory_space<vmem>>, vector<1x16x64xbf16>,
    %521 = vector.extract_strided_slice %504 {offsets = [64, 0], sizes = [16, 64], strides = [1, 1]} : vector<384x64xbf16> to vector<16x64xbf16>
    %c1_383 = arith.constant 1 : index
    %c80_384 = arith.constant 80 : index
    %c64_385 = arith.constant 64 : index
    %522 = vector.load %arg7[%c1_383, %c80_384, %c64_385] : memref<8x128x192xbf16, #tpu.memory_space<vmem>>, vector<1x16x64xbf16>
    %523 = vector.shape_cast %522 : vector<1x16x64xbf16> to vector<16x64xbf16>
    %524 = vector.shape_cast %521 : vector<16x64xbf16> to vector<1x16x64xbf16>
    tpu.vector_store %arg7[%c1_383, %c80_384, %c64_385], %524 {strides = array<i32>} : memref<8x128x192xbf16, #tpu.memory_space<vmem>>, vector<1x16x64xbf16>,
    %525 = vector.extract_strided_slice %504 {offsets = [80, 0], sizes = [16, 64], strides = [1, 1]} : vector<384x64xbf16> to vector<16x64xbf16>
    %c1_386 = arith.constant 1 : index
    %c80_387 = arith.constant 80 : index
    %c128_388 = arith.constant 128 : index
    %526 = vector.load %arg7[%c1_386, %c80_387, %c128_388] : memref<8x128x192xbf16, #tpu.memory_space<vmem>>, vector<1x16x64xbf16>
    %527 = vector.shape_cast %526 : vector<1x16x64xbf16> to vector<16x64xbf16>
    %528 = vector.shape_cast %525 : vector<16x64xbf16> to vector<1x16x64xbf16>
    tpu.vector_store %arg7[%c1_386, %c80_387, %c128_388], %528 {strides = array<i32>} : memref<8x128x192xbf16, #tpu.memory_space<vmem>>, vector<1x16x64xbf16>,
    %529 = vector.extract_strided_slice %504 {offsets = [96, 0], sizes = [16, 64], strides = [1, 1]} : vector<384x64xbf16> to vector<16x64xbf16>
    %c2_389 = arith.constant 2 : index
    %c80_390 = arith.constant 80 : index
    %c0_391 = arith.constant 0 : index
    %530 = vector.load %arg7[%c2_389, %c80_390, %c0_391] : memref<8x128x192xbf16, #tpu.memory_space<vmem>>, vector<1x16x64xbf16>
    %531 = vector.shape_cast %530 : vector<1x16x64xbf16> to vector<16x64xbf16>
    %532 = vector.shape_cast %529 : vector<16x64xbf16> to vector<1x16x64xbf16>
    tpu.vector_store %arg7[%c2_389, %c80_390, %c0_391], %532 {strides = array<i32>} : memref<8x128x192xbf16, #tpu.memory_space<vmem>>, vector<1x16x64xbf16>,
    %533 = vector.extract_strided_slice %504 {offsets = [112, 0], sizes = [16, 64], strides = [1, 1]} : vector<384x64xbf16> to vector<16x64xbf16>
    %c2_392 = arith.constant 2 : index
    %c80_393 = arith.constant 80 : index
    %c64_394 = arith.constant 64 : index
    %534 = vector.load %arg7[%c2_392, %c80_393, %c64_394] : memref<8x128x192xbf16, #tpu.memory_space<vmem>>, vector<1x16x64xbf16>
    %535 = vector.shape_cast %534 : vector<1x16x64xbf16> to vector<16x64xbf16>
    %536 = vector.shape_cast %533 : vector<16x64xbf16> to vector<1x16x64xbf16>
    tpu.vector_store %arg7[%c2_392, %c80_393, %c64_394], %536 {strides = array<i32>} : memref<8x128x192xbf16, #tpu.memory_space<vmem>>, vector<1x16x64xbf16>,
    %537 = vector.extract_strided_slice %504 {offsets = [128, 0], sizes = [16, 64], strides = [1, 1]} : vector<384x64xbf16> to vector<16x64xbf16>
    %c2_395 = arith.constant 2 : index
    %c80_396 = arith.constant 80 : index
    %c128_397 = arith.constant 128 : index
    %538 = vector.load %arg7[%c2_395, %c80_396, %c128_397] : memref<8x128x192xbf16, #tpu.memory_space<vmem>>, vector<1x16x64xbf16>
    %539 = vector.shape_cast %538 : vector<1x16x64xbf16> to vector<16x64xbf16>
    %540 = vector.shape_cast %537 : vector<16x64xbf16> to vector<1x16x64xbf16>
    tpu.vector_store %arg7[%c2_395, %c80_396, %c128_397], %540 {strides = array<i32>} : memref<8x128x192xbf16, #tpu.memory_space<vmem>>, vector<1x16x64xbf16>,
    %541 = vector.extract_strided_slice %504 {offsets = [144, 0], sizes = [16, 64], strides = [1, 1]} : vector<384x64xbf16> to vector<16x64xbf16>
    %c3_398 = arith.constant 3 : index
    %c80_399 = arith.constant 80 : index
    %c0_400 = arith.constant 0 : index
    %542 = vector.load %arg7[%c3_398, %c80_399, %c0_400] : memref<8x128x192xbf16, #tpu.memory_space<vmem>>, vector<1x16x64xbf16>
    %543 = vector.shape_cast %542 : vector<1x16x64xbf16> to vector<16x64xbf16>
    %544 = vector.shape_cast %541 : vector<16x64xbf16> to vector<1x16x64xbf16>
    tpu.vector_store %arg7[%c3_398, %c80_399, %c0_400], %544 {strides = array<i32>} : memref<8x128x192xbf16, #tpu.memory_space<vmem>>, vector<1x16x64xbf16>,
    %545 = vector.extract_strided_slice %504 {offsets = [160, 0], sizes = [16, 64], strides = [1, 1]} : vector<384x64xbf16> to vector<16x64xbf16>
    %c3_401 = arith.constant 3 : index
    %c80_402 = arith.constant 80 : index
    %c64_403 = arith.constant 64 : index
    %546 = vector.load %arg7[%c3_401, %c80_402, %c64_403] : memref<8x128x192xbf16, #tpu.memory_space<vmem>>, vector<1x16x64xbf16>
    %547 = vector.shape_cast %546 : vector<1x16x64xbf16> to vector<16x64xbf16>
    %548 = vector.shape_cast %545 : vector<16x64xbf16> to vector<1x16x64xbf16>
    tpu.vector_store %arg7[%c3_401, %c80_402, %c64_403], %548 {strides = array<i32>} : memref<8x128x192xbf16, #tpu.memory_space<vmem>>, vector<1x16x64xbf16>,
    %549 = vector.extract_strided_slice %504 {offsets = [176, 0], sizes = [16, 64], strides = [1, 1]} : vector<384x64xbf16> to vector<16x64xbf16>
    %c3_404 = arith.constant 3 : index
    %c80_405 = arith.constant 80 : index
    %c128_406 = arith.constant 128 : index
    %550 = vector.load %arg7[%c3_404, %c80_405, %c128_406] : memref<8x128x192xbf16, #tpu.memory_space<vmem>>, vector<1x16x64xbf16>
    %551 = vector.shape_cast %550 : vector<1x16x64xbf16> to vector<16x64xbf16>
    %552 = vector.shape_cast %549 : vector<16x64xbf16> to vector<1x16x64xbf16>
    tpu.vector_store %arg7[%c3_404, %c80_405, %c128_406], %552 {strides = array<i32>} : memref<8x128x192xbf16, #tpu.memory_space<vmem>>, vector<1x16x64xbf16>,
    %553 = vector.extract_strided_slice %504 {offsets = [192, 0], sizes = [16, 64], strides = [1, 1]} : vector<384x64xbf16> to vector<16x64xbf16>
    %c4_407 = arith.constant 4 : index
    %c80_408 = arith.constant 80 : index
    %c0_409 = arith.constant 0 : index
    %554 = vector.load %arg7[%c4_407, %c80_408, %c0_409] : memref<8x128x192xbf16, #tpu.memory_space<vmem>>, vector<1x16x64xbf16>
    %555 = vector.shape_cast %554 : vector<1x16x64xbf16> to vector<16x64xbf16>
    %556 = vector.shape_cast %553 : vector<16x64xbf16> to vector<1x16x64xbf16>
    tpu.vector_store %arg7[%c4_407, %c80_408, %c0_409], %556 {strides = array<i32>} : memref<8x128x192xbf16, #tpu.memory_space<vmem>>, vector<1x16x64xbf16>,
    %557 = vector.extract_strided_slice %504 {offsets = [208, 0], sizes = [16, 64], strides = [1, 1]} : vector<384x64xbf16> to vector<16x64xbf16>
    %c4_410 = arith.constant 4 : index
    %c80_411 = arith.constant 80 : index
    %c64_412 = arith.constant 64 : index
    %558 = vector.load %arg7[%c4_410, %c80_411, %c64_412] : memref<8x128x192xbf16, #tpu.memory_space<vmem>>, vector<1x16x64xbf16>
    %559 = vector.shape_cast %558 : vector<1x16x64xbf16> to vector<16x64xbf16>
    %560 = vector.shape_cast %557 : vector<16x64xbf16> to vector<1x16x64xbf16>
    tpu.vector_store %arg7[%c4_410, %c80_411, %c64_412], %560 {strides = array<i32>} : memref<8x128x192xbf16, #tpu.memory_space<vmem>>, vector<1x16x64xbf16>,
    %561 = vector.extract_strided_slice %504 {offsets = [224, 0], sizes = [16, 64], strides = [1, 1]} : vector<384x64xbf16> to vector<16x64xbf16>
    %c4_413 = arith.constant 4 : index
    %c80_414 = arith.constant 80 : index
    %c128_415 = arith.constant 128 : index
    %562 = vector.load %arg7[%c4_413, %c80_414, %c128_415] : memref<8x128x192xbf16, #tpu.memory_space<vmem>>, vector<1x16x64xbf16>
    %563 = vector.shape_cast %562 : vector<1x16x64xbf16> to vector<16x64xbf16>
    %564 = vector.shape_cast %561 : vector<16x64xbf16> to vector<1x16x64xbf16>
    tpu.vector_store %arg7[%c4_413, %c80_414, %c128_415], %564 {strides = array<i32>} : memref<8x128x192xbf16, #tpu.memory_space<vmem>>, vector<1x16x64xbf16>,
    %565 = vector.extract_strided_slice %504 {offsets = [240, 0], sizes = [16, 64], strides = [1, 1]} : vector<384x64xbf16> to vector<16x64xbf16>
    %c5_416 = arith.constant 5 : index
    %c80_417 = arith.constant 80 : index
    %c0_418 = arith.constant 0 : index
    %566 = vector.load %arg7[%c5_416, %c80_417, %c0_418] : memref<8x128x192xbf16, #tpu.memory_space<vmem>>, vector<1x16x64xbf16>
    %567 = vector.shape_cast %566 : vector<1x16x64xbf16> to vector<16x64xbf16>
    %568 = vector.shape_cast %565 : vector<16x64xbf16> to vector<1x16x64xbf16>
    tpu.vector_store %arg7[%c5_416, %c80_417, %c0_418], %568 {strides = array<i32>} : memref<8x128x192xbf16, #tpu.memory_space<vmem>>, vector<1x16x64xbf16>,
    %569 = vector.extract_strided_slice %504 {offsets = [256, 0], sizes = [16, 64], strides = [1, 1]} : vector<384x64xbf16> to vector<16x64xbf16>
    %c5_419 = arith.constant 5 : index
    %c80_420 = arith.constant 80 : index
    %c64_421 = arith.constant 64 : index
    %570 = vector.load %arg7[%c5_419, %c80_420, %c64_421] : memref<8x128x192xbf16, #tpu.memory_space<vmem>>, vector<1x16x64xbf16>
    %571 = vector.shape_cast %570 : vector<1x16x64xbf16> to vector<16x64xbf16>
    %572 = vector.shape_cast %569 : vector<16x64xbf16> to vector<1x16x64xbf16>
    tpu.vector_store %arg7[%c5_419, %c80_420, %c64_421], %572 {strides = array<i32>} : memref<8x128x192xbf16, #tpu.memory_space<vmem>>, vector<1x16x64xbf16>,
    %573 = vector.extract_strided_slice %504 {offsets = [272, 0], sizes = [16, 64], strides = [1, 1]} : vector<384x64xbf16> to vector<16x64xbf16>
    %c5_422 = arith.constant 5 : index
    %c80_423 = arith.constant 80 : index
    %c128_424 = arith.constant 128 : index
    %574 = vector.load %arg7[%c5_422, %c80_423, %c128_424] : memref<8x128x192xbf16, #tpu.memory_space<vmem>>, vector<1x16x64xbf16>
    %575 = vector.shape_cast %574 : vector<1x16x64xbf16> to vector<16x64xbf16>
    %576 = vector.shape_cast %573 : vector<16x64xbf16> to vector<1x16x64xbf16>
    tpu.vector_store %arg7[%c5_422, %c80_423, %c128_424], %576 {strides = array<i32>} : memref<8x128x192xbf16, #tpu.memory_space<vmem>>, vector<1x16x64xbf16>,
    %577 = vector.extract_strided_slice %504 {offsets = [288, 0], sizes = [16, 64], strides = [1, 1]} : vector<384x64xbf16> to vector<16x64xbf16>
    %c6_425 = arith.constant 6 : index
    %c80_426 = arith.constant 80 : index
    %c0_427 = arith.constant 0 : index
    %578 = vector.load %arg7[%c6_425, %c80_426, %c0_427] : memref<8x128x192xbf16, #tpu.memory_space<vmem>>, vector<1x16x64xbf16>
    %579 = vector.shape_cast %578 : vector<1x16x64xbf16> to vector<16x64xbf16>
    %580 = vector.shape_cast %577 : vector<16x64xbf16> to vector<1x16x64xbf16>
    tpu.vector_store %arg7[%c6_425, %c80_426, %c0_427], %580 {strides = array<i32>} : memref<8x128x192xbf16, #tpu.memory_space<vmem>>, vector<1x16x64xbf16>,
    %581 = vector.extract_strided_slice %504 {offsets = [304, 0], sizes = [16, 64], strides = [1, 1]} : vector<384x64xbf16> to vector<16x64xbf16>
    %c6_428 = arith.constant 6 : index
    %c80_429 = arith.constant 80 : index
    %c64_430 = arith.constant 64 : index
    %582 = vector.load %arg7[%c6_428, %c80_429, %c64_430] : memref<8x128x192xbf16, #tpu.memory_space<vmem>>, vector<1x16x64xbf16>
    %583 = vector.shape_cast %582 : vector<1x16x64xbf16> to vector<16x64xbf16>
    %584 = vector.shape_cast %581 : vector<16x64xbf16> to vector<1x16x64xbf16>
    tpu.vector_store %arg7[%c6_428, %c80_429, %c64_430], %584 {strides = array<i32>} : memref<8x128x192xbf16, #tpu.memory_space<vmem>>, vector<1x16x64xbf16>,
    %585 = vector.extract_strided_slice %504 {offsets = [320, 0], sizes = [16, 64], strides = [1, 1]} : vector<384x64xbf16> to vector<16x64xbf16>
    %c6_431 = arith.constant 6 : index
    %c80_432 = arith.constant 80 : index
    %c128_433 = arith.constant 128 : index
    %586 = vector.load %arg7[%c6_431, %c80_432, %c128_433] : memref<8x128x192xbf16, #tpu.memory_space<vmem>>, vector<1x16x64xbf16>
    %587 = vector.shape_cast %586 : vector<1x16x64xbf16> to vector<16x64xbf16>
    %588 = vector.shape_cast %585 : vector<16x64xbf16> to vector<1x16x64xbf16>
    tpu.vector_store %arg7[%c6_431, %c80_432, %c128_433], %588 {strides = array<i32>} : memref<8x128x192xbf16, #tpu.memory_space<vmem>>, vector<1x16x64xbf16>,
    %589 = vector.extract_strided_slice %504 {offsets = [336, 0], sizes = [16, 64], strides = [1, 1]} : vector<384x64xbf16> to vector<16x64xbf16>
    %c7_434 = arith.constant 7 : index
    %c80_435 = arith.constant 80 : index
    %c0_436 = arith.constant 0 : index
    %590 = vector.load %arg7[%c7_434, %c80_435, %c0_436] : memref<8x128x192xbf16, #tpu.memory_space<vmem>>, vector<1x16x64xbf16>
    %591 = vector.shape_cast %590 : vector<1x16x64xbf16> to vector<16x64xbf16>
    %592 = vector.shape_cast %589 : vector<16x64xbf16> to vector<1x16x64xbf16>
    tpu.vector_store %arg7[%c7_434, %c80_435, %c0_436], %592 {strides = array<i32>} : memref<8x128x192xbf16, #tpu.memory_space<vmem>>, vector<1x16x64xbf16>,
    %593 = vector.extract_strided_slice %504 {offsets = [352, 0], sizes = [16, 64], strides = [1, 1]} : vector<384x64xbf16> to vector<16x64xbf16>
    %c7_437 = arith.constant 7 : index
    %c80_438 = arith.constant 80 : index
    %c64_439 = arith.constant 64 : index
    %594 = vector.load %arg7[%c7_437, %c80_438, %c64_439] : memref<8x128x192xbf16, #tpu.memory_space<vmem>>, vector<1x16x64xbf16>
    %595 = vector.shape_cast %594 : vector<1x16x64xbf16> to vector<16x64xbf16>
    %596 = vector.shape_cast %593 : vector<16x64xbf16> to vector<1x16x64xbf16>
    tpu.vector_store %arg7[%c7_437, %c80_438, %c64_439], %596 {strides = array<i32>} : memref<8x128x192xbf16, #tpu.memory_space<vmem>>, vector<1x16x64xbf16>,
    %597 = vector.extract_strided_slice %504 {offsets = [368, 0], sizes = [16, 64], strides = [1, 1]} : vector<384x64xbf16> to vector<16x64xbf16>
    %c7_440 = arith.constant 7 : index
    %c80_441 = arith.constant 80 : index
    %c128_442 = arith.constant 128 : index
    %598 = vector.load %arg7[%c7_440, %c80_441, %c128_442] : memref<8x128x192xbf16, #tpu.memory_space<vmem>>, vector<1x16x64xbf16>
    %599 = vector.shape_cast %598 : vector<1x16x64xbf16> to vector<16x64xbf16>
    %600 = vector.shape_cast %597 : vector<16x64xbf16> to vector<1x16x64xbf16>
    tpu.vector_store %arg7[%c7_440, %c80_441, %c128_442], %600 {strides = array<i32>} : memref<8x128x192xbf16, #tpu.memory_space<vmem>>, vector<1x16x64xbf16>,
    %c6_443 = arith.constant 6 : index
    %c0_444 = arith.constant 0 : index
    %c0_445 = arith.constant 0 : index
    %601 = vector.load %arg1[%c6_443, %c0_444, %c0_445] : memref<8x16x64xbf16, #tpu.memory_space<vmem>>, vector<1x16x64xbf16>
    %602 = vector.shape_cast %601 : vector<1x16x64xbf16> to vector<16x64xbf16>
    %cst_446 = arith.constant dense<0.000000e+00> : vector<384x64xf32>
    %603 = tpu.matmul %0, %602, %cst_446 {dimension_numbers = #tpu.dot_dimension_numbers<[1], [0], [0], [1], [0, 0, 1, 1], [], []>} : vector<384x16xbf16>, vector<16x64xbf16>, vector<384x64xf32> -> vector<384x64xf32>
    %604 = arith.truncf %603 : vector<384x64xf32> to vector<384x64xbf16>
    %605 = vector.extract_strided_slice %604 {offsets = [0, 0], sizes = [16, 64], strides = [1, 1]} : vector<384x64xbf16> to vector<16x64xbf16>
    %c0_447 = arith.constant 0 : index
    %c96 = arith.constant 96 : index
    %c0_448 = arith.constant 0 : index
    %606 = vector.load %arg7[%c0_447, %c96, %c0_448] : memref<8x128x192xbf16, #tpu.memory_space<vmem>>, vector<1x16x64xbf16>
    %607 = vector.shape_cast %606 : vector<1x16x64xbf16> to vector<16x64xbf16>
    %608 = vector.shape_cast %605 : vector<16x64xbf16> to vector<1x16x64xbf16>
    tpu.vector_store %arg7[%c0_447, %c96, %c0_448], %608 {strides = array<i32>} : memref<8x128x192xbf16, #tpu.memory_space<vmem>>, vector<1x16x64xbf16>,
    %609 = vector.extract_strided_slice %604 {offsets = [16, 0], sizes = [16, 64], strides = [1, 1]} : vector<384x64xbf16> to vector<16x64xbf16>
    %c0_449 = arith.constant 0 : index
    %c96_450 = arith.constant 96 : index
    %c64_451 = arith.constant 64 : index
    %610 = vector.load %arg7[%c0_449, %c96_450, %c64_451] : memref<8x128x192xbf16, #tpu.memory_space<vmem>>, vector<1x16x64xbf16>
    %611 = vector.shape_cast %610 : vector<1x16x64xbf16> to vector<16x64xbf16>
    %612 = vector.shape_cast %609 : vector<16x64xbf16> to vector<1x16x64xbf16>
    tpu.vector_store %arg7[%c0_449, %c96_450, %c64_451], %612 {strides = array<i32>} : memref<8x128x192xbf16, #tpu.memory_space<vmem>>, vector<1x16x64xbf16>,
    %613 = vector.extract_strided_slice %604 {offsets = [32, 0], sizes = [16, 64], strides = [1, 1]} : vector<384x64xbf16> to vector<16x64xbf16>
    %c0_452 = arith.constant 0 : index
    %c96_453 = arith.constant 96 : index
    %c128_454 = arith.constant 128 : index
    %614 = vector.load %arg7[%c0_452, %c96_453, %c128_454] : memref<8x128x192xbf16, #tpu.memory_space<vmem>>, vector<1x16x64xbf16>
    %615 = vector.shape_cast %614 : vector<1x16x64xbf16> to vector<16x64xbf16>
    %616 = vector.shape_cast %613 : vector<16x64xbf16> to vector<1x16x64xbf16>
    tpu.vector_store %arg7[%c0_452, %c96_453, %c128_454], %616 {strides = array<i32>} : memref<8x128x192xbf16, #tpu.memory_space<vmem>>, vector<1x16x64xbf16>,
    %617 = vector.extract_strided_slice %604 {offsets = [48, 0], sizes = [16, 64], strides = [1, 1]} : vector<384x64xbf16> to vector<16x64xbf16>
    %c1_455 = arith.constant 1 : index
    %c96_456 = arith.constant 96 : index
    %c0_457 = arith.constant 0 : index
    %618 = vector.load %arg7[%c1_455, %c96_456, %c0_457] : memref<8x128x192xbf16, #tpu.memory_space<vmem>>, vector<1x16x64xbf16>
    %619 = vector.shape_cast %618 : vector<1x16x64xbf16> to vector<16x64xbf16>
    %620 = vector.shape_cast %617 : vector<16x64xbf16> to vector<1x16x64xbf16>
    tpu.vector_store %arg7[%c1_455, %c96_456, %c0_457], %620 {strides = array<i32>} : memref<8x128x192xbf16, #tpu.memory_space<vmem>>, vector<1x16x64xbf16>,
    %621 = vector.extract_strided_slice %604 {offsets = [64, 0], sizes = [16, 64], strides = [1, 1]} : vector<384x64xbf16> to vector<16x64xbf16>
    %c1_458 = arith.constant 1 : index
    %c96_459 = arith.constant 96 : index
    %c64_460 = arith.constant 64 : index
    %622 = vector.load %arg7[%c1_458, %c96_459, %c64_460] : memref<8x128x192xbf16, #tpu.memory_space<vmem>>, vector<1x16x64xbf16>
    %623 = vector.shape_cast %622 : vector<1x16x64xbf16> to vector<16x64xbf16>
    %624 = vector.shape_cast %621 : vector<16x64xbf16> to vector<1x16x64xbf16>
    tpu.vector_store %arg7[%c1_458, %c96_459, %c64_460], %624 {strides = array<i32>} : memref<8x128x192xbf16, #tpu.memory_space<vmem>>, vector<1x16x64xbf16>,
    %625 = vector.extract_strided_slice %604 {offsets = [80, 0], sizes = [16, 64], strides = [1, 1]} : vector<384x64xbf16> to vector<16x64xbf16>
    %c1_461 = arith.constant 1 : index
    %c96_462 = arith.constant 96 : index
    %c128_463 = arith.constant 128 : index
    %626 = vector.load %arg7[%c1_461, %c96_462, %c128_463] : memref<8x128x192xbf16, #tpu.memory_space<vmem>>, vector<1x16x64xbf16>
    %627 = vector.shape_cast %626 : vector<1x16x64xbf16> to vector<16x64xbf16>
    %628 = vector.shape_cast %625 : vector<16x64xbf16> to vector<1x16x64xbf16>
    tpu.vector_store %arg7[%c1_461, %c96_462, %c128_463], %628 {strides = array<i32>} : memref<8x128x192xbf16, #tpu.memory_space<vmem>>, vector<1x16x64xbf16>,
    %629 = vector.extract_strided_slice %604 {offsets = [96, 0], sizes = [16, 64], strides = [1, 1]} : vector<384x64xbf16> to vector<16x64xbf16>
    %c2_464 = arith.constant 2 : index
    %c96_465 = arith.constant 96 : index
    %c0_466 = arith.constant 0 : index
    %630 = vector.load %arg7[%c2_464, %c96_465, %c0_466] : memref<8x128x192xbf16, #tpu.memory_space<vmem>>, vector<1x16x64xbf16>
    %631 = vector.shape_cast %630 : vector<1x16x64xbf16> to vector<16x64xbf16>
    %632 = vector.shape_cast %629 : vector<16x64xbf16> to vector<1x16x64xbf16>
    tpu.vector_store %arg7[%c2_464, %c96_465, %c0_466], %632 {strides = array<i32>} : memref<8x128x192xbf16, #tpu.memory_space<vmem>>, vector<1x16x64xbf16>,
    %633 = vector.extract_strided_slice %604 {offsets = [112, 0], sizes = [16, 64], strides = [1, 1]} : vector<384x64xbf16> to vector<16x64xbf16>
    %c2_467 = arith.constant 2 : index
    %c96_468 = arith.constant 96 : index
    %c64_469 = arith.constant 64 : index
    %634 = vector.load %arg7[%c2_467, %c96_468, %c64_469] : memref<8x128x192xbf16, #tpu.memory_space<vmem>>, vector<1x16x64xbf16>
    %635 = vector.shape_cast %634 : vector<1x16x64xbf16> to vector<16x64xbf16>
    %636 = vector.shape_cast %633 : vector<16x64xbf16> to vector<1x16x64xbf16>
    tpu.vector_store %arg7[%c2_467, %c96_468, %c64_469], %636 {strides = array<i32>} : memref<8x128x192xbf16, #tpu.memory_space<vmem>>, vector<1x16x64xbf16>,
    %637 = vector.extract_strided_slice %604 {offsets = [128, 0], sizes = [16, 64], strides = [1, 1]} : vector<384x64xbf16> to vector<16x64xbf16>
    %c2_470 = arith.constant 2 : index
    %c96_471 = arith.constant 96 : index
    %c128_472 = arith.constant 128 : index
    %638 = vector.load %arg7[%c2_470, %c96_471, %c128_472] : memref<8x128x192xbf16, #tpu.memory_space<vmem>>, vector<1x16x64xbf16>
    %639 = vector.shape_cast %638 : vector<1x16x64xbf16> to vector<16x64xbf16>
    %640 = vector.shape_cast %637 : vector<16x64xbf16> to vector<1x16x64xbf16>
    tpu.vector_store %arg7[%c2_470, %c96_471, %c128_472], %640 {strides = array<i32>} : memref<8x128x192xbf16, #tpu.memory_space<vmem>>, vector<1x16x64xbf16>,
    %641 = vector.extract_strided_slice %604 {offsets = [144, 0], sizes = [16, 64], strides = [1, 1]} : vector<384x64xbf16> to vector<16x64xbf16>
    %c3_473 = arith.constant 3 : index
    %c96_474 = arith.constant 96 : index
    %c0_475 = arith.constant 0 : index
    %642 = vector.load %arg7[%c3_473, %c96_474, %c0_475] : memref<8x128x192xbf16, #tpu.memory_space<vmem>>, vector<1x16x64xbf16>
    %643 = vector.shape_cast %642 : vector<1x16x64xbf16> to vector<16x64xbf16>
    %644 = vector.shape_cast %641 : vector<16x64xbf16> to vector<1x16x64xbf16>
    tpu.vector_store %arg7[%c3_473, %c96_474, %c0_475], %644 {strides = array<i32>} : memref<8x128x192xbf16, #tpu.memory_space<vmem>>, vector<1x16x64xbf16>,
    %645 = vector.extract_strided_slice %604 {offsets = [160, 0], sizes = [16, 64], strides = [1, 1]} : vector<384x64xbf16> to vector<16x64xbf16>
    %c3_476 = arith.constant 3 : index
    %c96_477 = arith.constant 96 : index
    %c64_478 = arith.constant 64 : index
    %646 = vector.load %arg7[%c3_476, %c96_477, %c64_478] : memref<8x128x192xbf16, #tpu.memory_space<vmem>>, vector<1x16x64xbf16>
    %647 = vector.shape_cast %646 : vector<1x16x64xbf16> to vector<16x64xbf16>
    %648 = vector.shape_cast %645 : vector<16x64xbf16> to vector<1x16x64xbf16>
    tpu.vector_store %arg7[%c3_476, %c96_477, %c64_478], %648 {strides = array<i32>} : memref<8x128x192xbf16, #tpu.memory_space<vmem>>, vector<1x16x64xbf16>,
    %649 = vector.extract_strided_slice %604 {offsets = [176, 0], sizes = [16, 64], strides = [1, 1]} : vector<384x64xbf16> to vector<16x64xbf16>
    %c3_479 = arith.constant 3 : index
    %c96_480 = arith.constant 96 : index
    %c128_481 = arith.constant 128 : index
    %650 = vector.load %arg7[%c3_479, %c96_480, %c128_481] : memref<8x128x192xbf16, #tpu.memory_space<vmem>>, vector<1x16x64xbf16>
    %651 = vector.shape_cast %650 : vector<1x16x64xbf16> to vector<16x64xbf16>
    %652 = vector.shape_cast %649 : vector<16x64xbf16> to vector<1x16x64xbf16>
    tpu.vector_store %arg7[%c3_479, %c96_480, %c128_481], %652 {strides = array<i32>} : memref<8x128x192xbf16, #tpu.memory_space<vmem>>, vector<1x16x64xbf16>,
    %653 = vector.extract_strided_slice %604 {offsets = [192, 0], sizes = [16, 64], strides = [1, 1]} : vector<384x64xbf16> to vector<16x64xbf16>
    %c4_482 = arith.constant 4 : index
    %c96_483 = arith.constant 96 : index
    %c0_484 = arith.constant 0 : index
    %654 = vector.load %arg7[%c4_482, %c96_483, %c0_484] : memref<8x128x192xbf16, #tpu.memory_space<vmem>>, vector<1x16x64xbf16>
    %655 = vector.shape_cast %654 : vector<1x16x64xbf16> to vector<16x64xbf16>
    %656 = vector.shape_cast %653 : vector<16x64xbf16> to vector<1x16x64xbf16>
    tpu.vector_store %arg7[%c4_482, %c96_483, %c0_484], %656 {strides = array<i32>} : memref<8x128x192xbf16, #tpu.memory_space<vmem>>, vector<1x16x64xbf16>,
    %657 = vector.extract_strided_slice %604 {offsets = [208, 0], sizes = [16, 64], strides = [1, 1]} : vector<384x64xbf16> to vector<16x64xbf16>
    %c4_485 = arith.constant 4 : index
    %c96_486 = arith.constant 96 : index
    %c64_487 = arith.constant 64 : index
    %658 = vector.load %arg7[%c4_485, %c96_486, %c64_487] : memref<8x128x192xbf16, #tpu.memory_space<vmem>>, vector<1x16x64xbf16>
    %659 = vector.shape_cast %658 : vector<1x16x64xbf16> to vector<16x64xbf16>
    %660 = vector.shape_cast %657 : vector<16x64xbf16> to vector<1x16x64xbf16>
    tpu.vector_store %arg7[%c4_485, %c96_486, %c64_487], %660 {strides = array<i32>} : memref<8x128x192xbf16, #tpu.memory_space<vmem>>, vector<1x16x64xbf16>,
    %661 = vector.extract_strided_slice %604 {offsets = [224, 0], sizes = [16, 64], strides = [1, 1]} : vector<384x64xbf16> to vector<16x64xbf16>
    %c4_488 = arith.constant 4 : index
    %c96_489 = arith.constant 96 : index
    %c128_490 = arith.constant 128 : index
    %662 = vector.load %arg7[%c4_488, %c96_489, %c128_490] : memref<8x128x192xbf16, #tpu.memory_space<vmem>>, vector<1x16x64xbf16>
    %663 = vector.shape_cast %662 : vector<1x16x64xbf16> to vector<16x64xbf16>
    %664 = vector.shape_cast %661 : vector<16x64xbf16> to vector<1x16x64xbf16>
    tpu.vector_store %arg7[%c4_488, %c96_489, %c128_490], %664 {strides = array<i32>} : memref<8x128x192xbf16, #tpu.memory_space<vmem>>, vector<1x16x64xbf16>,
    %665 = vector.extract_strided_slice %604 {offsets = [240, 0], sizes = [16, 64], strides = [1, 1]} : vector<384x64xbf16> to vector<16x64xbf16>
    %c5_491 = arith.constant 5 : index
    %c96_492 = arith.constant 96 : index
    %c0_493 = arith.constant 0 : index
    %666 = vector.load %arg7[%c5_491, %c96_492, %c0_493] : memref<8x128x192xbf16, #tpu.memory_space<vmem>>, vector<1x16x64xbf16>
    %667 = vector.shape_cast %666 : vector<1x16x64xbf16> to vector<16x64xbf16>
    %668 = vector.shape_cast %665 : vector<16x64xbf16> to vector<1x16x64xbf16>
    tpu.vector_store %arg7[%c5_491, %c96_492, %c0_493], %668 {strides = array<i32>} : memref<8x128x192xbf16, #tpu.memory_space<vmem>>, vector<1x16x64xbf16>,
    %669 = vector.extract_strided_slice %604 {offsets = [256, 0], sizes = [16, 64], strides = [1, 1]} : vector<384x64xbf16> to vector<16x64xbf16>
    %c5_494 = arith.constant 5 : index
    %c96_495 = arith.constant 96 : index
    %c64_496 = arith.constant 64 : index
    %670 = vector.load %arg7[%c5_494, %c96_495, %c64_496] : memref<8x128x192xbf16, #tpu.memory_space<vmem>>, vector<1x16x64xbf16>
    %671 = vector.shape_cast %670 : vector<1x16x64xbf16> to vector<16x64xbf16>
    %672 = vector.shape_cast %669 : vector<16x64xbf16> to vector<1x16x64xbf16>
    tpu.vector_store %arg7[%c5_494, %c96_495, %c64_496], %672 {strides = array<i32>} : memref<8x128x192xbf16, #tpu.memory_space<vmem>>, vector<1x16x64xbf16>,
    %673 = vector.extract_strided_slice %604 {offsets = [272, 0], sizes = [16, 64], strides = [1, 1]} : vector<384x64xbf16> to vector<16x64xbf16>
    %c5_497 = arith.constant 5 : index
    %c96_498 = arith.constant 96 : index
    %c128_499 = arith.constant 128 : index
    %674 = vector.load %arg7[%c5_497, %c96_498, %c128_499] : memref<8x128x192xbf16, #tpu.memory_space<vmem>>, vector<1x16x64xbf16>
    %675 = vector.shape_cast %674 : vector<1x16x64xbf16> to vector<16x64xbf16>
    %676 = vector.shape_cast %673 : vector<16x64xbf16> to vector<1x16x64xbf16>
    tpu.vector_store %arg7[%c5_497, %c96_498, %c128_499], %676 {strides = array<i32>} : memref<8x128x192xbf16, #tpu.memory_space<vmem>>, vector<1x16x64xbf16>,
    %677 = vector.extract_strided_slice %604 {offsets = [288, 0], sizes = [16, 64], strides = [1, 1]} : vector<384x64xbf16> to vector<16x64xbf16>
    %c6_500 = arith.constant 6 : index
    %c96_501 = arith.constant 96 : index
    %c0_502 = arith.constant 0 : index
    %678 = vector.load %arg7[%c6_500, %c96_501, %c0_502] : memref<8x128x192xbf16, #tpu.memory_space<vmem>>, vector<1x16x64xbf16>
    %679 = vector.shape_cast %678 : vector<1x16x64xbf16> to vector<16x64xbf16>
    %680 = vector.shape_cast %677 : vector<16x64xbf16> to vector<1x16x64xbf16>
    tpu.vector_store %arg7[%c6_500, %c96_501, %c0_502], %680 {strides = array<i32>} : memref<8x128x192xbf16, #tpu.memory_space<vmem>>, vector<1x16x64xbf16>,
    %681 = vector.extract_strided_slice %604 {offsets = [304, 0], sizes = [16, 64], strides = [1, 1]} : vector<384x64xbf16> to vector<16x64xbf16>
    %c6_503 = arith.constant 6 : index
    %c96_504 = arith.constant 96 : index
    %c64_505 = arith.constant 64 : index
    %682 = vector.load %arg7[%c6_503, %c96_504, %c64_505] : memref<8x128x192xbf16, #tpu.memory_space<vmem>>, vector<1x16x64xbf16>
    %683 = vector.shape_cast %682 : vector<1x16x64xbf16> to vector<16x64xbf16>
    %684 = vector.shape_cast %681 : vector<16x64xbf16> to vector<1x16x64xbf16>
    tpu.vector_store %arg7[%c6_503, %c96_504, %c64_505], %684 {strides = array<i32>} : memref<8x128x192xbf16, #tpu.memory_space<vmem>>, vector<1x16x64xbf16>,
    %685 = vector.extract_strided_slice %604 {offsets = [320, 0], sizes = [16, 64], strides = [1, 1]} : vector<384x64xbf16> to vector<16x64xbf16>
    %c6_506 = arith.constant 6 : index
    %c96_507 = arith.constant 96 : index
    %c128_508 = arith.constant 128 : index
    %686 = vector.load %arg7[%c6_506, %c96_507, %c128_508] : memref<8x128x192xbf16, #tpu.memory_space<vmem>>, vector<1x16x64xbf16>
    %687 = vector.shape_cast %686 : vector<1x16x64xbf16> to vector<16x64xbf16>
    %688 = vector.shape_cast %685 : vector<16x64xbf16> to vector<1x16x64xbf16>
    tpu.vector_store %arg7[%c6_506, %c96_507, %c128_508], %688 {strides = array<i32>} : memref<8x128x192xbf16, #tpu.memory_space<vmem>>, vector<1x16x64xbf16>,
    %689 = vector.extract_strided_slice %604 {offsets = [336, 0], sizes = [16, 64], strides = [1, 1]} : vector<384x64xbf16> to vector<16x64xbf16>
    %c7_509 = arith.constant 7 : index
    %c96_510 = arith.constant 96 : index
    %c0_511 = arith.constant 0 : index
    %690 = vector.load %arg7[%c7_509, %c96_510, %c0_511] : memref<8x128x192xbf16, #tpu.memory_space<vmem>>, vector<1x16x64xbf16>
    %691 = vector.shape_cast %690 : vector<1x16x64xbf16> to vector<16x64xbf16>
    %692 = vector.shape_cast %689 : vector<16x64xbf16> to vector<1x16x64xbf16>
    tpu.vector_store %arg7[%c7_509, %c96_510, %c0_511], %692 {strides = array<i32>} : memref<8x128x192xbf16, #tpu.memory_space<vmem>>, vector<1x16x64xbf16>,
    %693 = vector.extract_strided_slice %604 {offsets = [352, 0], sizes = [16, 64], strides = [1, 1]} : vector<384x64xbf16> to vector<16x64xbf16>
    %c7_512 = arith.constant 7 : index
    %c96_513 = arith.constant 96 : index
    %c64_514 = arith.constant 64 : index
    %694 = vector.load %arg7[%c7_512, %c96_513, %c64_514] : memref<8x128x192xbf16, #tpu.memory_space<vmem>>, vector<1x16x64xbf16>
    %695 = vector.shape_cast %694 : vector<1x16x64xbf16> to vector<16x64xbf16>
    %696 = vector.shape_cast %693 : vector<16x64xbf16> to vector<1x16x64xbf16>
    tpu.vector_store %arg7[%c7_512, %c96_513, %c64_514], %696 {strides = array<i32>} : memref<8x128x192xbf16, #tpu.memory_space<vmem>>, vector<1x16x64xbf16>,
    %697 = vector.extract_strided_slice %604 {offsets = [368, 0], sizes = [16, 64], strides = [1, 1]} : vector<384x64xbf16> to vector<16x64xbf16>
    %c7_515 = arith.constant 7 : index
    %c96_516 = arith.constant 96 : index
    %c128_517 = arith.constant 128 : index
    %698 = vector.load %arg7[%c7_515, %c96_516, %c128_517] : memref<8x128x192xbf16, #tpu.memory_space<vmem>>, vector<1x16x64xbf16>
    %699 = vector.shape_cast %698 : vector<1x16x64xbf16> to vector<16x64xbf16>
    %700 = vector.shape_cast %697 : vector<16x64xbf16> to vector<1x16x64xbf16>
    tpu.vector_store %arg7[%c7_515, %c96_516, %c128_517], %700 {strides = array<i32>} : memref<8x128x192xbf16, #tpu.memory_space<vmem>>, vector<1x16x64xbf16>,
    %c7_518 = arith.constant 7 : index
    %c0_519 = arith.constant 0 : index
    %c0_520 = arith.constant 0 : index
    %701 = vector.load %arg1[%c7_518, %c0_519, %c0_520] : memref<8x16x64xbf16, #tpu.memory_space<vmem>>, vector<1x16x64xbf16>
    %702 = vector.shape_cast %701 : vector<1x16x64xbf16> to vector<16x64xbf16>
    %cst_521 = arith.constant dense<0.000000e+00> : vector<384x64xf32>
    %703 = tpu.matmul %0, %702, %cst_521 {dimension_numbers = #tpu.dot_dimension_numbers<[1], [0], [0], [1], [0, 0, 1, 1], [], []>} : vector<384x16xbf16>, vector<16x64xbf16>, vector<384x64xf32> -> vector<384x64xf32>
    %704 = arith.truncf %703 : vector<384x64xf32> to vector<384x64xbf16>
    %705 = vector.extract_strided_slice %704 {offsets = [0, 0], sizes = [16, 64], strides = [1, 1]} : vector<384x64xbf16> to vector<16x64xbf16>
    %c0_522 = arith.constant 0 : index
    %c112 = arith.constant 112 : index
    %c0_523 = arith.constant 0 : index
    %706 = vector.load %arg7[%c0_522, %c112, %c0_523] : memref<8x128x192xbf16, #tpu.memory_space<vmem>>, vector<1x16x64xbf16>
    %707 = vector.shape_cast %706 : vector<1x16x64xbf16> to vector<16x64xbf16>
    %708 = vector.shape_cast %705 : vector<16x64xbf16> to vector<1x16x64xbf16>
    tpu.vector_store %arg7[%c0_522, %c112, %c0_523], %708 {strides = array<i32>} : memref<8x128x192xbf16, #tpu.memory_space<vmem>>, vector<1x16x64xbf16>,
    %709 = vector.extract_strided_slice %704 {offsets = [16, 0], sizes = [16, 64], strides = [1, 1]} : vector<384x64xbf16> to vector<16x64xbf16>
    %c0_524 = arith.constant 0 : index
    %c112_525 = arith.constant 112 : index
    %c64_526 = arith.constant 64 : index
    %710 = vector.load %arg7[%c0_524, %c112_525, %c64_526] : memref<8x128x192xbf16, #tpu.memory_space<vmem>>, vector<1x16x64xbf16>
    %711 = vector.shape_cast %710 : vector<1x16x64xbf16> to vector<16x64xbf16>
    %712 = vector.shape_cast %709 : vector<16x64xbf16> to vector<1x16x64xbf16>
    tpu.vector_store %arg7[%c0_524, %c112_525, %c64_526], %712 {strides = array<i32>} : memref<8x128x192xbf16, #tpu.memory_space<vmem>>, vector<1x16x64xbf16>,
    %713 = vector.extract_strided_slice %704 {offsets = [32, 0], sizes = [16, 64], strides = [1, 1]} : vector<384x64xbf16> to vector<16x64xbf16>
    %c0_527 = arith.constant 0 : index
    %c112_528 = arith.constant 112 : index
    %c128_529 = arith.constant 128 : index
    %714 = vector.load %arg7[%c0_527, %c112_528, %c128_529] : memref<8x128x192xbf16, #tpu.memory_space<vmem>>, vector<1x16x64xbf16>
    %715 = vector.shape_cast %714 : vector<1x16x64xbf16> to vector<16x64xbf16>
    %716 = vector.shape_cast %713 : vector<16x64xbf16> to vector<1x16x64xbf16>
    tpu.vector_store %arg7[%c0_527, %c112_528, %c128_529], %716 {strides = array<i32>} : memref<8x128x192xbf16, #tpu.memory_space<vmem>>, vector<1x16x64xbf16>,
    %717 = vector.extract_strided_slice %704 {offsets = [48, 0], sizes = [16, 64], strides = [1, 1]} : vector<384x64xbf16> to vector<16x64xbf16>
    %c1_530 = arith.constant 1 : index
    %c112_531 = arith.constant 112 : index
    %c0_532 = arith.constant 0 : index
    %718 = vector.load %arg7[%c1_530, %c112_531, %c0_532] : memref<8x128x192xbf16, #tpu.memory_space<vmem>>, vector<1x16x64xbf16>
    %719 = vector.shape_cast %718 : vector<1x16x64xbf16> to vector<16x64xbf16>
    %720 = vector.shape_cast %717 : vector<16x64xbf16> to vector<1x16x64xbf16>
    tpu.vector_store %arg7[%c1_530, %c112_531, %c0_532], %720 {strides = array<i32>} : memref<8x128x192xbf16, #tpu.memory_space<vmem>>, vector<1x16x64xbf16>,
    %721 = vector.extract_strided_slice %704 {offsets = [64, 0], sizes = [16, 64], strides = [1, 1]} : vector<384x64xbf16> to vector<16x64xbf16>
    %c1_533 = arith.constant 1 : index
    %c112_534 = arith.constant 112 : index
    %c64_535 = arith.constant 64 : index
    %722 = vector.load %arg7[%c1_533, %c112_534, %c64_535] : memref<8x128x192xbf16, #tpu.memory_space<vmem>>, vector<1x16x64xbf16>
    %723 = vector.shape_cast %722 : vector<1x16x64xbf16> to vector<16x64xbf16>
    %724 = vector.shape_cast %721 : vector<16x64xbf16> to vector<1x16x64xbf16>
    tpu.vector_store %arg7[%c1_533, %c112_534, %c64_535], %724 {strides = array<i32>} : memref<8x128x192xbf16, #tpu.memory_space<vmem>>, vector<1x16x64xbf16>,
    %725 = vector.extract_strided_slice %704 {offsets = [80, 0], sizes = [16, 64], strides = [1, 1]} : vector<384x64xbf16> to vector<16x64xbf16>
    %c1_536 = arith.constant 1 : index
    %c112_537 = arith.constant 112 : index
    %c128_538 = arith.constant 128 : index
    %726 = vector.load %arg7[%c1_536, %c112_537, %c128_538] : memref<8x128x192xbf16, #tpu.memory_space<vmem>>, vector<1x16x64xbf16>
    %727 = vector.shape_cast %726 : vector<1x16x64xbf16> to vector<16x64xbf16>
    %728 = vector.shape_cast %725 : vector<16x64xbf16> to vector<1x16x64xbf16>
    tpu.vector_store %arg7[%c1_536, %c112_537, %c128_538], %728 {strides = array<i32>} : memref<8x128x192xbf16, #tpu.memory_space<vmem>>, vector<1x16x64xbf16>,
    %729 = vector.extract_strided_slice %704 {offsets = [96, 0], sizes = [16, 64], strides = [1, 1]} : vector<384x64xbf16> to vector<16x64xbf16>
    %c2_539 = arith.constant 2 : index
    %c112_540 = arith.constant 112 : index
    %c0_541 = arith.constant 0 : index
    %730 = vector.load %arg7[%c2_539, %c112_540, %c0_541] : memref<8x128x192xbf16, #tpu.memory_space<vmem>>, vector<1x16x64xbf16>
    %731 = vector.shape_cast %730 : vector<1x16x64xbf16> to vector<16x64xbf16>
    %732 = vector.shape_cast %729 : vector<16x64xbf16> to vector<1x16x64xbf16>
    tpu.vector_store %arg7[%c2_539, %c112_540, %c0_541], %732 {strides = array<i32>} : memref<8x128x192xbf16, #tpu.memory_space<vmem>>, vector<1x16x64xbf16>,
    %733 = vector.extract_strided_slice %704 {offsets = [112, 0], sizes = [16, 64], strides = [1, 1]} : vector<384x64xbf16> to vector<16x64xbf16>
    %c2_542 = arith.constant 2 : index
    %c112_543 = arith.constant 112 : index
    %c64_544 = arith.constant 64 : index
    %734 = vector.load %arg7[%c2_542, %c112_543, %c64_544] : memref<8x128x192xbf16, #tpu.memory_space<vmem>>, vector<1x16x64xbf16>
    %735 = vector.shape_cast %734 : vector<1x16x64xbf16> to vector<16x64xbf16>
    %736 = vector.shape_cast %733 : vector<16x64xbf16> to vector<1x16x64xbf16>
    tpu.vector_store %arg7[%c2_542, %c112_543, %c64_544], %736 {strides = array<i32>} : memref<8x128x192xbf16, #tpu.memory_space<vmem>>, vector<1x16x64xbf16>,
    %737 = vector.extract_strided_slice %704 {offsets = [128, 0], sizes = [16, 64], strides = [1, 1]} : vector<384x64xbf16> to vector<16x64xbf16>
    %c2_545 = arith.constant 2 : index
    %c112_546 = arith.constant 112 : index
    %c128_547 = arith.constant 128 : index
    %738 = vector.load %arg7[%c2_545, %c112_546, %c128_547] : memref<8x128x192xbf16, #tpu.memory_space<vmem>>, vector<1x16x64xbf16>
    %739 = vector.shape_cast %738 : vector<1x16x64xbf16> to vector<16x64xbf16>
    %740 = vector.shape_cast %737 : vector<16x64xbf16> to vector<1x16x64xbf16>
    tpu.vector_store %arg7[%c2_545, %c112_546, %c128_547], %740 {strides = array<i32>} : memref<8x128x192xbf16, #tpu.memory_space<vmem>>, vector<1x16x64xbf16>,
    %741 = vector.extract_strided_slice %704 {offsets = [144, 0], sizes = [16, 64], strides = [1, 1]} : vector<384x64xbf16> to vector<16x64xbf16>
    %c3_548 = arith.constant 3 : index
    %c112_549 = arith.constant 112 : index
    %c0_550 = arith.constant 0 : index
    %742 = vector.load %arg7[%c3_548, %c112_549, %c0_550] : memref<8x128x192xbf16, #tpu.memory_space<vmem>>, vector<1x16x64xbf16>
    %743 = vector.shape_cast %742 : vector<1x16x64xbf16> to vector<16x64xbf16>
    %744 = vector.shape_cast %741 : vector<16x64xbf16> to vector<1x16x64xbf16>
    tpu.vector_store %arg7[%c3_548, %c112_549, %c0_550], %744 {strides = array<i32>} : memref<8x128x192xbf16, #tpu.memory_space<vmem>>, vector<1x16x64xbf16>,
    %745 = vector.extract_strided_slice %704 {offsets = [160, 0], sizes = [16, 64], strides = [1, 1]} : vector<384x64xbf16> to vector<16x64xbf16>
    %c3_551 = arith.constant 3 : index
    %c112_552 = arith.constant 112 : index
    %c64_553 = arith.constant 64 : index
    %746 = vector.load %arg7[%c3_551, %c112_552, %c64_553] : memref<8x128x192xbf16, #tpu.memory_space<vmem>>, vector<1x16x64xbf16>
    %747 = vector.shape_cast %746 : vector<1x16x64xbf16> to vector<16x64xbf16>
    %748 = vector.shape_cast %745 : vector<16x64xbf16> to vector<1x16x64xbf16>
    tpu.vector_store %arg7[%c3_551, %c112_552, %c64_553], %748 {strides = array<i32>} : memref<8x128x192xbf16, #tpu.memory_space<vmem>>, vector<1x16x64xbf16>,
    %749 = vector.extract_strided_slice %704 {offsets = [176, 0], sizes = [16, 64], strides = [1, 1]} : vector<384x64xbf16> to vector<16x64xbf16>
    %c3_554 = arith.constant 3 : index
    %c112_555 = arith.constant 112 : index
    %c128_556 = arith.constant 128 : index
    %750 = vector.load %arg7[%c3_554, %c112_555, %c128_556] : memref<8x128x192xbf16, #tpu.memory_space<vmem>>, vector<1x16x64xbf16>
    %751 = vector.shape_cast %750 : vector<1x16x64xbf16> to vector<16x64xbf16>
    %752 = vector.shape_cast %749 : vector<16x64xbf16> to vector<1x16x64xbf16>
    tpu.vector_store %arg7[%c3_554, %c112_555, %c128_556], %752 {strides = array<i32>} : memref<8x128x192xbf16, #tpu.memory_space<vmem>>, vector<1x16x64xbf16>,
    %753 = vector.extract_strided_slice %704 {offsets = [192, 0], sizes = [16, 64], strides = [1, 1]} : vector<384x64xbf16> to vector<16x64xbf16>
    %c4_557 = arith.constant 4 : index
    %c112_558 = arith.constant 112 : index
    %c0_559 = arith.constant 0 : index
    %754 = vector.load %arg7[%c4_557, %c112_558, %c0_559] : memref<8x128x192xbf16, #tpu.memory_space<vmem>>, vector<1x16x64xbf16>
    %755 = vector.shape_cast %754 : vector<1x16x64xbf16> to vector<16x64xbf16>
    %756 = vector.shape_cast %753 : vector<16x64xbf16> to vector<1x16x64xbf16>
    tpu.vector_store %arg7[%c4_557, %c112_558, %c0_559], %756 {strides = array<i32>} : memref<8x128x192xbf16, #tpu.memory_space<vmem>>, vector<1x16x64xbf16>,
    %757 = vector.extract_strided_slice %704 {offsets = [208, 0], sizes = [16, 64], strides = [1, 1]} : vector<384x64xbf16> to vector<16x64xbf16>
    %c4_560 = arith.constant 4 : index
    %c112_561 = arith.constant 112 : index
    %c64_562 = arith.constant 64 : index
    %758 = vector.load %arg7[%c4_560, %c112_561, %c64_562] : memref<8x128x192xbf16, #tpu.memory_space<vmem>>, vector<1x16x64xbf16>
    %759 = vector.shape_cast %758 : vector<1x16x64xbf16> to vector<16x64xbf16>
    %760 = vector.shape_cast %757 : vector<16x64xbf16> to vector<1x16x64xbf16>
    tpu.vector_store %arg7[%c4_560, %c112_561, %c64_562], %760 {strides = array<i32>} : memref<8x128x192xbf16, #tpu.memory_space<vmem>>, vector<1x16x64xbf16>,
    %761 = vector.extract_strided_slice %704 {offsets = [224, 0], sizes = [16, 64], strides = [1, 1]} : vector<384x64xbf16> to vector<16x64xbf16>
    %c4_563 = arith.constant 4 : index
    %c112_564 = arith.constant 112 : index
    %c128_565 = arith.constant 128 : index
    %762 = vector.load %arg7[%c4_563, %c112_564, %c128_565] : memref<8x128x192xbf16, #tpu.memory_space<vmem>>, vector<1x16x64xbf16>
    %763 = vector.shape_cast %762 : vector<1x16x64xbf16> to vector<16x64xbf16>
    %764 = vector.shape_cast %761 : vector<16x64xbf16> to vector<1x16x64xbf16>
    tpu.vector_store %arg7[%c4_563, %c112_564, %c128_565], %764 {strides = array<i32>} : memref<8x128x192xbf16, #tpu.memory_space<vmem>>, vector<1x16x64xbf16>,
    %765 = vector.extract_strided_slice %704 {offsets = [240, 0], sizes = [16, 64], strides = [1, 1]} : vector<384x64xbf16> to vector<16x64xbf16>
    %c5_566 = arith.constant 5 : index
    %c112_567 = arith.constant 112 : index
    %c0_568 = arith.constant 0 : index
    %766 = vector.load %arg7[%c5_566, %c112_567, %c0_568] : memref<8x128x192xbf16, #tpu.memory_space<vmem>>, vector<1x16x64xbf16>
    %767 = vector.shape_cast %766 : vector<1x16x64xbf16> to vector<16x64xbf16>
    %768 = vector.shape_cast %765 : vector<16x64xbf16> to vector<1x16x64xbf16>
    tpu.vector_store %arg7[%c5_566, %c112_567, %c0_568], %768 {strides = array<i32>} : memref<8x128x192xbf16, #tpu.memory_space<vmem>>, vector<1x16x64xbf16>,
    %769 = vector.extract_strided_slice %704 {offsets = [256, 0], sizes = [16, 64], strides = [1, 1]} : vector<384x64xbf16> to vector<16x64xbf16>
    %c5_569 = arith.constant 5 : index
    %c112_570 = arith.constant 112 : index
    %c64_571 = arith.constant 64 : index
    %770 = vector.load %arg7[%c5_569, %c112_570, %c64_571] : memref<8x128x192xbf16, #tpu.memory_space<vmem>>, vector<1x16x64xbf16>
    %771 = vector.shape_cast %770 : vector<1x16x64xbf16> to vector<16x64xbf16>
    %772 = vector.shape_cast %769 : vector<16x64xbf16> to vector<1x16x64xbf16>
    tpu.vector_store %arg7[%c5_569, %c112_570, %c64_571], %772 {strides = array<i32>} : memref<8x128x192xbf16, #tpu.memory_space<vmem>>, vector<1x16x64xbf16>,
    %773 = vector.extract_strided_slice %704 {offsets = [272, 0], sizes = [16, 64], strides = [1, 1]} : vector<384x64xbf16> to vector<16x64xbf16>
    %c5_572 = arith.constant 5 : index
    %c112_573 = arith.constant 112 : index
    %c128_574 = arith.constant 128 : index
    %774 = vector.load %arg7[%c5_572, %c112_573, %c128_574] : memref<8x128x192xbf16, #tpu.memory_space<vmem>>, vector<1x16x64xbf16>
    %775 = vector.shape_cast %774 : vector<1x16x64xbf16> to vector<16x64xbf16>
    %776 = vector.shape_cast %773 : vector<16x64xbf16> to vector<1x16x64xbf16>
    tpu.vector_store %arg7[%c5_572, %c112_573, %c128_574], %776 {strides = array<i32>} : memref<8x128x192xbf16, #tpu.memory_space<vmem>>, vector<1x16x64xbf16>,
    %777 = vector.extract_strided_slice %704 {offsets = [288, 0], sizes = [16, 64], strides = [1, 1]} : vector<384x64xbf16> to vector<16x64xbf16>
    %c6_575 = arith.constant 6 : index
    %c112_576 = arith.constant 112 : index
    %c0_577 = arith.constant 0 : index
    %778 = vector.load %arg7[%c6_575, %c112_576, %c0_577] : memref<8x128x192xbf16, #tpu.memory_space<vmem>>, vector<1x16x64xbf16>
    %779 = vector.shape_cast %778 : vector<1x16x64xbf16> to vector<16x64xbf16>
    %780 = vector.shape_cast %777 : vector<16x64xbf16> to vector<1x16x64xbf16>
    tpu.vector_store %arg7[%c6_575, %c112_576, %c0_577], %780 {strides = array<i32>} : memref<8x128x192xbf16, #tpu.memory_space<vmem>>, vector<1x16x64xbf16>,
    %781 = vector.extract_strided_slice %704 {offsets = [304, 0], sizes = [16, 64], strides = [1, 1]} : vector<384x64xbf16> to vector<16x64xbf16>
    %c6_578 = arith.constant 6 : index
    %c112_579 = arith.constant 112 : index
    %c64_580 = arith.constant 64 : index
    %782 = vector.load %arg7[%c6_578, %c112_579, %c64_580] : memref<8x128x192xbf16, #tpu.memory_space<vmem>>, vector<1x16x64xbf16>
    %783 = vector.shape_cast %782 : vector<1x16x64xbf16> to vector<16x64xbf16>
    %784 = vector.shape_cast %781 : vector<16x64xbf16> to vector<1x16x64xbf16>
    tpu.vector_store %arg7[%c6_578, %c112_579, %c64_580], %784 {strides = array<i32>} : memref<8x128x192xbf16, #tpu.memory_space<vmem>>, vector<1x16x64xbf16>,
    %785 = vector.extract_strided_slice %704 {offsets = [320, 0], sizes = [16, 64], strides = [1, 1]} : vector<384x64xbf16> to vector<16x64xbf16>
    %c6_581 = arith.constant 6 : index
    %c112_582 = arith.constant 112 : index
    %c128_583 = arith.constant 128 : index
    %786 = vector.load %arg7[%c6_581, %c112_582, %c128_583] : memref<8x128x192xbf16, #tpu.memory_space<vmem>>, vector<1x16x64xbf16>
    %787 = vector.shape_cast %786 : vector<1x16x64xbf16> to vector<16x64xbf16>
    %788 = vector.shape_cast %785 : vector<16x64xbf16> to vector<1x16x64xbf16>
    tpu.vector_store %arg7[%c6_581, %c112_582, %c128_583], %788 {strides = array<i32>} : memref<8x128x192xbf16, #tpu.memory_space<vmem>>, vector<1x16x64xbf16>,
    %789 = vector.extract_strided_slice %704 {offsets = [336, 0], sizes = [16, 64], strides = [1, 1]} : vector<384x64xbf16> to vector<16x64xbf16>
    %c7_584 = arith.constant 7 : index
    %c112_585 = arith.constant 112 : index
    %c0_586 = arith.constant 0 : index
    %790 = vector.load %arg7[%c7_584, %c112_585, %c0_586] : memref<8x128x192xbf16, #tpu.memory_space<vmem>>, vector<1x16x64xbf16>
    %791 = vector.shape_cast %790 : vector<1x16x64xbf16> to vector<16x64xbf16>
    %792 = vector.shape_cast %789 : vector<16x64xbf16> to vector<1x16x64xbf16>
    tpu.vector_store %arg7[%c7_584, %c112_585, %c0_586], %792 {strides = array<i32>} : memref<8x128x192xbf16, #tpu.memory_space<vmem>>, vector<1x16x64xbf16>,
    %793 = vector.extract_strided_slice %704 {offsets = [352, 0], sizes = [16, 64], strides = [1, 1]} : vector<384x64xbf16> to vector<16x64xbf16>
    %c7_587 = arith.constant 7 : index
    %c112_588 = arith.constant 112 : index
    %c64_589 = arith.constant 64 : index
    %794 = vector.load %arg7[%c7_587, %c112_588, %c64_589] : memref<8x128x192xbf16, #tpu.memory_space<vmem>>, vector<1x16x64xbf16>
    %795 = vector.shape_cast %794 : vector<1x16x64xbf16> to vector<16x64xbf16>
    %796 = vector.shape_cast %793 : vector<16x64xbf16> to vector<1x16x64xbf16>
    tpu.vector_store %arg7[%c7_587, %c112_588, %c64_589], %796 {strides = array<i32>} : memref<8x128x192xbf16, #tpu.memory_space<vmem>>, vector<1x16x64xbf16>,
    %797 = vector.extract_strided_slice %704 {offsets = [368, 0], sizes = [16, 64], strides = [1, 1]} : vector<384x64xbf16> to vector<16x64xbf16>
    %c7_590 = arith.constant 7 : index
    %c112_591 = arith.constant 112 : index
    %c128_592 = arith.constant 128 : index
    %798 = vector.load %arg7[%c7_590, %c112_591, %c128_592] : memref<8x128x192xbf16, #tpu.memory_space<vmem>>, vector<1x16x64xbf16>
    %799 = vector.shape_cast %798 : vector<1x16x64xbf16> to vector<16x64xbf16>
    %800 = vector.shape_cast %797 : vector<16x64xbf16> to vector<1x16x64xbf16>
    tpu.vector_store %arg7[%c7_590, %c112_591, %c128_592], %800 {strides = array<i32>} : memref<8x128x192xbf16, #tpu.memory_space<vmem>>, vector<1x16x64xbf16>,
    %c0_593 = arith.constant 0 : index
    %c0_594 = arith.constant 0 : index
    %c0_595 = arith.constant 0 : index
    %801 = vector.load %arg7[%c0_593, %c0_594, %c0_595] : memref<8x128x192xbf16, #tpu.memory_space<vmem>>, vector<1x128x192xbf16>
    %802 = vector.shape_cast %801 : vector<1x128x192xbf16> to vector<128x192xbf16>
    %c0_596 = arith.constant 0 : index
    %c0_597 = arith.constant 0 : index
    %c0_598 = arith.constant 0 : index
    %803 = vector.load %arg3[%c0_596, %c0_597, %c0_598] : memref<8x192x128xbf16, #tpu.memory_space<vmem>>, vector<1x192x128xbf16>
    %804 = vector.shape_cast %803 : vector<1x192x128xbf16> to vector<192x128xbf16>
    %cst_599 = arith.constant dense<0.000000e+00> : vector<128x128xf32>
    %805 = tpu.matmul %802, %804, %cst_599 {dimension_numbers = #tpu.dot_dimension_numbers<[1], [0], [0], [1], [0, 0, 1, 1], [], []>} : vector<128x192xbf16>, vector<192x128xbf16>, vector<128x128xf32> -> vector<128x128xf32>
    %c0_600 = arith.constant 0 : index
    %c0_601 = arith.constant 0 : index
    %c0_602 = arith.constant 0 : index
    %806 = vector.load %arg6[%c0_600, %c0_601, %c0_602] : memref<8x128x128xf32, #tpu.memory_space<vmem>>, vector<1x128x128xf32>
    %807 = vector.shape_cast %806 : vector<1x128x128xf32> to vector<128x128xf32>
    %808 = vector.shape_cast %805 : vector<128x128xf32> to vector<1x128x128xf32>
    tpu.vector_store %arg6[%c0_600, %c0_601, %c0_602], %808 {strides = array<i32>} : memref<8x128x128xf32, #tpu.memory_space<vmem>>, vector<1x128x128xf32>,
    %c0_603 = arith.constant 0 : index
    %c0_604 = arith.constant 0 : index
    %809 = vector.load %arg8[%c0_603, %c0_604] : memref<128x128xf32, #tpu.memory_space<vmem>>, vector<128x128xf32>
    tpu.vector_store %arg8[%c0_603, %c0_604], %805 {strides = array<i32>} : memref<128x128xf32, #tpu.memory_space<vmem>>, vector<128x128xf32>,
    %c0_i32 = arith.constant 0 : i32
    %810 = vector.broadcast %c0_i32 : i32 to vector<128x128xi32>
    %c0_605 = arith.constant 0 : index
    %c0_606 = arith.constant 0 : index
    %811 = vector.load %arg9[%c0_605, %c0_606] : memref<128x128xi32, #tpu.memory_space<vmem>>, vector<128x128xi32>
    tpu.vector_store %arg9[%c0_605, %c0_606], %810 {strides = array<i32>} : memref<128x128xi32, #tpu.memory_space<vmem>>, vector<128x128xi32>,
    %c1_607 = arith.constant 1 : index
    %c0_608 = arith.constant 0 : index
    %c0_609 = arith.constant 0 : index
    %812 = vector.load %arg7[%c1_607, %c0_608, %c0_609] : memref<8x128x192xbf16, #tpu.memory_space<vmem>>, vector<1x128x192xbf16>
    %813 = vector.shape_cast %812 : vector<1x128x192xbf16> to vector<128x192xbf16>
    %c1_610 = arith.constant 1 : index
    %c0_611 = arith.constant 0 : index
    %c0_612 = arith.constant 0 : index
    %814 = vector.load %arg3[%c1_610, %c0_611, %c0_612] : memref<8x192x128xbf16, #tpu.memory_space<vmem>>, vector<1x192x128xbf16>
    %815 = vector.shape_cast %814 : vector<1x192x128xbf16> to vector<192x128xbf16>
    %cst_613 = arith.constant dense<0.000000e+00> : vector<128x128xf32>
    %816 = tpu.matmul %813, %815, %cst_613 {dimension_numbers = #tpu.dot_dimension_numbers<[1], [0], [0], [1], [0, 0, 1, 1], [], []>} : vector<128x192xbf16>, vector<192x128xbf16>, vector<128x128xf32> -> vector<128x128xf32>
    %c1_614 = arith.constant 1 : index
    %c0_615 = arith.constant 0 : index
    %c0_616 = arith.constant 0 : index
    %817 = vector.load %arg6[%c1_614, %c0_615, %c0_616] : memref<8x128x128xf32, #tpu.memory_space<vmem>>, vector<1x128x128xf32>
    %818 = vector.shape_cast %817 : vector<1x128x128xf32> to vector<128x128xf32>
    %819 = vector.shape_cast %816 : vector<128x128xf32> to vector<1x128x128xf32>
    tpu.vector_store %arg6[%c1_614, %c0_615, %c0_616], %819 {strides = array<i32>} : memref<8x128x128xf32, #tpu.memory_space<vmem>>, vector<1x128x128xf32>,
    %c0_617 = arith.constant 0 : index
    %c0_618 = arith.constant 0 : index
    %820 = vector.load %arg8[%c0_617, %c0_618] : memref<128x128xf32, #tpu.memory_space<vmem>>, vector<128x128xf32>
    %821 = arith.cmpf ogt, %816, %820 : vector<128x128xf32>
    %822 = arith.select %821, %816, %820 : vector<128x128xi1>, vector<128x128xf32>
    %c0_619 = arith.constant 0 : index
    %c0_620 = arith.constant 0 : index
    %823 = vector.load %arg8[%c0_619, %c0_620] : memref<128x128xf32, #tpu.memory_space<vmem>>, vector<128x128xf32>
    tpu.vector_store %arg8[%c0_619, %c0_620], %822 {strides = array<i32>} : memref<128x128xf32, #tpu.memory_space<vmem>>, vector<128x128xf32>,
    %c0_621 = arith.constant 0 : index
    %c0_622 = arith.constant 0 : index
    %824 = vector.load %arg9[%c0_621, %c0_622] : memref<128x128xi32, #tpu.memory_space<vmem>>, vector<128x128xi32>
    %c1_i32 = arith.constant 1 : i32
    %825 = vector.broadcast %c1_i32 : i32 to vector<128x128xi32>
    %826 = arith.select %821, %825, %824 : vector<128x128xi1>, vector<128x128xi32>
    %c0_623 = arith.constant 0 : index
    %c0_624 = arith.constant 0 : index
    %827 = vector.load %arg9[%c0_623, %c0_624] : memref<128x128xi32, #tpu.memory_space<vmem>>, vector<128x128xi32>
    tpu.vector_store %arg9[%c0_623, %c0_624], %826 {strides = array<i32>} : memref<128x128xi32, #tpu.memory_space<vmem>>, vector<128x128xi32>,
    %c2_625 = arith.constant 2 : index
    %c0_626 = arith.constant 0 : index
    %c0_627 = arith.constant 0 : index
    %828 = vector.load %arg7[%c2_625, %c0_626, %c0_627] : memref<8x128x192xbf16, #tpu.memory_space<vmem>>, vector<1x128x192xbf16>
    %829 = vector.shape_cast %828 : vector<1x128x192xbf16> to vector<128x192xbf16>
    %c2_628 = arith.constant 2 : index
    %c0_629 = arith.constant 0 : index
    %c0_630 = arith.constant 0 : index
    %830 = vector.load %arg3[%c2_628, %c0_629, %c0_630] : memref<8x192x128xbf16, #tpu.memory_space<vmem>>, vector<1x192x128xbf16>
    %831 = vector.shape_cast %830 : vector<1x192x128xbf16> to vector<192x128xbf16>
    %cst_631 = arith.constant dense<0.000000e+00> : vector<128x128xf32>
    %832 = tpu.matmul %829, %831, %cst_631 {dimension_numbers = #tpu.dot_dimension_numbers<[1], [0], [0], [1], [0, 0, 1, 1], [], []>} : vector<128x192xbf16>, vector<192x128xbf16>, vector<128x128xf32> -> vector<128x128xf32>
    %c2_632 = arith.constant 2 : index
    %c0_633 = arith.constant 0 : index
    %c0_634 = arith.constant 0 : index
    %833 = vector.load %arg6[%c2_632, %c0_633, %c0_634] : memref<8x128x128xf32, #tpu.memory_space<vmem>>, vector<1x128x128xf32>
    %834 = vector.shape_cast %833 : vector<1x128x128xf32> to vector<128x128xf32>
    %835 = vector.shape_cast %832 : vector<128x128xf32> to vector<1x128x128xf32>
    tpu.vector_store %arg6[%c2_632, %c0_633, %c0_634], %835 {strides = array<i32>} : memref<8x128x128xf32, #tpu.memory_space<vmem>>, vector<1x128x128xf32>,
    %c0_635 = arith.constant 0 : index
    %c0_636 = arith.constant 0 : index
    %836 = vector.load %arg8[%c0_635, %c0_636] : memref<128x128xf32, #tpu.memory_space<vmem>>, vector<128x128xf32>
    %837 = arith.cmpf ogt, %832, %836 : vector<128x128xf32>
    %838 = arith.select %837, %832, %836 : vector<128x128xi1>, vector<128x128xf32>
    %c0_637 = arith.constant 0 : index
    %c0_638 = arith.constant 0 : index
    %839 = vector.load %arg8[%c0_637, %c0_638] : memref<128x128xf32, #tpu.memory_space<vmem>>, vector<128x128xf32>
    tpu.vector_store %arg8[%c0_637, %c0_638], %838 {strides = array<i32>} : memref<128x128xf32, #tpu.memory_space<vmem>>, vector<128x128xf32>,
    %c0_639 = arith.constant 0 : index
    %c0_640 = arith.constant 0 : index
    %840 = vector.load %arg9[%c0_639, %c0_640] : memref<128x128xi32, #tpu.memory_space<vmem>>, vector<128x128xi32>
    %c2_i32 = arith.constant 2 : i32
    %841 = vector.broadcast %c2_i32 : i32 to vector<128x128xi32>
    %842 = arith.select %837, %841, %840 : vector<128x128xi1>, vector<128x128xi32>
    %c0_641 = arith.constant 0 : index
    %c0_642 = arith.constant 0 : index
    %843 = vector.load %arg9[%c0_641, %c0_642] : memref<128x128xi32, #tpu.memory_space<vmem>>, vector<128x128xi32>
    tpu.vector_store %arg9[%c0_641, %c0_642], %842 {strides = array<i32>} : memref<128x128xi32, #tpu.memory_space<vmem>>, vector<128x128xi32>,
    %c3_643 = arith.constant 3 : index
    %c0_644 = arith.constant 0 : index
    %c0_645 = arith.constant 0 : index
    %844 = vector.load %arg7[%c3_643, %c0_644, %c0_645] : memref<8x128x192xbf16, #tpu.memory_space<vmem>>, vector<1x128x192xbf16>
    %845 = vector.shape_cast %844 : vector<1x128x192xbf16> to vector<128x192xbf16>
    %c3_646 = arith.constant 3 : index
    %c0_647 = arith.constant 0 : index
    %c0_648 = arith.constant 0 : index
    %846 = vector.load %arg3[%c3_646, %c0_647, %c0_648] : memref<8x192x128xbf16, #tpu.memory_space<vmem>>, vector<1x192x128xbf16>
    %847 = vector.shape_cast %846 : vector<1x192x128xbf16> to vector<192x128xbf16>
    %cst_649 = arith.constant dense<0.000000e+00> : vector<128x128xf32>
    %848 = tpu.matmul %845, %847, %cst_649 {dimension_numbers = #tpu.dot_dimension_numbers<[1], [0], [0], [1], [0, 0, 1, 1], [], []>} : vector<128x192xbf16>, vector<192x128xbf16>, vector<128x128xf32> -> vector<128x128xf32>
    %c3_650 = arith.constant 3 : index
    %c0_651 = arith.constant 0 : index
    %c0_652 = arith.constant 0 : index
    %849 = vector.load %arg6[%c3_650, %c0_651, %c0_652] : memref<8x128x128xf32, #tpu.memory_space<vmem>>, vector<1x128x128xf32>
    %850 = vector.shape_cast %849 : vector<1x128x128xf32> to vector<128x128xf32>
    %851 = vector.shape_cast %848 : vector<128x128xf32> to vector<1x128x128xf32>
    tpu.vector_store %arg6[%c3_650, %c0_651, %c0_652], %851 {strides = array<i32>} : memref<8x128x128xf32, #tpu.memory_space<vmem>>, vector<1x128x128xf32>,
    %c0_653 = arith.constant 0 : index
    %c0_654 = arith.constant 0 : index
    %852 = vector.load %arg8[%c0_653, %c0_654] : memref<128x128xf32, #tpu.memory_space<vmem>>, vector<128x128xf32>
    %853 = arith.cmpf ogt, %848, %852 : vector<128x128xf32>
    %854 = arith.select %853, %848, %852 : vector<128x128xi1>, vector<128x128xf32>
    %c0_655 = arith.constant 0 : index
    %c0_656 = arith.constant 0 : index
    %855 = vector.load %arg8[%c0_655, %c0_656] : memref<128x128xf32, #tpu.memory_space<vmem>>, vector<128x128xf32>
    tpu.vector_store %arg8[%c0_655, %c0_656], %854 {strides = array<i32>} : memref<128x128xf32, #tpu.memory_space<vmem>>, vector<128x128xf32>,
    %c0_657 = arith.constant 0 : index
    %c0_658 = arith.constant 0 : index
    %856 = vector.load %arg9[%c0_657, %c0_658] : memref<128x128xi32, #tpu.memory_space<vmem>>, vector<128x128xi32>
    %c3_i32 = arith.constant 3 : i32
    %857 = vector.broadcast %c3_i32 : i32 to vector<128x128xi32>
    %858 = arith.select %853, %857, %856 : vector<128x128xi1>, vector<128x128xi32>
    %c0_659 = arith.constant 0 : index
    %c0_660 = arith.constant 0 : index
    %859 = vector.load %arg9[%c0_659, %c0_660] : memref<128x128xi32, #tpu.memory_space<vmem>>, vector<128x128xi32>
    tpu.vector_store %arg9[%c0_659, %c0_660], %858 {strides = array<i32>} : memref<128x128xi32, #tpu.memory_space<vmem>>, vector<128x128xi32>,
    %c4_661 = arith.constant 4 : index
    %c0_662 = arith.constant 0 : index
    %c0_663 = arith.constant 0 : index
    %860 = vector.load %arg7[%c4_661, %c0_662, %c0_663] : memref<8x128x192xbf16, #tpu.memory_space<vmem>>, vector<1x128x192xbf16>
    %861 = vector.shape_cast %860 : vector<1x128x192xbf16> to vector<128x192xbf16>
    %c4_664 = arith.constant 4 : index
    %c0_665 = arith.constant 0 : index
    %c0_666 = arith.constant 0 : index
    %862 = vector.load %arg3[%c4_664, %c0_665, %c0_666] : memref<8x192x128xbf16, #tpu.memory_space<vmem>>, vector<1x192x128xbf16>
    %863 = vector.shape_cast %862 : vector<1x192x128xbf16> to vector<192x128xbf16>
    %cst_667 = arith.constant dense<0.000000e+00> : vector<128x128xf32>
    %864 = tpu.matmul %861, %863, %cst_667 {dimension_numbers = #tpu.dot_dimension_numbers<[1], [0], [0], [1], [0, 0, 1, 1], [], []>} : vector<128x192xbf16>, vector<192x128xbf16>, vector<128x128xf32> -> vector<128x128xf32>
    %c4_668 = arith.constant 4 : index
    %c0_669 = arith.constant 0 : index
    %c0_670 = arith.constant 0 : index
    %865 = vector.load %arg6[%c4_668, %c0_669, %c0_670] : memref<8x128x128xf32, #tpu.memory_space<vmem>>, vector<1x128x128xf32>
    %866 = vector.shape_cast %865 : vector<1x128x128xf32> to vector<128x128xf32>
    %867 = vector.shape_cast %864 : vector<128x128xf32> to vector<1x128x128xf32>
    tpu.vector_store %arg6[%c4_668, %c0_669, %c0_670], %867 {strides = array<i32>} : memref<8x128x128xf32, #tpu.memory_space<vmem>>, vector<1x128x128xf32>,
    %c0_671 = arith.constant 0 : index
    %c0_672 = arith.constant 0 : index
    %868 = vector.load %arg8[%c0_671, %c0_672] : memref<128x128xf32, #tpu.memory_space<vmem>>, vector<128x128xf32>
    %869 = arith.cmpf ogt, %864, %868 : vector<128x128xf32>
    %870 = arith.select %869, %864, %868 : vector<128x128xi1>, vector<128x128xf32>
    %c0_673 = arith.constant 0 : index
    %c0_674 = arith.constant 0 : index
    %871 = vector.load %arg8[%c0_673, %c0_674] : memref<128x128xf32, #tpu.memory_space<vmem>>, vector<128x128xf32>
    tpu.vector_store %arg8[%c0_673, %c0_674], %870 {strides = array<i32>} : memref<128x128xf32, #tpu.memory_space<vmem>>, vector<128x128xf32>,
    %c0_675 = arith.constant 0 : index
    %c0_676 = arith.constant 0 : index
    %872 = vector.load %arg9[%c0_675, %c0_676] : memref<128x128xi32, #tpu.memory_space<vmem>>, vector<128x128xi32>
    %c4_i32 = arith.constant 4 : i32
    %873 = vector.broadcast %c4_i32 : i32 to vector<128x128xi32>
    %874 = arith.select %869, %873, %872 : vector<128x128xi1>, vector<128x128xi32>
    %c0_677 = arith.constant 0 : index
    %c0_678 = arith.constant 0 : index
    %875 = vector.load %arg9[%c0_677, %c0_678] : memref<128x128xi32, #tpu.memory_space<vmem>>, vector<128x128xi32>
    tpu.vector_store %arg9[%c0_677, %c0_678], %874 {strides = array<i32>} : memref<128x128xi32, #tpu.memory_space<vmem>>, vector<128x128xi32>,
    %c5_679 = arith.constant 5 : index
    %c0_680 = arith.constant 0 : index
    %c0_681 = arith.constant 0 : index
    %876 = vector.load %arg7[%c5_679, %c0_680, %c0_681] : memref<8x128x192xbf16, #tpu.memory_space<vmem>>, vector<1x128x192xbf16>
    %877 = vector.shape_cast %876 : vector<1x128x192xbf16> to vector<128x192xbf16>
    %c5_682 = arith.constant 5 : index
    %c0_683 = arith.constant 0 : index
    %c0_684 = arith.constant 0 : index
    %878 = vector.load %arg3[%c5_682, %c0_683, %c0_684] : memref<8x192x128xbf16, #tpu.memory_space<vmem>>, vector<1x192x128xbf16>
    %879 = vector.shape_cast %878 : vector<1x192x128xbf16> to vector<192x128xbf16>
    %cst_685 = arith.constant dense<0.000000e+00> : vector<128x128xf32>
    %880 = tpu.matmul %877, %879, %cst_685 {dimension_numbers = #tpu.dot_dimension_numbers<[1], [0], [0], [1], [0, 0, 1, 1], [], []>} : vector<128x192xbf16>, vector<192x128xbf16>, vector<128x128xf32> -> vector<128x128xf32>
    %c5_686 = arith.constant 5 : index
    %c0_687 = arith.constant 0 : index
    %c0_688 = arith.constant 0 : index
    %881 = vector.load %arg6[%c5_686, %c0_687, %c0_688] : memref<8x128x128xf32, #tpu.memory_space<vmem>>, vector<1x128x128xf32>
    %882 = vector.shape_cast %881 : vector<1x128x128xf32> to vector<128x128xf32>
    %883 = vector.shape_cast %880 : vector<128x128xf32> to vector<1x128x128xf32>
    tpu.vector_store %arg6[%c5_686, %c0_687, %c0_688], %883 {strides = array<i32>} : memref<8x128x128xf32, #tpu.memory_space<vmem>>, vector<1x128x128xf32>,
    %c0_689 = arith.constant 0 : index
    %c0_690 = arith.constant 0 : index
    %884 = vector.load %arg8[%c0_689, %c0_690] : memref<128x128xf32, #tpu.memory_space<vmem>>, vector<128x128xf32>
    %885 = arith.cmpf ogt, %880, %884 : vector<128x128xf32>
    %886 = arith.select %885, %880, %884 : vector<128x128xi1>, vector<128x128xf32>
    %c0_691 = arith.constant 0 : index
    %c0_692 = arith.constant 0 : index
    %887 = vector.load %arg8[%c0_691, %c0_692] : memref<128x128xf32, #tpu.memory_space<vmem>>, vector<128x128xf32>
    tpu.vector_store %arg8[%c0_691, %c0_692], %886 {strides = array<i32>} : memref<128x128xf32, #tpu.memory_space<vmem>>, vector<128x128xf32>,
    %c0_693 = arith.constant 0 : index
    %c0_694 = arith.constant 0 : index
    %888 = vector.load %arg9[%c0_693, %c0_694] : memref<128x128xi32, #tpu.memory_space<vmem>>, vector<128x128xi32>
    %c5_i32 = arith.constant 5 : i32
    %889 = vector.broadcast %c5_i32 : i32 to vector<128x128xi32>
    %890 = arith.select %885, %889, %888 : vector<128x128xi1>, vector<128x128xi32>
    %c0_695 = arith.constant 0 : index
    %c0_696 = arith.constant 0 : index
    %891 = vector.load %arg9[%c0_695, %c0_696] : memref<128x128xi32, #tpu.memory_space<vmem>>, vector<128x128xi32>
    tpu.vector_store %arg9[%c0_695, %c0_696], %890 {strides = array<i32>} : memref<128x128xi32, #tpu.memory_space<vmem>>, vector<128x128xi32>,
    %c6_697 = arith.constant 6 : index
    %c0_698 = arith.constant 0 : index
    %c0_699 = arith.constant 0 : index
    %892 = vector.load %arg7[%c6_697, %c0_698, %c0_699] : memref<8x128x192xbf16, #tpu.memory_space<vmem>>, vector<1x128x192xbf16>
    %893 = vector.shape_cast %892 : vector<1x128x192xbf16> to vector<128x192xbf16>
    %c6_700 = arith.constant 6 : index
    %c0_701 = arith.constant 0 : index
    %c0_702 = arith.constant 0 : index
    %894 = vector.load %arg3[%c6_700, %c0_701, %c0_702] : memref<8x192x128xbf16, #tpu.memory_space<vmem>>, vector<1x192x128xbf16>
    %895 = vector.shape_cast %894 : vector<1x192x128xbf16> to vector<192x128xbf16>
    %cst_703 = arith.constant dense<0.000000e+00> : vector<128x128xf32>
    %896 = tpu.matmul %893, %895, %cst_703 {dimension_numbers = #tpu.dot_dimension_numbers<[1], [0], [0], [1], [0, 0, 1, 1], [], []>} : vector<128x192xbf16>, vector<192x128xbf16>, vector<128x128xf32> -> vector<128x128xf32>
    %c6_704 = arith.constant 6 : index
    %c0_705 = arith.constant 0 : index
    %c0_706 = arith.constant 0 : index
    %897 = vector.load %arg6[%c6_704, %c0_705, %c0_706] : memref<8x128x128xf32, #tpu.memory_space<vmem>>, vector<1x128x128xf32>
    %898 = vector.shape_cast %897 : vector<1x128x128xf32> to vector<128x128xf32>
    %899 = vector.shape_cast %896 : vector<128x128xf32> to vector<1x128x128xf32>
    tpu.vector_store %arg6[%c6_704, %c0_705, %c0_706], %899 {strides = array<i32>} : memref<8x128x128xf32, #tpu.memory_space<vmem>>, vector<1x128x128xf32>,
    %c0_707 = arith.constant 0 : index
    %c0_708 = arith.constant 0 : index
    %900 = vector.load %arg8[%c0_707, %c0_708] : memref<128x128xf32, #tpu.memory_space<vmem>>, vector<128x128xf32>
    %901 = arith.cmpf ogt, %896, %900 : vector<128x128xf32>
    %902 = arith.select %901, %896, %900 : vector<128x128xi1>, vector<128x128xf32>
    %c0_709 = arith.constant 0 : index
    %c0_710 = arith.constant 0 : index
    %903 = vector.load %arg8[%c0_709, %c0_710] : memref<128x128xf32, #tpu.memory_space<vmem>>, vector<128x128xf32>
    tpu.vector_store %arg8[%c0_709, %c0_710], %902 {strides = array<i32>} : memref<128x128xf32, #tpu.memory_space<vmem>>, vector<128x128xf32>,
    %c0_711 = arith.constant 0 : index
    %c0_712 = arith.constant 0 : index
    %904 = vector.load %arg9[%c0_711, %c0_712] : memref<128x128xi32, #tpu.memory_space<vmem>>, vector<128x128xi32>
    %c6_i32 = arith.constant 6 : i32
    %905 = vector.broadcast %c6_i32 : i32 to vector<128x128xi32>
    %906 = arith.select %901, %905, %904 : vector<128x128xi1>, vector<128x128xi32>
    %c0_713 = arith.constant 0 : index
    %c0_714 = arith.constant 0 : index
    %907 = vector.load %arg9[%c0_713, %c0_714] : memref<128x128xi32, #tpu.memory_space<vmem>>, vector<128x128xi32>
    tpu.vector_store %arg9[%c0_713, %c0_714], %906 {strides = array<i32>} : memref<128x128xi32, #tpu.memory_space<vmem>>, vector<128x128xi32>,
    %c7_715 = arith.constant 7 : index
    %c0_716 = arith.constant 0 : index
    %c0_717 = arith.constant 0 : index
    %908 = vector.load %arg7[%c7_715, %c0_716, %c0_717] : memref<8x128x192xbf16, #tpu.memory_space<vmem>>, vector<1x128x192xbf16>
    %909 = vector.shape_cast %908 : vector<1x128x192xbf16> to vector<128x192xbf16>
    %c7_718 = arith.constant 7 : index
    %c0_719 = arith.constant 0 : index
    %c0_720 = arith.constant 0 : index
    %910 = vector.load %arg3[%c7_718, %c0_719, %c0_720] : memref<8x192x128xbf16, #tpu.memory_space<vmem>>, vector<1x192x128xbf16>
    %911 = vector.shape_cast %910 : vector<1x192x128xbf16> to vector<192x128xbf16>
    %cst_721 = arith.constant dense<0.000000e+00> : vector<128x128xf32>
    %912 = tpu.matmul %909, %911, %cst_721 {dimension_numbers = #tpu.dot_dimension_numbers<[1], [0], [0], [1], [0, 0, 1, 1], [], []>} : vector<128x192xbf16>, vector<192x128xbf16>, vector<128x128xf32> -> vector<128x128xf32>
    %c7_722 = arith.constant 7 : index
    %c0_723 = arith.constant 0 : index
    %c0_724 = arith.constant 0 : index
    %913 = vector.load %arg6[%c7_722, %c0_723, %c0_724] : memref<8x128x128xf32, #tpu.memory_space<vmem>>, vector<1x128x128xf32>
    %914 = vector.shape_cast %913 : vector<1x128x128xf32> to vector<128x128xf32>
    %915 = vector.shape_cast %912 : vector<128x128xf32> to vector<1x128x128xf32>
    tpu.vector_store %arg6[%c7_722, %c0_723, %c0_724], %915 {strides = array<i32>} : memref<8x128x128xf32, #tpu.memory_space<vmem>>, vector<1x128x128xf32>,
    %c0_725 = arith.constant 0 : index
    %c0_726 = arith.constant 0 : index
    %916 = vector.load %arg8[%c0_725, %c0_726] : memref<128x128xf32, #tpu.memory_space<vmem>>, vector<128x128xf32>
    %917 = arith.cmpf ogt, %912, %916 : vector<128x128xf32>
    %918 = arith.select %917, %912, %916 : vector<128x128xi1>, vector<128x128xf32>
    %c0_727 = arith.constant 0 : index
    %c0_728 = arith.constant 0 : index
    %919 = vector.load %arg8[%c0_727, %c0_728] : memref<128x128xf32, #tpu.memory_space<vmem>>, vector<128x128xf32>
    tpu.vector_store %arg8[%c0_727, %c0_728], %918 {strides = array<i32>} : memref<128x128xf32, #tpu.memory_space<vmem>>, vector<128x128xf32>,
    %c0_729 = arith.constant 0 : index
    %c0_730 = arith.constant 0 : index
    %920 = vector.load %arg9[%c0_729, %c0_730] : memref<128x128xi32, #tpu.memory_space<vmem>>, vector<128x128xi32>
    %c7_i32 = arith.constant 7 : i32
    %921 = vector.broadcast %c7_i32 : i32 to vector<128x128xi32>
    %922 = arith.select %917, %921, %920 : vector<128x128xi1>, vector<128x128xi32>
    %c0_731 = arith.constant 0 : index
    %c0_732 = arith.constant 0 : index
    %923 = vector.load %arg9[%c0_731, %c0_732] : memref<128x128xi32, #tpu.memory_space<vmem>>, vector<128x128xi32>
    tpu.vector_store %arg9[%c0_731, %c0_732], %922 {strides = array<i32>} : memref<128x128xi32, #tpu.memory_space<vmem>>, vector<128x128xi32>,
    %c0_733 = arith.constant 0 : index
    %c0_734 = arith.constant 0 : index
    %924 = vector.load %arg8[%c0_733, %c0_734] : memref<128x128xf32, #tpu.memory_space<vmem>>, vector<128x128xf32>
    %cst_735 = arith.constant 0.000000e+00 : f32
    %925 = vector.broadcast %cst_735 : f32 to vector<128x128xf32>
    %926 = arith.maximumf %924, %925 : vector<128x128xf32>
    %c0_736 = arith.constant 0 : index
    %c0_737 = arith.constant 0 : index
    %927 = vector.load %arg9[%c0_736, %c0_737] : memref<128x128xi32, #tpu.memory_space<vmem>>, vector<128x128xi32>
    %cst_738 = arith.constant 0.365341038 : f32
    %928 = vector.broadcast %cst_738 : f32 to vector<128x128xf32>
    %cst_739 = arith.constant -0.930873751 : f32
    %929 = vector.broadcast %cst_739 : f32 to vector<128x128xf32>
    %c1_i32_740 = arith.constant 1 : i32
    %930 = vector.broadcast %c1_i32_740 : i32 to vector<128x128xi32>
    %931 = arith.cmpi eq, %927, %930 : vector<128x128xi32>
    %cst_741 = arith.constant 0.623489797 : f32
    %932 = vector.broadcast %cst_741 : f32 to vector<128x128xf32>
    %933 = arith.select %931, %932, %928 : vector<128x128xi1>, vector<128x128xf32>
    %cst_742 = arith.constant -0.781831503 : f32
    %934 = vector.broadcast %cst_742 : f32 to vector<128x128xf32>
    %935 = arith.select %931, %934, %929 : vector<128x128xi1>, vector<128x128xf32>
    %c2_i32_743 = arith.constant 2 : i32
    %936 = vector.broadcast %c2_i32_743 : i32 to vector<128x128xi32>
    %937 = arith.cmpi eq, %927, %936 : vector<128x128xi32>
    %cst_744 = arith.constant 0.826238751 : f32
    %938 = vector.broadcast %cst_744 : f32 to vector<128x128xf32>
    %939 = arith.select %937, %938, %933 : vector<128x128xi1>, vector<128x128xf32>
    %cst_745 = arith.constant -0.563320041 : f32
    %940 = vector.broadcast %cst_745 : f32 to vector<128x128xf32>
    %941 = arith.select %937, %940, %935 : vector<128x128xi1>, vector<128x128xf32>
    %c3_i32_746 = arith.constant 3 : i32
    %942 = vector.broadcast %c3_i32_746 : i32 to vector<128x128xi32>
    %943 = arith.cmpi eq, %927, %942 : vector<128x128xi32>
    %cst_747 = arith.constant 0.955572783 : f32
    %944 = vector.broadcast %cst_747 : f32 to vector<128x128xf32>
    %945 = arith.select %943, %944, %939 : vector<128x128xi1>, vector<128x128xf32>
    %cst_748 = arith.constant -0.294755161 : f32
    %946 = vector.broadcast %cst_748 : f32 to vector<128x128xf32>
    %947 = arith.select %943, %946, %941 : vector<128x128xi1>, vector<128x128xf32>
    %c4_i32_749 = arith.constant 4 : i32
    %948 = vector.broadcast %c4_i32_749 : i32 to vector<128x128xi32>
    %949 = arith.cmpi eq, %927, %948 : vector<128x128xi32>
    %cst_750 = arith.constant 1.000000e+00 : f32
    %950 = vector.broadcast %cst_750 : f32 to vector<128x128xf32>
    %951 = arith.select %949, %950, %945 : vector<128x128xi1>, vector<128x128xf32>
    %cst_751 = arith.constant 0.000000e+00 : f32
    %952 = vector.broadcast %cst_751 : f32 to vector<128x128xf32>
    %953 = arith.select %949, %952, %947 : vector<128x128xi1>, vector<128x128xf32>
    %c5_i32_752 = arith.constant 5 : i32
    %954 = vector.broadcast %c5_i32_752 : i32 to vector<128x128xi32>
    %955 = arith.cmpi eq, %927, %954 : vector<128x128xi32>
    %cst_753 = arith.constant 0.955572783 : f32
    %956 = vector.broadcast %cst_753 : f32 to vector<128x128xf32>
    %957 = arith.select %955, %956, %951 : vector<128x128xi1>, vector<128x128xf32>
    %cst_754 = arith.constant 0.294755161 : f32
    %958 = vector.broadcast %cst_754 : f32 to vector<128x128xf32>
    %959 = arith.select %955, %958, %953 : vector<128x128xi1>, vector<128x128xf32>
    %c6_i32_755 = arith.constant 6 : i32
    %960 = vector.broadcast %c6_i32_755 : i32 to vector<128x128xi32>
    %961 = arith.cmpi eq, %927, %960 : vector<128x128xi32>
    %cst_756 = arith.constant 0.826238751 : f32
    %962 = vector.broadcast %cst_756 : f32 to vector<128x128xf32>
    %963 = arith.select %961, %962, %957 : vector<128x128xi1>, vector<128x128xf32>
    %cst_757 = arith.constant 0.563320041 : f32
    %964 = vector.broadcast %cst_757 : f32 to vector<128x128xf32>
    %965 = arith.select %961, %964, %959 : vector<128x128xi1>, vector<128x128xf32>
    %c7_i32_758 = arith.constant 7 : i32
    %966 = vector.broadcast %c7_i32_758 : i32 to vector<128x128xi32>
    %967 = arith.cmpi eq, %927, %966 : vector<128x128xi32>
    %cst_759 = arith.constant 0.623489797 : f32
    %968 = vector.broadcast %cst_759 : f32 to vector<128x128xf32>
    %969 = arith.select %967, %968, %963 : vector<128x128xi1>, vector<128x128xf32>
    %cst_760 = arith.constant 0.781831503 : f32
    %970 = vector.broadcast %cst_760 : f32 to vector<128x128xf32>
    %971 = arith.select %967, %970, %965 : vector<128x128xi1>, vector<128x128xf32>
    %972 = arith.mulf %926, %969 : vector<128x128xf32>
    %c0_761 = arith.constant 0 : index
    %c0_762 = arith.constant 0 : index
    %973 = vector.load %arg4[%c0_761, %c0_762] : memref<128x128xf32, #tpu.memory_space<vmem>>, vector<128x128xf32>
    tpu.vector_store %arg4[%c0_761, %c0_762], %972 {strides = array<i32>} : memref<128x128xf32, #tpu.memory_space<vmem>>, vector<128x128xf32>,
    %974 = arith.mulf %926, %971 : vector<128x128xf32>
    %c0_763 = arith.constant 0 : index
    %c0_764 = arith.constant 0 : index
    %975 = vector.load %arg5[%c0_763, %c0_764] : memref<128x128xf32, #tpu.memory_space<vmem>>, vector<128x128xf32>
    tpu.vector_store %arg5[%c0_763, %c0_764], %974 {strides = array<i32>} : memref<128x128xf32, #tpu.memory_space<vmem>>, vector<128x128xf32>,
    return
  }
  func.func @transform_0(%arg0: i32) -> (i32, i32, i32) {
    %c0_i32 = arith.constant 0 : i32
    %c0_i32_0 = arith.constant 0 : i32
    %c0_i32_1 = arith.constant 0 : i32
    return %arg0, %c0_i32, %c0_i32_0 : i32, i32, i32
  }
  func.func @transform_1(%arg0: i32) -> (i32, i32) {
    %c0_i32 = arith.constant 0 : i32
    %c0_i32_0 = arith.constant 0 : i32
    %c0_i32_1 = arith.constant 0 : i32
    return %c0_i32, %c0_i32_0 : i32, i32
  }
  func.func @transform_2(%arg0: i32) -> (i32, i32, i32) {
    %c0_i32 = arith.constant 0 : i32
    %c0_i32_0 = arith.constant 0 : i32
    %c0_i32_1 = arith.constant 0 : i32
    %c0_i32_2 = arith.constant 0 : i32
    return %c0_i32, %c0_i32_0, %c0_i32_1 : i32, i32, i32
  }
  func.func @transform_3(%arg0: i32) -> (i32, i32) {
    %c0_i32 = arith.constant 0 : i32
    %c0_i32_0 = arith.constant 0 : i32
    return %arg0, %c0_i32 : i32, i32
  }
  func.func @transform_4(%arg0: i32) -> (i32, i32) {
    %c0_i32 = arith.constant 0 : i32
    %c0_i32_0 = arith.constant 0 : i32
    return %arg0, %c0_i32 : i32, i32
  }
  func.func @transform_5(%arg0: i32) -> (i32, i32, i32) {
    %c0_i32 = arith.constant 0 : i32
    %c0_i32_0 = arith.constant 0 : i32
    %c0_i32_1 = arith.constant 0 : i32
    return %c0_i32, %arg0, %c0_i32_0 : i32, i32, i32
  }
}

</mosaic_0001>

<llo_original>
// kernel: tpu_custom_call.1
$region0: #{tpu_custom_call.1}
  #allocation0 [shape = 'u32[]', space=smem, size = 0x4, offset = 0x4, fixed_abs, tag = 'smem constant byte address 0x4 - core index']
  #allocation1 [shape = 'u32[144,128]{1,0:T(1,128)}', space=vmem, size = 0x12000, scoped, tag = 'internal scratch']
  #allocation2 [shape = 'bf16[8,128,192]{2,1,0:T(16,128)(2,1)}', space=vmem, size = 0x80000, scoped, tag = 'scratch operand']
  #allocation3 [shape = 'f32[128,128]{1,0:T(8,128)}', space=vmem, size = 0x10000, scoped, tag = 'scratch operand']
  #allocation4 [shape = 's32[128,128]{1,0:T(8,128)}', space=vmem, size = 0x10000, scoped, tag = 'scratch operand']
  %s0 = inlined_call_operand.vmem [shape: bf16[8,16,64], index: 0, kind: input, shape index: {}]
  %s1 = inlined_call_operand.vmem [shape: bf16[384,16], index: 1, kind: input, shape index: {}]
  %s2 = inlined_call_operand.hbm [shape: bf16[8,192,128], index: 2, kind: input, shape index: {}]
  %s3 = inlined_call_operand.hbm [shape: f32[128,128], index: 3, kind: output, shape index: {0}]
  %s4 = inlined_call_operand.hbm [shape: f32[128,128], index: 4, kind: output, shape index: {1}]
  %s5 = inlined_call_operand.hbm [shape: f32[8,128,128], index: 5, kind: output, shape index: {2}]
  %6 = xla_tuple %s3, %s4, %s5
  %s7 = sld [smem:[#allocation0]]
  $region42: #{tpu_custom_call.1} parent=0
    _
  %s9 = ssub.s32 1, %s7
  %s10 = scalar_select 0, %s9, %s7
  $region1: #{tpu_custom_call.1} parent=0
    #allocation5 [shape = 'u8[393216]{0}', space=vmem, size = 0x60000, scoped, tag = 'input window, operand 2, single buffered']
    #allocation6 [shape = 's32[1]{0}', space=sflag, size = 0x4, scoped, tag = 'scoped memory for tpu_custom_call.1']
    #allocation7 [shape = 's32[1]{0}', space=sflag, size = 0x4, scoped, tag = 'scoped memory for tpu_custom_call.1']
    #allocation8 [shape = 'u8[65536]{0}', space=vmem, size = 0x10000, scoped, tag = 'output window, operand 0, single buffered']
    #allocation9 [shape = 'u8[65536]{0}', space=vmem, size = 0x10000, scoped, tag = 'output window, operand 1, single buffered']
    #allocation10 [shape = 's32[1]{0}', space=sflag, size = 0x4, scoped, tag = 'scoped memory for tpu_custom_call.1']
    #allocation11 [shape = 'u8[524288]{0}', space=vmem, size = 0x80000, scoped, tag = 'output window, operand 2, single buffered']
    %11 = vsyncpa [#allocation6], 0
    %12 = vsyncpa [#allocation7], 0
    %13 = vsyncpa [#allocation10], 0
    // Predicated region
    $region2: #{tpu_custom_call.1} parent=1 // pred_check
      _
    $region3: #{tpu_custom_call.1} parent=1 // pred_check_branch
      %15 = sbr.rel (0) target = $region5
    $region4: #{tpu_custom_call.1} parent=1 // pred_region
      _
    $region5: #{tpu_custom_call.1} parent=1 // pred_fallthru
      _
    // Predicated region
    $region6: #{tpu_custom_call.1} parent=1 // pred_check
      _
    $region7: #{tpu_custom_call.1} parent=1 // pred_check_branch
      %17 = sbr.rel (0) target = $region9
    $region8: #{tpu_custom_call.1} parent=1 // pred_region
      _
    $region9: #{tpu_custom_call.1} parent=1 // pred_fallthru
      _
    // Predicated region
    $region10: #{tpu_custom_call.1} parent=1 // pred_check
      _
    $region11: #{tpu_custom_call.1} parent=1 // pred_check_branch
      %19 = sbr.rel (0) target = $region13
    $region12: #{tpu_custom_call.1} parent=1 // pred_region
      %s21 = ssub.s32 12288, 12288
      %22 = vsyncadd [#allocation6], %s21
      %s23 = sshll.u32 [#allocation5], 4
      %s24 = int_to_ptr.vmem [resolvable:$true] %s23
      %29 = dma.hbm_to_vmem [thread:$0]  %s2, 12288, %s24, [#allocation6], 64, 64, 4
    $region13: #{tpu_custom_call.1} parent=1 // pred_fallthru
      _
    // Predicated region
    $region14: #{tpu_custom_call.1} parent=1 // pred_check
      _
    $region15: #{tpu_custom_call.1} parent=1 // pred_check_branch
      %31 = sbr.rel (0) target = $region17
    $region16: #{tpu_custom_call.1} parent=1 // pred_region
      %32 = dma.done [#allocation6], 12288
    $region17: #{tpu_custom_call.1} parent=1 // pred_fallthru
      _
    %v34 = vld [vmem:[%s1] sm:$0xf]
    %v35 = vld [vmem:[%s1 + $0x4] sm:$0xf]
    %v36 = vld [vmem:[%s1 + $0x8] sm:$0xf]
    %v37 = vld [vmem:[%s1 + $0xc] sm:$0xf]
    %v38 = vld [vmem:[%s1 + $0x10] sm:$0xf]
    %v39 = vld [vmem:[%s1 + $0x14] sm:$0xf]
    %v40 = vld [vmem:[%s1 + $0x18] sm:$0xf]
    %v41 = vld [vmem:[%s1 + $0x1c] sm:$0xf]
    %v42 = vld [vmem:[%s1 + $0x20] sm:$0xf]
    %v43 = vld [vmem:[%s1 + $0x24] sm:$0xf]
    %v44 = vld [vmem:[%s1 + $0x28] sm:$0xf]
    %v45 = vld [vmem:[%s1 + $0x2c] sm:$0xf]
    %v46 = vld [vmem:[%s1 + $0x30] sm:$0xf]
    %v47 = vld [vmem:[%s1 + $0x34] sm:$0xf]
    %v48 = vld [vmem:[%s1 + $0x38] sm:$0xf]
    %v49 = vld [vmem:[%s1 + $0x3c] sm:$0xf]
    %v50 = vld [vmem:[%s1 + $0x40] sm:$0xf]
    %v51 = vld [vmem:[%s1 + $0x44] sm:$0xf]
    %v52 = vld [vmem:[%s1 + $0x48] sm:$0xf]
    %v53 = vld [vmem:[%s1 + $0x4c] sm:$0xf]
    %v54 = vld [vmem:[%s1 + $0x50] sm:$0xf]
    %v55 = vld [vmem:[%s1 + $0x54] sm:$0xf]
    %v56 = vld [vmem:[%s1 + $0x58] sm:$0xf]
    %v57 = vld [vmem:[%s1 + $0x5c] sm:$0xf]
    %v58 = vld [vmem:[%s1 + $0x60] sm:$0xf]
    %v59 = vld [vmem:[%s1 + $0x64] sm:$0xf]
    %v60 = vld [vmem:[%s1 + $0x68] sm:$0xf]
    %v61 = vld [vmem:[%s1 + $0x6c] sm:$0xf]
    %v62 = vld [vmem:[%s1 + $0x70] sm:$0xf]
    %v63 = vld [vmem:[%s1 + $0x74] sm:$0xf]
    %v64 = vld [vmem:[%s1 + $0x78] sm:$0xf]
    %v65 = vld [vmem:[%s1 + $0x7c] sm:$0xf]
    %v66 = vld [vmem:[%s1 + $0x80] sm:$0xf]
    %v67 = vld [vmem:[%s1 + $0x84] sm:$0xf]
    %v68 = vld [vmem:[%s1 + $0x88] sm:$0xf]
    %v69 = vld [vmem:[%s1 + $0x8c] sm:$0xf]
    %v70 = vld [vmem:[%s1 + $0x90] sm:$0xf]
    %v71 = vld [vmem:[%s1 + $0x94] sm:$0xf]
    %v72 = vld [vmem:[%s1 + $0x98] sm:$0xf]
    %v73 = vld [vmem:[%s1 + $0x9c] sm:$0xf]
    %v74 = vld [vmem:[%s1 + $0xa0] sm:$0xf]
    %v75 = vld [vmem:[%s1 + $0xa4] sm:$0xf]
    %v76 = vld [vmem:[%s1 + $0xa8] sm:$0xf]
    %v77 = vld [vmem:[%s1 + $0xac] sm:$0xf]
    %v78 = vld [vmem:[%s1 + $0xb0] sm:$0xf]
    %v79 = vld [vmem:[%s1 + $0xb4] sm:$0xf]
    %v80 = vld [vmem:[%s1 + $0xb8] sm:$0xf]
    %v81 = vld [vmem:[%s1 + $0xbc] sm:$0xf]
    %v82 = vld [vmem:[%s0] sm:$0xf]
    %v83 = vld [vmem:[%s0 + $0x4] sm:$0xf]
    %v132 = vunpack.c.l.b16 %v34
    %v133 = vunpack.c.l.b16 %v35
    %v134 = vunpack.c.l.b16 %v36
    %v135 = vunpack.c.l.b16 %v37
    %v136 = vunpack.c.l.b16 %v38
    %v137 = vunpack.c.l.b16 %v39
    %v138 = vunpack.c.l.b16 %v40
    %v139 = vunpack.c.l.b16 %v41
    %v140 = vunpack.c.l.b16 %v42
    %v141 = vunpack.c.l.b16 %v43
    %v142 = vunpack.c.l.b16 %v44
    %v143 = vunpack.c.l.b16 %v45
    %v144 = vunpack.c.l.b16 %v46
    %v145 = vunpack.c.l.b16 %v47
    %v146 = vunpack.c.l.b16 %v48
    %v147 = vunpack.c.l.b16 %v49
    %v148 = vunpack.c.l.b16 %v50
    %v149 = vunpack.c.l.b16 %v51
    %v150 = vunpack.c.l.b16 %v52
    %v151 = vunpack.c.l.b16 %v53
    %v152 = vunpack.c.l.b16 %v54
    %v153 = vunpack.c.l.b16 %v55
    %v154 = vunpack.c.l.b16 %v56
    %v155 = vunpack.c.l.b16 %v57
    %v156 = vunpack.c.l.b16 %v58
    %v157 = vunpack.c.l.b16 %v59
    %v158 = vunpack.c.l.b16 %v60
    %v159 = vunpack.c.l.b16 %v61
    %v160 = vunpack.c.l.b16 %v62
    %v161 = vunpack.c.l.b16 %v63
    %v162 = vunpack.c.l.b16 %v64
    %v163 = vunpack.c.l.b16 %v65
    %v164 = vunpack.c.l.b16 %v66
    %v165 = vunpack.c.l.b16 %v67
    %v166 = vunpack.c.l.b16 %v68
    %v167 = vunpack.c.l.b16 %v69
    %v168 = vunpack.c.l.b16 %v70
    %v169 = vunpack.c.l.b16 %v71
    %v170 = vunpack.c.l.b16 %v72
    %v171 = vunpack.c.l.b16 %v73
    %v172 = vunpack.c.l.b16 %v74
    %v173 = vunpack.c.l.b16 %v75
    %v174 = vunpack.c.l.b16 %v76
    %v175 = vunpack.c.l.b16 %v77
    %v176 = vunpack.c.l.b16 %v78
    %v177 = vunpack.c.l.b16 %v79
    %v178 = vunpack.c.l.b16 %v80
    %v179 = vunpack.c.l.b16 %v81
    %v180 = vpack.c.b16 %v133, %v132
    %v181 = vpack.c.b16 %v135, %v134
    %v182 = vpack.c.b16 %v137, %v136
    %v183 = vpack.c.b16 %v139, %v138
    %v184 = vpack.c.b16 %v141, %v140
    %v185 = vpack.c.b16 %v143, %v142
    %v186 = vpack.c.b16 %v145, %v144
    %v187 = vpack.c.b16 %v147, %v146
    %v188 = vpack.c.b16 %v149, %v148
    %v189 = vpack.c.b16 %v151, %v150
    %v190 = vpack.c.b16 %v153, %v152
    %v191 = vpack.c.b16 %v155, %v154
    %v192 = vpack.c.b16 %v157, %v156
    %v193 = vpack.c.b16 %v159, %v158
    %v194 = vpack.c.b16 %v161, %v160
    %v195 = vpack.c.b16 %v163, %v162
    %v196 = vpack.c.b16 %v165, %v164
    %v197 = vpack.c.b16 %v167, %v166
    %v198 = vpack.c.b16 %v169, %v168
    %v199 = vpack.c.b16 %v171, %v170
    %v200 = vpack.c.b16 %v173, %v172
    %v201 = vpack.c.b16 %v175, %v174
    %v202 = vpack.c.b16 %v177, %v176
    %v203 = vpack.c.b16 %v179, %v178
    %v206 = vunpack.c.l.b16 %v82
    %v207 = vunpack.c.l.b16 %v83
    %v208 = vpack.c.b16 %v207, %v206
    %vm210 = vcmask 130048
    %v212 = vsel %vm210, %v180, 0
    %v215 = vsel %vm210, %v181, 0
    %v218 = vsel %vm210, %v182, 0
    %v221 = vsel %vm210, %v183, 0
    %v224 = vsel %vm210, %v184, 0
    %v227 = vsel %vm210, %v185, 0
    %v230 = vsel %vm210, %v186, 0
    %v233 = vsel %vm210, %v187, 0
    %v236 = vsel %vm210, %v188, 0
    %v239 = vsel %vm210, %v189, 0
    %v242 = vsel %vm210, %v190, 0
    %v245 = vsel %vm210, %v191, 0
    %v248 = vsel %vm210, %v192, 0
    %v251 = vsel %vm210, %v193, 0
    %v254 = vsel %vm210, %v194, 0
    %v257 = vsel %vm210, %v195, 0
    %v260 = vsel %vm210, %v196, 0
    %v263 = vsel %vm210, %v197, 0
    %v266 = vsel %vm210, %v198, 0
    %v269 = vsel %vm210, %v199, 0
    %v272 = vsel %vm210, %v200, 0
    %v275 = vsel %vm210, %v201, 0
    %v278 = vsel %vm210, %v202, 0
    %v281 = vsel %vm210, %v203, 0
    %283 = vmatprep.subr.bf16.mxu0 0
    %284 = vmatpush1.bf16.msra.mxu0 %v208
    %285 = vmatprep.subr.bf16.mxu0 0
    %286 = vmatpush1.bf16.msra.mxu0 0
    %287 = vmatprep.subr.bf16.mxu0 0
    %288 = vmatpush1.bf16.msra.mxu0 0
    %289 = vmatprep.subr.bf16.mxu0 0
    %290 = vmatpush1.bf16.msra.mxu0 0
    %291 = vmatprep.subr.bf16.mxu0 0
    %292 = vmatpush1.bf16.msra.mxu0 0
    %293 = vmatprep.subr.bf16.mxu0 0
    %294 = vmatpush1.bf16.msra.mxu0 0
    %295 = vmatprep.subr.bf16.mxu0 0
    %296 = vmatpush1.bf16.msra.mxu0 0
    %297 = vmatprep.subr.bf16.mxu0 0
    %298 = vmatpush1.bf16.msra.mxu0 0
    %299 = vmatprep.subr.bf16.mxu0 0
    %300 = vmatpush1.bf16.msra.mxu0 0
    %301 = vmatprep.subr.bf16.mxu0 0
    %302 = vmatpush1.bf16.msra.mxu0 0
    %303 = vmatprep.subr.bf16.mxu0 0
    %304 = vmatpush1.bf16.msra.mxu0 0
    %305 = vmatprep.subr.bf16.mxu0 0
    %306 = vmatpush1.bf16.msra.mxu0 0
    %307 = vmatprep.subr.bf16.mxu0 0
    %308 = vmatpush1.bf16.msra.mxu0 0
    %309 = vmatprep.subr.bf16.mxu0 0
    %310 = vmatpush1.bf16.msra.mxu0 0
    %311 = vmatprep.subr.bf16.mxu0 0
    %312 = vmatpush1.bf16.msra.mxu0 0
    %313 = vmatprep.subr.bf16.mxu0 0
    %314 = vmatpush1.bf16.msra.mxu0 0
    %315 = vmatprep.mubr.bf16.mxu0 0
    %316 = vmatmul.mubr.bf16.gmra.mrb[0].mxu0 %v212
    %v317 = vpop.f32.mrb[0].mxu0
    %v318 = vadd.f32 0.0, %v317
    %v319 = vpop.f32.mrb[0].mxu0
    %v320 = vpop.f32.mrb[0].mxu0
    %v321 = vadd.f32 0.0, %v320
    %v322 = vpop.f32.mrb[0].mxu0
    %323 = vmatprep.mubr.bf16.mxu0 0
    %324 = vmatmul.mubr.bf16.gmra.mrb[0].mxu0 %v215
    %v325 = vpop.f32.mrb[0].mxu0
    %v326 = vadd.f32 0.0, %v325
    %v327 = vpop.f32.mrb[0].mxu0
    %v328 = vpop.f32.mrb[0].mxu0
    %v329 = vadd.f32 0.0, %v328
    %v330 = vpop.f32.mrb[0].mxu0
    %331 = vmatprep.mubr.bf16.mxu0 0
    %332 = vmatmul.mubr.bf16.gmra.mrb[0].mxu0 %v218
    %v333 = vpop.f32.mrb[0].mxu0
    %v334 = vadd.f32 0.0, %v333
    %v335 = vpop.f32.mrb[0].mxu0
    %v336 = vpop.f32.mrb[0].mxu0
    %v337 = vadd.f32 0.0, %v336
    %v338 = vpop.f32.mrb[0].mxu0
    %339 = vmatprep.mubr.bf16.mxu0 0
    %340 = vmatmul.mubr.bf16.gmra.mrb[0].mxu0 %v221
    %v341 = vpop.f32.mrb[0].mxu0
    %v342 = vadd.f32 0.0, %v341
    %v343 = vpop.f32.mrb[0].mxu0
    %v344 = vpop.f32.mrb[0].mxu0
    %v345 = vadd.f32 0.0, %v344
    %v346 = vpop.f32.mrb[0].mxu0
    %347 = vmatprep.mubr.bf16.mxu0 0
    %348 = vmatmul.mubr.bf16.gmra.mrb[0].mxu0 %v224
    %v349 = vpop.f32.mrb[0].mxu0
    %v350 = vadd.f32 0.0, %v349
    %v351 = vpop.f32.mrb[0].mxu0
    %v352 = vpop.f32.mrb[0].mxu0
    %v353 = vadd.f32 0.0, %v352
    %v354 = vpop.f32.mrb[0].mxu0
    %355 = vmatprep.mubr.bf16.mxu0 0
    %356 = vmatmul.mubr.bf16.gmra.mrb[0].mxu0 %v227
    %v357 = vpop.f32.mrb[0].mxu0
    %v358 = vadd.f32 0.0, %v357
    %v359 = vpop.f32.mrb[0].mxu0
    %v360 = vpop.f32.mrb[0].mxu0
    %v361 = vadd.f32 0.0, %v360
    %v362 = vpop.f32.mrb[0].mxu0
    %363 = vmatprep.mubr.bf16.mxu0 0
    %364 = vmatmul.mubr.bf16.gmra.mrb[0].mxu0 %v230
    %v365 = vpop.f32.mrb[0].mxu0
    %v366 = vadd.f32 0.0, %v365
    %v367 = vpop.f32.mrb[0].mxu0
    %v368 = vpop.f32.mrb[0].mxu0
    %v369 = vadd.f32 0.0, %v368
    %v370 = vpop.f32.mrb[0].mxu0
    %371 = vmatprep.mubr.bf16.mxu0 0
    %372 = vmatmul.mubr.bf16.gmra.mrb[0].mxu0 %v233
    %v373 = vpop.f32.mrb[0].mxu0
    %v374 = vadd.f32 0.0, %v373
    %v375 = vpop.f32.mrb[0].mxu0
    %v376 = vpop.f32.mrb[0].mxu0
    %v377 = vadd.f32 0.0, %v376
    %v378 = vpop.f32.mrb[0].mxu0
    %379 = vmatprep.mubr.bf16.mxu0 0
    %380 = vmatmul.mubr.bf16.gmra.mrb[0].mxu0 %v236
    %v381 = vpop.f32.mrb[0].mxu0
    %v382 = vadd.f32 0.0, %v381
    %v383 = vpop.f32.mrb[0].mxu0
    %v384 = vpop.f32.mrb[0].mxu0
    %v385 = vadd.f32 0.0, %v384
    %v386 = vpop.f32.mrb[0].mxu0
    %387 = vmatprep.mubr.bf16.mxu0 0
    %388 = vmatmul.mubr.bf16.gmra.mrb[0].mxu0 %v239
    %v389 = vpop.f32.mrb[0].mxu0
    %v390 = vadd.f32 0.0, %v389
    %v391 = vpop.f32.mrb[0].mxu0
    %v392 = vpop.f32.mrb[0].mxu0
    %v393 = vadd.f32 0.0, %v392
    %v394 = vpop.f32.mrb[0].mxu0
    %395 = vmatprep.mubr.bf16.mxu0 0
    %396 = vmatmul.mubr.bf16.gmra.mrb[0].mxu0 %v242
    %v397 = vpop.f32.mrb[0].mxu0
    %v398 = vadd.f32 0.0, %v397
    %v399 = vpop.f32.mrb[0].mxu0
    %v400 = vpop.f32.mrb[0].mxu0
    %v401 = vadd.f32 0.0, %v400
    %v402 = vpop.f32.mrb[0].mxu0
    %403 = vmatprep.mubr.bf16.mxu0 0
    %404 = vmatmul.mubr.bf16.gmra.mrb[0].mxu0 %v245
    %v405 = vpop.f32.mrb[0].mxu0
    %v406 = vadd.f32 0.0, %v405
    %v407 = vpop.f32.mrb[0].mxu0
    %v408 = vpop.f32.mrb[0].mxu0
    %v409 = vadd.f32 0.0, %v408
    %v410 = vpop.f32.mrb[0].mxu0
    %411 = vmatprep.mubr.bf16.mxu0 0
    %412 = vmatmul.mubr.bf16.gmra.mrb[0].mxu0 %v248
    %v413 = vpop.f32.mrb[0].mxu0
    %v414 = vadd.f32 0.0, %v413
    %v415 = vpop.f32.mrb[0].mxu0
    %v416 = vpop.f32.mrb[0].mxu0
    %v417 = vadd.f32 0.0, %v416
    %v418 = vpop.f32.mrb[0].mxu0
    %419 = vmatprep.mubr.bf16.mxu0 0
    %420 = vmatmul.mubr.bf16.gmra.mrb[0].mxu0 %v251
    %v421 = vpop.f32.mrb[0].mxu0
    %v422 = vadd.f32 0.0, %v421
    %v423 = vpop.f32.mrb[0].mxu0
    %v424 = vpop.f32.mrb[0].mxu0
    %v425 = vadd.f32 0.0, %v424
    %v426 = vpop.f32.mrb[0].mxu0
    %427 = vmatprep.mubr.bf16.mxu0 0
    %428 = vmatmul.mubr.bf16.gmra.mrb[0].mxu0 %v254
    %v429 = vpop.f32.mrb[0].mxu0
    %v430 = vadd.f32 0.0, %v429
    %v431 = vpop.f32.mrb[0].mxu0
    %v432 = vpop.f32.mrb[0].mxu0
    %v433 = vadd.f32 0.0, %v432
    %v434 = vpop.f32.mrb[0].mxu0
    %435 = vmatprep.mubr.bf16.mxu0 0
    %436 = vmatmul.mubr.bf16.gmra.mrb[0].mxu0 %v257
    %v437 = vpop.f32.mrb[0].mxu0
    %v438 = vadd.f32 0.0, %v437
    %v439 = vpop.f32.mrb[0].mxu0
    %v440 = vpop.f32.mrb[0].mxu0
    %v441 = vadd.f32 0.0, %v440
    %v442 = vpop.f32.mrb[0].mxu0
    %443 = vmatprep.mubr.bf16.mxu0 0
    %444 = vmatmul.mubr.bf16.gmra.mrb[0].mxu0 %v260
    %v445 = vpop.f32.mrb[0].mxu0
    %v446 = vadd.f32 0.0, %v445
    %v447 = vpop.f32.mrb[0].mxu0
    %v448 = vpop.f32.mrb[0].mxu0
    %v449 = vadd.f32 0.0, %v448
    %v450 = vpop.f32.mrb[0].mxu0
    %451 = vmatprep.mubr.bf16.mxu0 0
    %452 = vmatmul.mubr.bf16.gmra.mrb[0].mxu0 %v263
    %v453 = vpop.f32.mrb[0].mxu0
    %v454 = vadd.f32 0.0, %v453
    %v455 = vpop.f32.mrb[0].mxu0
    %v456 = vpop.f32.mrb[0].mxu0
    %v457 = vadd.f32 0.0, %v456
    %v458 = vpop.f32.mrb[0].mxu0
    %459 = vmatprep.mubr.bf16.mxu0 0
    %460 = vmatmul.mubr.bf16.gmra.mrb[0].mxu0 %v266
    %v461 = vpop.f32.mrb[0].mxu0
    %v462 = vadd.f32 0.0, %v461
    %v463 = vpop.f32.mrb[0].mxu0
    %v464 = vpop.f32.mrb[0].mxu0
    %v465 = vadd.f32 0.0, %v464
    %v466 = vpop.f32.mrb[0].mxu0
    %467 = vmatprep.mubr.bf16.mxu0 0
    %468 = vmatmul.mubr.bf16.gmra.mrb[0].mxu0 %v269
    %v469 = vpop.f32.mrb[0].mxu0
    %v470 = vadd.f32 0.0, %v469
    %v471 = vpop.f32.mrb[0].mxu0
    %v472 = vpop.f32.mrb[0].mxu0
    %v473 = vadd.f32 0.0, %v472
    %v474 = vpop.f32.mrb[0].mxu0
    %475 = vmatprep.mubr.bf16.mxu0 0
    %476 = vmatmul.mubr.bf16.gmra.mrb[0].mxu0 %v272
    %v477 = vpop.f32.mrb[0].mxu0
    %v478 = vadd.f32 0.0, %v477
    %v479 = vpop.f32.mrb[0].mxu0
    %v480 = vpop.f32.mrb[0].mxu0
    %v481 = vadd.f32 0.0, %v480
    %v482 = vpop.f32.mrb[0].mxu0
    %483 = vmatprep.mubr.bf16.mxu0 0
    %484 = vmatmul.mubr.bf16.gmra.mrb[0].mxu0 %v275
    %v485 = vpop.f32.mrb[0].mxu0
    %v486 = vadd.f32 0.0, %v485
    %v487 = vpop.f32.mrb[0].mxu0
    %v488 = vpop.f32.mrb[0].mxu0
    %v489 = vadd.f32 0.0, %v488
    %v490 = vpop.f32.mrb[0].mxu0
    %491 = vmatprep.mubr.bf16.mxu0 0
    %492 = vmatmul.mubr.bf16.gmra.mrb[0].mxu0 %v278
    %v493 = vpop.f32.mrb[0].mxu0
    %v494 = vadd.f32 0.0, %v493
    %v495 = vpop.f32.mrb[0].mxu0
    %v496 = vpop.f32.mrb[0].mxu0
    %v497 = vadd.f32 0.0, %v496
    %v498 = vpop.f32.mrb[0].mxu0
    %499 = vmatprep.mubr.bf16.mxu0 0
    %500 = vmatmul.mubr.bf16.gmra.mrb[0].mxu0 %v281
    %v501 = vpop.f32.mrb[0].mxu0
    %v502 = vadd.f32 0.0, %v501
    %v503 = vpop.f32.mrb[0].mxu0
    %v504 = vpop.f32.mrb[0].mxu0
    %v505 = vadd.f32 0.0, %v504
    %v506 = vpop.f32.mrb[0].mxu0
    %507 = vdwg.mxu0
    %v508 = vpack.c.bf16 %v321, %v318
    %v509 = vpack.c.bf16 %v329, %v326
    %v510 = vpack.c.bf16 %v337, %v334
    %v511 = vpack.c.bf16 %v345, %v342
    %v512 = vpack.c.bf16 %v353, %v350
    %v513 = vpack.c.bf16 %v361, %v358
    %v514 = vpack.c.bf16 %v369, %v366
    %v515 = vpack.c.bf16 %v377, %v374
    %v516 = vpack.c.bf16 %v385, %v382
    %v517 = vpack.c.bf16 %v393, %v390
    %v518 = vpack.c.bf16 %v401, %v398
    %v519 = vpack.c.bf16 %v409, %v406
    %v520 = vpack.c.bf16 %v417, %v414
    %v521 = vpack.c.bf16 %v425, %v422
    %v522 = vpack.c.bf16 %v433, %v430
    %v523 = vpack.c.bf16 %v441, %v438
    %v524 = vpack.c.bf16 %v449, %v446
    %v525 = vpack.c.bf16 %v457, %v454
    %v526 = vpack.c.bf16 %v465, %v462
    %v527 = vpack.c.bf16 %v473, %v470
    %v528 = vpack.c.bf16 %v481, %v478
    %v529 = vpack.c.bf16 %v489, %v486
    %v530 = vpack.c.bf16 %v497, %v494
    %v531 = vpack.c.bf16 %v505, %v502
    %vm532 = vcmask 523264
    %533 = vst.msk [vmem:[#allocation2] sm:$0xff] %vm532, %v508
    %535 = vrot.lane.b32.xlu0 %v509, 64
    %v536 = vpop.permute.xlu0 %535
    %vm538 = vcmask 1048064
    %539 = vst.msk [vmem:[#allocation2] sm:$0xff] %vm538, %v536
    %540 = vst.msk [vmem:[#allocation2 + $0x8] sm:$0xff] %vm532, %v510
    %s541 = scalar_lea.vmem [#allocation2], 128
    %542 = vst.msk [vmem:[%s541] sm:$0xff] %vm532, %v511
    %544 = vrot.lane.b32.xlu0 %v512, 64
    %v545 = vpop.permute.xlu0 %544
    %547 = vst.msk [vmem:[%s541] sm:$0xff] %vm538, %v545
    %548 = vst.msk [vmem:[%s541 + $0x8] sm:$0xff] %vm532, %v513
    %s549 = scalar_lea.vmem [#allocation2], 256
    %550 = vst.msk [vmem:[%s549] sm:$0xff] %vm532, %v514
    %552 = vrot.lane.b32.xlu0 %v515, 64
    %v553 = vpop.permute.xlu0 %552
    %555 = vst.msk [vmem:[%s549] sm:$0xff] %vm538, %v553
    %556 = vst.msk [vmem:[%s549 + $0x8] sm:$0xff] %vm532, %v516
    %s557 = scalar_lea.vmem [#allocation2], 384
    %558 = vst.msk [vmem:[%s557] sm:$0xff] %vm532, %v517
    %560 = vrot.lane.b32.xlu0 %v518, 64
    %v561 = vpop.permute.xlu0 %560
    %563 = vst.msk [vmem:[%s557] sm:$0xff] %vm538, %v561
    %564 = vst.msk [vmem:[%s557 + $0x8] sm:$0xff] %vm532, %v519
    %s565 = scalar_lea.vmem [#allocation2], 512
    %566 = vst.msk [vmem:[%s565] sm:$0xff] %vm532, %v520
    %568 = vrot.lane.b32.xlu0 %v521, 64
    %v569 = vpop.permute.xlu0 %568
    %571 = vst.msk [vmem:[%s565] sm:$0xff] %vm538, %v569
    %572 = vst.msk [vmem:[%s565 + $0x8] sm:$0xff] %vm532, %v522
    %s573 = scalar_lea.vmem [#allocation2], 640
    %574 = vst.msk [vmem:[%s573] sm:$0xff] %vm532, %v523
    %576 = vrot.lane.b32.xlu0 %v524, 64
    %v577 = vpop.permute.xlu0 %576
    %579 = vst.msk [vmem:[%s573] sm:$0xff] %vm538, %v577
    %580 = vst.msk [vmem:[%s573 + $0x8] sm:$0xff] %vm532, %v525
    %s581 = scalar_lea.vmem [#allocation2], 768
    %582 = vst.msk [vmem:[%s581] sm:$0xff] %vm532, %v526
    %584 = vrot.lane.b32.xlu0 %v527, 64
    %v585 = vpop.permute.xlu0 %584
    %587 = vst.msk [vmem:[%s581] sm:$0xff] %vm538, %v585
    %588 = vst.msk [vmem:[%s581 + $0x8] sm:$0xff] %vm532, %v528
    %s589 = scalar_lea.vmem [#allocation2], 896
    %590 = vst.msk [vmem:[%s589] sm:$0xff] %vm532, %v529
    %592 = vrot.lane.b32.xlu0 %v530, 64
    %v593 = vpop.permute.xlu0 %592
    %595 = vst.msk [vmem:[%s589] sm:$0xff] %vm538, %v593
    %596 = vst.msk [vmem:[%s589 + $0x8] sm:$0xff] %vm532, %v531
    %s597 = scalar_lea.vmem %s0, 8
    %v598 = vld [vmem:[%s597] sm:$0xf]
    %v599 = vld [vmem:[%s597 + $0x4] sm:$0xf]
    %v602 = vunpack.c.l.b16 %v598
    %v603 = vunpack.c.l.b16 %v599
    %v604 = vpack.c.b16 %v603, %v602
    %606 = vmatprep.subr.bf16.mxu0 0
    %607 = vmatpush1.bf16.msra.mxu0 %v604
    %608 = vmatprep.subr.bf16.mxu0 0
    %609 = vmatpush1.bf16.msra.mxu0 0
    %610 = vmatprep.subr.bf16.mxu0 0
    %611 = vmatpush1.bf16.msra.mxu0 0
    %612 = vmatprep.subr.bf16.mxu0 0
    %613 = vmatpush1.bf16.msra.mxu0 0
    %614 = vmatprep.subr.bf16.mxu0 0
    %615 = vmatpush1.bf16.msra.mxu0 0
    %616 = vmatprep.subr.bf16.mxu0 0
    %617 = vmatpush1.bf16.msra.mxu0 0
    %618 = vmatprep.subr.bf16.mxu0 0
    %619 = vmatpush1.bf16.msra.mxu0 0
    %620 = vmatprep.subr.bf16.mxu0 0
    %621 = vmatpush1.bf16.msra.mxu0 0
    %622 = vmatprep.subr.bf16.mxu0 0
    %623 = vmatpush1.bf16.msra.mxu0 0
    %624 = vmatprep.subr.bf16.mxu0 0
    %625 = vmatpush1.bf16.msra.mxu0 0
    %626 = vmatprep.subr.bf16.mxu0 0
    %627 = vmatpush1.bf16.msra.mxu0 0
    %628 = vmatprep.subr.bf16.mxu0 0
    %629 = vmatpush1.bf16.msra.mxu0 0
    %630 = vmatprep.subr.bf16.mxu0 0
    %631 = vmatpush1.bf16.msra.mxu0 0
    %632 = vmatprep.subr.bf16.mxu0 0
    %633 = vmatpush1.bf16.msra.mxu0 0
    %634 = vmatprep.subr.bf16.mxu0 0
    %635 = vmatpush1.bf16.msra.mxu0 0
    %636 = vmatprep.subr.bf16.mxu0 0
    %637 = vmatpush1.bf16.msra.mxu0 0
    %638 = vmatprep.mubr.bf16.mxu0 0
    %639 = vmatmul.mubr.bf16.gmra.mrb[0].mxu0 %v212
    %v640 = vpop.f32.mrb[0].mxu0
    %v641 = vadd.f32 0.0, %v640
    %v642 = vpop.f32.mrb[0].mxu0
    %v643 = vpop.f32.mrb[0].mxu0
    %v644 = vadd.f32 0.0, %v643
    %v645 = vpop.f32.mrb[0].mxu0
    %646 = vmatprep.mubr.bf16.mxu0 0
    %647 = vmatmul.mubr.bf16.gmra.mrb[0].mxu0 %v215
    %v648 = vpop.f32.mrb[0].mxu0
    %v649 = vadd.f32 0.0, %v648
    %v650 = vpop.f32.mrb[0].mxu0
    %v651 = vpop.f32.mrb[0].mxu0
    %v652 = vadd.f32 0.0, %v651
    %v653 = vpop.f32.mrb[0].mxu0
    %654 = vmatprep.mubr.bf16.mxu0 0
    %655 = vmatmul.mubr.bf16.gmra.mrb[0].mxu0 %v218
    %v656 = vpop.f32.mrb[0].mxu0
    %v657 = vadd.f32 0.0, %v656
    %v658 = vpop.f32.mrb[0].mxu0
    %v659 = vpop.f32.mrb[0].mxu0
    %v660 = vadd.f32 0.0, %v659
    %v661 = vpop.f32.mrb[0].mxu0
    %662 = vmatprep.mubr.bf16.mxu0 0
    %663 = vmatmul.mubr.bf16.gmra.mrb[0].mxu0 %v221
    %v664 = vpop.f32.mrb[0].mxu0
    %v665 = vadd.f32 0.0, %v664
    %v666 = vpop.f32.mrb[0].mxu0
    %v667 = vpop.f32.mrb[0].mxu0
    %v668 = vadd.f32 0.0, %v667
    %v669 = vpop.f32.mrb[0].mxu0
    %670 = vmatprep.mubr.bf16.mxu0 0
    %671 = vmatmul.mubr.bf16.gmra.mrb[0].mxu0 %v224
    %v672 = vpop.f32.mrb[0].mxu0
    %v673 = vadd.f32 0.0, %v672
    %v674 = vpop.f32.mrb[0].mxu0
    %v675 = vpop.f32.mrb[0].mxu0
    %v676 = vadd.f32 0.0, %v675
    %v677 = vpop.f32.mrb[0].mxu0
    %678 = vmatprep.mubr.bf16.mxu0 0
    %679 = vmatmul.mubr.bf16.gmra.mrb[0].mxu0 %v227
    %v680 = vpop.f32.mrb[0].mxu0
    %v681 = vadd.f32 0.0, %v680
    %v682 = vpop.f32.mrb[0].mxu0
    %v683 = vpop.f32.mrb[0].mxu0
    %v684 = vadd.f32 0.0, %v683
    %v685 = vpop.f32.mrb[0].mxu0
    %686 = vmatprep.mubr.bf16.mxu0 0
    %687 = vmatmul.mubr.bf16.gmra.mrb[0].mxu0 %v230
    %v688 = vpop.f32.mrb[0].mxu0
    %v689 = vadd.f32 0.0, %v688
    %v690 = vpop.f32.mrb[0].mxu0
    %v691 = vpop.f32.mrb[0].mxu0
    %v692 = vadd.f32 0.0, %v691
    %v693 = vpop.f32.mrb[0].mxu0
    %694 = vmatprep.mubr.bf16.mxu0 0
    %695 = vmatmul.mubr.bf16.gmra.mrb[0].mxu0 %v233
    %v696 = vpop.f32.mrb[0].mxu0
    %v697 = vadd.f32 0.0, %v696
    %v698 = vpop.f32.mrb[0].mxu0
    %v699 = vpop.f32.mrb[0].mxu0
    %v700 = vadd.f32 0.0, %v699
    %v701 = vpop.f32.mrb[0].mxu0
    %702 = vmatprep.mubr.bf16.mxu0 0
    %703 = vmatmul.mubr.bf16.gmra.mrb[0].mxu0 %v236
    %v704 = vpop.f32.mrb[0].mxu0
    %v705 = vadd.f32 0.0, %v704
    %v706 = vpop.f32.mrb[0].mxu0
    %v707 = vpop.f32.mrb[0].mxu0
    %v708 = vadd.f32 0.0, %v707
    %v709 = vpop.f32.mrb[0].mxu0
    %710 = vmatprep.mubr.bf16.mxu0 0
    %711 = vmatmul.mubr.bf16.gmra.mrb[0].mxu0 %v239
    %v712 = vpop.f32.mrb[0].mxu0
    %v713 = vadd.f32 0.0, %v712
    %v714 = vpop.f32.mrb[0].mxu0
    %v715 = vpop.f32.mrb[0].mxu0
    %v716 = vadd.f32 0.0, %v715
    %v717 = vpop.f32.mrb[0].mxu0
    %718 = vmatprep.mubr.bf16.mxu0 0
    %719 = vmatmul.mubr.bf16.gmra.mrb[0].mxu0 %v242
    %v720 = vpop.f32.mrb[0].mxu0
    %v721 = vadd.f32 0.0, %v720
    %v722 = vpop.f32.mrb[0].mxu0
    %v723 = vpop.f32.mrb[0].mxu0
    %v724 = vadd.f32 0.0, %v723
    %v725 = vpop.f32.mrb[0].mxu0
    %726 = vmatprep.mubr.bf16.mxu0 0
    %727 = vmatmul.mubr.bf16.gmra.mrb[0].mxu0 %v245
    %v728 = vpop.f32.mrb[0].mxu0
    %v729 = vadd.f32 0.0, %v728
    %v730 = vpop.f32.mrb[0].mxu0
    %v731 = vpop.f32.mrb[0].mxu0
    %v732 = vadd.f32 0.0, %v731
    %v733 = vpop.f32.mrb[0].mxu0
    %734 = vmatprep.mubr.bf16.mxu0 0
    %735 = vmatmul.mubr.bf16.gmra.mrb[0].mxu0 %v248
    %v736 = vpop.f32.mrb[0].mxu0
    %v737 = vadd.f32 0.0, %v736
    %v738 = vpop.f32.mrb[0].mxu0
    %v739 = vpop.f32.mrb[0].mxu0
    %v740 = vadd.f32 0.0, %v739
    %v741 = vpop.f32.mrb[0].mxu0
    %742 = vmatprep.mubr.bf16.mxu0 0
    %743 = vmatmul.mubr.bf16.gmra.mrb[0].mxu0 %v251
    %v744 = vpop.f32.mrb[0].mxu0
    %v745 = vadd.f32 0.0, %v744
    %v746 = vpop.f32.mrb[0].mxu0
    %v747 = vpop.f32.mrb[0].mxu0
    %v748 = vadd.f32 0.0, %v747
    %v749 = vpop.f32.mrb[0].mxu0
    %750 = vmatprep.mubr.bf16.mxu0 0
    %751 = vmatmul.mubr.bf16.gmra.mrb[0].mxu0 %v254
    %v752 = vpop.f32.mrb[0].mxu0
    %v753 = vadd.f32 0.0, %v752
    %v754 = vpop.f32.mrb[0].mxu0
    %v755 = vpop.f32.mrb[0].mxu0
    %v756 = vadd.f32 0.0, %v755
    %v757 = vpop.f32.mrb[0].mxu0
    %758 = vmatprep.mubr.bf16.mxu0 0
    %759 = vmatmul.mubr.bf16.gmra.mrb[0].mxu0 %v257
    %v760 = vpop.f32.mrb[0].mxu0
    %v761 = vadd.f32 0.0, %v760
    %v762 = vpop.f32.mrb[0].mxu0
    %v763 = vpop.f32.mrb[0].mxu0
    %v764 = vadd.f32 0.0, %v763
    %v765 = vpop.f32.mrb[0].mxu0
    %766 = vmatprep.mubr.bf16.mxu0 0
    %767 = vmatmul.mubr.bf16.gmra.mrb[0].mxu0 %v260
    %v768 = vpop.f32.mrb[0].mxu0
    %v769 = vadd.f32 0.0, %v768
    %v770 = vpop.f32.mrb[0].mxu0
    %v771 = vpop.f32.mrb[0].mxu0
    %v772 = vadd.f32 0.0, %v771
    %v773 = vpop.f32.mrb[0].mxu0
    %774 = vmatprep.mubr.bf16.mxu0 0
    %775 = vmatmul.mubr.bf16.gmra.mrb[0].mxu0 %v263
    %v776 = vpop.f32.mrb[0].mxu0
    %v777 = vadd.f32 0.0, %v776
    %v778 = vpop.f32.mrb[0].mxu0
    %v779 = vpop.f32.mrb[0].mxu0
    %v780 = vadd.f32 0.0, %v779
    %v781 = vpop.f32.mrb[0].mxu0
    %782 = vmatprep.mubr.bf16.mxu0 0
    %783 = vmatmul.mubr.bf16.gmra.mrb[0].mxu0 %v266
    %v784 = vpop.f32.mrb[0].mxu0
    %v785 = vadd.f32 0.0, %v784
    %v786 = vpop.f32.mrb[0].mxu0
    %v787 = vpop.f32.mrb[0].mxu0
    %v788 = vadd.f32 0.0, %v787
    %v789 = vpop.f32.mrb[0].mxu0
    %790 = vmatprep.mubr.bf16.mxu0 0
    %791 = vmatmul.mubr.bf16.gmra.mrb[0].mxu0 %v269
    %v792 = vpop.f32.mrb[0].mxu0
    %v793 = vadd.f32 0.0, %v792
    %v794 = vpop.f32.mrb[0].mxu0
    %v795 = vpop.f32.mrb[0].mxu0
    %v796 = vadd.f32 0.0, %v795
    %v797 = vpop.f32.mrb[0].mxu0
    %798 = vmatprep.mubr.bf16.mxu0 0
    %799 = vmatmul.mubr.bf16.gmra.mrb[0].mxu0 %v272
    %v800 = vpop.f32.mrb[0].mxu0
    %v801 = vadd.f32 0.0, %v800
    %v802 = vpop.f32.mrb[0].mxu0
    %v803 = vpop.f32.mrb[0].mxu0
    %v804 = vadd.f32 0.0, %v803
    %v805 = vpop.f32.mrb[0].mxu0
    %806 = vmatprep.mubr.bf16.mxu0 0
    %807 = vmatmul.mubr.bf16.gmra.mrb[0].mxu0 %v275
    %v808 = vpop.f32.mrb[0].mxu0
    %v809 = vadd.f32 0.0, %v808
    %v810 = vpop.f32.mrb[0].mxu0
    %v811 = vpop.f32.mrb[0].mxu0
    %v812 = vadd.f32 0.0, %v811
    %v813 = vpop.f32.mrb[0].mxu0
    %814 = vmatprep.mubr.bf16.mxu0 0
    %815 = vmatmul.mubr.bf16.gmra.mrb[0].mxu0 %v278
    %v816 = vpop.f32.mrb[0].mxu0
    %v817 = vadd.f32 0.0, %v816
    %v818 = vpop.f32.mrb[0].mxu0
    %v819 = vpop.f32.mrb[0].mxu0
    %v820 = vadd.f32 0.0, %v819
    %v821 = vpop.f32.mrb[0].mxu0
    %822 = vmatprep.mubr.bf16.mxu0 0
    %823 = vmatmul.mubr.bf16.gmra.mrb[0].mxu0 %v281
    %v824 = vpop.f32.mrb[0].mxu0
    %v825 = vadd.f32 0.0, %v824
    %v826 = vpop.f32.mrb[0].mxu0
    %v827 = vpop.f32.mrb[0].mxu0
    %v828 = vadd.f32 0.0, %v827
    %v829 = vpop.f32.mrb[0].mxu0
    %830 = vdwg.mxu0
    %v831 = vpack.c.bf16 %v644, %v641
    %v832 = vpack.c.bf16 %v652, %v649
    %v833 = vpack.c.bf16 %v660, %v657
    %v834 = vpack.c.bf16 %v668, %v665
    %v835 = vpack.c.bf16 %v676, %v673
    %v836 = vpack.c.bf16 %v684, %v681
    %v837 = vpack.c.bf16 %v692, %v689
    %v838 = vpack.c.bf16 %v700, %v697
    %v839 = vpack.c.bf16 %v708, %v705
    %v840 = vpack.c.bf16 %v716, %v713
    %v841 = vpack.c.bf16 %v724, %v721
    %v842 = vpack.c.bf16 %v732, %v729
    %v843 = vpack.c.bf16 %v740, %v737
    %v844 = vpack.c.bf16 %v748, %v745
    %v845 = vpack.c.bf16 %v756, %v753
    %v846 = vpack.c.bf16 %v764, %v761
    %v847 = vpack.c.bf16 %v772, %v769
    %v848 = vpack.c.bf16 %v780, %v777
    %v849 = vpack.c.bf16 %v788, %v785
    %v850 = vpack.c.bf16 %v796, %v793
    %v851 = vpack.c.bf16 %v804, %v801
    %v852 = vpack.c.bf16 %v812, %v809
    %v853 = vpack.c.bf16 %v820, %v817
    %v854 = vpack.c.bf16 %v828, %v825
    %855 = vst.msk [vmem:[#allocation2 + $0x10] sm:$0xff] %vm532, %v831
    %857 = vrot.lane.b32.xlu0 %v832, 64
    %v858 = vpop.permute.xlu0 %857
    %860 = vst.msk [vmem:[#allocation2 + $0x10] sm:$0xff] %vm538, %v858
    %861 = vst.msk [vmem:[#allocation2 + $0x18] sm:$0xff] %vm532, %v833
    %862 = vst.msk [vmem:[%s541 + $0x10] sm:$0xff] %vm532, %v834
    %864 = vrot.lane.b32.xlu0 %v835, 64
    %v865 = vpop.permute.xlu0 %864
    %867 = vst.msk [vmem:[%s541 + $0x10] sm:$0xff] %vm538, %v865
    %868 = vst.msk [vmem:[%s541 + $0x18] sm:$0xff] %vm532, %v836
    %869 = vst.msk [vmem:[%s549 + $0x10] sm:$0xff] %vm532, %v837
    %871 = vrot.lane.b32.xlu0 %v838, 64
    %v872 = vpop.permute.xlu0 %871
    %874 = vst.msk [vmem:[%s549 + $0x10] sm:$0xff] %vm538, %v872
    %875 = vst.msk [vmem:[%s549 + $0x18] sm:$0xff] %vm532, %v839
    %876 = vst.msk [vmem:[%s557 + $0x10] sm:$0xff] %vm532, %v840
    %878 = vrot.lane.b32.xlu0 %v841, 64
    %v879 = vpop.permute.xlu0 %878
    %881 = vst.msk [vmem:[%s557 + $0x10] sm:$0xff] %vm538, %v879
    %882 = vst.msk [vmem:[%s557 + $0x18] sm:$0xff] %vm532, %v842
    %883 = vst.msk [vmem:[%s565 + $0x10] sm:$0xff] %vm532, %v843
    %885 = vrot.lane.b32.xlu0 %v844, 64
    %v886 = vpop.permute.xlu0 %885
    %888 = vst.msk [vmem:[%s565 + $0x10] sm:$0xff] %vm538, %v886
    %889 = vst.msk [vmem:[%s565 + $0x18] sm:$0xff] %vm532, %v845
    %890 = vst.msk [vmem:[%s573 + $0x10] sm:$0xff] %vm532, %v846
    %892 = vrot.lane.b32.xlu0 %v847, 64
    %v893 = vpop.permute.xlu0 %892
    %895 = vst.msk [vmem:[%s573 + $0x10] sm:$0xff] %vm538, %v893
    %896 = vst.msk [vmem:[%s573 + $0x18] sm:$0xff] %vm532, %v848
    %897 = vst.msk [vmem:[%s581 + $0x10] sm:$0xff] %vm532, %v849
    %899 = vrot.lane.b32.xlu0 %v850, 64
    %v900 = vpop.permute.xlu0 %899
    %902 = vst.msk [vmem:[%s581 + $0x10] sm:$0xff] %vm538, %v900
    %903 = vst.msk [vmem:[%s581 + $0x18] sm:$0xff] %vm532, %v851
    %904 = vst.msk [vmem:[%s589 + $0x10] sm:$0xff] %vm532, %v852
    %906 = vrot.lane.b32.xlu0 %v853, 64
    %v907 = vpop.permute.xlu0 %906
    %909 = vst.msk [vmem:[%s589 + $0x10] sm:$0xff] %vm538, %v907
    %910 = vst.msk [vmem:[%s589 + $0x18] sm:$0xff] %vm532, %v854
    %s911 = scalar_lea.vmem %s0, 16
    %v912 = vld [vmem:[%s911] sm:$0xf]
    %v913 = vld [vmem:[%s911 + $0x4] sm:$0xf]
    %v916 = vunpack.c.l.b16 %v912
    %v917 = vunpack.c.l.b16 %v913
    %v918 = vpack.c.b16 %v917, %v916
    %920 = vmatprep.subr.bf16.mxu0 0
    %921 = vmatpush1.bf16.msra.mxu0 %v918
    %922 = vmatprep.subr.bf16.mxu0 0
    %923 = vmatpush1.bf16.msra.mxu0 0
    %924 = vmatprep.subr.bf16.mxu0 0
    %925 = vmatpush1.bf16.msra.mxu0 0
    %926 = vmatprep.subr.bf16.mxu0 0
    %927 = vmatpush1.bf16.msra.mxu0 0
    %928 = vmatprep.subr.bf16.mxu0 0
    %929 = vmatpush1.bf16.msra.mxu0 0
    %930 = vmatprep.subr.bf16.mxu0 0
    %931 = vmatpush1.bf16.msra.mxu0 0
    %932 = vmatprep.subr.bf16.mxu0 0
    %933 = vmatpush1.bf16.msra.mxu0 0
    %934 = vmatprep.subr.bf16.mxu0 0
    %935 = vmatpush1.bf16.msra.mxu0 0
    %936 = vmatprep.subr.bf16.mxu0 0
    %937 = vmatpush1.bf16.msra.mxu0 0
    %938 = vmatprep.subr.bf16.mxu0 0
    %939 = vmatpush1.bf16.msra.mxu0 0
    %940 = vmatprep.subr.bf16.mxu0 0
    %941 = vmatpush1.bf16.msra.mxu0 0
    %942 = vmatprep.subr.bf16.mxu0 0
    %943 = vmatpush1.bf16.msra.mxu0 0
    %944 = vmatprep.subr.bf16.mxu0 0
    %945 = vmatpush1.bf16.msra.mxu0 0
    %946 = vmatprep.subr.bf16.mxu0 0
    %947 = vmatpush1.bf16.msra.mxu0 0
    %948 = vmatprep.subr.bf16.mxu0 0
    %949 = vmatpush1.bf16.msra.mxu0 0
    %950 = vmatprep.subr.bf16.mxu0 0
    %951 = vmatpush1.bf16.msra.mxu0 0
    %952 = vmatprep.mubr.bf16.mxu0 0
    %953 = vmatmul.mubr.bf16.gmra.mrb[0].mxu0 %v212
    %v954 = vpop.f32.mrb[0].mxu0
    %v955 = vadd.f32 0.0, %v954
    %v956 = vpop.f32.mrb[0].mxu0
    %v957 = vpop.f32.mrb[0].mxu0
    %v958 = vadd.f32 0.0, %v957
    %v959 = vpop.f32.mrb[0].mxu0
    %960 = vmatprep.mubr.bf16.mxu0 0
    %961 = vmatmul.mubr.bf16.gmra.mrb[0].mxu0 %v215
    %v962 = vpop.f32.mrb[0].mxu0
    %v963 = vadd.f32 0.0, %v962
    %v964 = vpop.f32.mrb[0].mxu0
    %v965 = vpop.f32.mrb[0].mxu0
    %v966 = vadd.f32 0.0, %v965
    %v967 = vpop.f32.mrb[0].mxu0
    %968 = vmatprep.mubr.bf16.mxu0 0
    %969 = vmatmul.mubr.bf16.gmra.mrb[0].mxu0 %v218
    %v970 = vpop.f32.mrb[0].mxu0
    %v971 = vadd.f32 0.0, %v970
    %v972 = vpop.f32.mrb[0].mxu0
    %v973 = vpop.f32.mrb[0].mxu0
    %v974 = vadd.f32 0.0, %v973
    %v975 = vpop.f32.mrb[0].mxu0
    %976 = vmatprep.mubr.bf16.mxu0 0
    %977 = vmatmul.mubr.bf16.gmra.mrb[0].mxu0 %v221
    %v978 = vpop.f32.mrb[0].mxu0
    %v979 = vadd.f32 0.0, %v978
    %v980 = vpop.f32.mrb[0].mxu0
    %v981 = vpop.f32.mrb[0].mxu0
    %v982 = vadd.f32 0.0, %v981
    %v983 = vpop.f32.mrb[0].mxu0
    %984 = vmatprep.mubr.bf16.mxu0 0
    %985 = vmatmul.mubr.bf16.gmra.mrb[0].mxu0 %v224
    %v986 = vpop.f32.mrb[0].mxu0
    %v987 = vadd.f32 0.0, %v986
    %v988 = vpop.f32.mrb[0].mxu0
    %v989 = vpop.f32.mrb[0].mxu0
    %v990 = vadd.f32 0.0, %v989
    %v991 = vpop.f32.mrb[0].mxu0
    %992 = vmatprep.mubr.bf16.mxu0 0
    %993 = vmatmul.mubr.bf16.gmra.mrb[0].mxu0 %v227
    %v994 = vpop.f32.mrb[0].mxu0
    %v995 = vadd.f32 0.0, %v994
    %v996 = vpop.f32.mrb[0].mxu0
    %v997 = vpop.f32.mrb[0].mxu0
    %v998 = vadd.f32 0.0, %v997
    %v999 = vpop.f32.mrb[0].mxu0
    %1000 = vmatprep.mubr.bf16.mxu0 0
    %1001 = vmatmul.mubr.bf16.gmra.mrb[0].mxu0 %v230
    %v1002 = vpop.f32.mrb[0].mxu0
    %v1003 = vadd.f32 0.0, %v1002
    %v1004 = vpop.f32.mrb[0].mxu0
    %v1005 = vpop.f32.mrb[0].mxu0
    %v1006 = vadd.f32 0.0, %v1005
    %v1007 = vpop.f32.mrb[0].mxu0
    %1008 = vmatprep.mubr.bf16.mxu0 0
    %1009 = vmatmul.mubr.bf16.gmra.mrb[0].mxu0 %v233
    %v1010 = vpop.f32.mrb[0].mxu0
    %v1011 = vadd.f32 0.0, %v1010
    %v1012 = vpop.f32.mrb[0].mxu0
    %v1013 = vpop.f32.mrb[0].mxu0
    %v1014 = vadd.f32 0.0, %v1013
    %v1015 = vpop.f32.mrb[0].mxu0
    %1016 = vmatprep.mubr.bf16.mxu0 0
    %1017 = vmatmul.mubr.bf16.gmra.mrb[0].mxu0 %v236
    %v1018 = vpop.f32.mrb[0].mxu0
    %v1019 = vadd.f32 0.0, %v1018
    %v1020 = vpop.f32.mrb[0].mxu0
    %v1021 = vpop.f32.mrb[0].mxu0
    %v1022 = vadd.f32 0.0, %v1021
    %v1023 = vpop.f32.mrb[0].mxu0
    %1024 = vmatprep.mubr.bf16.mxu0 0
    %1025 = vmatmul.mubr.bf16.gmra.mrb[0].mxu0 %v239
    %v1026 = vpop.f32.mrb[0].mxu0
    %v1027 = vadd.f32 0.0, %v1026
    %v1028 = vpop.f32.mrb[0].mxu0
    %v1029 = vpop.f32.mrb[0].mxu0
    %v1030 = vadd.f32 0.0, %v1029
    %v1031 = vpop.f32.mrb[0].mxu0
    %1032 = vmatprep.mubr.bf16.mxu0 0
    %1033 = vmatmul.mubr.bf16.gmra.mrb[0].mxu0 %v242
    %v1034 = vpop.f32.mrb[0].mxu0
    %v1035 = vadd.f32 0.0, %v1034
    %v1036 = vpop.f32.mrb[0].mxu0
    %v1037 = vpop.f32.mrb[0].mxu0
    %v1038 = vadd.f32 0.0, %v1037
    %v1039 = vpop.f32.mrb[0].mxu0
    %1040 = vmatprep.mubr.bf16.mxu0 0
    %1041 = vmatmul.mubr.bf16.gmra.mrb[0].mxu0 %v245
    %v1042 = vpop.f32.mrb[0].mxu0
    %v1043 = vadd.f32 0.0, %v1042
    %v1044 = vpop.f32.mrb[0].mxu0
    %v1045 = vpop.f32.mrb[0].mxu0
    %v1046 = vadd.f32 0.0, %v1045
    %v1047 = vpop.f32.mrb[0].mxu0
    %1048 = vmatprep.mubr.bf16.mxu0 0
    %1049 = vmatmul.mubr.bf16.gmra.mrb[0].mxu0 %v248
    %v1050 = vpop.f32.mrb[0].mxu0
    %v1051 = vadd.f32 0.0, %v1050
    %v1052 = vpop.f32.mrb[0].mxu0
    %v1053 = vpop.f32.mrb[0].mxu0
    %v1054 = vadd.f32 0.0, %v1053
    %v1055 = vpop.f32.mrb[0].mxu0
    %1056 = vmatprep.mubr.bf16.mxu0 0
    %1057 = vmatmul.mubr.bf16.gmra.mrb[0].mxu0 %v251
    %v1058 = vpop.f32.mrb[0].mxu0
    %v1059 = vadd.f32 0.0, %v1058
    %v1060 = vpop.f32.mrb[0].mxu0
    %v1061 = vpop.f32.mrb[0].mxu0
    %v1062 = vadd.f32 0.0, %v1061
    %v1063 = vpop.f32.mrb[0].mxu0
    %1064 = vmatprep.mubr.bf16.mxu0 0
    %1065 = vmatmul.mubr.bf16.gmra.mrb[0].mxu0 %v254
    %v1066 = vpop.f32.mrb[0].mxu0
    %v1067 = vadd.f32 0.0, %v1066
    %v1068 = vpop.f32.mrb[0].mxu0
    %v1069 = vpop.f32.mrb[0].mxu0
    %v1070 = vadd.f32 0.0, %v1069
    %v1071 = vpop.f32.mrb[0].mxu0
    %1072 = vmatprep.mubr.bf16.mxu0 0
    %1073 = vmatmul.mubr.bf16.gmra.mrb[0].mxu0 %v257
    %v1074 = vpop.f32.mrb[0].mxu0
    %v1075 = vadd.f32 0.0, %v1074
    %v1076 = vpop.f32.mrb[0].mxu0
    %v1077 = vpop.f32.mrb[0].mxu0
    %v1078 = vadd.f32 0.0, %v1077
    %v1079 = vpop.f32.mrb[0].mxu0
    %1080 = vmatprep.mubr.bf16.mxu0 0
    %1081 = vmatmul.mubr.bf16.gmra.mrb[0].mxu0 %v260
    %v1082 = vpop.f32.mrb[0].mxu0
    %v1083 = vadd.f32 0.0, %v1082
    %v1084 = vpop.f32.mrb[0].mxu0
    %v1085 = vpop.f32.mrb[0].mxu0
    %v1086 = vadd.f32 0.0, %v1085
    %v1087 = vpop.f32.mrb[0].mxu0
    %1088 = vmatprep.mubr.bf16.mxu0 0
    %1089 = vmatmul.mubr.bf16.gmra.mrb[0].mxu0 %v263
    %v1090 = vpop.f32.mrb[0].mxu0
    %v1091 = vadd.f32 0.0, %v1090
    %v1092 = vpop.f32.mrb[0].mxu0
    %v1093 = vpop.f32.mrb[0].mxu0
    %v1094 = vadd.f32 0.0, %v1093
    %v1095 = vpop.f32.mrb[0].mxu0
    %1096 = vmatprep.mubr.bf16.mxu0 0
    %1097 = vmatmul.mubr.bf16.gmra.mrb[0].mxu0 %v266
    %v1098 = vpop.f32.mrb[0].mxu0
    %v1099 = vadd.f32 0.0, %v1098
    %v1100 = vpop.f32.mrb[0].mxu0
    %v1101 = vpop.f32.mrb[0].mxu0
    %v1102 = vadd.f32 0.0, %v1101
    %v1103 = vpop.f32.mrb[0].mxu0
    %1104 = vmatprep.mubr.bf16.mxu0 0
    %1105 = vmatmul.mubr.bf16.gmra.mrb[0].mxu0 %v269
    %v1106 = vpop.f32.mrb[0].mxu0
    %v1107 = vadd.f32 0.0, %v1106
    %v1108 = vpop.f32.mrb[0].mxu0
    %v1109 = vpop.f32.mrb[0].mxu0
    %v1110 = vadd.f32 0.0, %v1109
    %v1111 = vpop.f32.mrb[0].mxu0
    %1112 = vmatprep.mubr.bf16.mxu0 0
    %1113 = vmatmul.mubr.bf16.gmra.mrb[0].mxu0 %v272
    %v1114 = vpop.f32.mrb[0].mxu0
    %v1115 = vadd.f32 0.0, %v1114
    %v1116 = vpop.f32.mrb[0].mxu0
    %v1117 = vpop.f32.mrb[0].mxu0
    %v1118 = vadd.f32 0.0, %v1117
    %v1119 = vpop.f32.mrb[0].mxu0
    %1120 = vmatprep.mubr.bf16.mxu0 0
    %1121 = vmatmul.mubr.bf16.gmra.mrb[0].mxu0 %v275
    %v1122 = vpop.f32.mrb[0].mxu0
    %v1123 = vadd.f32 0.0, %v1122
    %v1124 = vpop.f32.mrb[0].mxu0
    %v1125 = vpop.f32.mrb[0].mxu0
    %v1126 = vadd.f32 0.0, %v1125
    %v1127 = vpop.f32.mrb[0].mxu0
    %1128 = vmatprep.mubr.bf16.mxu0 0
    %1129 = vmatmul.mubr.bf16.gmra.mrb[0].mxu0 %v278
    %v1130 = vpop.f32.mrb[0].mxu0
    %v1131 = vadd.f32 0.0, %v1130
    %v1132 = vpop.f32.mrb[0].mxu0
    %v1133 = vpop.f32.mrb[0].mxu0
    %v1134 = vadd.f32 0.0, %v1133
    %v1135 = vpop.f32.mrb[0].mxu0
    %1136 = vmatprep.mubr.bf16.mxu0 0
    %1137 = vmatmul.mubr.bf16.gmra.mrb[0].mxu0 %v281
    %v1138 = vpop.f32.mrb[0].mxu0
    %v1139 = vadd.f32 0.0, %v1138
    %v1140 = vpop.f32.mrb[0].mxu0
    %v1141 = vpop.f32.mrb[0].mxu0
    %v1142 = vadd.f32 0.0, %v1141
    %v1143 = vpop.f32.mrb[0].mxu0
    %1144 = vdwg.mxu0
    %v1145 = vpack.c.bf16 %v958, %v955
    %v1146 = vpack.c.bf16 %v966, %v963
    %v1147 = vpack.c.bf16 %v974, %v971
    %v1148 = vpack.c.bf16 %v982, %v979
    %v1149 = vpack.c.bf16 %v990, %v987
    %v1150 = vpack.c.bf16 %v998, %v995
    %v1151 = vpack.c.bf16 %v1006, %v1003
    %v1152 = vpack.c.bf16 %v1014, %v1011
    %v1153 = vpack.c.bf16 %v1022, %v1019
    %v1154 = vpack.c.bf16 %v1030, %v1027
    %v1155 = vpack.c.bf16 %v1038, %v1035
    %v1156 = vpack.c.bf16 %v1046, %v1043
    %v1157 = vpack.c.bf16 %v1054, %v1051
    %v1158 = vpack.c.bf16 %v1062, %v1059
    %v1159 = vpack.c.bf16 %v1070, %v1067
    %v1160 = vpack.c.bf16 %v1078, %v1075
    %v1161 = vpack.c.bf16 %v1086, %v1083
    %v1162 = vpack.c.bf16 %v1094, %v1091
    %v1163 = vpack.c.bf16 %v1102, %v1099
    %v1164 = vpack.c.bf16 %v1110, %v1107
    %v1165 = vpack.c.bf16 %v1118, %v1115
    %v1166 = vpack.c.bf16 %v1126, %v1123
    %v1167 = vpack.c.bf16 %v1134, %v1131
    %v1168 = vpack.c.bf16 %v1142, %v1139
    %1169 = vst.msk [vmem:[#allocation2 + $0x20] sm:$0xff] %vm532, %v1145
    %1171 = vrot.lane.b32.xlu0 %v1146, 64
    %v1172 = vpop.permute.xlu0 %1171
    %1174 = vst.msk [vmem:[#allocation2 + $0x20] sm:$0xff] %vm538, %v1172
    %1175 = vst.msk [vmem:[#allocation2 + $0x28] sm:$0xff] %vm532, %v1147
    %1176 = vst.msk [vmem:[%s541 + $0x20] sm:$0xff] %vm532, %v1148
    %1178 = vrot.lane.b32.xlu0 %v1149, 64
    %v1179 = vpop.permute.xlu0 %1178
    %1181 = vst.msk [vmem:[%s541 + $0x20] sm:$0xff] %vm538, %v1179
    %1182 = vst.msk [vmem:[%s541 + $0x28] sm:$0xff] %vm532, %v1150
    %1183 = vst.msk [vmem:[%s549 + $0x20] sm:$0xff] %vm532, %v1151
    %1185 = vrot.lane.b32.xlu0 %v1152, 64
    %v1186 = vpop.permute.xlu0 %1185
    %1188 = vst.msk [vmem:[%s549 + $0x20] sm:$0xff] %vm538, %v1186
    %1189 = vst.msk [vmem:[%s549 + $0x28] sm:$0xff] %vm532, %v1153
    %1190 = vst.msk [vmem:[%s557 + $0x20] sm:$0xff] %vm532, %v1154
    %1192 = vrot.lane.b32.xlu0 %v1155, 64
    %v1193 = vpop.permute.xlu0 %1192
    %1195 = vst.msk [vmem:[%s557 + $0x20] sm:$0xff] %vm538, %v1193
    %1196 = vst.msk [vmem:[%s557 + $0x28] sm:$0xff] %vm532, %v1156
    %1197 = vst.msk [vmem:[%s565 + $0x20] sm:$0xff] %vm532, %v1157
    %1199 = vrot.lane.b32.xlu0 %v1158, 64
    %v1200 = vpop.permute.xlu0 %1199
    %1202 = vst.msk [vmem:[%s565 + $0x20] sm:$0xff] %vm538, %v1200
    %1203 = vst.msk [vmem:[%s565 + $0x28] sm:$0xff] %vm532, %v1159
    %1204 = vst.msk [vmem:[%s573 + $0x20] sm:$0xff] %vm532, %v1160
    %1206 = vrot.lane.b32.xlu0 %v1161, 64
    %v1207 = vpop.permute.xlu0 %1206
    %1209 = vst.msk [vmem:[%s573 + $0x20] sm:$0xff] %vm538, %v1207
    %1210 = vst.msk [vmem:[%s573 + $0x28] sm:$0xff] %vm532, %v1162
    %1211 = vst.msk [vmem:[%s581 + $0x20] sm:$0xff] %vm532, %v1163
    %1213 = vrot.lane.b32.xlu0 %v1164, 64
    %v1214 = vpop.permute.xlu0 %1213
    %1216 = vst.msk [vmem:[%s581 + $0x20] sm:$0xff] %vm538, %v1214
    %1217 = vst.msk [vmem:[%s581 + $0x28] sm:$0xff] %vm532, %v1165
    %1218 = vst.msk [vmem:[%s589 + $0x20] sm:$0xff] %vm532, %v1166
    %1220 = vrot.lane.b32.xlu0 %v1167, 64
    %v1221 = vpop.permute.xlu0 %1220
    %1223 = vst.msk [vmem:[%s589 + $0x20] sm:$0xff] %vm538, %v1221
    %1224 = vst.msk [vmem:[%s589 + $0x28] sm:$0xff] %vm532, %v1168
    %s1225 = scalar_lea.vmem %s0, 24
    %v1226 = vld [vmem:[%s1225] sm:$0xf]
    %v1227 = vld [vmem:[%s1225 + $0x4] sm:$0xf]
    %v1230 = vunpack.c.l.b16 %v1226
    %v1231 = vunpack.c.l.b16 %v1227
    %v1232 = vpack.c.b16 %v1231, %v1230
    %1234 = vmatprep.subr.bf16.mxu0 0
    %1235 = vmatpush1.bf16.msra.mxu0 %v1232
    %1236 = vmatprep.subr.bf16.mxu0 0
    %1237 = vmatpush1.bf16.msra.mxu0 0
    %1238 = vmatprep.subr.bf16.mxu0 0
    %1239 = vmatpush1.bf16.msra.mxu0 0
    %1240 = vmatprep.subr.bf16.mxu0 0
    %1241 = vmatpush1.bf16.msra.mxu0 0
    %1242 = vmatprep.subr.bf16.mxu0 0
    %1243 = vmatpush1.bf16.msra.mxu0 0
    %1244 = vmatprep.subr.bf16.mxu0 0
    %1245 = vmatpush1.bf16.msra.mxu0 0
    %1246 = vmatprep.subr.bf16.mxu0 0
    %1247 = vmatpush1.bf16.msra.mxu0 0
    %1248 = vmatprep.subr.bf16.mxu0 0
    %1249 = vmatpush1.bf16.msra.mxu0 0
    %1250 = vmatprep.subr.bf16.mxu0 0
    %1251 = vmatpush1.bf16.msra.mxu0 0
    %1252 = vmatprep.subr.bf16.mxu0 0
    %1253 = vmatpush1.bf16.msra.mxu0 0
    %1254 = vmatprep.subr.bf16.mxu0 0
    %1255 = vmatpush1.bf16.msra.mxu0 0
    %1256 = vmatprep.subr.bf16.mxu0 0
    %1257 = vmatpush1.bf16.msra.mxu0 0
    %1258 = vmatprep.subr.bf16.mxu0 0
    %1259 = vmatpush1.bf16.msra.mxu0 0
    %1260 = vmatprep.subr.bf16.mxu0 0
    %1261 = vmatpush1.bf16.msra.mxu0 0
    %1262 = vmatprep.subr.bf16.mxu0 0
    %1263 = vmatpush1.bf16.msra.mxu0 0
    %1264 = vmatprep.subr.bf16.mxu0 0
    %1265 = vmatpush1.bf16.msra.mxu0 0
    %1266 = vmatprep.mubr.bf16.mxu0 0
    %1267 = vmatmul.mubr.bf16.gmra.mrb[0].mxu0 %v212
    %v1268 = vpop.f32.mrb[0].mxu0
    %v1269 = vadd.f32 0.0, %v1268
    %v1270 = vpop.f32.mrb[0].mxu0
    %v1271 = vpop.f32.mrb[0].mxu0
    %v1272 = vadd.f32 0.0, %v1271
    %v1273 = vpop.f32.mrb[0].mxu0
    %1274 = vmatprep.mubr.bf16.mxu0 0
    %1275 = vmatmul.mubr.bf16.gmra.mrb[0].mxu0 %v215
    %v1276 = vpop.f32.mrb[0].mxu0
    %v1277 = vadd.f32 0.0, %v1276
    %v1278 = vpop.f32.mrb[0].mxu0
    %v1279 = vpop.f32.mrb[0].mxu0
    %v1280 = vadd.f32 0.0, %v1279
    %v1281 = vpop.f32.mrb[0].mxu0
    %1282 = vmatprep.mubr.bf16.mxu0 0
    %1283 = vmatmul.mubr.bf16.gmra.mrb[0].mxu0 %v218
    %v1284 = vpop.f32.mrb[0].mxu0
    %v1285 = vadd.f32 0.0, %v1284
    %v1286 = vpop.f32.mrb[0].mxu0
    %v1287 = vpop.f32.mrb[0].mxu0
    %v1288 = vadd.f32 0.0, %v1287
    %v1289 = vpop.f32.mrb[0].mxu0
    %1290 = vmatprep.mubr.bf16.mxu0 0
    %1291 = vmatmul.mubr.bf16.gmra.mrb[0].mxu0 %v221
    %v1292 = vpop.f32.mrb[0].mxu0
    %v1293 = vadd.f32 0.0, %v1292
    %v1294 = vpop.f32.mrb[0].mxu0
    %v1295 = vpop.f32.mrb[0].mxu0
    %v1296 = vadd.f32 0.0, %v1295
    %v1297 = vpop.f32.mrb[0].mxu0
    %1298 = vmatprep.mubr.bf16.mxu0 0
    %1299 = vmatmul.mubr.bf16.gmra.mrb[0].mxu0 %v224
    %v1300 = vpop.f32.mrb[0].mxu0
    %v1301 = vadd.f32 0.0, %v1300
    %v1302 = vpop.f32.mrb[0].mxu0
    %v1303 = vpop.f32.mrb[0].mxu0
    %v1304 = vadd.f32 0.0, %v1303
    %v1305 = vpop.f32.mrb[0].mxu0
    %1306 = vmatprep.mubr.bf16.mxu0 0
    %1307 = vmatmul.mubr.bf16.gmra.mrb[0].mxu0 %v227
    %v1308 = vpop.f32.mrb[0].mxu0
    %v1309 = vadd.f32 0.0, %v1308
    %v1310 = vpop.f32.mrb[0].mxu0
    %v1311 = vpop.f32.mrb[0].mxu0
    %v1312 = vadd.f32 0.0, %v1311
    %v1313 = vpop.f32.mrb[0].mxu0
    %1314 = vmatprep.mubr.bf16.mxu0 0
    %1315 = vmatmul.mubr.bf16.gmra.mrb[0].mxu0 %v230
    %v1316 = vpop.f32.mrb[0].mxu0
    %v1317 = vadd.f32 0.0, %v1316
    %v1318 = vpop.f32.mrb[0].mxu0
    %v1319 = vpop.f32.mrb[0].mxu0
    %v1320 = vadd.f32 0.0, %v1319
    %v1321 = vpop.f32.mrb[0].mxu0
    %1322 = vmatprep.mubr.bf16.mxu0 0
    %1323 = vmatmul.mubr.bf16.gmra.mrb[0].mxu0 %v233
    %v1324 = vpop.f32.mrb[0].mxu0
    %v1325 = vadd.f32 0.0, %v1324
    %v1326 = vpop.f32.mrb[0].mxu0
    %v1327 = vpop.f32.mrb[0].mxu0
    %v1328 = vadd.f32 0.0, %v1327
    %v1329 = vpop.f32.mrb[0].mxu0
    %1330 = vmatprep.mubr.bf16.mxu0 0
    %1331 = vmatmul.mubr.bf16.gmra.mrb[0].mxu0 %v236
    %v1332 = vpop.f32.mrb[0].mxu0
    %v1333 = vadd.f32 0.0, %v1332
    %v1334 = vpop.f32.mrb[0].mxu0
    %v1335 = vpop.f32.mrb[0].mxu0
    %v1336 = vadd.f32 0.0, %v1335
    %v1337 = vpop.f32.mrb[0].mxu0
    %1338 = vmatprep.mubr.bf16.mxu0 0
    %1339 = vmatmul.mubr.bf16.gmra.mrb[0].mxu0 %v239
    %v1340 = vpop.f32.mrb[0].mxu0
    %v1341 = vadd.f32 0.0, %v1340
    %v1342 = vpop.f32.mrb[0].mxu0
    %v1343 = vpop.f32.mrb[0].mxu0
    %v1344 = vadd.f32 0.0, %v1343
    %v1345 = vpop.f32.mrb[0].mxu0
    %1346 = vmatprep.mubr.bf16.mxu0 0
    %1347 = vmatmul.mubr.bf16.gmra.mrb[0].mxu0 %v242
    %v1348 = vpop.f32.mrb[0].mxu0
    %v1349 = vadd.f32 0.0, %v1348
    %v1350 = vpop.f32.mrb[0].mxu0
    %v1351 = vpop.f32.mrb[0].mxu0
    %v1352 = vadd.f32 0.0, %v1351
    %v1353 = vpop.f32.mrb[0].mxu0
    %1354 = vmatprep.mubr.bf16.mxu0 0
    %1355 = vmatmul.mubr.bf16.gmra.mrb[0].mxu0 %v245
    %v1356 = vpop.f32.mrb[0].mxu0
    %v1357 = vadd.f32 0.0, %v1356
    %v1358 = vpop.f32.mrb[0].mxu0
    %v1359 = vpop.f32.mrb[0].mxu0
    %v1360 = vadd.f32 0.0, %v1359
    %v1361 = vpop.f32.mrb[0].mxu0
    %1362 = vmatprep.mubr.bf16.mxu0 0
    %1363 = vmatmul.mubr.bf16.gmra.mrb[0].mxu0 %v248
    %v1364 = vpop.f32.mrb[0].mxu0
    %v1365 = vadd.f32 0.0, %v1364
    %v1366 = vpop.f32.mrb[0].mxu0
    %v1367 = vpop.f32.mrb[0].mxu0
    %v1368 = vadd.f32 0.0, %v1367
    %v1369 = vpop.f32.mrb[0].mxu0
    %1370 = vmatprep.mubr.bf16.mxu0 0
    %1371 = vmatmul.mubr.bf16.gmra.mrb[0].mxu0 %v251
    %v1372 = vpop.f32.mrb[0].mxu0
    %v1373 = vadd.f32 0.0, %v1372
    %v1374 = vpop.f32.mrb[0].mxu0
    %v1375 = vpop.f32.mrb[0].mxu0
    %v1376 = vadd.f32 0.0, %v1375
    %v1377 = vpop.f32.mrb[0].mxu0
    %1378 = vmatprep.mubr.bf16.mxu0 0
    %1379 = vmatmul.mubr.bf16.gmra.mrb[0].mxu0 %v254
    %v1380 = vpop.f32.mrb[0].mxu0
    %v1381 = vadd.f32 0.0, %v1380
    %v1382 = vpop.f32.mrb[0].mxu0
    %v1383 = vpop.f32.mrb[0].mxu0
    %v1384 = vadd.f32 0.0, %v1383
    %v1385 = vpop.f32.mrb[0].mxu0
    %1386 = vmatprep.mubr.bf16.mxu0 0
    %1387 = vmatmul.mubr.bf16.gmra.mrb[0].mxu0 %v257
    %v1388 = vpop.f32.mrb[0].mxu0
    %v1389 = vadd.f32 0.0, %v1388
    %v1390 = vpop.f32.mrb[0].mxu0
    %v1391 = vpop.f32.mrb[0].mxu0
    %v1392 = vadd.f32 0.0, %v1391
    %v1393 = vpop.f32.mrb[0].mxu0
    %1394 = vmatprep.mubr.bf16.mxu0 0
    %1395 = vmatmul.mubr.bf16.gmra.mrb[0].mxu0 %v260
    %v1396 = vpop.f32.mrb[0].mxu0
    %v1397 = vadd.f32 0.0, %v1396
    %v1398 = vpop.f32.mrb[0].mxu0
    %v1399 = vpop.f32.mrb[0].mxu0
    %v1400 = vadd.f32 0.0, %v1399
    %v1401 = vpop.f32.mrb[0].mxu0
    %1402 = vmatprep.mubr.bf16.mxu0 0
    %1403 = vmatmul.mubr.bf16.gmra.mrb[0].mxu0 %v263
    %v1404 = vpop.f32.mrb[0].mxu0
    %v1405 = vadd.f32 0.0, %v1404
    %v1406 = vpop.f32.mrb[0].mxu0
    %v1407 = vpop.f32.mrb[0].mxu0
    %v1408 = vadd.f32 0.0, %v1407
    %v1409 = vpop.f32.mrb[0].mxu0
    %1410 = vmatprep.mubr.bf16.mxu0 0
    %1411 = vmatmul.mubr.bf16.gmra.mrb[0].mxu0 %v266
    %v1412 = vpop.f32.mrb[0].mxu0
    %v1413 = vadd.f32 0.0, %v1412
    %v1414 = vpop.f32.mrb[0].mxu0
    %v1415 = vpop.f32.mrb[0].mxu0
    %v1416 = vadd.f32 0.0, %v1415
    %v1417 = vpop.f32.mrb[0].mxu0
    %1418 = vmatprep.mubr.bf16.mxu0 0
    %1419 = vmatmul.mubr.bf16.gmra.mrb[0].mxu0 %v269
    %v1420 = vpop.f32.mrb[0].mxu0
    %v1421 = vadd.f32 0.0, %v1420
    %v1422 = vpop.f32.mrb[0].mxu0
    %v1423 = vpop.f32.mrb[0].mxu0
    %v1424 = vadd.f32 0.0, %v1423
    %v1425 = vpop.f32.mrb[0].mxu0
    %1426 = vmatprep.mubr.bf16.mxu0 0
    %1427 = vmatmul.mubr.bf16.gmra.mrb[0].mxu0 %v272
    %v1428 = vpop.f32.mrb[0].mxu0
    %v1429 = vadd.f32 0.0, %v1428
    %v1430 = vpop.f32.mrb[0].mxu0
    %v1431 = vpop.f32.mrb[0].mxu0
    %v1432 = vadd.f32 0.0, %v1431
    %v1433 = vpop.f32.mrb[0].mxu0
    %1434 = vmatprep.mubr.bf16.mxu0 0
    %1435 = vmatmul.mubr.bf16.gmra.mrb[0].mxu0 %v275
    %v1436 = vpop.f32.mrb[0].mxu0
    %v1437 = vadd.f32 0.0, %v1436
    %v1438 = vpop.f32.mrb[0].mxu0
    %v1439 = vpop.f32.mrb[0].mxu0
    %v1440 = vadd.f32 0.0, %v1439
    %v1441 = vpop.f32.mrb[0].mxu0
    %1442 = vmatprep.mubr.bf16.mxu0 0
    %1443 = vmatmul.mubr.bf16.gmra.mrb[0].mxu0 %v278
    %v1444 = vpop.f32.mrb[0].mxu0
    %v1445 = vadd.f32 0.0, %v1444
    %v1446 = vpop.f32.mrb[0].mxu0
    %v1447 = vpop.f32.mrb[0].mxu0
    %v1448 = vadd.f32 0.0, %v1447
    %v1449 = vpop.f32.mrb[0].mxu0
    %1450 = vmatprep.mubr.bf16.mxu0 0
    %1451 = vmatmul.mubr.bf16.gmra.mrb[0].mxu0 %v281
    %v1452 = vpop.f32.mrb[0].mxu0
    %v1453 = vadd.f32 0.0, %v1452
    %v1454 = vpop.f32.mrb[0].mxu0
    %v1455 = vpop.f32.mrb[0].mxu0
    %v1456 = vadd.f32 0.0, %v1455
    %v1457 = vpop.f32.mrb[0].mxu0
    %1458 = vdwg.mxu0
    %v1459 = vpack.c.bf16 %v1272, %v1269
    %v1460 = vpack.c.bf16 %v1280, %v1277
    %v1461 = vpack.c.bf16 %v1288, %v1285
    %v1462 = vpack.c.bf16 %v1296, %v1293
    %v1463 = vpack.c.bf16 %v1304, %v1301
    %v1464 = vpack.c.bf16 %v1312, %v1309
    %v1465 = vpack.c.bf16 %v1320, %v1317
    %v1466 = vpack.c.bf16 %v1328, %v1325
    %v1467 = vpack.c.bf16 %v1336, %v1333
    %v1468 = vpack.c.bf16 %v1344, %v1341
    %v1469 = vpack.c.bf16 %v1352, %v1349
    %v1470 = vpack.c.bf16 %v1360, %v1357
    %v1471 = vpack.c.bf16 %v1368, %v1365
    %v1472 = vpack.c.bf16 %v1376, %v1373
    %v1473 = vpack.c.bf16 %v1384, %v1381
    %v1474 = vpack.c.bf16 %v1392, %v1389
    %v1475 = vpack.c.bf16 %v1400, %v1397
    %v1476 = vpack.c.bf16 %v1408, %v1405
    %v1477 = vpack.c.bf16 %v1416, %v1413
    %v1478 = vpack.c.bf16 %v1424, %v1421
    %v1479 = vpack.c.bf16 %v1432, %v1429
    %v1480 = vpack.c.bf16 %v1440, %v1437
    %v1481 = vpack.c.bf16 %v1448, %v1445
    %v1482 = vpack.c.bf16 %v1456, %v1453
    %1483 = vst.msk [vmem:[#allocation2 + $0x30] sm:$0xff] %vm532, %v1459
    %1485 = vrot.lane.b32.xlu0 %v1460, 64
    %v1486 = vpop.permute.xlu0 %1485
    %1488 = vst.msk [vmem:[#allocation2 + $0x30] sm:$0xff] %vm538, %v1486
    %1489 = vst.msk [vmem:[#allocation2 + $0x38] sm:$0xff] %vm532, %v1461
    %1490 = vst.msk [vmem:[%s541 + $0x30] sm:$0xff] %vm532, %v1462
    %1492 = vrot.lane.b32.xlu0 %v1463, 64
    %v1493 = vpop.permute.xlu0 %1492
    %1495 = vst.msk [vmem:[%s541 + $0x30] sm:$0xff] %vm538, %v1493
    %1496 = vst.msk [vmem:[%s541 + $0x38] sm:$0xff] %vm532, %v1464
    %1497 = vst.msk [vmem:[%s549 + $0x30] sm:$0xff] %vm532, %v1465
    %1499 = vrot.lane.b32.xlu0 %v1466, 64
    %v1500 = vpop.permute.xlu0 %1499
    %1502 = vst.msk [vmem:[%s549 + $0x30] sm:$0xff] %vm538, %v1500
    %1503 = vst.msk [vmem:[%s549 + $0x38] sm:$0xff] %vm532, %v1467
    %1504 = vst.msk [vmem:[%s557 + $0x30] sm:$0xff] %vm532, %v1468
    %1506 = vrot.lane.b32.xlu0 %v1469, 64
    %v1507 = vpop.permute.xlu0 %1506
    %1509 = vst.msk [vmem:[%s557 + $0x30] sm:$0xff] %vm538, %v1507
    %1510 = vst.msk [vmem:[%s557 + $0x38] sm:$0xff] %vm532, %v1470
    %1511 = vst.msk [vmem:[%s565 + $0x30] sm:$0xff] %vm532, %v1471
    %1513 = vrot.lane.b32.xlu0 %v1472, 64
    %v1514 = vpop.permute.xlu0 %1513
    %1516 = vst.msk [vmem:[%s565 + $0x30] sm:$0xff] %vm538, %v1514
    %1517 = vst.msk [vmem:[%s565 + $0x38] sm:$0xff] %vm532, %v1473
    %1518 = vst.msk [vmem:[%s573 + $0x30] sm:$0xff] %vm532, %v1474
    %1520 = vrot.lane.b32.xlu0 %v1475, 64
    %v1521 = vpop.permute.xlu0 %1520
    %1523 = vst.msk [vmem:[%s573 + $0x30] sm:$0xff] %vm538, %v1521
    %1524 = vst.msk [vmem:[%s573 + $0x38] sm:$0xff] %vm532, %v1476
    %1525 = vst.msk [vmem:[%s581 + $0x30] sm:$0xff] %vm532, %v1477
    %1527 = vrot.lane.b32.xlu0 %v1478, 64
    %v1528 = vpop.permute.xlu0 %1527
    %1530 = vst.msk [vmem:[%s581 + $0x30] sm:$0xff] %vm538, %v1528
    %1531 = vst.msk [vmem:[%s581 + $0x38] sm:$0xff] %vm532, %v1479
    %1532 = vst.msk [vmem:[%s589 + $0x30] sm:$0xff] %vm532, %v1480
    %1534 = vrot.lane.b32.xlu0 %v1481, 64
    %v1535 = vpop.permute.xlu0 %1534
    %1537 = vst.msk [vmem:[%s589 + $0x30] sm:$0xff] %vm538, %v1535
    %1538 = vst.msk [vmem:[%s589 + $0x38] sm:$0xff] %vm532, %v1482
    %s1539 = scalar_lea.vmem %s0, 32
    %v1540 = vld [vmem:[%s1539] sm:$0xf]
    %v1541 = vld [vmem:[%s1539 + $0x4] sm:$0xf]
    %v1544 = vunpack.c.l.b16 %v1540
    %v1545 = vunpack.c.l.b16 %v1541
    %v1546 = vpack.c.b16 %v1545, %v1544
    %1548 = vmatprep.subr.bf16.mxu0 0
    %1549 = vmatpush1.bf16.msra.mxu0 %v1546
    %1550 = vmatprep.subr.bf16.mxu0 0
    %1551 = vmatpush1.bf16.msra.mxu0 0
    %1552 = vmatprep.subr.bf16.mxu0 0
    %1553 = vmatpush1.bf16.msra.mxu0 0
    %1554 = vmatprep.subr.bf16.mxu0 0
    %1555 = vmatpush1.bf16.msra.mxu0 0
    %1556 = vmatprep.subr.bf16.mxu0 0
    %1557 = vmatpush1.bf16.msra.mxu0 0
    %1558 = vmatprep.subr.bf16.mxu0 0
    %1559 = vmatpush1.bf16.msra.mxu0 0
    %1560 = vmatprep.subr.bf16.mxu0 0
    %1561 = vmatpush1.bf16.msra.mxu0 0
    %1562 = vmatprep.subr.bf16.mxu0 0
    %1563 = vmatpush1.bf16.msra.mxu0 0
    %1564 = vmatprep.subr.bf16.mxu0 0
    %1565 = vmatpush1.bf16.msra.mxu0 0
    %1566 = vmatprep.subr.bf16.mxu0 0
    %1567 = vmatpush1.bf16.msra.mxu0 0
    %1568 = vmatprep.subr.bf16.mxu0 0
    %1569 = vmatpush1.bf16.msra.mxu0 0
    %1570 = vmatprep.subr.bf16.mxu0 0
    %1571 = vmatpush1.bf16.msra.mxu0 0
    %1572 = vmatprep.subr.bf16.mxu0 0
    %1573 = vmatpush1.bf16.msra.mxu0 0
    %1574 = vmatprep.subr.bf16.mxu0 0
    %1575 = vmatpush1.bf16.msra.mxu0 0
    %1576 = vmatprep.subr.bf16.mxu0 0
    %1577 = vmatpush1.bf16.msra.mxu0 0
    %1578 = vmatprep.subr.bf16.mxu0 0
    %1579 = vmatpush1.bf16.msra.mxu0 0
    %1580 = vmatprep.mubr.bf16.mxu0 0
    %1581 = vmatmul.mubr.bf16.gmra.mrb[0].mxu0 %v212
    %v1582 = vpop.f32.mrb[0].mxu0
    %v1583 = vadd.f32 0.0, %v1582
    %v1584 = vpop.f32.mrb[0].mxu0
    %v1585 = vpop.f32.mrb[0].mxu0
    %v1586 = vadd.f32 0.0, %v1585
    %v1587 = vpop.f32.mrb[0].mxu0
    %1588 = vmatprep.mubr.bf16.mxu0 0
    %1589 = vmatmul.mubr.bf16.gmra.mrb[0].mxu0 %v215
    %v1590 = vpop.f32.mrb[0].mxu0
    %v1591 = vadd.f32 0.0, %v1590
    %v1592 = vpop.f32.mrb[0].mxu0
    %v1593 = vpop.f32.mrb[0].mxu0
    %v1594 = vadd.f32 0.0, %v1593
    %v1595 = vpop.f32.mrb[0].mxu0
    %1596 = vmatprep.mubr.bf16.mxu0 0
    %1597 = vmatmul.mubr.bf16.gmra.mrb[0].mxu0 %v218
    %v1598 = vpop.f32.mrb[0].mxu0
    %v1599 = vadd.f32 0.0, %v1598
    %v1600 = vpop.f32.mrb[0].mxu0
    %v1601 = vpop.f32.mrb[0].mxu0
    %v1602 = vadd.f32 0.0, %v1601
    %v1603 = vpop.f32.mrb[0].mxu0
    %1604 = vmatprep.mubr.bf16.mxu0 0
    %1605 = vmatmul.mubr.bf16.gmra.mrb[0].mxu0 %v221
    %v1606 = vpop.f32.mrb[0].mxu0
    %v1607 = vadd.f32 0.0, %v1606
    %v1608 = vpop.f32.mrb[0].mxu0
    %v1609 = vpop.f32.mrb[0].mxu0
    %v1610 = vadd.f32 0.0, %v1609
    %v1611 = vpop.f32.mrb[0].mxu0
    %1612 = vmatprep.mubr.bf16.mxu0 0
    %1613 = vmatmul.mubr.bf16.gmra.mrb[0].mxu0 %v224
    %v1614 = vpop.f32.mrb[0].mxu0
    %v1615 = vadd.f32 0.0, %v1614
    %v1616 = vpop.f32.mrb[0].mxu0
    %v1617 = vpop.f32.mrb[0].mxu0
    %v1618 = vadd.f32 0.0, %v1617
    %v1619 = vpop.f32.mrb[0].mxu0
    %1620 = vmatprep.mubr.bf16.mxu0 0
    %1621 = vmatmul.mubr.bf16.gmra.mrb[0].mxu0 %v227
    %v1622 = vpop.f32.mrb[0].mxu0
    %v1623 = vadd.f32 0.0, %v1622
    %v1624 = vpop.f32.mrb[0].mxu0
    %v1625 = vpop.f32.mrb[0].mxu0
    %v1626 = vadd.f32 0.0, %v1625
    %v1627 = vpop.f32.mrb[0].mxu0
    %1628 = vmatprep.mubr.bf16.mxu0 0
    %1629 = vmatmul.mubr.bf16.gmra.mrb[0].mxu0 %v230
    %v1630 = vpop.f32.mrb[0].mxu0
    %v1631 = vadd.f32 0.0, %v1630
    %v1632 = vpop.f32.mrb[0].mxu0
    %v1633 = vpop.f32.mrb[0].mxu0
    %v1634 = vadd.f32 0.0, %v1633
    %v1635 = vpop.f32.mrb[0].mxu0
    %1636 = vmatprep.mubr.bf16.mxu0 0
    %1637 = vmatmul.mubr.bf16.gmra.mrb[0].mxu0 %v233
    %v1638 = vpop.f32.mrb[0].mxu0
    %v1639 = vadd.f32 0.0, %v1638
    %v1640 = vpop.f32.mrb[0].mxu0
    %v1641 = vpop.f32.mrb[0].mxu0
    %v1642 = vadd.f32 0.0, %v1641
    %v1643 = vpop.f32.mrb[0].mxu0
    %1644 = vmatprep.mubr.bf16.mxu0 0
    %1645 = vmatmul.mubr.bf16.gmra.mrb[0].mxu0 %v236
    %v1646 = vpop.f32.mrb[0].mxu0
    %v1647 = vadd.f32 0.0, %v1646
    %v1648 = vpop.f32.mrb[0].mxu0
    %v1649 = vpop.f32.mrb[0].mxu0
    %v1650 = vadd.f32 0.0, %v1649
    %v1651 = vpop.f32.mrb[0].mxu0
    %1652 = vmatprep.mubr.bf16.mxu0 0
    %1653 = vmatmul.mubr.bf16.gmra.mrb[0].mxu0 %v239
    %v1654 = vpop.f32.mrb[0].mxu0
    %v1655 = vadd.f32 0.0, %v1654
    %v1656 = vpop.f32.mrb[0].mxu0
    %v1657 = vpop.f32.mrb[0].mxu0
    %v1658 = vadd.f32 0.0, %v1657
    %v1659 = vpop.f32.mrb[0].mxu0
    %1660 = vmatprep.mubr.bf16.mxu0 0
    %1661 = vmatmul.mubr.bf16.gmra.mrb[0].mxu0 %v242
    %v1662 = vpop.f32.mrb[0].mxu0
    %v1663 = vadd.f32 0.0, %v1662
    %v1664 = vpop.f32.mrb[0].mxu0
    %v1665 = vpop.f32.mrb[0].mxu0
    %v1666 = vadd.f32 0.0, %v1665
    %v1667 = vpop.f32.mrb[0].mxu0
    %1668 = vmatprep.mubr.bf16.mxu0 0
    %1669 = vmatmul.mubr.bf16.gmra.mrb[0].mxu0 %v245
    %v1670 = vpop.f32.mrb[0].mxu0
    %v1671 = vadd.f32 0.0, %v1670
    %v1672 = vpop.f32.mrb[0].mxu0
    %v1673 = vpop.f32.mrb[0].mxu0
    %v1674 = vadd.f32 0.0, %v1673
    %v1675 = vpop.f32.mrb[0].mxu0
    %1676 = vmatprep.mubr.bf16.mxu0 0
    %1677 = vmatmul.mubr.bf16.gmra.mrb[0].mxu0 %v248
    %v1678 = vpop.f32.mrb[0].mxu0
    %v1679 = vadd.f32 0.0, %v1678
    %v1680 = vpop.f32.mrb[0].mxu0
    %v1681 = vpop.f32.mrb[0].mxu0
    %v1682 = vadd.f32 0.0, %v1681
    %v1683 = vpop.f32.mrb[0].mxu0
    %1684 = vmatprep.mubr.bf16.mxu0 0
    %1685 = vmatmul.mubr.bf16.gmra.mrb[0].mxu0 %v251
    %v1686 = vpop.f32.mrb[0].mxu0
    %v1687 = vadd.f32 0.0, %v1686
    %v1688 = vpop.f32.mrb[0].mxu0
    %v1689 = vpop.f32.mrb[0].mxu0
    %v1690 = vadd.f32 0.0, %v1689
    %v1691 = vpop.f32.mrb[0].mxu0
    %1692 = vmatprep.mubr.bf16.mxu0 0
    %1693 = vmatmul.mubr.bf16.gmra.mrb[0].mxu0 %v254
    %v1694 = vpop.f32.mrb[0].mxu0
    %v1695 = vadd.f32 0.0, %v1694
    %v1696 = vpop.f32.mrb[0].mxu0
    %v1697 = vpop.f32.mrb[0].mxu0
    %v1698 = vadd.f32 0.0, %v1697
    %v1699 = vpop.f32.mrb[0].mxu0
    %1700 = vmatprep.mubr.bf16.mxu0 0
    %1701 = vmatmul.mubr.bf16.gmra.mrb[0].mxu0 %v257
    %v1702 = vpop.f32.mrb[0].mxu0
    %v1703 = vadd.f32 0.0, %v1702
    %v1704 = vpop.f32.mrb[0].mxu0
    %v1705 = vpop.f32.mrb[0].mxu0
    %v1706 = vadd.f32 0.0, %v1705
    %v1707 = vpop.f32.mrb[0].mxu0
    %1708 = vmatprep.mubr.bf16.mxu0 0
    %1709 = vmatmul.mubr.bf16.gmra.mrb[0].mxu0 %v260
    %v1710 = vpop.f32.mrb[0].mxu0
    %v1711 = vadd.f32 0.0, %v1710
    %v1712 = vpop.f32.mrb[0].mxu0
    %v1713 = vpop.f32.mrb[0].mxu0
    %v1714 = vadd.f32 0.0, %v1713
    %v1715 = vpop.f32.mrb[0].mxu0
    %1716 = vmatprep.mubr.bf16.mxu0 0
    %1717 = vmatmul.mubr.bf16.gmra.mrb[0].mxu0 %v263
    %v1718 = vpop.f32.mrb[0].mxu0
    %v1719 = vadd.f32 0.0, %v1718
    %v1720 = vpop.f32.mrb[0].mxu0
    %v1721 = vpop.f32.mrb[0].mxu0
    %v1722 = vadd.f32 0.0, %v1721
    %v1723 = vpop.f32.mrb[0].mxu0
    %1724 = vmatprep.mubr.bf16.mxu0 0
    %1725 = vmatmul.mubr.bf16.gmra.mrb[0].mxu0 %v266
    %v1726 = vpop.f32.mrb[0].mxu0
    %v1727 = vadd.f32 0.0, %v1726
    %v1728 = vpop.f32.mrb[0].mxu0
    %v1729 = vpop.f32.mrb[0].mxu0
    %v1730 = vadd.f32 0.0, %v1729
    %v1731 = vpop.f32.mrb[0].mxu0
    %1732 = vmatprep.mubr.bf16.mxu0 0
    %1733 = vmatmul.mubr.bf16.gmra.mrb[0].mxu0 %v269
    %v1734 = vpop.f32.mrb[0].mxu0
    %v1735 = vadd.f32 0.0, %v1734
    %v1736 = vpop.f32.mrb[0].mxu0
    %v1737 = vpop.f32.mrb[0].mxu0
    %v1738 = vadd.f32 0.0, %v1737
    %v1739 = vpop.f32.mrb[0].mxu0
    %1740 = vmatprep.mubr.bf16.mxu0 0
    %1741 = vmatmul.mubr.bf16.gmra.mrb[0].mxu0 %v272
    %v1742 = vpop.f32.mrb[0].mxu0
    %v1743 = vadd.f32 0.0, %v1742
    %v1744 = vpop.f32.mrb[0].mxu0
    %v1745 = vpop.f32.mrb[0].mxu0
    %v1746 = vadd.f32 0.0, %v1745
    %v1747 = vpop.f32.mrb[0].mxu0
    %1748 = vmatprep.mubr.bf16.mxu0 0
    %1749 = vmatmul.mubr.bf16.gmra.mrb[0].mxu0 %v275
    %v1750 = vpop.f32.mrb[0].mxu0
    %v1751 = vadd.f32 0.0, %v1750
    %v1752 = vpop.f32.mrb[0].mxu0
    %v1753 = vpop.f32.mrb[0].mxu0
    %v1754 = vadd.f32 0.0, %v1753
    %v1755 = vpop.f32.mrb[0].mxu0
    %1756 = vmatprep.mubr.bf16.mxu0 0
    %1757 = vmatmul.mubr.bf16.gmra.mrb[0].mxu0 %v278
    %v1758 = vpop.f32.mrb[0].mxu0
    %v1759 = vadd.f32 0.0, %v1758
    %v1760 = vpop.f32.mrb[0].mxu0
    %v1761 = vpop.f32.mrb[0].mxu0
    %v1762 = vadd.f32 0.0, %v1761
    %v1763 = vpop.f32.mrb[0].mxu0
    %1764 = vmatprep.mubr.bf16.mxu0 0
    %1765 = vmatmul.mubr.bf16.gmra.mrb[0].mxu0 %v281
    %v1766 = vpop.f32.mrb[0].mxu0
    %v1767 = vadd.f32 0.0, %v1766
    %v1768 = vpop.f32.mrb[0].mxu0
    %v1769 = vpop.f32.mrb[0].mxu0
    %v1770 = vadd.f32 0.0, %v1769
    %v1771 = vpop.f32.mrb[0].mxu0
    %1772 = vdwg.mxu0
    %v1773 = vpack.c.bf16 %v1586, %v1583
    %v1774 = vpack.c.bf16 %v1594, %v1591
    %v1775 = vpack.c.bf16 %v1602, %v1599
    %v1776 = vpack.c.bf16 %v1610, %v1607
    %v1777 = vpack.c.bf16 %v1618, %v1615
    %v1778 = vpack.c.bf16 %v1626, %v1623
    %v1779 = vpack.c.bf16 %v1634, %v1631
    %v1780 = vpack.c.bf16 %v1642, %v1639
    %v1781 = vpack.c.bf16 %v1650, %v1647
    %v1782 = vpack.c.bf16 %v1658, %v1655
    %v1783 = vpack.c.bf16 %v1666, %v1663
    %v1784 = vpack.c.bf16 %v1674, %v1671
    %v1785 = vpack.c.bf16 %v1682, %v1679
    %v1786 = vpack.c.bf16 %v1690, %v1687
    %v1787 = vpack.c.bf16 %v1698, %v1695
    %v1788 = vpack.c.bf16 %v1706, %v1703
    %v1789 = vpack.c.bf16 %v1714, %v1711
    %v1790 = vpack.c.bf16 %v1722, %v1719
    %v1791 = vpack.c.bf16 %v1730, %v1727
    %v1792 = vpack.c.bf16 %v1738, %v1735
    %v1793 = vpack.c.bf16 %v1746, %v1743
    %v1794 = vpack.c.bf16 %v1754, %v1751
    %v1795 = vpack.c.bf16 %v1762, %v1759
    %v1796 = vpack.c.bf16 %v1770, %v1767
    %1797 = vst.msk [vmem:[#allocation2 + $0x40] sm:$0xff] %vm532, %v1773
    %1799 = vrot.lane.b32.xlu0 %v1774, 64
    %v1800 = vpop.permute.xlu0 %1799
    %1802 = vst.msk [vmem:[#allocation2 + $0x40] sm:$0xff] %vm538, %v1800
    %1803 = vst.msk [vmem:[#allocation2 + $0x48] sm:$0xff] %vm532, %v1775
    %1804 = vst.msk [vmem:[%s541 + $0x40] sm:$0xff] %vm532, %v1776
    %1806 = vrot.lane.b32.xlu0 %v1777, 64
    %v1807 = vpop.permute.xlu0 %1806
    %1809 = vst.msk [vmem:[%s541 + $0x40] sm:$0xff] %vm538, %v1807
    %1810 = vst.msk [vmem:[%s541 + $0x48] sm:$0xff] %vm532, %v1778
    %1811 = vst.msk [vmem:[%s549 + $0x40] sm:$0xff] %vm532, %v1779
    %1813 = vrot.lane.b32.xlu0 %v1780, 64
    %v1814 = vpop.permute.xlu0 %1813
    %1816 = vst.msk [vmem:[%s549 + $0x40] sm:$0xff] %vm538, %v1814
    %1817 = vst.msk [vmem:[%s549 + $0x48] sm:$0xff] %vm532, %v1781
    %1818 = vst.msk [vmem:[%s557 + $0x40] sm:$0xff] %vm532, %v1782
    %1820 = vrot.lane.b32.xlu0 %v1783, 64
    %v1821 = vpop.permute.xlu0 %1820
    %1823 = vst.msk [vmem:[%s557 + $0x40] sm:$0xff] %vm538, %v1821
    %1824 = vst.msk [vmem:[%s557 + $0x48] sm:$0xff] %vm532, %v1784
    %1825 = vst.msk [vmem:[%s565 + $0x40] sm:$0xff] %vm532, %v1785
    %1827 = vrot.lane.b32.xlu0 %v1786, 64
    %v1828 = vpop.permute.xlu0 %1827
    %1830 = vst.msk [vmem:[%s565 + $0x40] sm:$0xff] %vm538, %v1828
    %1831 = vst.msk [vmem:[%s565 + $0x48] sm:$0xff] %vm532, %v1787
    %1832 = vst.msk [vmem:[%s573 + $0x40] sm:$0xff] %vm532, %v1788
    %1834 = vrot.lane.b32.xlu0 %v1789, 64
    %v1835 = vpop.permute.xlu0 %1834
    %1837 = vst.msk [vmem:[%s573 + $0x40] sm:$0xff] %vm538, %v1835
    %1838 = vst.msk [vmem:[%s573 + $0x48] sm:$0xff] %vm532, %v1790
    %1839 = vst.msk [vmem:[%s581 + $0x40] sm:$0xff] %vm532, %v1791
    %1841 = vrot.lane.b32.xlu0 %v1792, 64
    %v1842 = vpop.permute.xlu0 %1841
    %1844 = vst.msk [vmem:[%s581 + $0x40] sm:$0xff] %vm538, %v1842
    %1845 = vst.msk [vmem:[%s581 + $0x48] sm:$0xff] %vm532, %v1793
    %1846 = vst.msk [vmem:[%s589 + $0x40] sm:$0xff] %vm532, %v1794
    %1848 = vrot.lane.b32.xlu0 %v1795, 64
    %v1849 = vpop.permute.xlu0 %1848
    %1851 = vst.msk [vmem:[%s589 + $0x40] sm:$0xff] %vm538, %v1849
    %1852 = vst.msk [vmem:[%s589 + $0x48] sm:$0xff] %vm532, %v1796
    %s1853 = scalar_lea.vmem %s0, 40
    %v1854 = vld [vmem:[%s1853] sm:$0xf]
    %v1855 = vld [vmem:[%s1853 + $0x4] sm:$0xf]
    %v1858 = vunpack.c.l.b16 %v1854
    %v1859 = vunpack.c.l.b16 %v1855
    %v1860 = vpack.c.b16 %v1859, %v1858
    %1862 = vmatprep.subr.bf16.mxu0 0
    %1863 = vmatpush1.bf16.msra.mxu0 %v1860
    %1864 = vmatprep.subr.bf16.mxu0 0
    %1865 = vmatpush1.bf16.msra.mxu0 0
    %1866 = vmatprep.subr.bf16.mxu0 0
    %1867 = vmatpush1.bf16.msra.mxu0 0
    %1868 = vmatprep.subr.bf16.mxu0 0
    %1869 = vmatpush1.bf16.msra.mxu0 0
    %1870 = vmatprep.subr.bf16.mxu0 0
    %1871 = vmatpush1.bf16.msra.mxu0 0
    %1872 = vmatprep.subr.bf16.mxu0 0
    %1873 = vmatpush1.bf16.msra.mxu0 0
    %1874 = vmatprep.subr.bf16.mxu0 0
    %1875 = vmatpush1.bf16.msra.mxu0 0
    %1876 = vmatprep.subr.bf16.mxu0 0
    %1877 = vmatpush1.bf16.msra.mxu0 0
    %1878 = vmatprep.subr.bf16.mxu0 0
    %1879 = vmatpush1.bf16.msra.mxu0 0
    %1880 = vmatprep.subr.bf16.mxu0 0
    %1881 = vmatpush1.bf16.msra.mxu0 0
    %1882 = vmatprep.subr.bf16.mxu0 0
    %1883 = vmatpush1.bf16.msra.mxu0 0
    %1884 = vmatprep.subr.bf16.mxu0 0
    %1885 = vmatpush1.bf16.msra.mxu0 0
    %1886 = vmatprep.subr.bf16.mxu0 0
    %1887 = vmatpush1.bf16.msra.mxu0 0
    %1888 = vmatprep.subr.bf16.mxu0 0
    %1889 = vmatpush1.bf16.msra.mxu0 0
    %1890 = vmatprep.subr.bf16.mxu0 0
    %1891 = vmatpush1.bf16.msra.mxu0 0
    %1892 = vmatprep.subr.bf16.mxu0 0
    %1893 = vmatpush1.bf16.msra.mxu0 0
    %1894 = vmatprep.mubr.bf16.mxu0 0
    %1895 = vmatmul.mubr.bf16.gmra.mrb[0].mxu0 %v212
    %v1896 = vpop.f32.mrb[0].mxu0
    %v1897 = vadd.f32 0.0, %v1896
    %v1898 = vpop.f32.mrb[0].mxu0
    %v1899 = vpop.f32.mrb[0].mxu0
    %v1900 = vadd.f32 0.0, %v1899
    %v1901 = vpop.f32.mrb[0].mxu0
    %1902 = vmatprep.mubr.bf16.mxu0 0
    %1903 = vmatmul.mubr.bf16.gmra.mrb[0].mxu0 %v215
    %v1904 = vpop.f32.mrb[0].mxu0
    %v1905 = vadd.f32 0.0, %v1904
    %v1906 = vpop.f32.mrb[0].mxu0
    %v1907 = vpop.f32.mrb[0].mxu0
    %v1908 = vadd.f32 0.0, %v1907
    %v1909 = vpop.f32.mrb[0].mxu0
    %1910 = vmatprep.mubr.bf16.mxu0 0
    %1911 = vmatmul.mubr.bf16.gmra.mrb[0].mxu0 %v218
    %v1912 = vpop.f32.mrb[0].mxu0
    %v1913 = vadd.f32 0.0, %v1912
    %v1914 = vpop.f32.mrb[0].mxu0
    %v1915 = vpop.f32.mrb[0].mxu0
    %v1916 = vadd.f32 0.0, %v1915
    %v1917 = vpop.f32.mrb[0].mxu0
    %1918 = vmatprep.mubr.bf16.mxu0 0
    %1919 = vmatmul.mubr.bf16.gmra.mrb[0].mxu0 %v221
    %v1920 = vpop.f32.mrb[0].mxu0
    %v1921 = vadd.f32 0.0, %v1920
    %v1922 = vpop.f32.mrb[0].mxu0
    %v1923 = vpop.f32.mrb[0].mxu0
    %v1924 = vadd.f32 0.0, %v1923
    %v1925 = vpop.f32.mrb[0].mxu0
    %1926 = vmatprep.mubr.bf16.mxu0 0
    %1927 = vmatmul.mubr.bf16.gmra.mrb[0].mxu0 %v224
    %v1928 = vpop.f32.mrb[0].mxu0
    %v1929 = vadd.f32 0.0, %v1928
    %v1930 = vpop.f32.mrb[0].mxu0
    %v1931 = vpop.f32.mrb[0].mxu0
    %v1932 = vadd.f32 0.0, %v1931
    %v1933 = vpop.f32.mrb[0].mxu0
    %1934 = vmatprep.mubr.bf16.mxu0 0
    %1935 = vmatmul.mubr.bf16.gmra.mrb[0].mxu0 %v227
    %v1936 = vpop.f32.mrb[0].mxu0
    %v1937 = vadd.f32 0.0, %v1936
    %v1938 = vpop.f32.mrb[0].mxu0
    %v1939 = vpop.f32.mrb[0].mxu0
    %v1940 = vadd.f32 0.0, %v1939
    %v1941 = vpop.f32.mrb[0].mxu0
    %1942 = vmatprep.mubr.bf16.mxu0 0
    %1943 = vmatmul.mubr.bf16.gmra.mrb[0].mxu0 %v230
    %v1944 = vpop.f32.mrb[0].mxu0
    %v1945 = vadd.f32 0.0, %v1944
    %v1946 = vpop.f32.mrb[0].mxu0
    %v1947 = vpop.f32.mrb[0].mxu0
    %v1948 = vadd.f32 0.0, %v1947
    %v1949 = vpop.f32.mrb[0].mxu0
    %1950 = vmatprep.mubr.bf16.mxu0 0
    %1951 = vmatmul.mubr.bf16.gmra.mrb[0].mxu0 %v233
    %v1952 = vpop.f32.mrb[0].mxu0
    %v1953 = vadd.f32 0.0, %v1952
    %v1954 = vpop.f32.mrb[0].mxu0
    %v1955 = vpop.f32.mrb[0].mxu0
    %v1956 = vadd.f32 0.0, %v1955
    %v1957 = vpop.f32.mrb[0].mxu0
    %1958 = vmatprep.mubr.bf16.mxu0 0
    %1959 = vmatmul.mubr.bf16.gmra.mrb[0].mxu0 %v236
    %v1960 = vpop.f32.mrb[0].mxu0
    %v1961 = vadd.f32 0.0, %v1960
    %v1962 = vpop.f32.mrb[0].mxu0
    %v1963 = vpop.f32.mrb[0].mxu0
    %v1964 = vadd.f32 0.0, %v1963
    %v1965 = vpop.f32.mrb[0].mxu0
    %1966 = vmatprep.mubr.bf16.mxu0 0
    %1967 = vmatmul.mubr.bf16.gmra.mrb[0].mxu0 %v239
    %v1968 = vpop.f32.mrb[0].mxu0
    %v1969 = vadd.f32 0.0, %v1968
    %v1970 = vpop.f32.mrb[0].mxu0
    %v1971 = vpop.f32.mrb[0].mxu0
    %v1972 = vadd.f32 0.0, %v1971
    %v1973 = vpop.f32.mrb[0].mxu0
    %1974 = vmatprep.mubr.bf16.mxu0 0
    %1975 = vmatmul.mubr.bf16.gmra.mrb[0].mxu0 %v242
    %v1976 = vpop.f32.mrb[0].mxu0
    %v1977 = vadd.f32 0.0, %v1976
    %v1978 = vpop.f32.mrb[0].mxu0
    %v1979 = vpop.f32.mrb[0].mxu0
    %v1980 = vadd.f32 0.0, %v1979
    %v1981 = vpop.f32.mrb[0].mxu0
    %1982 = vmatprep.mubr.bf16.mxu0 0
    %1983 = vmatmul.mubr.bf16.gmra.mrb[0].mxu0 %v245
    %v1984 = vpop.f32.mrb[0].mxu0
    %v1985 = vadd.f32 0.0, %v1984
    %v1986 = vpop.f32.mrb[0].mxu0
    %v1987 = vpop.f32.mrb[0].mxu0
    %v1988 = vadd.f32 0.0, %v1987
    %v1989 = vpop.f32.mrb[0].mxu0
    %1990 = vmatprep.mubr.bf16.mxu0 0
    %1991 = vmatmul.mubr.bf16.gmra.mrb[0].mxu0 %v248
    %v1992 = vpop.f32.mrb[0].mxu0
    %v1993 = vadd.f32 0.0, %v1992
    %v1994 = vpop.f32.mrb[0].mxu0
    %v1995 = vpop.f32.mrb[0].mxu0
    %v1996 = vadd.f32 0.0, %v1995
    %v1997 = vpop.f32.mrb[0].mxu0
    %1998 = vmatprep.mubr.bf16.mxu0 0
    %1999 = vmatmul.mubr.bf16.gmra.mrb[0].mxu0 %v251
    %v2000 = vpop.f32.mrb[0].mxu0
    %v2001 = vadd.f32 0.0, %v2000
    %v2002 = vpop.f32.mrb[0].mxu0
    %v2003 = vpop.f32.mrb[0].mxu0
    %v2004 = vadd.f32 0.0, %v2003
    %v2005 = vpop.f32.mrb[0].mxu0
    %2006 = vmatprep.mubr.bf16.mxu0 0
    %2007 = vmatmul.mubr.bf16.gmra.mrb[0].mxu0 %v254
    %v2008 = vpop.f32.mrb[0].mxu0
    %v2009 = vadd.f32 0.0, %v2008
    %v2010 = vpop.f32.mrb[0].mxu0
    %v2011 = vpop.f32.mrb[0].mxu0
    %v2012 = vadd.f32 0.0, %v2011
    %v2013 = vpop.f32.mrb[0].mxu0
    %2014 = vmatprep.mubr.bf16.mxu0 0
    %2015 = vmatmul.mubr.bf16.gmra.mrb[0].mxu0 %v257
    %v2016 = vpop.f32.mrb[0].mxu0
    %v2017 = vadd.f32 0.0, %v2016
    %v2018 = vpop.f32.mrb[0].mxu0
    %v2019 = vpop.f32.mrb[0].mxu0
    %v2020 = vadd.f32 0.0, %v2019
    %v2021 = vpop.f32.mrb[0].mxu0
    %2022 = vmatprep.mubr.bf16.mxu0 0
    %2023 = vmatmul.mubr.bf16.gmra.mrb[0].mxu0 %v260
    %v2024 = vpop.f32.mrb[0].mxu0
    %v2025 = vadd.f32 0.0, %v2024
    %v2026 = vpop.f32.mrb[0].mxu0
    %v2027 = vpop.f32.mrb[0].mxu0
    %v2028 = vadd.f32 0.0, %v2027
    %v2029 = vpop.f32.mrb[0].mxu0
    %2030 = vmatprep.mubr.bf16.mxu0 0
    %2031 = vmatmul.mubr.bf16.gmra.mrb[0].mxu0 %v263
    %v2032 = vpop.f32.mrb[0].mxu0
    %v2033 = vadd.f32 0.0, %v2032
    %v2034 = vpop.f32.mrb[0].mxu0
    %v2035 = vpop.f32.mrb[0].mxu0
    %v2036 = vadd.f32 0.0, %v2035
    %v2037 = vpop.f32.mrb[0].mxu0
    %2038 = vmatprep.mubr.bf16.mxu0 0
    %2039 = vmatmul.mubr.bf16.gmra.mrb[0].mxu0 %v266
    %v2040 = vpop.f32.mrb[0].mxu0
    %v2041 = vadd.f32 0.0, %v2040
    %v2042 = vpop.f32.mrb[0].mxu0
    %v2043 = vpop.f32.mrb[0].mxu0
    %v2044 = vadd.f32 0.0, %v2043
    %v2045 = vpop.f32.mrb[0].mxu0
    %2046 = vmatprep.mubr.bf16.mxu0 0
    %2047 = vmatmul.mubr.bf16.gmra.mrb[0].mxu0 %v269
    %v2048 = vpop.f32.mrb[0].mxu0
    %v2049 = vadd.f32 0.0, %v2048
    %v2050 = vpop.f32.mrb[0].mxu0
    %v2051 = vpop.f32.mrb[0].mxu0
    %v2052 = vadd.f32 0.0, %v2051
    %v2053 = vpop.f32.mrb[0].mxu0
    %2054 = vmatprep.mubr.bf16.mxu0 0
    %2055 = vmatmul.mubr.bf16.gmra.mrb[0].mxu0 %v272
    %v2056 = vpop.f32.mrb[0].mxu0
    %v2057 = vadd.f32 0.0, %v2056
    %v2058 = vpop.f32.mrb[0].mxu0
    %v2059 = vpop.f32.mrb[0].mxu0
    %v2060 = vadd.f32 0.0, %v2059
    %v2061 = vpop.f32.mrb[0].mxu0
    %2062 = vmatprep.mubr.bf16.mxu0 0
    %2063 = vmatmul.mubr.bf16.gmra.mrb[0].mxu0 %v275
    %v2064 = vpop.f32.mrb[0].mxu0
    %v2065 = vadd.f32 0.0, %v2064
    %v2066 = vpop.f32.mrb[0].mxu0
    %v2067 = vpop.f32.mrb[0].mxu0
    %v2068 = vadd.f32 0.0, %v2067
    %v2069 = vpop.f32.mrb[0].mxu0
    %2070 = vmatprep.mubr.bf16.mxu0 0
    %2071 = vmatmul.mubr.bf16.gmra.mrb[0].mxu0 %v278
    %v2072 = vpop.f32.mrb[0].mxu0
    %v2073 = vadd.f32 0.0, %v2072
    %v2074 = vpop.f32.mrb[0].mxu0
    %v2075 = vpop.f32.mrb[0].mxu0
    %v2076 = vadd.f32 0.0, %v2075
    %v2077 = vpop.f32.mrb[0].mxu0
    %2078 = vmatprep.mubr.bf16.mxu0 0
    %2079 = vmatmul.mubr.bf16.gmra.mrb[0].mxu0 %v281
    %v2080 = vpop.f32.mrb[0].mxu0
    %v2081 = vadd.f32 0.0, %v2080
    %v2082 = vpop.f32.mrb[0].mxu0
    %v2083 = vpop.f32.mrb[0].mxu0
    %v2084 = vadd.f32 0.0, %v2083
    %v2085 = vpop.f32.mrb[0].mxu0
    %2086 = vdwg.mxu0
    %v2087 = vpack.c.bf16 %v1900, %v1897
    %v2088 = vpack.c.bf16 %v1908, %v1905
    %v2089 = vpack.c.bf16 %v1916, %v1913
    %v2090 = vpack.c.bf16 %v1924, %v1921
    %v2091 = vpack.c.bf16 %v1932, %v1929
    %v2092 = vpack.c.bf16 %v1940, %v1937
    %v2093 = vpack.c.bf16 %v1948, %v1945
    %v2094 = vpack.c.bf16 %v1956, %v1953
    %v2095 = vpack.c.bf16 %v1964, %v1961
    %v2096 = vpack.c.bf16 %v1972, %v1969
    %v2097 = vpack.c.bf16 %v1980, %v1977
    %v2098 = vpack.c.bf16 %v1988, %v1985
    %v2099 = vpack.c.bf16 %v1996, %v1993
    %v2100 = vpack.c.bf16 %v2004, %v2001
    %v2101 = vpack.c.bf16 %v2012, %v2009
    %v2102 = vpack.c.bf16 %v2020, %v2017
    %v2103 = vpack.c.bf16 %v2028, %v2025
    %v2104 = vpack.c.bf16 %v2036, %v2033
    %v2105 = vpack.c.bf16 %v2044, %v2041
    %v2106 = vpack.c.bf16 %v2052, %v2049
    %v2107 = vpack.c.bf16 %v2060, %v2057
    %v2108 = vpack.c.bf16 %v2068, %v2065
    %v2109 = vpack.c.bf16 %v2076, %v2073
    %v2110 = vpack.c.bf16 %v2084, %v2081
    %2111 = vst.msk [vmem:[#allocation2 + $0x50] sm:$0xff] %vm532, %v2087
    %2113 = vrot.lane.b32.xlu0 %v2088, 64
    %v2114 = vpop.permute.xlu0 %2113
    %2116 = vst.msk [vmem:[#allocation2 + $0x50] sm:$0xff] %vm538, %v2114
    %2117 = vst.msk [vmem:[#allocation2 + $0x58] sm:$0xff] %vm532, %v2089
    %2118 = vst.msk [vmem:[%s541 + $0x50] sm:$0xff] %vm532, %v2090
    %2120 = vrot.lane.b32.xlu0 %v2091, 64
    %v2121 = vpop.permute.xlu0 %2120
    %2123 = vst.msk [vmem:[%s541 + $0x50] sm:$0xff] %vm538, %v2121
    %2124 = vst.msk [vmem:[%s541 + $0x58] sm:$0xff] %vm532, %v2092
    %2125 = vst.msk [vmem:[%s549 + $0x50] sm:$0xff] %vm532, %v2093
    %2127 = vrot.lane.b32.xlu0 %v2094, 64
    %v2128 = vpop.permute.xlu0 %2127
    %2130 = vst.msk [vmem:[%s549 + $0x50] sm:$0xff] %vm538, %v2128
    %2131 = vst.msk [vmem:[%s549 + $0x58] sm:$0xff] %vm532, %v2095
    %2132 = vst.msk [vmem:[%s557 + $0x50] sm:$0xff] %vm532, %v2096
    %2134 = vrot.lane.b32.xlu0 %v2097, 64
    %v2135 = vpop.permute.xlu0 %2134
    %2137 = vst.msk [vmem:[%s557 + $0x50] sm:$0xff] %vm538, %v2135
    %2138 = vst.msk [vmem:[%s557 + $0x58] sm:$0xff] %vm532, %v2098
    %2139 = vst.msk [vmem:[%s565 + $0x50] sm:$0xff] %vm532, %v2099
    %2141 = vrot.lane.b32.xlu0 %v2100, 64
    %v2142 = vpop.permute.xlu0 %2141
    %2144 = vst.msk [vmem:[%s565 + $0x50] sm:$0xff] %vm538, %v2142
    %2145 = vst.msk [vmem:[%s565 + $0x58] sm:$0xff] %vm532, %v2101
    %2146 = vst.msk [vmem:[%s573 + $0x50] sm:$0xff] %vm532, %v2102
    %2148 = vrot.lane.b32.xlu0 %v2103, 64
    %v2149 = vpop.permute.xlu0 %2148
    %2151 = vst.msk [vmem:[%s573 + $0x50] sm:$0xff] %vm538, %v2149
    %2152 = vst.msk [vmem:[%s573 + $0x58] sm:$0xff] %vm532, %v2104
    %2153 = vst.msk [vmem:[%s581 + $0x50] sm:$0xff] %vm532, %v2105
    %2155 = vrot.lane.b32.xlu0 %v2106, 64
    %v2156 = vpop.permute.xlu0 %2155
    %2158 = vst.msk [vmem:[%s581 + $0x50] sm:$0xff] %vm538, %v2156
    %2159 = vst.msk [vmem:[%s581 + $0x58] sm:$0xff] %vm532, %v2107
    %2160 = vst.msk [vmem:[%s589 + $0x50] sm:$0xff] %vm532, %v2108
    %2162 = vrot.lane.b32.xlu0 %v2109, 64
    %v2163 = vpop.permute.xlu0 %2162
    %2165 = vst.msk [vmem:[%s589 + $0x50] sm:$0xff] %vm538, %v2163
    %2166 = vst.msk [vmem:[%s589 + $0x58] sm:$0xff] %vm532, %v2110
    %s2167 = scalar_lea.vmem %s0, 48
    %v2168 = vld [vmem:[%s2167] sm:$0xf]
    %v2169 = vld [vmem:[%s2167 + $0x4] sm:$0xf]
    %v2172 = vunpack.c.l.b16 %v2168
    %v2173 = vunpack.c.l.b16 %v2169
    %v2174 = vpack.c.b16 %v2173, %v2172
    %2176 = vmatprep.subr.bf16.mxu0 0
    %2177 = vmatpush1.bf16.msra.mxu0 %v2174
    %2178 = vmatprep.subr.bf16.mxu0 0
    %2179 = vmatpush1.bf16.msra.mxu0 0
    %2180 = vmatprep.subr.bf16.mxu0 0
    %2181 = vmatpush1.bf16.msra.mxu0 0
    %2182 = vmatprep.subr.bf16.mxu0 0
    %2183 = vmatpush1.bf16.msra.mxu0 0
    %2184 = vmatprep.subr.bf16.mxu0 0
    %2185 = vmatpush1.bf16.msra.mxu0 0
    %2186 = vmatprep.subr.bf16.mxu0 0
    %2187 = vmatpush1.bf16.msra.mxu0 0
    %2188 = vmatprep.subr.bf16.mxu0 0
    %2189 = vmatpush1.bf16.msra.mxu0 0
    %2190 = vmatprep.subr.bf16.mxu0 0
    %2191 = vmatpush1.bf16.msra.mxu0 0
    %2192 = vmatprep.subr.bf16.mxu0 0
    %2193 = vmatpush1.bf16.msra.mxu0 0
    %2194 = vmatprep.subr.bf16.mxu0 0
    %2195 = vmatpush1.bf16.msra.mxu0 0
    %2196 = vmatprep.subr.bf16.mxu0 0
    %2197 = vmatpush1.bf16.msra.mxu0 0
    %2198 = vmatprep.subr.bf16.mxu0 0
    %2199 = vmatpush1.bf16.msra.mxu0 0
    %2200 = vmatprep.subr.bf16.mxu0 0
    %2201 = vmatpush1.bf16.msra.mxu0 0
    %2202 = vmatprep.subr.bf16.mxu0 0
    %2203 = vmatpush1.bf16.msra.mxu0 0
    %2204 = vmatprep.subr.bf16.mxu0 0
    %2205 = vmatpush1.bf16.msra.mxu0 0
    %2206 = vmatprep.subr.bf16.mxu0 0
    %2207 = vmatpush1.bf16.msra.mxu0 0
    %2208 = vmatprep.mubr.bf16.mxu0 0
    %2209 = vmatmul.mubr.bf16.gmra.mrb[0].mxu0 %v212
    %v2210 = vpop.f32.mrb[0].mxu0
    %v2211 = vadd.f32 0.0, %v2210
    %v2212 = vpop.f32.mrb[0].mxu0
    %v2213 = vpop.f32.mrb[0].mxu0
    %v2214 = vadd.f32 0.0, %v2213
    %v2215 = vpop.f32.mrb[0].mxu0
    %2216 = vmatprep.mubr.bf16.mxu0 0
    %2217 = vmatmul.mubr.bf16.gmra.mrb[0].mxu0 %v215
    %v2218 = vpop.f32.mrb[0].mxu0
    %v2219 = vadd.f32 0.0, %v2218
    %v2220 = vpop.f32.mrb[0].mxu0
    %v2221 = vpop.f32.mrb[0].mxu0
    %v2222 = vadd.f32 0.0, %v2221
    %v2223 = vpop.f32.mrb[0].mxu0
    %2224 = vmatprep.mubr.bf16.mxu0 0
    %2225 = vmatmul.mubr.bf16.gmra.mrb[0].mxu0 %v218
    %v2226 = vpop.f32.mrb[0].mxu0
    %v2227 = vadd.f32 0.0, %v2226
    %v2228 = vpop.f32.mrb[0].mxu0
    %v2229 = vpop.f32.mrb[0].mxu0
    %v2230 = vadd.f32 0.0, %v2229
    %v2231 = vpop.f32.mrb[0].mxu0
    %2232 = vmatprep.mubr.bf16.mxu0 0
    %2233 = vmatmul.mubr.bf16.gmra.mrb[0].mxu0 %v221
    %v2234 = vpop.f32.mrb[0].mxu0
    %v2235 = vadd.f32 0.0, %v2234
    %v2236 = vpop.f32.mrb[0].mxu0
    %v2237 = vpop.f32.mrb[0].mxu0
    %v2238 = vadd.f32 0.0, %v2237
    %v2239 = vpop.f32.mrb[0].mxu0
    %2240 = vmatprep.mubr.bf16.mxu0 0
    %2241 = vmatmul.mubr.bf16.gmra.mrb[0].mxu0 %v224
    %v2242 = vpop.f32.mrb[0].mxu0
    %v2243 = vadd.f32 0.0, %v2242
    %v2244 = vpop.f32.mrb[0].mxu0
    %v2245 = vpop.f32.mrb[0].mxu0
    %v2246 = vadd.f32 0.0, %v2245
    %v2247 = vpop.f32.mrb[0].mxu0
    %2248 = vmatprep.mubr.bf16.mxu0 0
    %2249 = vmatmul.mubr.bf16.gmra.mrb[0].mxu0 %v227
    %v2250 = vpop.f32.mrb[0].mxu0
    %v2251 = vadd.f32 0.0, %v2250
    %v2252 = vpop.f32.mrb[0].mxu0
    %v2253 = vpop.f32.mrb[0].mxu0
    %v2254 = vadd.f32 0.0, %v2253
    %v2255 = vpop.f32.mrb[0].mxu0
    %2256 = vmatprep.mubr.bf16.mxu0 0
    %2257 = vmatmul.mubr.bf16.gmra.mrb[0].mxu0 %v230
    %v2258 = vpop.f32.mrb[0].mxu0
    %v2259 = vadd.f32 0.0, %v2258
    %v2260 = vpop.f32.mrb[0].mxu0
    %v2261 = vpop.f32.mrb[0].mxu0
    %v2262 = vadd.f32 0.0, %v2261
    %v2263 = vpop.f32.mrb[0].mxu0
    %2264 = vmatprep.mubr.bf16.mxu0 0
    %2265 = vmatmul.mubr.bf16.gmra.mrb[0].mxu0 %v233
    %v2266 = vpop.f32.mrb[0].mxu0
    %v2267 = vadd.f32 0.0, %v2266
    %v2268 = vpop.f32.mrb[0].mxu0
    %v2269 = vpop.f32.mrb[0].mxu0
    %v2270 = vadd.f32 0.0, %v2269
    %v2271 = vpop.f32.mrb[0].mxu0
    %2272 = vmatprep.mubr.bf16.mxu0 0
    %2273 = vmatmul.mubr.bf16.gmra.mrb[0].mxu0 %v236
    %v2274 = vpop.f32.mrb[0].mxu0
    %v2275 = vadd.f32 0.0, %v2274
    %v2276 = vpop.f32.mrb[0].mxu0
    %v2277 = vpop.f32.mrb[0].mxu0
    %v2278 = vadd.f32 0.0, %v2277
    %v2279 = vpop.f32.mrb[0].mxu0
    %2280 = vmatprep.mubr.bf16.mxu0 0
    %2281 = vmatmul.mubr.bf16.gmra.mrb[0].mxu0 %v239
    %v2282 = vpop.f32.mrb[0].mxu0
    %v2283 = vadd.f32 0.0, %v2282
    %v2284 = vpop.f32.mrb[0].mxu0
    %v2285 = vpop.f32.mrb[0].mxu0
    %v2286 = vadd.f32 0.0, %v2285
    %v2287 = vpop.f32.mrb[0].mxu0
    %2288 = vmatprep.mubr.bf16.mxu0 0
    %2289 = vmatmul.mubr.bf16.gmra.mrb[0].mxu0 %v242
    %v2290 = vpop.f32.mrb[0].mxu0
    %v2291 = vadd.f32 0.0, %v2290
    %v2292 = vpop.f32.mrb[0].mxu0
    %v2293 = vpop.f32.mrb[0].mxu0
    %v2294 = vadd.f32 0.0, %v2293
    %v2295 = vpop.f32.mrb[0].mxu0
    %2296 = vmatprep.mubr.bf16.mxu0 0
    %2297 = vmatmul.mubr.bf16.gmra.mrb[0].mxu0 %v245
    %v2298 = vpop.f32.mrb[0].mxu0
    %v2299 = vadd.f32 0.0, %v2298
    %v2300 = vpop.f32.mrb[0].mxu0
    %v2301 = vpop.f32.mrb[0].mxu0
    %v2302 = vadd.f32 0.0, %v2301
    %v2303 = vpop.f32.mrb[0].mxu0
    %2304 = vmatprep.mubr.bf16.mxu0 0
    %2305 = vmatmul.mubr.bf16.gmra.mrb[0].mxu0 %v248
    %v2306 = vpop.f32.mrb[0].mxu0
    %v2307 = vadd.f32 0.0, %v2306
    %v2308 = vpop.f32.mrb[0].mxu0
    %v2309 = vpop.f32.mrb[0].mxu0
    %v2310 = vadd.f32 0.0, %v2309
    %v2311 = vpop.f32.mrb[0].mxu0
    %2312 = vmatprep.mubr.bf16.mxu0 0
    %2313 = vmatmul.mubr.bf16.gmra.mrb[0].mxu0 %v251
    %v2314 = vpop.f32.mrb[0].mxu0
    %v2315 = vadd.f32 0.0, %v2314
    %v2316 = vpop.f32.mrb[0].mxu0
    %v2317 = vpop.f32.mrb[0].mxu0
    %v2318 = vadd.f32 0.0, %v2317
    %v2319 = vpop.f32.mrb[0].mxu0
    %2320 = vmatprep.mubr.bf16.mxu0 0
    %2321 = vmatmul.mubr.bf16.gmra.mrb[0].mxu0 %v254
    %v2322 = vpop.f32.mrb[0].mxu0
    %v2323 = vadd.f32 0.0, %v2322
    %v2324 = vpop.f32.mrb[0].mxu0
    %v2325 = vpop.f32.mrb[0].mxu0
    %v2326 = vadd.f32 0.0, %v2325
    %v2327 = vpop.f32.mrb[0].mxu0
    %2328 = vmatprep.mubr.bf16.mxu0 0
    %2329 = vmatmul.mubr.bf16.gmra.mrb[0].mxu0 %v257
    %v2330 = vpop.f32.mrb[0].mxu0
    %v2331 = vadd.f32 0.0, %v2330
    %v2332 = vpop.f32.mrb[0].mxu0
    %v2333 = vpop.f32.mrb[0].mxu0
    %v2334 = vadd.f32 0.0, %v2333
    %v2335 = vpop.f32.mrb[0].mxu0
    %2336 = vmatprep.mubr.bf16.mxu0 0
    %2337 = vmatmul.mubr.bf16.gmra.mrb[0].mxu0 %v260
    %v2338 = vpop.f32.mrb[0].mxu0
    %v2339 = vadd.f32 0.0, %v2338
    %v2340 = vpop.f32.mrb[0].mxu0
    %v2341 = vpop.f32.mrb[0].mxu0
    %v2342 = vadd.f32 0.0, %v2341
    %v2343 = vpop.f32.mrb[0].mxu0
    %2344 = vmatprep.mubr.bf16.mxu0 0
    %2345 = vmatmul.mubr.bf16.gmra.mrb[0].mxu0 %v263
    %v2346 = vpop.f32.mrb[0].mxu0
    %v2347 = vadd.f32 0.0, %v2346
    %v2348 = vpop.f32.mrb[0].mxu0
    %v2349 = vpop.f32.mrb[0].mxu0
    %v2350 = vadd.f32 0.0, %v2349
    %v2351 = vpop.f32.mrb[0].mxu0
    %2352 = vmatprep.mubr.bf16.mxu0 0
    %2353 = vmatmul.mubr.bf16.gmra.mrb[0].mxu0 %v266
    %v2354 = vpop.f32.mrb[0].mxu0
    %v2355 = vadd.f32 0.0, %v2354
    %v2356 = vpop.f32.mrb[0].mxu0
    %v2357 = vpop.f32.mrb[0].mxu0
    %v2358 = vadd.f32 0.0, %v2357
    %v2359 = vpop.f32.mrb[0].mxu0
    %2360 = vmatprep.mubr.bf16.mxu0 0
    %2361 = vmatmul.mubr.bf16.gmra.mrb[0].mxu0 %v269
    %v2362 = vpop.f32.mrb[0].mxu0
    %v2363 = vadd.f32 0.0, %v2362
    %v2364 = vpop.f32.mrb[0].mxu0
    %v2365 = vpop.f32.mrb[0].mxu0
    %v2366 = vadd.f32 0.0, %v2365
    %v2367 = vpop.f32.mrb[0].mxu0
    %2368 = vmatprep.mubr.bf16.mxu0 0
    %2369 = vmatmul.mubr.bf16.gmra.mrb[0].mxu0 %v272
    %v2370 = vpop.f32.mrb[0].mxu0
    %v2371 = vadd.f32 0.0, %v2370
    %v2372 = vpop.f32.mrb[0].mxu0
    %v2373 = vpop.f32.mrb[0].mxu0
    %v2374 = vadd.f32 0.0, %v2373
    %v2375 = vpop.f32.mrb[0].mxu0
    %2376 = vmatprep.mubr.bf16.mxu0 0
    %2377 = vmatmul.mubr.bf16.gmra.mrb[0].mxu0 %v275
    %v2378 = vpop.f32.mrb[0].mxu0
    %v2379 = vadd.f32 0.0, %v2378
    %v2380 = vpop.f32.mrb[0].mxu0
    %v2381 = vpop.f32.mrb[0].mxu0
    %v2382 = vadd.f32 0.0, %v2381
    %v2383 = vpop.f32.mrb[0].mxu0
    %2384 = vmatprep.mubr.bf16.mxu0 0
    %2385 = vmatmul.mubr.bf16.gmra.mrb[0].mxu0 %v278
    %v2386 = vpop.f32.mrb[0].mxu0
    %v2387 = vadd.f32 0.0, %v2386
    %v2388 = vpop.f32.mrb[0].mxu0
    %v2389 = vpop.f32.mrb[0].mxu0
    %v2390 = vadd.f32 0.0, %v2389
    %v2391 = vpop.f32.mrb[0].mxu0
    %2392 = vmatprep.mubr.bf16.mxu0 0
    %2393 = vmatmul.mubr.bf16.gmra.mrb[0].mxu0 %v281
    %v2394 = vpop.f32.mrb[0].mxu0
    %v2395 = vadd.f32 0.0, %v2394
    %v2396 = vpop.f32.mrb[0].mxu0
    %v2397 = vpop.f32.mrb[0].mxu0
    %v2398 = vadd.f32 0.0, %v2397
    %v2399 = vpop.f32.mrb[0].mxu0
    %2400 = vdwg.mxu0
    %v2401 = vpack.c.bf16 %v2214, %v2211
    %v2402 = vpack.c.bf16 %v2222, %v2219
    %v2403 = vpack.c.bf16 %v2230, %v2227
    %v2404 = vpack.c.bf16 %v2238, %v2235
    %v2405 = vpack.c.bf16 %v2246, %v2243
    %v2406 = vpack.c.bf16 %v2254, %v2251
    %v2407 = vpack.c.bf16 %v2262, %v2259
    %v2408 = vpack.c.bf16 %v2270, %v2267
    %v2409 = vpack.c.bf16 %v2278, %v2275
    %v2410 = vpack.c.bf16 %v2286, %v2283
    %v2411 = vpack.c.bf16 %v2294, %v2291
    %v2412 = vpack.c.bf16 %v2302, %v2299
    %v2413 = vpack.c.bf16 %v2310, %v2307
    %v2414 = vpack.c.bf16 %v2318, %v2315
    %v2415 = vpack.c.bf16 %v2326, %v2323
    %v2416 = vpack.c.bf16 %v2334, %v2331
    %v2417 = vpack.c.bf16 %v2342, %v2339
    %v2418 = vpack.c.bf16 %v2350, %v2347
    %v2419 = vpack.c.bf16 %v2358, %v2355
    %v2420 = vpack.c.bf16 %v2366, %v2363
    %v2421 = vpack.c.bf16 %v2374, %v2371
    %v2422 = vpack.c.bf16 %v2382, %v2379
    %v2423 = vpack.c.bf16 %v2390, %v2387
    %v2424 = vpack.c.bf16 %v2398, %v2395
    %2425 = vst.msk [vmem:[#allocation2 + $0x60] sm:$0xff] %vm532, %v2401
    %2427 = vrot.lane.b32.xlu0 %v2402, 64
    %v2428 = vpop.permute.xlu0 %2427
    %2430 = vst.msk [vmem:[#allocation2 + $0x60] sm:$0xff] %vm538, %v2428
    %2431 = vst.msk [vmem:[#allocation2 + $0x68] sm:$0xff] %vm532, %v2403
    %2432 = vst.msk [vmem:[%s541 + $0x60] sm:$0xff] %vm532, %v2404
    %2434 = vrot.lane.b32.xlu0 %v2405, 64
    %v2435 = vpop.permute.xlu0 %2434
    %2437 = vst.msk [vmem:[%s541 + $0x60] sm:$0xff] %vm538, %v2435
    %2438 = vst.msk [vmem:[%s541 + $0x68] sm:$0xff] %vm532, %v2406
    %2439 = vst.msk [vmem:[%s549 + $0x60] sm:$0xff] %vm532, %v2407
    %2441 = vrot.lane.b32.xlu0 %v2408, 64
    %v2442 = vpop.permute.xlu0 %2441
    %2444 = vst.msk [vmem:[%s549 + $0x60] sm:$0xff] %vm538, %v2442
    %2445 = vst.msk [vmem:[%s549 + $0x68] sm:$0xff] %vm532, %v2409
    %2446 = vst.msk [vmem:[%s557 + $0x60] sm:$0xff] %vm532, %v2410
    %2448 = vrot.lane.b32.xlu0 %v2411, 64
    %v2449 = vpop.permute.xlu0 %2448
    %2451 = vst.msk [vmem:[%s557 + $0x60] sm:$0xff] %vm538, %v2449
    %2452 = vst.msk [vmem:[%s557 + $0x68] sm:$0xff] %vm532, %v2412
    %2453 = vst.msk [vmem:[%s565 + $0x60] sm:$0xff] %vm532, %v2413
    %2455 = vrot.lane.b32.xlu0 %v2414, 64
    %v2456 = vpop.permute.xlu0 %2455
    %2458 = vst.msk [vmem:[%s565 + $0x60] sm:$0xff] %vm538, %v2456
    %2459 = vst.msk [vmem:[%s565 + $0x68] sm:$0xff] %vm532, %v2415
    %2460 = vst.msk [vmem:[%s573 + $0x60] sm:$0xff] %vm532, %v2416
    %2462 = vrot.lane.b32.xlu0 %v2417, 64
    %v2463 = vpop.permute.xlu0 %2462
    %2465 = vst.msk [vmem:[%s573 + $0x60] sm:$0xff] %vm538, %v2463
    %2466 = vst.msk [vmem:[%s573 + $0x68] sm:$0xff] %vm532, %v2418
    %2467 = vst.msk [vmem:[%s581 + $0x60] sm:$0xff] %vm532, %v2419
    %2469 = vrot.lane.b32.xlu0 %v2420, 64
    %v2470 = vpop.permute.xlu0 %2469
    %2472 = vst.msk [vmem:[%s581 + $0x60] sm:$0xff] %vm538, %v2470
    %2473 = vst.msk [vmem:[%s581 + $0x68] sm:$0xff] %vm532, %v2421
    %2474 = vst.msk [vmem:[%s589 + $0x60] sm:$0xff] %vm532, %v2422
    %2476 = vrot.lane.b32.xlu0 %v2423, 64
    %v2477 = vpop.permute.xlu0 %2476
    %2479 = vst.msk [vmem:[%s589 + $0x60] sm:$0xff] %vm538, %v2477
    %2480 = vst.msk [vmem:[%s589 + $0x68] sm:$0xff] %vm532, %v2424
    %s2481 = scalar_lea.vmem %s0, 56
    %v2482 = vld [vmem:[%s2481] sm:$0xf]
    %v2483 = vld [vmem:[%s2481 + $0x4] sm:$0xf]
    %v2486 = vunpack.c.l.b16 %v2482
    %v2487 = vunpack.c.l.b16 %v2483
    %v2488 = vpack.c.b16 %v2487, %v2486
    %2490 = vmatprep.subr.bf16.mxu0 0
    %2491 = vmatpush1.bf16.msra.mxu0 %v2488
    %2492 = vmatprep.subr.bf16.mxu0 0
    %2493 = vmatpush1.bf16.msra.mxu0 0
    %2494 = vmatprep.subr.bf16.mxu0 0
    %2495 = vmatpush1.bf16.msra.mxu0 0
    %2496 = vmatprep.subr.bf16.mxu0 0
    %2497 = vmatpush1.bf16.msra.mxu0 0
    %2498 = vmatprep.subr.bf16.mxu0 0
    %2499 = vmatpush1.bf16.msra.mxu0 0
    %2500 = vmatprep.subr.bf16.mxu0 0
    %2501 = vmatpush1.bf16.msra.mxu0 0
    %2502 = vmatprep.subr.bf16.mxu0 0
    %2503 = vmatpush1.bf16.msra.mxu0 0
    %2504 = vmatprep.subr.bf16.mxu0 0
    %2505 = vmatpush1.bf16.msra.mxu0 0
    %2506 = vmatprep.subr.bf16.mxu0 0
    %2507 = vmatpush1.bf16.msra.mxu0 0
    %2508 = vmatprep.subr.bf16.mxu0 0
    %2509 = vmatpush1.bf16.msra.mxu0 0
    %2510 = vmatprep.subr.bf16.mxu0 0
    %2511 = vmatpush1.bf16.msra.mxu0 0
    %2512 = vmatprep.subr.bf16.mxu0 0
    %2513 = vmatpush1.bf16.msra.mxu0 0
    %2514 = vmatprep.subr.bf16.mxu0 0
    %2515 = vmatpush1.bf16.msra.mxu0 0
    %2516 = vmatprep.subr.bf16.mxu0 0
    %2517 = vmatpush1.bf16.msra.mxu0 0
    %2518 = vmatprep.subr.bf16.mxu0 0
    %2519 = vmatpush1.bf16.msra.mxu0 0
    %2520 = vmatprep.subr.bf16.mxu0 0
    %2521 = vmatpush1.bf16.msra.mxu0 0
    %2522 = vmatprep.mubr.bf16.mxu0 0
    %2523 = vmatmul.mubr.bf16.gmra.mrb[0].mxu0 %v212
    %v2524 = vpop.f32.mrb[0].mxu0
    %v2525 = vadd.f32 0.0, %v2524
    %v2526 = vpop.f32.mrb[0].mxu0
    %v2527 = vpop.f32.mrb[0].mxu0
    %v2528 = vadd.f32 0.0, %v2527
    %v2529 = vpop.f32.mrb[0].mxu0
    %2530 = vmatprep.mubr.bf16.mxu0 0
    %2531 = vmatmul.mubr.bf16.gmra.mrb[0].mxu0 %v215
    %v2532 = vpop.f32.mrb[0].mxu0
    %v2533 = vadd.f32 0.0, %v2532
    %v2534 = vpop.f32.mrb[0].mxu0
    %v2535 = vpop.f32.mrb[0].mxu0
    %v2536 = vadd.f32 0.0, %v2535
    %v2537 = vpop.f32.mrb[0].mxu0
    %2538 = vmatprep.mubr.bf16.mxu0 0
    %2539 = vmatmul.mubr.bf16.gmra.mrb[0].mxu0 %v218
    %v2540 = vpop.f32.mrb[0].mxu0
    %v2541 = vadd.f32 0.0, %v2540
    %v2542 = vpop.f32.mrb[0].mxu0
    %v2543 = vpop.f32.mrb[0].mxu0
    %v2544 = vadd.f32 0.0, %v2543
    %v2545 = vpop.f32.mrb[0].mxu0
    %2546 = vmatprep.mubr.bf16.mxu0 0
    %2547 = vmatmul.mubr.bf16.gmra.mrb[0].mxu0 %v221
    %v2548 = vpop.f32.mrb[0].mxu0
    %v2549 = vadd.f32 0.0, %v2548
    %v2550 = vpop.f32.mrb[0].mxu0
    %v2551 = vpop.f32.mrb[0].mxu0
    %v2552 = vadd.f32 0.0, %v2551
    %v2553 = vpop.f32.mrb[0].mxu0
    %2554 = vmatprep.mubr.bf16.mxu0 0
    %2555 = vmatmul.mubr.bf16.gmra.mrb[0].mxu0 %v224
    %v2556 = vpop.f32.mrb[0].mxu0
    %v2557 = vadd.f32 0.0, %v2556
    %v2558 = vpop.f32.mrb[0].mxu0
    %v2559 = vpop.f32.mrb[0].mxu0
    %v2560 = vadd.f32 0.0, %v2559
    %v2561 = vpop.f32.mrb[0].mxu0
    %2562 = vmatprep.mubr.bf16.mxu0 0
    %2563 = vmatmul.mubr.bf16.gmra.mrb[0].mxu0 %v227
    %v2564 = vpop.f32.mrb[0].mxu0
    %v2565 = vadd.f32 0.0, %v2564
    %v2566 = vpop.f32.mrb[0].mxu0
    %v2567 = vpop.f32.mrb[0].mxu0
    %v2568 = vadd.f32 0.0, %v2567
    %v2569 = vpop.f32.mrb[0].mxu0
    %2570 = vmatprep.mubr.bf16.mxu0 0
    %2571 = vmatmul.mubr.bf16.gmra.mrb[0].mxu0 %v230
    %v2572 = vpop.f32.mrb[0].mxu0
    %v2573 = vadd.f32 0.0, %v2572
    %v2574 = vpop.f32.mrb[0].mxu0
    %v2575 = vpop.f32.mrb[0].mxu0
    %v2576 = vadd.f32 0.0, %v2575
    %v2577 = vpop.f32.mrb[0].mxu0
    %2578 = vmatprep.mubr.bf16.mxu0 0
    %2579 = vmatmul.mubr.bf16.gmra.mrb[0].mxu0 %v233
    %v2580 = vpop.f32.mrb[0].mxu0
    %v2581 = vadd.f32 0.0, %v2580
    %v2582 = vpop.f32.mrb[0].mxu0
    %v2583 = vpop.f32.mrb[0].mxu0
    %v2584 = vadd.f32 0.0, %v2583
    %v2585 = vpop.f32.mrb[0].mxu0
    %2586 = vmatprep.mubr.bf16.mxu0 0
    %2587 = vmatmul.mubr.bf16.gmra.mrb[0].mxu0 %v236
    %v2588 = vpop.f32.mrb[0].mxu0
    %v2589 = vadd.f32 0.0, %v2588
    %v2590 = vpop.f32.mrb[0].mxu0
    %v2591 = vpop.f32.mrb[0].mxu0
    %v2592 = vadd.f32 0.0, %v2591
    %v2593 = vpop.f32.mrb[0].mxu0
    %2594 = vmatprep.mubr.bf16.mxu0 0
    %2595 = vmatmul.mubr.bf16.gmra.mrb[0].mxu0 %v239
    %v2596 = vpop.f32.mrb[0].mxu0
    %v2597 = vadd.f32 0.0, %v2596
    %v2598 = vpop.f32.mrb[0].mxu0
    %v2599 = vpop.f32.mrb[0].mxu0
    %v2600 = vadd.f32 0.0, %v2599
    %v2601 = vpop.f32.mrb[0].mxu0
    %2602 = vmatprep.mubr.bf16.mxu0 0
    %2603 = vmatmul.mubr.bf16.gmra.mrb[0].mxu0 %v242
    %v2604 = vpop.f32.mrb[0].mxu0
    %v2605 = vadd.f32 0.0, %v2604
    %v2606 = vpop.f32.mrb[0].mxu0
    %v2607 = vpop.f32.mrb[0].mxu0
    %v2608 = vadd.f32 0.0, %v2607
    %v2609 = vpop.f32.mrb[0].mxu0
    %2610 = vmatprep.mubr.bf16.mxu0 0
    %2611 = vmatmul.mubr.bf16.gmra.mrb[0].mxu0 %v245
    %v2612 = vpop.f32.mrb[0].mxu0
    %v2613 = vadd.f32 0.0, %v2612
    %v2614 = vpop.f32.mrb[0].mxu0
    %v2615 = vpop.f32.mrb[0].mxu0
    %v2616 = vadd.f32 0.0, %v2615
    %v2617 = vpop.f32.mrb[0].mxu0
    %2618 = vmatprep.mubr.bf16.mxu0 0
    %2619 = vmatmul.mubr.bf16.gmra.mrb[0].mxu0 %v248
    %v2620 = vpop.f32.mrb[0].mxu0
    %v2621 = vadd.f32 0.0, %v2620
    %v2622 = vpop.f32.mrb[0].mxu0
    %v2623 = vpop.f32.mrb[0].mxu0
    %v2624 = vadd.f32 0.0, %v2623
    %v2625 = vpop.f32.mrb[0].mxu0
    %2626 = vmatprep.mubr.bf16.mxu0 0
    %2627 = vmatmul.mubr.bf16.gmra.mrb[0].mxu0 %v251
    %v2628 = vpop.f32.mrb[0].mxu0
    %v2629 = vadd.f32 0.0, %v2628
    %v2630 = vpop.f32.mrb[0].mxu0
    %v2631 = vpop.f32.mrb[0].mxu0
    %v2632 = vadd.f32 0.0, %v2631
    %v2633 = vpop.f32.mrb[0].mxu0
    %2634 = vmatprep.mubr.bf16.mxu0 0
    %2635 = vmatmul.mubr.bf16.gmra.mrb[0].mxu0 %v254
    %v2636 = vpop.f32.mrb[0].mxu0
    %v2637 = vadd.f32 0.0, %v2636
    %v2638 = vpop.f32.mrb[0].mxu0
    %v2639 = vpop.f32.mrb[0].mxu0
    %v2640 = vadd.f32 0.0, %v2639
    %v2641 = vpop.f32.mrb[0].mxu0
    %2642 = vmatprep.mubr.bf16.mxu0 0
    %2643 = vmatmul.mubr.bf16.gmra.mrb[0].mxu0 %v257
    %v2644 = vpop.f32.mrb[0].mxu0
    %v2645 = vadd.f32 0.0, %v2644
    %v2646 = vpop.f32.mrb[0].mxu0
    %v2647 = vpop.f32.mrb[0].mxu0
    %v2648 = vadd.f32 0.0, %v2647
    %v2649 = vpop.f32.mrb[0].mxu0
    %2650 = vmatprep.mubr.bf16.mxu0 0
    %2651 = vmatmul.mubr.bf16.gmra.mrb[0].mxu0 %v260
    %v2652 = vpop.f32.mrb[0].mxu0
    %v2653 = vadd.f32 0.0, %v2652
    %v2654 = vpop.f32.mrb[0].mxu0
    %v2655 = vpop.f32.mrb[0].mxu0
    %v2656 = vadd.f32 0.0, %v2655
    %v2657 = vpop.f32.mrb[0].mxu0
    %2658 = vmatprep.mubr.bf16.mxu0 0
    %2659 = vmatmul.mubr.bf16.gmra.mrb[0].mxu0 %v263
    %v2660 = vpop.f32.mrb[0].mxu0
    %v2661 = vadd.f32 0.0, %v2660
    %v2662 = vpop.f32.mrb[0].mxu0
    %v2663 = vpop.f32.mrb[0].mxu0
    %v2664 = vadd.f32 0.0, %v2663
    %v2665 = vpop.f32.mrb[0].mxu0
    %2666 = vmatprep.mubr.bf16.mxu0 0
    %2667 = vmatmul.mubr.bf16.gmra.mrb[0].mxu0 %v266
    %v2668 = vpop.f32.mrb[0].mxu0
    %v2669 = vadd.f32 0.0, %v2668
    %v2670 = vpop.f32.mrb[0].mxu0
    %v2671 = vpop.f32.mrb[0].mxu0
    %v2672 = vadd.f32 0.0, %v2671
    %v2673 = vpop.f32.mrb[0].mxu0
    %2674 = vmatprep.mubr.bf16.mxu0 0
    %2675 = vmatmul.mubr.bf16.gmra.mrb[0].mxu0 %v269
    %v2676 = vpop.f32.mrb[0].mxu0
    %v2677 = vadd.f32 0.0, %v2676
    %v2678 = vpop.f32.mrb[0].mxu0
    %v2679 = vpop.f32.mrb[0].mxu0
    %v2680 = vadd.f32 0.0, %v2679
    %v2681 = vpop.f32.mrb[0].mxu0
    %2682 = vmatprep.mubr.bf16.mxu0 0
    %2683 = vmatmul.mubr.bf16.gmra.mrb[0].mxu0 %v272
    %v2684 = vpop.f32.mrb[0].mxu0
    %v2685 = vadd.f32 0.0, %v2684
    %v2686 = vpop.f32.mrb[0].mxu0
    %v2687 = vpop.f32.mrb[0].mxu0
    %v2688 = vadd.f32 0.0, %v2687
    %v2689 = vpop.f32.mrb[0].mxu0
    %2690 = vmatprep.mubr.bf16.mxu0 0
    %2691 = vmatmul.mubr.bf16.gmra.mrb[0].mxu0 %v275
    %v2692 = vpop.f32.mrb[0].mxu0
    %v2693 = vadd.f32 0.0, %v2692
    %v2694 = vpop.f32.mrb[0].mxu0
    %v2695 = vpop.f32.mrb[0].mxu0
    %v2696 = vadd.f32 0.0, %v2695
    %v2697 = vpop.f32.mrb[0].mxu0
    %2698 = vmatprep.mubr.bf16.mxu0 0
    %2699 = vmatmul.mubr.bf16.gmra.mrb[0].mxu0 %v278
    %v2700 = vpop.f32.mrb[0].mxu0
    %v2701 = vadd.f32 0.0, %v2700
    %v2702 = vpop.f32.mrb[0].mxu0
    %v2703 = vpop.f32.mrb[0].mxu0
    %v2704 = vadd.f32 0.0, %v2703
    %v2705 = vpop.f32.mrb[0].mxu0
    %2706 = vmatprep.mubr.bf16.mxu0 0
    %2707 = vmatmul.mubr.bf16.gmra.mrb[0].mxu0 %v281
    %v2708 = vpop.f32.mrb[0].mxu0
    %v2709 = vadd.f32 0.0, %v2708
    %v2710 = vpop.f32.mrb[0].mxu0
    %v2711 = vpop.f32.mrb[0].mxu0
    %v2712 = vadd.f32 0.0, %v2711
    %v2713 = vpop.f32.mrb[0].mxu0
    %2714 = vdwg.mxu0
    %v2715 = vpack.c.bf16 %v2528, %v2525
    %v2716 = vpack.c.bf16 %v2536, %v2533
    %v2717 = vpack.c.bf16 %v2544, %v2541
    %v2718 = vpack.c.bf16 %v2552, %v2549
    %v2719 = vpack.c.bf16 %v2560, %v2557
    %v2720 = vpack.c.bf16 %v2568, %v2565
    %v2721 = vpack.c.bf16 %v2576, %v2573
    %v2722 = vpack.c.bf16 %v2584, %v2581
    %v2723 = vpack.c.bf16 %v2592, %v2589
    %v2724 = vpack.c.bf16 %v2600, %v2597
    %v2725 = vpack.c.bf16 %v2608, %v2605
    %v2726 = vpack.c.bf16 %v2616, %v2613
    %v2727 = vpack.c.bf16 %v2624, %v2621
    %v2728 = vpack.c.bf16 %v2632, %v2629
    %v2729 = vpack.c.bf16 %v2640, %v2637
    %v2730 = vpack.c.bf16 %v2648, %v2645
    %v2731 = vpack.c.bf16 %v2656, %v2653
    %v2732 = vpack.c.bf16 %v2664, %v2661
    %v2733 = vpack.c.bf16 %v2672, %v2669
    %v2734 = vpack.c.bf16 %v2680, %v2677
    %v2735 = vpack.c.bf16 %v2688, %v2685
    %v2736 = vpack.c.bf16 %v2696, %v2693
    %v2737 = vpack.c.bf16 %v2704, %v2701
    %v2738 = vpack.c.bf16 %v2712, %v2709
    %2739 = vst.msk [vmem:[#allocation2 + $0x70] sm:$0xff] %vm532, %v2715
    %2741 = vrot.lane.b32.xlu0 %v2716, 64
    %v2742 = vpop.permute.xlu0 %2741
    %2744 = vst.msk [vmem:[#allocation2 + $0x70] sm:$0xff] %vm538, %v2742
    %2745 = vst.msk [vmem:[#allocation2 + $0x78] sm:$0xff] %vm532, %v2717
    %2746 = vst.msk [vmem:[%s541 + $0x70] sm:$0xff] %vm532, %v2718
    %2748 = vrot.lane.b32.xlu0 %v2719, 64
    %v2749 = vpop.permute.xlu0 %2748
    %2751 = vst.msk [vmem:[%s541 + $0x70] sm:$0xff] %vm538, %v2749
    %2752 = vst.msk [vmem:[%s541 + $0x78] sm:$0xff] %vm532, %v2720
    %2753 = vst.msk [vmem:[%s549 + $0x70] sm:$0xff] %vm532, %v2721
    %2755 = vrot.lane.b32.xlu0 %v2722, 64
    %v2756 = vpop.permute.xlu0 %2755
    %2758 = vst.msk [vmem:[%s549 + $0x70] sm:$0xff] %vm538, %v2756
    %2759 = vst.msk [vmem:[%s549 + $0x78] sm:$0xff] %vm532, %v2723
    %2760 = vst.msk [vmem:[%s557 + $0x70] sm:$0xff] %vm532, %v2724
    %2762 = vrot.lane.b32.xlu0 %v2725, 64
    %v2763 = vpop.permute.xlu0 %2762
    %2765 = vst.msk [vmem:[%s557 + $0x70] sm:$0xff] %vm538, %v2763
    %2766 = vst.msk [vmem:[%s557 + $0x78] sm:$0xff] %vm532, %v2726
    %2767 = vst.msk [vmem:[%s565 + $0x70] sm:$0xff] %vm532, %v2727
    %2769 = vrot.lane.b32.xlu0 %v2728, 64
    %v2770 = vpop.permute.xlu0 %2769
    %2772 = vst.msk [vmem:[%s565 + $0x70] sm:$0xff] %vm538, %v2770
    %2773 = vst.msk [vmem:[%s565 + $0x78] sm:$0xff] %vm532, %v2729
    %2774 = vst.msk [vmem:[%s573 + $0x70] sm:$0xff] %vm532, %v2730
    %2776 = vrot.lane.b32.xlu0 %v2731, 64
    %v2777 = vpop.permute.xlu0 %2776
    %2779 = vst.msk [vmem:[%s573 + $0x70] sm:$0xff] %vm538, %v2777
    %2780 = vst.msk [vmem:[%s573 + $0x78] sm:$0xff] %vm532, %v2732
    %2781 = vst.msk [vmem:[%s581 + $0x70] sm:$0xff] %vm532, %v2733
    %2783 = vrot.lane.b32.xlu0 %v2734, 64
    %v2784 = vpop.permute.xlu0 %2783
    %2786 = vst.msk [vmem:[%s581 + $0x70] sm:$0xff] %vm538, %v2784
    %2787 = vst.msk [vmem:[%s581 + $0x78] sm:$0xff] %vm532, %v2735
    %2788 = vst.msk [vmem:[%s589 + $0x70] sm:$0xff] %vm532, %v2736
    %2790 = vrot.lane.b32.xlu0 %v2737, 64
    %v2791 = vpop.permute.xlu0 %2790
    %2793 = vst.msk [vmem:[%s589 + $0x70] sm:$0xff] %vm538, %v2791
    %2794 = vst.msk [vmem:[%s589 + $0x78] sm:$0xff] %vm532, %v2738
    %v2795 = vld [vmem:[#allocation2] sm:$0xff]
    %v2796 = vld [vmem:[#allocation2 + $0x8] sm:$0xff]
    %v2797 = vld [vmem:[#allocation2 + $0x10] sm:$0xff]
    %v2798 = vld [vmem:[#allocation2 + $0x18] sm:$0xff]
    %v2799 = vld [vmem:[#allocation2 + $0x20] sm:$0xff]
    %v2800 = vld [vmem:[#allocation2 + $0x28] sm:$0xff]
    %v2801 = vld [vmem:[#allocation2 + $0x30] sm:$0xff]
    %v2802 = vld [vmem:[#allocation2 + $0x38] sm:$0xff]
    %v2803 = vld [vmem:[#allocation2 + $0x40] sm:$0xff]
    %v2804 = vld [vmem:[#allocation2 + $0x48] sm:$0xff]
    %v2805 = vld [vmem:[#allocation2 + $0x50] sm:$0xff]
    %v2806 = vld [vmem:[#allocation2 + $0x58] sm:$0xff]
    %v2807 = vld [vmem:[#allocation2 + $0x60] sm:$0xff]
    %v2808 = vld [vmem:[#allocation2 + $0x68] sm:$0xff]
    %v2809 = vld [vmem:[#allocation2 + $0x70] sm:$0xff]
    %v2810 = vld [vmem:[#allocation2 + $0x78] sm:$0xff]
    %v2811 = vld [vmem:[#allocation5] sm:$0xf]
    %v2812 = vld [vmem:[#allocation5 + $0x4] sm:$0xf]
    %v2813 = vld [vmem:[#allocation5 + $0x8] sm:$0xf]
    %v2814 = vld [vmem:[#allocation5 + $0xc] sm:$0xf]
    %v2815 = vld [vmem:[#allocation5 + $0x10] sm:$0xf]
    %v2816 = vld [vmem:[#allocation5 + $0x14] sm:$0xf]
    %v2817 = vld [vmem:[#allocation5 + $0x18] sm:$0xf]
    %v2818 = vld [vmem:[#allocation5 + $0x1c] sm:$0xf]
    %v2819 = vld [vmem:[#allocation5 + $0x20] sm:$0xf]
    %v2820 = vld [vmem:[#allocation5 + $0x24] sm:$0xf]
    %v2821 = vld [vmem:[#allocation5 + $0x28] sm:$0xf]
    %v2822 = vld [vmem:[#allocation5 + $0x2c] sm:$0xf]
    %v2823 = vld [vmem:[#allocation5 + $0x30] sm:$0xf]
    %v2824 = vld [vmem:[#allocation5 + $0x34] sm:$0xf]
    %v2825 = vld [vmem:[#allocation5 + $0x38] sm:$0xf]
    %v2826 = vld [vmem:[#allocation5 + $0x3c] sm:$0xf]
    %v2827 = vld [vmem:[#allocation5 + $0x40] sm:$0xf]
    %v2828 = vld [vmem:[#allocation5 + $0x44] sm:$0xf]
    %v2829 = vld [vmem:[#allocation5 + $0x48] sm:$0xf]
    %v2830 = vld [vmem:[#allocation5 + $0x4c] sm:$0xf]
    %v2831 = vld [vmem:[#allocation5 + $0x50] sm:$0xf]
    %v2832 = vld [vmem:[#allocation5 + $0x54] sm:$0xf]
    %v2833 = vld [vmem:[#allocation5 + $0x58] sm:$0xf]
    %v2834 = vld [vmem:[#allocation5 + $0x5c] sm:$0xf]
    %v2859 = vunpack.c.l.b16 %v2811
    %v2860 = vunpack.c.l.b16 %v2812
    %v2861 = vunpack.c.l.b16 %v2813
    %v2862 = vunpack.c.l.b16 %v2814
    %v2863 = vunpack.c.l.b16 %v2815
    %v2864 = vunpack.c.l.b16 %v2816
    %v2865 = vunpack.c.l.b16 %v2817
    %v2866 = vunpack.c.l.b16 %v2818
    %v2867 = vunpack.c.l.b16 %v2819
    %v2868 = vunpack.c.l.b16 %v2820
    %v2869 = vunpack.c.l.b16 %v2821
    %v2870 = vunpack.c.l.b16 %v2822
    %v2871 = vunpack.c.l.b16 %v2823
    %v2872 = vunpack.c.l.b16 %v2824
    %v2873 = vunpack.c.l.b16 %v2825
    %v2874 = vunpack.c.l.b16 %v2826
    %v2875 = vunpack.c.l.b16 %v2827
    %v2876 = vunpack.c.l.b16 %v2828
    %v2877 = vunpack.c.l.b16 %v2829
    %v2878 = vunpack.c.l.b16 %v2830
    %v2879 = vunpack.c.l.b16 %v2831
    %v2880 = vunpack.c.l.b16 %v2832
    %v2881 = vunpack.c.l.b16 %v2833
    %v2882 = vunpack.c.l.b16 %v2834
    %v2883 = vpack.c.b16 %v2860, %v2859
    %v2884 = vpack.c.b16 %v2862, %v2861
    %v2885 = vpack.c.b16 %v2864, %v2863
    %v2886 = vpack.c.b16 %v2866, %v2865
    %v2887 = vpack.c.b16 %v2868, %v2867
    %v2888 = vpack.c.b16 %v2870, %v2869
    %v2889 = vpack.c.b16 %v2872, %v2871
    %v2890 = vpack.c.b16 %v2874, %v2873
    %v2891 = vpack.c.b16 %v2876, %v2875
    %v2892 = vpack.c.b16 %v2878, %v2877
    %v2893 = vpack.c.b16 %v2880, %v2879
    %v2894 = vpack.c.b16 %v2882, %v2881
    %v2908 = vsel %vm532, %v2796, 0
    %v2911 = vsel %vm532, %v2798, 0
    %v2914 = vsel %vm532, %v2800, 0
    %v2917 = vsel %vm532, %v2802, 0
    %v2920 = vsel %vm532, %v2804, 0
    %v2923 = vsel %vm532, %v2806, 0
    %v2926 = vsel %vm532, %v2808, 0
    %v2929 = vsel %vm532, %v2810, 0
    %2931 = vmatprep.subr.bf16.mxu0 0
    %2932 = vmatpush1.bf16.msra.mxu0 %v2883
    %2933 = vmatprep.subr.bf16.mxu0 0
    %2934 = vmatpush1.bf16.msra.mxu0 %v2884
    %2935 = vmatprep.subr.bf16.mxu0 0
    %2936 = vmatpush1.bf16.msra.mxu0 %v2885
    %2937 = vmatprep.subr.bf16.mxu0 0
    %2938 = vmatpush1.bf16.msra.mxu0 %v2886
    %2939 = vmatprep.subr.bf16.mxu0 0
    %2940 = vmatpush1.bf16.msra.mxu0 %v2887
    %2941 = vmatprep.subr.bf16.mxu0 0
    %2942 = vmatpush1.bf16.msra.mxu0 %v2888
    %2943 = vmatprep.subr.bf16.mxu0 0
    %2944 = vmatpush1.bf16.msra.mxu0 %v2889
    %2945 = vmatprep.subr.bf16.mxu0 0
    %2946 = vmatpush1.bf16.msra.mxu0 %v2890
    %2947 = vmatprep.subr.bf16.mxu0 0
    %2948 = vmatpush1.bf16.msra.mxu0 %v2891
    %2949 = vmatprep.subr.bf16.mxu0 0
    %2950 = vmatpush1.bf16.msra.mxu0 %v2892
    %2951 = vmatprep.subr.bf16.mxu0 0
    %2952 = vmatpush1.bf16.msra.mxu0 %v2893
    %2953 = vmatprep.subr.bf16.mxu0 0
    %2954 = vmatpush1.bf16.msra.mxu0 %v2894
    %2955 = vmatprep.subr.bf16.mxu0 0
    %2956 = vmatpush1.bf16.msra.mxu0 0
    %2957 = vmatprep.subr.bf16.mxu0 0
    %2958 = vmatpush1.bf16.msra.mxu0 0
    %2959 = vmatprep.subr.bf16.mxu0 0
    %2960 = vmatpush1.bf16.msra.mxu0 0
    %2961 = vmatprep.subr.bf16.mxu0 0
    %2962 = vmatpush1.bf16.msra.mxu0 0
    %2963 = vmatprep.mubr.bf16.mxu0 %v2908
    %2964 = vmatmul.mubr.bf16.gmra.mrb[0].mxu0 %v2795
    %v2965 = vpop.f32.mrb[0].mxu0
    %v2966 = vadd.f32 0.0, %v2965
    %v2967 = vpop.f32.mrb[0].mxu0
    %v2968 = vpop.f32.mrb[0].mxu0
    %v2969 = vadd.f32 0.0, %v2968
    %v2970 = vpop.f32.mrb[0].mxu0
    %2971 = vmatprep.mubr.bf16.mxu0 %v2911
    %2972 = vmatmul.mubr.bf16.gmra.mrb[0].mxu0 %v2797
    %v2973 = vpop.f32.mrb[0].mxu0
    %v2974 = vadd.f32 0.0, %v2973
    %v2975 = vpop.f32.mrb[0].mxu0
    %v2976 = vpop.f32.mrb[0].mxu0
    %v2977 = vadd.f32 0.0, %v2976
    %v2978 = vpop.f32.mrb[0].mxu0
    %2979 = vmatprep.mubr.bf16.mxu0 %v2914
    %2980 = vmatmul.mubr.bf16.gmra.mrb[0].mxu0 %v2799
    %v2981 = vpop.f32.mrb[0].mxu0
    %v2982 = vadd.f32 0.0, %v2981
    %v2983 = vpop.f32.mrb[0].mxu0
    %v2984 = vpop.f32.mrb[0].mxu0
    %v2985 = vadd.f32 0.0, %v2984
    %v2986 = vpop.f32.mrb[0].mxu0
    %2987 = vmatprep.mubr.bf16.mxu0 %v2917
    %2988 = vmatmul.mubr.bf16.gmra.mrb[0].mxu0 %v2801
    %v2989 = vpop.f32.mrb[0].mxu0
    %v2990 = vadd.f32 0.0, %v2989
    %v2991 = vpop.f32.mrb[0].mxu0
    %v2992 = vpop.f32.mrb[0].mxu0
    %v2993 = vadd.f32 0.0, %v2992
    %v2994 = vpop.f32.mrb[0].mxu0
    %2995 = vmatprep.mubr.bf16.mxu0 %v2920
    %2996 = vmatmul.mubr.bf16.gmra.mrb[0].mxu0 %v2803
    %v2997 = vpop.f32.mrb[0].mxu0
    %v2998 = vadd.f32 0.0, %v2997
    %v2999 = vpop.f32.mrb[0].mxu0
    %v3000 = vpop.f32.mrb[0].mxu0
    %v3001 = vadd.f32 0.0, %v3000
    %v3002 = vpop.f32.mrb[0].mxu0
    %3003 = vmatprep.mubr.bf16.mxu0 %v2923
    %3004 = vmatmul.mubr.bf16.gmra.mrb[0].mxu0 %v2805
    %v3005 = vpop.f32.mrb[0].mxu0
    %v3006 = vadd.f32 0.0, %v3005
    %v3007 = vpop.f32.mrb[0].mxu0
    %v3008 = vpop.f32.mrb[0].mxu0
    %v3009 = vadd.f32 0.0, %v3008
    %v3010 = vpop.f32.mrb[0].mxu0
    %3011 = vmatprep.mubr.bf16.mxu0 %v2926
    %3012 = vmatmul.mubr.bf16.gmra.mrb[0].mxu0 %v2807
    %v3013 = vpop.f32.mrb[0].mxu0
    %v3014 = vadd.f32 0.0, %v3013
    %v3015 = vpop.f32.mrb[0].mxu0
    %v3016 = vpop.f32.mrb[0].mxu0
    %v3017 = vadd.f32 0.0, %v3016
    %v3018 = vpop.f32.mrb[0].mxu0
    %3019 = vmatprep.mubr.bf16.mxu0 %v2929
    %3020 = vmatmul.mubr.bf16.gmra.mrb[0].mxu0 %v2809
    %v3021 = vpop.f32.mrb[0].mxu0
    %v3022 = vadd.f32 0.0, %v3021
    %v3023 = vpop.f32.mrb[0].mxu0
    %v3024 = vpop.f32.mrb[0].mxu0
    %v3025 = vadd.f32 0.0, %v3024
    %v3026 = vpop.f32.mrb[0].mxu0
    %3027 = vdwg.mxu0
    %3028 = vst [vmem:[#allocation11] sm:$0xff] %v2966
    %3029 = vst [vmem:[#allocation11 + $0x8] sm:$0xff] %v2969
    %3030 = vst [vmem:[#allocation11 + $0x10] sm:$0xff] %v2974
    %3031 = vst [vmem:[#allocation11 + $0x18] sm:$0xff] %v2977
    %3032 = vst [vmem:[#allocation11 + $0x20] sm:$0xff] %v2982
    %3033 = vst [vmem:[#allocation11 + $0x28] sm:$0xff] %v2985
    %3034 = vst [vmem:[#allocation11 + $0x30] sm:$0xff] %v2990
    %3035 = vst [vmem:[#allocation11 + $0x38] sm:$0xff] %v2993
    %3036 = vst [vmem:[#allocation11 + $0x40] sm:$0xff] %v2998
    %3037 = vst [vmem:[#allocation11 + $0x48] sm:$0xff] %v3001
    %3038 = vst [vmem:[#allocation11 + $0x50] sm:$0xff] %v3006
    %3039 = vst [vmem:[#allocation11 + $0x58] sm:$0xff] %v3009
    %3040 = vst [vmem:[#allocation11 + $0x60] sm:$0xff] %v3014
    %3041 = vst [vmem:[#allocation11 + $0x68] sm:$0xff] %v3017
    %3042 = vst [vmem:[#allocation11 + $0x70] sm:$0xff] %v3022
    %3043 = vst [vmem:[#allocation11 + $0x78] sm:$0xff] %v3025
    %3044 = vst [vmem:[#allocation3] sm:$0xff] %v2966
    %3045 = vst [vmem:[#allocation3 + $0x8] sm:$0xff] %v2969
    %3046 = vst [vmem:[#allocation3 + $0x10] sm:$0xff] %v2974
    %3047 = vst [vmem:[#allocation3 + $0x18] sm:$0xff] %v2977
    %3048 = vst [vmem:[#allocation3 + $0x20] sm:$0xff] %v2982
    %3049 = vst [vmem:[#allocation3 + $0x28] sm:$0xff] %v2985
    %3050 = vst [vmem:[#allocation3 + $0x30] sm:$0xff] %v2990
    %3051 = vst [vmem:[#allocation3 + $0x38] sm:$0xff] %v2993
    %3052 = vst [vmem:[#allocation3 + $0x40] sm:$0xff] %v2998
    %3053 = vst [vmem:[#allocation3 + $0x48] sm:$0xff] %v3001
    %3054 = vst [vmem:[#allocation3 + $0x50] sm:$0xff] %v3006
    %3055 = vst [vmem:[#allocation3 + $0x58] sm:$0xff] %v3009
    %3056 = vst [vmem:[#allocation3 + $0x60] sm:$0xff] %v3014
    %3057 = vst [vmem:[#allocation3 + $0x68] sm:$0xff] %v3017
    %3058 = vst [vmem:[#allocation3 + $0x70] sm:$0xff] %v3022
    %3059 = vst [vmem:[#allocation3 + $0x78] sm:$0xff] %v3025
    %3060 = vst [vmem:[#allocation4] sm:$0xff] 0
    %3061 = vst [vmem:[#allocation4 + $0x8] sm:$0xff] 0
    %3062 = vst [vmem:[#allocation4 + $0x10] sm:$0xff] 0
    %3063 = vst [vmem:[#allocation4 + $0x18] sm:$0xff] 0
    %3064 = vst [vmem:[#allocation4 + $0x20] sm:$0xff] 0
    %3065 = vst [vmem:[#allocation4 + $0x28] sm:$0xff] 0
    %3066 = vst [vmem:[#allocation4 + $0x30] sm:$0xff] 0
    %3067 = vst [vmem:[#allocation4 + $0x38] sm:$0xff] 0
    %3068 = vst [vmem:[#allocation4 + $0x40] sm:$0xff] 0
    %3069 = vst [vmem:[#allocation4 + $0x48] sm:$0xff] 0
    %3070 = vst [vmem:[#allocation4 + $0x50] sm:$0xff] 0
    %3071 = vst [vmem:[#allocation4 + $0x58] sm:$0xff] 0
    %3072 = vst [vmem:[#allocation4 + $0x60] sm:$0xff] 0
    %3073 = vst [vmem:[#allocation4 + $0x68] sm:$0xff] 0
    %3074 = vst [vmem:[#allocation4 + $0x70] sm:$0xff] 0
    %3075 = vst [vmem:[#allocation4 + $0x78] sm:$0xff] 0
    %v3076 = vld [vmem:[%s541] sm:$0xff]
    %v3077 = vld [vmem:[%s541 + $0x8] sm:$0xff]
    %v3078 = vld [vmem:[%s541 + $0x10] sm:$0xff]
    %v3079 = vld [vmem:[%s541 + $0x18] sm:$0xff]
    %v3080 = vld [vmem:[%s541 + $0x20] sm:$0xff]
    %v3081 = vld [vmem:[%s541 + $0x28] sm:$0xff]
    %v3082 = vld [vmem:[%s541 + $0x30] sm:$0xff]
    %v3083 = vld [vmem:[%s541 + $0x38] sm:$0xff]
    %v3084 = vld [vmem:[%s541 + $0x40] sm:$0xff]
    %v3085 = vld [vmem:[%s541 + $0x48] sm:$0xff]
    %v3086 = vld [vmem:[%s541 + $0x50] sm:$0xff]
    %v3087 = vld [vmem:[%s541 + $0x58] sm:$0xff]
    %v3088 = vld [vmem:[%s541 + $0x60] sm:$0xff]
    %v3089 = vld [vmem:[%s541 + $0x68] sm:$0xff]
    %v3090 = vld [vmem:[%s541 + $0x70] sm:$0xff]
    %v3091 = vld [vmem:[%s541 + $0x78] sm:$0xff]
    %s3092 = scalar_lea.vmem [#allocation5], 96
    %v3093 = vld [vmem:[%s3092] sm:$0xf]
    %v3094 = vld [vmem:[%s3092 + $0x4] sm:$0xf]
    %v3095 = vld [vmem:[%s3092 + $0x8] sm:$0xf]
    %v3096 = vld [vmem:[%s3092 + $0xc] sm:$0xf]
    %v3097 = vld [vmem:[%s3092 + $0x10] sm:$0xf]
    %v3098 = vld [vmem:[%s3092 + $0x14] sm:$0xf]
    %v3099 = vld [vmem:[%s3092 + $0x18] sm:$0xf]
    %v3100 = vld [vmem:[%s3092 + $0x1c] sm:$0xf]
    %v3101 = vld [vmem:[%s3092 + $0x20] sm:$0xf]
    %v3102 = vld [vmem:[%s3092 + $0x24] sm:$0xf]
    %v3103 = vld [vmem:[%s3092 + $0x28] sm:$0xf]
    %v3104 = vld [vmem:[%s3092 + $0x2c] sm:$0xf]
    %v3105 = vld [vmem:[%s3092 + $0x30] sm:$0xf]
    %v3106 = vld [vmem:[%s3092 + $0x34] sm:$0xf]
    %v3107 = vld [vmem:[%s3092 + $0x38] sm:$0xf]
    %v3108 = vld [vmem:[%s3092 + $0x3c] sm:$0xf]
    %v3109 = vld [vmem:[%s3092 + $0x40] sm:$0xf]
    %v3110 = vld [vmem:[%s3092 + $0x44] sm:$0xf]
    %v3111 = vld [vmem:[%s3092 + $0x48] sm:$0xf]
    %v3112 = vld [vmem:[%s3092 + $0x4c] sm:$0xf]
    %v3113 = vld [vmem:[%s3092 + $0x50] sm:$0xf]
    %v3114 = vld [vmem:[%s3092 + $0x54] sm:$0xf]
    %v3115 = vld [vmem:[%s3092 + $0x58] sm:$0xf]
    %v3116 = vld [vmem:[%s3092 + $0x5c] sm:$0xf]
    %v3141 = vunpack.c.l.b16 %v3093
    %v3142 = vunpack.c.l.b16 %v3094
    %v3143 = vunpack.c.l.b16 %v3095
    %v3144 = vunpack.c.l.b16 %v3096
    %v3145 = vunpack.c.l.b16 %v3097
    %v3146 = vunpack.c.l.b16 %v3098
    %v3147 = vunpack.c.l.b16 %v3099
    %v3148 = vunpack.c.l.b16 %v3100
    %v3149 = vunpack.c.l.b16 %v3101
    %v3150 = vunpack.c.l.b16 %v3102
    %v3151 = vunpack.c.l.b16 %v3103
    %v3152 = vunpack.c.l.b16 %v3104
    %v3153 = vunpack.c.l.b16 %v3105
    %v3154 = vunpack.c.l.b16 %v3106
    %v3155 = vunpack.c.l.b16 %v3107
    %v3156 = vunpack.c.l.b16 %v3108
    %v3157 = vunpack.c.l.b16 %v3109
    %v3158 = vunpack.c.l.b16 %v3110
    %v3159 = vunpack.c.l.b16 %v3111
    %v3160 = vunpack.c.l.b16 %v3112
    %v3161 = vunpack.c.l.b16 %v3113
    %v3162 = vunpack.c.l.b16 %v3114
    %v3163 = vunpack.c.l.b16 %v3115
    %v3164 = vunpack.c.l.b16 %v3116
    %v3165 = vpack.c.b16 %v3142, %v3141
    %v3166 = vpack.c.b16 %v3144, %v3143
    %v3167 = vpack.c.b16 %v3146, %v3145
    %v3168 = vpack.c.b16 %v3148, %v3147
    %v3169 = vpack.c.b16 %v3150, %v3149
    %v3170 = vpack.c.b16 %v3152, %v3151
    %v3171 = vpack.c.b16 %v3154, %v3153
    %v3172 = vpack.c.b16 %v3156, %v3155
    %v3173 = vpack.c.b16 %v3158, %v3157
    %v3174 = vpack.c.b16 %v3160, %v3159
    %v3175 = vpack.c.b16 %v3162, %v3161
    %v3176 = vpack.c.b16 %v3164, %v3163
    %v3190 = vsel %vm532, %v3077, 0
    %v3193 = vsel %vm532, %v3079, 0
    %v3196 = vsel %vm532, %v3081, 0
    %v3199 = vsel %vm532, %v3083, 0
    %v3202 = vsel %vm532, %v3085, 0
    %v3205 = vsel %vm532, %v3087, 0
    %v3208 = vsel %vm532, %v3089, 0
    %v3211 = vsel %vm532, %v3091, 0
    %3213 = vmatprep.subr.bf16.mxu0 0
    %3214 = vmatpush1.bf16.msra.mxu0 %v3165
    %3215 = vmatprep.subr.bf16.mxu0 0
    %3216 = vmatpush1.bf16.msra.mxu0 %v3166
    %3217 = vmatprep.subr.bf16.mxu0 0
    %3218 = vmatpush1.bf16.msra.mxu0 %v3167
    %3219 = vmatprep.subr.bf16.mxu0 0
    %3220 = vmatpush1.bf16.msra.mxu0 %v3168
    %3221 = vmatprep.subr.bf16.mxu0 0
    %3222 = vmatpush1.bf16.msra.mxu0 %v3169
    %3223 = vmatprep.subr.bf16.mxu0 0
    %3224 = vmatpush1.bf16.msra.mxu0 %v3170
    %3225 = vmatprep.subr.bf16.mxu0 0
    %3226 = vmatpush1.bf16.msra.mxu0 %v3171
    %3227 = vmatprep.subr.bf16.mxu0 0
    %3228 = vmatpush1.bf16.msra.mxu0 %v3172
    %3229 = vmatprep.subr.bf16.mxu0 0
    %3230 = vmatpush1.bf16.msra.mxu0 %v3173
    %3231 = vmatprep.subr.bf16.mxu0 0
    %3232 = vmatpush1.bf16.msra.mxu0 %v3174
    %3233 = vmatprep.subr.bf16.mxu0 0
    %3234 = vmatpush1.bf16.msra.mxu0 %v3175
    %3235 = vmatprep.subr.bf16.mxu0 0
    %3236 = vmatpush1.bf16.msra.mxu0 %v3176
    %3237 = vmatprep.subr.bf16.mxu0 0
    %3238 = vmatpush1.bf16.msra.mxu0 0
    %3239 = vmatprep.subr.bf16.mxu0 0
    %3240 = vmatpush1.bf16.msra.mxu0 0
    %3241 = vmatprep.subr.bf16.mxu0 0
    %3242 = vmatpush1.bf16.msra.mxu0 0
    %3243 = vmatprep.subr.bf16.mxu0 0
    %3244 = vmatpush1.bf16.msra.mxu0 0
    %3245 = vmatprep.mubr.bf16.mxu0 %v3190
    %3246 = vmatmul.mubr.bf16.gmra.mrb[0].mxu0 %v3076
    %v3247 = vpop.f32.mrb[0].mxu0
    %v3248 = vadd.f32 0.0, %v3247
    %v3249 = vpop.f32.mrb[0].mxu0
    %v3250 = vpop.f32.mrb[0].mxu0
    %v3251 = vadd.f32 0.0, %v3250
    %v3252 = vpop.f32.mrb[0].mxu0
    %3253 = vmatprep.mubr.bf16.mxu0 %v3193
    %3254 = vmatmul.mubr.bf16.gmra.mrb[0].mxu0 %v3078
    %v3255 = vpop.f32.mrb[0].mxu0
    %v3256 = vadd.f32 0.0, %v3255
    %v3257 = vpop.f32.mrb[0].mxu0
    %v3258 = vpop.f32.mrb[0].mxu0
    %v3259 = vadd.f32 0.0, %v3258
    %v3260 = vpop.f32.mrb[0].mxu0
    %3261 = vmatprep.mubr.bf16.mxu0 %v3196
    %3262 = vmatmul.mubr.bf16.gmra.mrb[0].mxu0 %v3080
    %v3263 = vpop.f32.mrb[0].mxu0
    %v3264 = vadd.f32 0.0, %v3263
    %v3265 = vpop.f32.mrb[0].mxu0
    %v3266 = vpop.f32.mrb[0].mxu0
    %v3267 = vadd.f32 0.0, %v3266
    %v3268 = vpop.f32.mrb[0].mxu0
    %3269 = vmatprep.mubr.bf16.mxu0 %v3199
    %3270 = vmatmul.mubr.bf16.gmra.mrb[0].mxu0 %v3082
    %v3271 = vpop.f32.mrb[0].mxu0
    %v3272 = vadd.f32 0.0, %v3271
    %v3273 = vpop.f32.mrb[0].mxu0
    %v3274 = vpop.f32.mrb[0].mxu0
    %v3275 = vadd.f32 0.0, %v3274
    %v3276 = vpop.f32.mrb[0].mxu0
    %3277 = vmatprep.mubr.bf16.mxu0 %v3202
    %3278 = vmatmul.mubr.bf16.gmra.mrb[0].mxu0 %v3084
    %v3279 = vpop.f32.mrb[0].mxu0
    %v3280 = vadd.f32 0.0, %v3279
    %v3281 = vpop.f32.mrb[0].mxu0
    %v3282 = vpop.f32.mrb[0].mxu0
    %v3283 = vadd.f32 0.0, %v3282
    %v3284 = vpop.f32.mrb[0].mxu0
    %3285 = vmatprep.mubr.bf16.mxu0 %v3205
    %3286 = vmatmul.mubr.bf16.gmra.mrb[0].mxu0 %v3086
    %v3287 = vpop.f32.mrb[0].mxu0
    %v3288 = vadd.f32 0.0, %v3287
    %v3289 = vpop.f32.mrb[0].mxu0
    %v3290 = vpop.f32.mrb[0].mxu0
    %v3291 = vadd.f32 0.0, %v3290
    %v3292 = vpop.f32.mrb[0].mxu0
    %3293 = vmatprep.mubr.bf16.mxu0 %v3208
    %3294 = vmatmul.mubr.bf16.gmra.mrb[0].mxu0 %v3088
    %v3295 = vpop.f32.mrb[0].mxu0
    %v3296 = vadd.f32 0.0, %v3295
    %v3297 = vpop.f32.mrb[0].mxu0
    %v3298 = vpop.f32.mrb[0].mxu0
    %v3299 = vadd.f32 0.0, %v3298
    %v3300 = vpop.f32.mrb[0].mxu0
    %3301 = vmatprep.mubr.bf16.mxu0 %v3211
    %3302 = vmatmul.mubr.bf16.gmra.mrb[0].mxu0 %v3090
    %v3303 = vpop.f32.mrb[0].mxu0
    %v3304 = vadd.f32 0.0, %v3303
    %v3305 = vpop.f32.mrb[0].mxu0
    %v3306 = vpop.f32.mrb[0].mxu0
    %v3307 = vadd.f32 0.0, %v3306
    %v3308 = vpop.f32.mrb[0].mxu0
    %3309 = vdwg.mxu0
    %s3310 = scalar_lea.vmem [#allocation11], 128
    %3311 = vst [vmem:[%s3310] sm:$0xff] %v3248
    %3312 = vst [vmem:[%s3310 + $0x8] sm:$0xff] %v3251
    %3313 = vst [vmem:[%s3310 + $0x10] sm:$0xff] %v3256
    %3314 = vst [vmem:[%s3310 + $0x18] sm:$0xff] %v3259
    %3315 = vst [vmem:[%s3310 + $0x20] sm:$0xff] %v3264
    %3316 = vst [vmem:[%s3310 + $0x28] sm:$0xff] %v3267
    %3317 = vst [vmem:[%s3310 + $0x30] sm:$0xff] %v3272
    %3318 = vst [vmem:[%s3310 + $0x38] sm:$0xff] %v3275
    %3319 = vst [vmem:[%s3310 + $0x40] sm:$0xff] %v3280
    %3320 = vst [vmem:[%s3310 + $0x48] sm:$0xff] %v3283
    %3321 = vst [vmem:[%s3310 + $0x50] sm:$0xff] %v3288
    %3322 = vst [vmem:[%s3310 + $0x58] sm:$0xff] %v3291
    %3323 = vst [vmem:[%s3310 + $0x60] sm:$0xff] %v3296
    %3324 = vst [vmem:[%s3310 + $0x68] sm:$0xff] %v3299
    %3325 = vst [vmem:[%s3310 + $0x70] sm:$0xff] %v3304
    %3326 = vst [vmem:[%s3310 + $0x78] sm:$0xff] %v3307
    %v3327 = vld [vmem:[#allocation3] sm:$0xff]
    %v3328 = vld [vmem:[#allocation3 + $0x8] sm:$0xff]
    %v3329 = vld [vmem:[#allocation3 + $0x10] sm:$0xff]
    %v3330 = vld [vmem:[#allocation3 + $0x18] sm:$0xff]
    %v3331 = vld [vmem:[#allocation3 + $0x20] sm:$0xff]
    %v3332 = vld [vmem:[#allocation3 + $0x28] sm:$0xff]
    %v3333 = vld [vmem:[#allocation3 + $0x30] sm:$0xff]
    %v3334 = vld [vmem:[#allocation3 + $0x38] sm:$0xff]
    %v3335 = vld [vmem:[#allocation3 + $0x40] sm:$0xff]
    %v3336 = vld [vmem:[#allocation3 + $0x48] sm:$0xff]
    %v3337 = vld [vmem:[#allocation3 + $0x50] sm:$0xff]
    %v3338 = vld [vmem:[#allocation3 + $0x58] sm:$0xff]
    %v3339 = vld [vmem:[#allocation3 + $0x60] sm:$0xff]
    %v3340 = vld [vmem:[#allocation3 + $0x68] sm:$0xff]
    %v3341 = vld [vmem:[#allocation3 + $0x70] sm:$0xff]
    %v3342 = vld [vmem:[#allocation3 + $0x78] sm:$0xff]
    %vm3343 = vcmp.gt.f32.partialorder %v3248, %v3327
    %vm3344 = vcmp.gt.f32.partialorder %v3251, %v3328
    %vm3345 = vcmp.gt.f32.partialorder %v3256, %v3329
    %vm3346 = vcmp.gt.f32.partialorder %v3259, %v3330
    %vm3347 = vcmp.gt.f32.partialorder %v3264, %v3331
    %vm3348 = vcmp.gt.f32.partialorder %v3267, %v3332
    %vm3349 = vcmp.gt.f32.partialorder %v3272, %v3333
    %vm3350 = vcmp.gt.f32.partialorder %v3275, %v3334
    %vm3351 = vcmp.gt.f32.partialorder %v3280, %v3335
    %vm3352 = vcmp.gt.f32.partialorder %v3283, %v3336
    %vm3353 = vcmp.gt.f32.partialorder %v3288, %v3337
    %vm3354 = vcmp.gt.f32.partialorder %v3291, %v3338
    %vm3355 = vcmp.gt.f32.partialorder %v3296, %v3339
    %vm3356 = vcmp.gt.f32.partialorder %v3299, %v3340
    %vm3357 = vcmp.gt.f32.partialorder %v3304, %v3341
    %vm3358 = vcmp.gt.f32.partialorder %v3307, %v3342
    %v3359 = vsel %vm3343, %v3248, %v3327
    %v3360 = vsel %vm3344, %v3251, %v3328
    %v3361 = vsel %vm3345, %v3256, %v3329
    %v3362 = vsel %vm3346, %v3259, %v3330
    %v3363 = vsel %vm3347, %v3264, %v3331
    %v3364 = vsel %vm3348, %v3267, %v3332
    %v3365 = vsel %vm3349, %v3272, %v3333
    %v3366 = vsel %vm3350, %v3275, %v3334
    %v3367 = vsel %vm3351, %v3280, %v3335
    %v3368 = vsel %vm3352, %v3283, %v3336
    %v3369 = vsel %vm3353, %v3288, %v3337
    %v3370 = vsel %vm3354, %v3291, %v3338
    %v3371 = vsel %vm3355, %v3296, %v3339
    %v3372 = vsel %vm3356, %v3299, %v3340
    %v3373 = vsel %vm3357, %v3304, %v3341
    %v3374 = vsel %vm3358, %v3307, %v3342
    %3375 = vst [vmem:[#allocation3] sm:$0xff] %v3359
    %3376 = vst [vmem:[#allocation3 + $0x8] sm:$0xff] %v3360
    %3377 = vst [vmem:[#allocation3 + $0x10] sm:$0xff] %v3361
    %3378 = vst [vmem:[#allocation3 + $0x18] sm:$0xff] %v3362
    %3379 = vst [vmem:[#allocation3 + $0x20] sm:$0xff] %v3363
    %3380 = vst [vmem:[#allocation3 + $0x28] sm:$0xff] %v3364
    %3381 = vst [vmem:[#allocation3 + $0x30] sm:$0xff] %v3365
    %3382 = vst [vmem:[#allocation3 + $0x38] sm:$0xff] %v3366
    %3383 = vst [vmem:[#allocation3 + $0x40] sm:$0xff] %v3367
    %3384 = vst [vmem:[#allocation3 + $0x48] sm:$0xff] %v3368
    %3385 = vst [vmem:[#allocation3 + $0x50] sm:$0xff] %v3369
    %3386 = vst [vmem:[#allocation3 + $0x58] sm:$0xff] %v3370
    %3387 = vst [vmem:[#allocation3 + $0x60] sm:$0xff] %v3371
    %3388 = vst [vmem:[#allocation3 + $0x68] sm:$0xff] %v3372
    %3389 = vst [vmem:[#allocation3 + $0x70] sm:$0xff] %v3373
    %3390 = vst [vmem:[#allocation3 + $0x78] sm:$0xff] %v3374
    %v3391 = vld [vmem:[#allocation4] sm:$0xff]
    %v3392 = vld [vmem:[#allocation4 + $0x8] sm:$0xff]
    %v3393 = vld [vmem:[#allocation4 + $0x10] sm:$0xff]
    %v3394 = vld [vmem:[#allocation4 + $0x18] sm:$0xff]
    %v3395 = vld [vmem:[#allocation4 + $0x20] sm:$0xff]
    %v3396 = vld [vmem:[#allocation4 + $0x28] sm:$0xff]
    %v3397 = vld [vmem:[#allocation4 + $0x30] sm:$0xff]
    %v3398 = vld [vmem:[#allocation4 + $0x38] sm:$0xff]
    %v3399 = vld [vmem:[#allocation4 + $0x40] sm:$0xff]
    %v3400 = vld [vmem:[#allocation4 + $0x48] sm:$0xff]
    %v3401 = vld [vmem:[#allocation4 + $0x50] sm:$0xff]
    %v3402 = vld [vmem:[#allocation4 + $0x58] sm:$0xff]
    %v3403 = vld [vmem:[#allocation4 + $0x60] sm:$0xff]
    %v3404 = vld [vmem:[#allocation4 + $0x68] sm:$0xff]
    %v3405 = vld [vmem:[#allocation4 + $0x70] sm:$0xff]
    %v3406 = vld [vmem:[#allocation4 + $0x78] sm:$0xff]
    %v3407 = vsel %vm3343, 1, %v3391
    %v3408 = vsel %vm3344, 1, %v3392
    %v3409 = vsel %vm3345, 1, %v3393
    %v3410 = vsel %vm3346, 1, %v3394
    %v3411 = vsel %vm3347, 1, %v3395
    %v3412 = vsel %vm3348, 1, %v3396
    %v3413 = vsel %vm3349, 1, %v3397
    %v3414 = vsel %vm3350, 1, %v3398
    %v3415 = vsel %vm3351, 1, %v3399
    %v3416 = vsel %vm3352, 1, %v3400
    %v3417 = vsel %vm3353, 1, %v3401
    %v3418 = vsel %vm3354, 1, %v3402
    %v3419 = vsel %vm3355, 1, %v3403
    %v3420 = vsel %vm3356, 1, %v3404
    %v3421 = vsel %vm3357, 1, %v3405
    %v3422 = vsel %vm3358, 1, %v3406
    %3423 = vst [vmem:[#allocation4] sm:$0xff] %v3407
    %3424 = vst [vmem:[#allocation4 + $0x8] sm:$0xff] %v3408
    %3425 = vst [vmem:[#allocation4 + $0x10] sm:$0xff] %v3409
    %3426 = vst [vmem:[#allocation4 + $0x18] sm:$0xff] %v3410
    %3427 = vst [vmem:[#allocation4 + $0x20] sm:$0xff] %v3411
    %3428 = vst [vmem:[#allocation4 + $0x28] sm:$0xff] %v3412
    %3429 = vst [vmem:[#allocation4 + $0x30] sm:$0xff] %v3413
    %3430 = vst [vmem:[#allocation4 + $0x38] sm:$0xff] %v3414
    %3431 = vst [vmem:[#allocation4 + $0x40] sm:$0xff] %v3415
    %3432 = vst [vmem:[#allocation4 + $0x48] sm:$0xff] %v3416
    %3433 = vst [vmem:[#allocation4 + $0x50] sm:$0xff] %v3417
    %3434 = vst [vmem:[#allocation4 + $0x58] sm:$0xff] %v3418
    %3435 = vst [vmem:[#allocation4 + $0x60] sm:$0xff] %v3419
    %3436 = vst [vmem:[#allocation4 + $0x68] sm:$0xff] %v3420
    %3437 = vst [vmem:[#allocation4 + $0x70] sm:$0xff] %v3421
    %3438 = vst [vmem:[#allocation4 + $0x78] sm:$0xff] %v3422
    %v3439 = vld [vmem:[%s549] sm:$0xff]
    %v3440 = vld [vmem:[%s549 + $0x8] sm:$0xff]
    %v3441 = vld [vmem:[%s549 + $0x10] sm:$0xff]
    %v3442 = vld [vmem:[%s549 + $0x18] sm:$0xff]
    %v3443 = vld [vmem:[%s549 + $0x20] sm:$0xff]
    %v3444 = vld [vmem:[%s549 + $0x28] sm:$0xff]
    %v3445 = vld [vmem:[%s549 + $0x30] sm:$0xff]
    %v3446 = vld [vmem:[%s549 + $0x38] sm:$0xff]
    %v3447 = vld [vmem:[%s549 + $0x40] sm:$0xff]
    %v3448 = vld [vmem:[%s549 + $0x48] sm:$0xff]
    %v3449 = vld [vmem:[%s549 + $0x50] sm:$0xff]
    %v3450 = vld [vmem:[%s549 + $0x58] sm:$0xff]
    %v3451 = vld [vmem:[%s549 + $0x60] sm:$0xff]
    %v3452 = vld [vmem:[%s549 + $0x68] sm:$0xff]
    %v3453 = vld [vmem:[%s549 + $0x70] sm:$0xff]
    %v3454 = vld [vmem:[%s549 + $0x78] sm:$0xff]
    %s3455 = scalar_lea.vmem [#allocation5], 192
    %v3456 = vld [vmem:[%s3455] sm:$0xf]
    %v3457 = vld [vmem:[%s3455 + $0x4] sm:$0xf]
    %v3458 = vld [vmem:[%s3455 + $0x8] sm:$0xf]
    %v3459 = vld [vmem:[%s3455 + $0xc] sm:$0xf]
    %v3460 = vld [vmem:[%s3455 + $0x10] sm:$0xf]
    %v3461 = vld [vmem:[%s3455 + $0x14] sm:$0xf]
    %v3462 = vld [vmem:[%s3455 + $0x18] sm:$0xf]
    %v3463 = vld [vmem:[%s3455 + $0x1c] sm:$0xf]
    %v3464 = vld [vmem:[%s3455 + $0x20] sm:$0xf]
    %v3465 = vld [vmem:[%s3455 + $0x24] sm:$0xf]
    %v3466 = vld [vmem:[%s3455 + $0x28] sm:$0xf]
    %v3467 = vld [vmem:[%s3455 + $0x2c] sm:$0xf]
    %v3468 = vld [vmem:[%s3455 + $0x30] sm:$0xf]
    %v3469 = vld [vmem:[%s3455 + $0x34] sm:$0xf]
    %v3470 = vld [vmem:[%s3455 + $0x38] sm:$0xf]
    %v3471 = vld [vmem:[%s3455 + $0x3c] sm:$0xf]
    %v3472 = vld [vmem:[%s3455 + $0x40] sm:$0xf]
    %v3473 = vld [vmem:[%s3455 + $0x44] sm:$0xf]
    %v3474 = vld [vmem:[%s3455 + $0x48] sm:$0xf]
    %v3475 = vld [vmem:[%s3455 + $0x4c] sm:$0xf]
    %v3476 = vld [vmem:[%s3455 + $0x50] sm:$0xf]
    %v3477 = vld [vmem:[%s3455 + $0x54] sm:$0xf]
    %v3478 = vld [vmem:[%s3455 + $0x58] sm:$0xf]
    %v3479 = vld [vmem:[%s3455 + $0x5c] sm:$0xf]
    %v3504 = vunpack.c.l.b16 %v3456
    %v3505 = vunpack.c.l.b16 %v3457
    %v3506 = vunpack.c.l.b16 %v3458
    %v3507 = vunpack.c.l.b16 %v3459
    %v3508 = vunpack.c.l.b16 %v3460
    %v3509 = vunpack.c.l.b16 %v3461
    %v3510 = vunpack.c.l.b16 %v3462
    %v3511 = vunpack.c.l.b16 %v3463
    %v3512 = vunpack.c.l.b16 %v3464
    %v3513 = vunpack.c.l.b16 %v3465
    %v3514 = vunpack.c.l.b16 %v3466
    %v3515 = vunpack.c.l.b16 %v3467
    %v3516 = vunpack.c.l.b16 %v3468
    %v3517 = vunpack.c.l.b16 %v3469
    %v3518 = vunpack.c.l.b16 %v3470
    %v3519 = vunpack.c.l.b16 %v3471
    %v3520 = vunpack.c.l.b16 %v3472
    %v3521 = vunpack.c.l.b16 %v3473
    %v3522 = vunpack.c.l.b16 %v3474
    %v3523 = vunpack.c.l.b16 %v3475
    %v3524 = vunpack.c.l.b16 %v3476
    %v3525 = vunpack.c.l.b16 %v3477
    %v3526 = vunpack.c.l.b16 %v3478
    %v3527 = vunpack.c.l.b16 %v3479
    %v3528 = vpack.c.b16 %v3505, %v3504
    %v3529 = vpack.c.b16 %v3507, %v3506
    %v3530 = vpack.c.b16 %v3509, %v3508
    %v3531 = vpack.c.b16 %v3511, %v3510
    %v3532 = vpack.c.b16 %v3513, %v3512
    %v3533 = vpack.c.b16 %v3515, %v3514
    %v3534 = vpack.c.b16 %v3517, %v3516
    %v3535 = vpack.c.b16 %v3519, %v3518
    %v3536 = vpack.c.b16 %v3521, %v3520
    %v3537 = vpack.c.b16 %v3523, %v3522
    %v3538 = vpack.c.b16 %v3525, %v3524
    %v3539 = vpack.c.b16 %v3527, %v3526
    %v3553 = vsel %vm532, %v3440, 0
    %v3556 = vsel %vm532, %v3442, 0
    %v3559 = vsel %vm532, %v3444, 0
    %v3562 = vsel %vm532, %v3446, 0
    %v3565 = vsel %vm532, %v3448, 0
    %v3568 = vsel %vm532, %v3450, 0
    %v3571 = vsel %vm532, %v3452, 0
    %v3574 = vsel %vm532, %v3454, 0
    %3576 = vmatprep.subr.bf16.mxu0 0
    %3577 = vmatpush1.bf16.msra.mxu0 %v3528
    %3578 = vmatprep.subr.bf16.mxu0 0
    %3579 = vmatpush1.bf16.msra.mxu0 %v3529
    %3580 = vmatprep.subr.bf16.mxu0 0
    %3581 = vmatpush1.bf16.msra.mxu0 %v3530
    %3582 = vmatprep.subr.bf16.mxu0 0
    %3583 = vmatpush1.bf16.msra.mxu0 %v3531
    %3584 = vmatprep.subr.bf16.mxu0 0
    %3585 = vmatpush1.bf16.msra.mxu0 %v3532
    %3586 = vmatprep.subr.bf16.mxu0 0
    %3587 = vmatpush1.bf16.msra.mxu0 %v3533
    %3588 = vmatprep.subr.bf16.mxu0 0
    %3589 = vmatpush1.bf16.msra.mxu0 %v3534
    %3590 = vmatprep.subr.bf16.mxu0 0
    %3591 = vmatpush1.bf16.msra.mxu0 %v3535
    %3592 = vmatprep.subr.bf16.mxu0 0
    %3593 = vmatpush1.bf16.msra.mxu0 %v3536
    %3594 = vmatprep.subr.bf16.mxu0 0
    %3595 = vmatpush1.bf16.msra.mxu0 %v3537
    %3596 = vmatprep.subr.bf16.mxu0 0
    %3597 = vmatpush1.bf16.msra.mxu0 %v3538
    %3598 = vmatprep.subr.bf16.mxu0 0
    %3599 = vmatpush1.bf16.msra.mxu0 %v3539
    %3600 = vmatprep.subr.bf16.mxu0 0
    %3601 = vmatpush1.bf16.msra.mxu0 0
    %3602 = vmatprep.subr.bf16.mxu0 0
    %3603 = vmatpush1.bf16.msra.mxu0 0
    %3604 = vmatprep.subr.bf16.mxu0 0
    %3605 = vmatpush1.bf16.msra.mxu0 0
    %3606 = vmatprep.subr.bf16.mxu0 0
    %3607 = vmatpush1.bf16.msra.mxu0 0
    %3608 = vmatprep.mubr.bf16.mxu0 %v3553
    %3609 = vmatmul.mubr.bf16.gmra.mrb[0].mxu0 %v3439
    %v3610 = vpop.f32.mrb[0].mxu0
    %v3611 = vadd.f32 0.0, %v3610
    %v3612 = vpop.f32.mrb[0].mxu0
    %v3613 = vpop.f32.mrb[0].mxu0
    %v3614 = vadd.f32 0.0, %v3613
    %v3615 = vpop.f32.mrb[0].mxu0
    %3616 = vmatprep.mubr.bf16.mxu0 %v3556
    %3617 = vmatmul.mubr.bf16.gmra.mrb[0].mxu0 %v3441
    %v3618 = vpop.f32.mrb[0].mxu0
    %v3619 = vadd.f32 0.0, %v3618
    %v3620 = vpop.f32.mrb[0].mxu0
    %v3621 = vpop.f32.mrb[0].mxu0
    %v3622 = vadd.f32 0.0, %v3621
    %v3623 = vpop.f32.mrb[0].mxu0
    %3624 = vmatprep.mubr.bf16.mxu0 %v3559
    %3625 = vmatmul.mubr.bf16.gmra.mrb[0].mxu0 %v3443
    %v3626 = vpop.f32.mrb[0].mxu0
    %v3627 = vadd.f32 0.0, %v3626
    %v3628 = vpop.f32.mrb[0].mxu0
    %v3629 = vpop.f32.mrb[0].mxu0
    %v3630 = vadd.f32 0.0, %v3629
    %v3631 = vpop.f32.mrb[0].mxu0
    %3632 = vmatprep.mubr.bf16.mxu0 %v3562
    %3633 = vmatmul.mubr.bf16.gmra.mrb[0].mxu0 %v3445
    %v3634 = vpop.f32.mrb[0].mxu0
    %v3635 = vadd.f32 0.0, %v3634
    %v3636 = vpop.f32.mrb[0].mxu0
    %v3637 = vpop.f32.mrb[0].mxu0
    %v3638 = vadd.f32 0.0, %v3637
    %v3639 = vpop.f32.mrb[0].mxu0
    %3640 = vmatprep.mubr.bf16.mxu0 %v3565
    %3641 = vmatmul.mubr.bf16.gmra.mrb[0].mxu0 %v3447
    %v3642 = vpop.f32.mrb[0].mxu0
    %v3643 = vadd.f32 0.0, %v3642
    %v3644 = vpop.f32.mrb[0].mxu0
    %v3645 = vpop.f32.mrb[0].mxu0
    %v3646 = vadd.f32 0.0, %v3645
    %v3647 = vpop.f32.mrb[0].mxu0
    %3648 = vmatprep.mubr.bf16.mxu0 %v3568
    %3649 = vmatmul.mubr.bf16.gmra.mrb[0].mxu0 %v3449
    %v3650 = vpop.f32.mrb[0].mxu0
    %v3651 = vadd.f32 0.0, %v3650
    %v3652 = vpop.f32.mrb[0].mxu0
    %v3653 = vpop.f32.mrb[0].mxu0
    %v3654 = vadd.f32 0.0, %v3653
    %v3655 = vpop.f32.mrb[0].mxu0
    %3656 = vmatprep.mubr.bf16.mxu0 %v3571
    %3657 = vmatmul.mubr.bf16.gmra.mrb[0].mxu0 %v3451
    %v3658 = vpop.f32.mrb[0].mxu0
    %v3659 = vadd.f32 0.0, %v3658
    %v3660 = vpop.f32.mrb[0].mxu0
    %v3661 = vpop.f32.mrb[0].mxu0
    %v3662 = vadd.f32 0.0, %v3661
    %v3663 = vpop.f32.mrb[0].mxu0
    %3664 = vmatprep.mubr.bf16.mxu0 %v3574
    %3665 = vmatmul.mubr.bf16.gmra.mrb[0].mxu0 %v3453
    %v3666 = vpop.f32.mrb[0].mxu0
    %v3667 = vadd.f32 0.0, %v3666
    %v3668 = vpop.f32.mrb[0].mxu0
    %v3669 = vpop.f32.mrb[0].mxu0
    %v3670 = vadd.f32 0.0, %v3669
    %v3671 = vpop.f32.mrb[0].mxu0
    %3672 = vdwg.mxu0
    %s3673 = scalar_lea.vmem [#allocation11], 256
    %3674 = vst [vmem:[%s3673] sm:$0xff] %v3611
    %3675 = vst [vmem:[%s3673 + $0x8] sm:$0xff] %v3614
    %3676 = vst [vmem:[%s3673 + $0x10] sm:$0xff] %v3619
    %3677 = vst [vmem:[%s3673 + $0x18] sm:$0xff] %v3622
    %3678 = vst [vmem:[%s3673 + $0x20] sm:$0xff] %v3627
    %3679 = vst [vmem:[%s3673 + $0x28] sm:$0xff] %v3630
    %3680 = vst [vmem:[%s3673 + $0x30] sm:$0xff] %v3635
    %3681 = vst [vmem:[%s3673 + $0x38] sm:$0xff] %v3638
    %3682 = vst [vmem:[%s3673 + $0x40] sm:$0xff] %v3643
    %3683 = vst [vmem:[%s3673 + $0x48] sm:$0xff] %v3646
    %3684 = vst [vmem:[%s3673 + $0x50] sm:$0xff] %v3651
    %3685 = vst [vmem:[%s3673 + $0x58] sm:$0xff] %v3654
    %3686 = vst [vmem:[%s3673 + $0x60] sm:$0xff] %v3659
    %3687 = vst [vmem:[%s3673 + $0x68] sm:$0xff] %v3662
    %3688 = vst [vmem:[%s3673 + $0x70] sm:$0xff] %v3667
    %3689 = vst [vmem:[%s3673 + $0x78] sm:$0xff] %v3670
    %v3690 = vld [vmem:[#allocation3] sm:$0xff]
    %v3691 = vld [vmem:[#allocation3 + $0x8] sm:$0xff]
    %v3692 = vld [vmem:[#allocation3 + $0x10] sm:$0xff]
    %v3693 = vld [vmem:[#allocation3 + $0x18] sm:$0xff]
    %v3694 = vld [vmem:[#allocation3 + $0x20] sm:$0xff]
    %v3695 = vld [vmem:[#allocation3 + $0x28] sm:$0xff]
    %v3696 = vld [vmem:[#allocation3 + $0x30] sm:$0xff]
    %v3697 = vld [vmem:[#allocation3 + $0x38] sm:$0xff]
    %v3698 = vld [vmem:[#allocation3 + $0x40] sm:$0xff]
    %v3699 = vld [vmem:[#allocation3 + $0x48] sm:$0xff]
    %v3700 = vld [vmem:[#allocation3 + $0x50] sm:$0xff]
    %v3701 = vld [vmem:[#allocation3 + $0x58] sm:$0xff]
    %v3702 = vld [vmem:[#allocation3 + $0x60] sm:$0xff]
    %v3703 = vld [vmem:[#allocation3 + $0x68] sm:$0xff]
    %v3704 = vld [vmem:[#allocation3 + $0x70] sm:$0xff]
    %v3705 = vld [vmem:[#allocation3 + $0x78] sm:$0xff]
    %vm3706 = vcmp.gt.f32.partialorder %v3611, %v3690
    %vm3707 = vcmp.gt.f32.partialorder %v3614, %v3691
    %vm3708 = vcmp.gt.f32.partialorder %v3619, %v3692
    %vm3709 = vcmp.gt.f32.partialorder %v3622, %v3693
    %vm3710 = vcmp.gt.f32.partialorder %v3627, %v3694
    %vm3711 = vcmp.gt.f32.partialorder %v3630, %v3695
    %vm3712 = vcmp.gt.f32.partialorder %v3635, %v3696
    %vm3713 = vcmp.gt.f32.partialorder %v3638, %v3697
    %vm3714 = vcmp.gt.f32.partialorder %v3643, %v3698
    %vm3715 = vcmp.gt.f32.partialorder %v3646, %v3699
    %vm3716 = vcmp.gt.f32.partialorder %v3651, %v3700
    %vm3717 = vcmp.gt.f32.partialorder %v3654, %v3701
    %vm3718 = vcmp.gt.f32.partialorder %v3659, %v3702
    %vm3719 = vcmp.gt.f32.partialorder %v3662, %v3703
    %vm3720 = vcmp.gt.f32.partialorder %v3667, %v3704
    %vm3721 = vcmp.gt.f32.partialorder %v3670, %v3705
    %v3722 = vsel %vm3706, %v3611, %v3690
    %v3723 = vsel %vm3707, %v3614, %v3691
    %v3724 = vsel %vm3708, %v3619, %v3692
    %v3725 = vsel %vm3709, %v3622, %v3693
    %v3726 = vsel %vm3710, %v3627, %v3694
    %v3727 = vsel %vm3711, %v3630, %v3695
    %v3728 = vsel %vm3712, %v3635, %v3696
    %v3729 = vsel %vm3713, %v3638, %v3697
    %v3730 = vsel %vm3714, %v3643, %v3698
    %v3731 = vsel %vm3715, %v3646, %v3699
    %v3732 = vsel %vm3716, %v3651, %v3700
    %v3733 = vsel %vm3717, %v3654, %v3701
    %v3734 = vsel %vm3718, %v3659, %v3702
    %v3735 = vsel %vm3719, %v3662, %v3703
    %v3736 = vsel %vm3720, %v3667, %v3704
    %v3737 = vsel %vm3721, %v3670, %v3705
    %3738 = vst [vmem:[#allocation3] sm:$0xff] %v3722
    %3739 = vst [vmem:[#allocation3 + $0x8] sm:$0xff] %v3723
    %3740 = vst [vmem:[#allocation3 + $0x10] sm:$0xff] %v3724
    %3741 = vst [vmem:[#allocation3 + $0x18] sm:$0xff] %v3725
    %3742 = vst [vmem:[#allocation3 + $0x20] sm:$0xff] %v3726
    %3743 = vst [vmem:[#allocation3 + $0x28] sm:$0xff] %v3727
    %3744 = vst [vmem:[#allocation3 + $0x30] sm:$0xff] %v3728
    %3745 = vst [vmem:[#allocation3 + $0x38] sm:$0xff] %v3729
    %3746 = vst [vmem:[#allocation3 + $0x40] sm:$0xff] %v3730
    %3747 = vst [vmem:[#allocation3 + $0x48] sm:$0xff] %v3731
    %3748 = vst [vmem:[#allocation3 + $0x50] sm:$0xff] %v3732
    %3749 = vst [vmem:[#allocation3 + $0x58] sm:$0xff] %v3733
    %3750 = vst [vmem:[#allocation3 + $0x60] sm:$0xff] %v3734
    %3751 = vst [vmem:[#allocation3 + $0x68] sm:$0xff] %v3735
    %3752 = vst [vmem:[#allocation3 + $0x70] sm:$0xff] %v3736
    %3753 = vst [vmem:[#allocation3 + $0x78] sm:$0xff] %v3737
    %v3754 = vld [vmem:[#allocation4] sm:$0xff]
    %v3755 = vld [vmem:[#allocation4 + $0x8] sm:$0xff]
    %v3756 = vld [vmem:[#allocation4 + $0x10] sm:$0xff]
    %v3757 = vld [vmem:[#allocation4 + $0x18] sm:$0xff]
    %v3758 = vld [vmem:[#allocation4 + $0x20] sm:$0xff]
    %v3759 = vld [vmem:[#allocation4 + $0x28] sm:$0xff]
    %v3760 = vld [vmem:[#allocation4 + $0x30] sm:$0xff]
    %v3761 = vld [vmem:[#allocation4 + $0x38] sm:$0xff]
    %v3762 = vld [vmem:[#allocation4 + $0x40] sm:$0xff]
    %v3763 = vld [vmem:[#allocation4 + $0x48] sm:$0xff]
    %v3764 = vld [vmem:[#allocation4 + $0x50] sm:$0xff]
    %v3765 = vld [vmem:[#allocation4 + $0x58] sm:$0xff]
    %v3766 = vld [vmem:[#allocation4 + $0x60] sm:$0xff]
    %v3767 = vld [vmem:[#allocation4 + $0x68] sm:$0xff]
    %v3768 = vld [vmem:[#allocation4 + $0x70] sm:$0xff]
    %v3769 = vld [vmem:[#allocation4 + $0x78] sm:$0xff]
    %v3770 = vsel %vm3706, 2, %v3754
    %v3771 = vsel %vm3707, 2, %v3755
    %v3772 = vsel %vm3708, 2, %v3756
    %v3773 = vsel %vm3709, 2, %v3757
    %v3774 = vsel %vm3710, 2, %v3758
    %v3775 = vsel %vm3711, 2, %v3759
    %v3776 = vsel %vm3712, 2, %v3760
    %v3777 = vsel %vm3713, 2, %v3761
    %v3778 = vsel %vm3714, 2, %v3762
    %v3779 = vsel %vm3715, 2, %v3763
    %v3780 = vsel %vm3716, 2, %v3764
    %v3781 = vsel %vm3717, 2, %v3765
    %v3782 = vsel %vm3718, 2, %v3766
    %v3783 = vsel %vm3719, 2, %v3767
    %v3784 = vsel %vm3720, 2, %v3768
    %v3785 = vsel %vm3721, 2, %v3769
    %3786 = vst [vmem:[#allocation4] sm:$0xff] %v3770
    %3787 = vst [vmem:[#allocation4 + $0x8] sm:$0xff] %v3771
    %3788 = vst [vmem:[#allocation4 + $0x10] sm:$0xff] %v3772
    %3789 = vst [vmem:[#allocation4 + $0x18] sm:$0xff] %v3773
    %3790 = vst [vmem:[#allocation4 + $0x20] sm:$0xff] %v3774
    %3791 = vst [vmem:[#allocation4 + $0x28] sm:$0xff] %v3775
    %3792 = vst [vmem:[#allocation4 + $0x30] sm:$0xff] %v3776
    %3793 = vst [vmem:[#allocation4 + $0x38] sm:$0xff] %v3777
    %3794 = vst [vmem:[#allocation4 + $0x40] sm:$0xff] %v3778
    %3795 = vst [vmem:[#allocation4 + $0x48] sm:$0xff] %v3779
    %3796 = vst [vmem:[#allocation4 + $0x50] sm:$0xff] %v3780
    %3797 = vst [vmem:[#allocation4 + $0x58] sm:$0xff] %v3781
    %3798 = vst [vmem:[#allocation4 + $0x60] sm:$0xff] %v3782
    %3799 = vst [vmem:[#allocation4 + $0x68] sm:$0xff] %v3783
    %3800 = vst [vmem:[#allocation4 + $0x70] sm:$0xff] %v3784
    %3801 = vst [vmem:[#allocation4 + $0x78] sm:$0xff] %v3785
    %v3802 = vld [vmem:[%s557] sm:$0xff]
    %v3803 = vld [vmem:[%s557 + $0x8] sm:$0xff]
    %v3804 = vld [vmem:[%s557 + $0x10] sm:$0xff]
    %v3805 = vld [vmem:[%s557 + $0x18] sm:$0xff]
    %v3806 = vld [vmem:[%s557 + $0x20] sm:$0xff]
    %v3807 = vld [vmem:[%s557 + $0x28] sm:$0xff]
    %v3808 = vld [vmem:[%s557 + $0x30] sm:$0xff]
    %v3809 = vld [vmem:[%s557 + $0x38] sm:$0xff]
    %v3810 = vld [vmem:[%s557 + $0x40] sm:$0xff]
    %v3811 = vld [vmem:[%s557 + $0x48] sm:$0xff]
    %v3812 = vld [vmem:[%s557 + $0x50] sm:$0xff]
    %v3813 = vld [vmem:[%s557 + $0x58] sm:$0xff]
    %v3814 = vld [vmem:[%s557 + $0x60] sm:$0xff]
    %v3815 = vld [vmem:[%s557 + $0x68] sm:$0xff]
    %v3816 = vld [vmem:[%s557 + $0x70] sm:$0xff]
    %v3817 = vld [vmem:[%s557 + $0x78] sm:$0xff]
    %s3818 = scalar_lea.vmem [#allocation5], 288
    %v3819 = vld [vmem:[%s3818] sm:$0xf]
    %v3820 = vld [vmem:[%s3818 + $0x4] sm:$0xf]
    %v3821 = vld [vmem:[%s3818 + $0x8] sm:$0xf]
    %v3822 = vld [vmem:[%s3818 + $0xc] sm:$0xf]
    %v3823 = vld [vmem:[%s3818 + $0x10] sm:$0xf]
    %v3824 = vld [vmem:[%s3818 + $0x14] sm:$0xf]
    %v3825 = vld [vmem:[%s3818 + $0x18] sm:$0xf]
    %v3826 = vld [vmem:[%s3818 + $0x1c] sm:$0xf]
    %v3827 = vld [vmem:[%s3818 + $0x20] sm:$0xf]
    %v3828 = vld [vmem:[%s3818 + $0x24] sm:$0xf]
    %v3829 = vld [vmem:[%s3818 + $0x28] sm:$0xf]
    %v3830 = vld [vmem:[%s3818 + $0x2c] sm:$0xf]
    %v3831 = vld [vmem:[%s3818 + $0x30] sm:$0xf]
    %v3832 = vld [vmem:[%s3818 + $0x34] sm:$0xf]
    %v3833 = vld [vmem:[%s3818 + $0x38] sm:$0xf]
    %v3834 = vld [vmem:[%s3818 + $0x3c] sm:$0xf]
    %v3835 = vld [vmem:[%s3818 + $0x40] sm:$0xf]
    %v3836 = vld [vmem:[%s3818 + $0x44] sm:$0xf]
    %v3837 = vld [vmem:[%s3818 + $0x48] sm:$0xf]
    %v3838 = vld [vmem:[%s3818 + $0x4c] sm:$0xf]
    %v3839 = vld [vmem:[%s3818 + $0x50] sm:$0xf]
    %v3840 = vld [vmem:[%s3818 + $0x54] sm:$0xf]
    %v3841 = vld [vmem:[%s3818 + $0x58] sm:$0xf]
    %v3842 = vld [vmem:[%s3818 + $0x5c] sm:$0xf]
    %v3867 = vunpack.c.l.b16 %v3819
    %v3868 = vunpack.c.l.b16 %v3820
    %v3869 = vunpack.c.l.b16 %v3821
    %v3870 = vunpack.c.l.b16 %v3822
    %v3871 = vunpack.c.l.b16 %v3823
    %v3872 = vunpack.c.l.b16 %v3824
    %v3873 = vunpack.c.l.b16 %v3825
    %v3874 = vunpack.c.l.b16 %v3826
    %v3875 = vunpack.c.l.b16 %v3827
    %v3876 = vunpack.c.l.b16 %v3828
    %v3877 = vunpack.c.l.b16 %v3829
    %v3878 = vunpack.c.l.b16 %v3830
    %v3879 = vunpack.c.l.b16 %v3831
    %v3880 = vunpack.c.l.b16 %v3832
    %v3881 = vunpack.c.l.b16 %v3833
    %v3882 = vunpack.c.l.b16 %v3834
    %v3883 = vunpack.c.l.b16 %v3835
    %v3884 = vunpack.c.l.b16 %v3836
    %v3885 = vunpack.c.l.b16 %v3837
    %v3886 = vunpack.c.l.b16 %v3838
    %v3887 = vunpack.c.l.b16 %v3839
    %v3888 = vunpack.c.l.b16 %v3840
    %v3889 = vunpack.c.l.b16 %v3841
    %v3890 = vunpack.c.l.b16 %v3842
    %v3891 = vpack.c.b16 %v3868, %v3867
    %v3892 = vpack.c.b16 %v3870, %v3869
    %v3893 = vpack.c.b16 %v3872, %v3871
    %v3894 = vpack.c.b16 %v3874, %v3873
    %v3895 = vpack.c.b16 %v3876, %v3875
    %v3896 = vpack.c.b16 %v3878, %v3877
    %v3897 = vpack.c.b16 %v3880, %v3879
    %v3898 = vpack.c.b16 %v3882, %v3881
    %v3899 = vpack.c.b16 %v3884, %v3883
    %v3900 = vpack.c.b16 %v3886, %v3885
    %v3901 = vpack.c.b16 %v3888, %v3887
    %v3902 = vpack.c.b16 %v3890, %v3889
    %v3916 = vsel %vm532, %v3803, 0
    %v3919 = vsel %vm532, %v3805, 0
    %v3922 = vsel %vm532, %v3807, 0
    %v3925 = vsel %vm532, %v3809, 0
    %v3928 = vsel %vm532, %v3811, 0
    %v3931 = vsel %vm532, %v3813, 0
    %v3934 = vsel %vm532, %v3815, 0
    %v3937 = vsel %vm532, %v3817, 0
    %3939 = vmatprep.subr.bf16.mxu0 0
    %3940 = vmatpush1.bf16.msra.mxu0 %v3891
    %3941 = vmatprep.subr.bf16.mxu0 0
    %3942 = vmatpush1.bf16.msra.mxu0 %v3892
    %3943 = vmatprep.subr.bf16.mxu0 0
    %3944 = vmatpush1.bf16.msra.mxu0 %v3893
    %3945 = vmatprep.subr.bf16.mxu0 0
    %3946 = vmatpush1.bf16.msra.mxu0 %v3894
    %3947 = vmatprep.subr.bf16.mxu0 0
    %3948 = vmatpush1.bf16.msra.mxu0 %v3895
    %3949 = vmatprep.subr.bf16.mxu0 0
    %3950 = vmatpush1.bf16.msra.mxu0 %v3896
    %3951 = vmatprep.subr.bf16.mxu0 0
    %3952 = vmatpush1.bf16.msra.mxu0 %v3897
    %3953 = vmatprep.subr.bf16.mxu0 0
    %3954 = vmatpush1.bf16.msra.mxu0 %v3898
    %3955 = vmatprep.subr.bf16.mxu0 0
    %3956 = vmatpush1.bf16.msra.mxu0 %v3899
    %3957 = vmatprep.subr.bf16.mxu0 0
    %3958 = vmatpush1.bf16.msra.mxu0 %v3900
    %3959 = vmatprep.subr.bf16.mxu0 0
    %3960 = vmatpush1.bf16.msra.mxu0 %v3901
    %3961 = vmatprep.subr.bf16.mxu0 0
    %3962 = vmatpush1.bf16.msra.mxu0 %v3902
    %3963 = vmatprep.subr.bf16.mxu0 0
    %3964 = vmatpush1.bf16.msra.mxu0 0
    %3965 = vmatprep.subr.bf16.mxu0 0
    %3966 = vmatpush1.bf16.msra.mxu0 0
    %3967 = vmatprep.subr.bf16.mxu0 0
    %3968 = vmatpush1.bf16.msra.mxu0 0
    %3969 = vmatprep.subr.bf16.mxu0 0
    %3970 = vmatpush1.bf16.msra.mxu0 0
    %3971 = vmatprep.mubr.bf16.mxu0 %v3916
    %3972 = vmatmul.mubr.bf16.gmra.mrb[0].mxu0 %v3802
    %v3973 = vpop.f32.mrb[0].mxu0
    %v3974 = vadd.f32 0.0, %v3973
    %v3975 = vpop.f32.mrb[0].mxu0
    %v3976 = vpop.f32.mrb[0].mxu0
    %v3977 = vadd.f32 0.0, %v3976
    %v3978 = vpop.f32.mrb[0].mxu0
    %3979 = vmatprep.mubr.bf16.mxu0 %v3919
    %3980 = vmatmul.mubr.bf16.gmra.mrb[0].mxu0 %v3804
    %v3981 = vpop.f32.mrb[0].mxu0
    %v3982 = vadd.f32 0.0, %v3981
    %v3983 = vpop.f32.mrb[0].mxu0
    %v3984 = vpop.f32.mrb[0].mxu0
    %v3985 = vadd.f32 0.0, %v3984
    %v3986 = vpop.f32.mrb[0].mxu0
    %3987 = vmatprep.mubr.bf16.mxu0 %v3922
    %3988 = vmatmul.mubr.bf16.gmra.mrb[0].mxu0 %v3806
    %v3989 = vpop.f32.mrb[0].mxu0
    %v3990 = vadd.f32 0.0, %v3989
    %v3991 = vpop.f32.mrb[0].mxu0
    %v3992 = vpop.f32.mrb[0].mxu0
    %v3993 = vadd.f32 0.0, %v3992
    %v3994 = vpop.f32.mrb[0].mxu0
    %3995 = vmatprep.mubr.bf16.mxu0 %v3925
    %3996 = vmatmul.mubr.bf16.gmra.mrb[0].mxu0 %v3808
    %v3997 = vpop.f32.mrb[0].mxu0
    %v3998 = vadd.f32 0.0, %v3997
    %v3999 = vpop.f32.mrb[0].mxu0
    %v4000 = vpop.f32.mrb[0].mxu0
    %v4001 = vadd.f32 0.0, %v4000
    %v4002 = vpop.f32.mrb[0].mxu0
    %4003 = vmatprep.mubr.bf16.mxu0 %v3928
    %4004 = vmatmul.mubr.bf16.gmra.mrb[0].mxu0 %v3810
    %v4005 = vpop.f32.mrb[0].mxu0
    %v4006 = vadd.f32 0.0, %v4005
    %v4007 = vpop.f32.mrb[0].mxu0
    %v4008 = vpop.f32.mrb[0].mxu0
    %v4009 = vadd.f32 0.0, %v4008
    %v4010 = vpop.f32.mrb[0].mxu0
    %4011 = vmatprep.mubr.bf16.mxu0 %v3931
    %4012 = vmatmul.mubr.bf16.gmra.mrb[0].mxu0 %v3812
    %v4013 = vpop.f32.mrb[0].mxu0
    %v4014 = vadd.f32 0.0, %v4013
    %v4015 = vpop.f32.mrb[0].mxu0
    %v4016 = vpop.f32.mrb[0].mxu0
    %v4017 = vadd.f32 0.0, %v4016
    %v4018 = vpop.f32.mrb[0].mxu0
    %4019 = vmatprep.mubr.bf16.mxu0 %v3934
    %4020 = vmatmul.mubr.bf16.gmra.mrb[0].mxu0 %v3814
    %v4021 = vpop.f32.mrb[0].mxu0
    %v4022 = vadd.f32 0.0, %v4021
    %v4023 = vpop.f32.mrb[0].mxu0
    %v4024 = vpop.f32.mrb[0].mxu0
    %v4025 = vadd.f32 0.0, %v4024
    %v4026 = vpop.f32.mrb[0].mxu0
    %4027 = vmatprep.mubr.bf16.mxu0 %v3937
    %4028 = vmatmul.mubr.bf16.gmra.mrb[0].mxu0 %v3816
    %v4029 = vpop.f32.mrb[0].mxu0
    %v4030 = vadd.f32 0.0, %v4029
    %v4031 = vpop.f32.mrb[0].mxu0
    %v4032 = vpop.f32.mrb[0].mxu0
    %v4033 = vadd.f32 0.0, %v4032
    %v4034 = vpop.f32.mrb[0].mxu0
    %4035 = vdwg.mxu0
    %s4036 = scalar_lea.vmem [#allocation11], 384
    %4037 = vst [vmem:[%s4036] sm:$0xff] %v3974
    %4038 = vst [vmem:[%s4036 + $0x8] sm:$0xff] %v3977
    %4039 = vst [vmem:[%s4036 + $0x10] sm:$0xff] %v3982
    %4040 = vst [vmem:[%s4036 + $0x18] sm:$0xff] %v3985
    %4041 = vst [vmem:[%s4036 + $0x20] sm:$0xff] %v3990
    %4042 = vst [vmem:[%s4036 + $0x28] sm:$0xff] %v3993
    %4043 = vst [vmem:[%s4036 + $0x30] sm:$0xff] %v3998
    %4044 = vst [vmem:[%s4036 + $0x38] sm:$0xff] %v4001
    %4045 = vst [vmem:[%s4036 + $0x40] sm:$0xff] %v4006
    %4046 = vst [vmem:[%s4036 + $0x48] sm:$0xff] %v4009
    %4047 = vst [vmem:[%s4036 + $0x50] sm:$0xff] %v4014
    %4048 = vst [vmem:[%s4036 + $0x58] sm:$0xff] %v4017
    %4049 = vst [vmem:[%s4036 + $0x60] sm:$0xff] %v4022
    %4050 = vst [vmem:[%s4036 + $0x68] sm:$0xff] %v4025
    %4051 = vst [vmem:[%s4036 + $0x70] sm:$0xff] %v4030
    %4052 = vst [vmem:[%s4036 + $0x78] sm:$0xff] %v4033
    %v4053 = vld [vmem:[#allocation3] sm:$0xff]
    %v4054 = vld [vmem:[#allocation3 + $0x8] sm:$0xff]
    %v4055 = vld [vmem:[#allocation3 + $0x10] sm:$0xff]
    %v4056 = vld [vmem:[#allocation3 + $0x18] sm:$0xff]
    %v4057 = vld [vmem:[#allocation3 + $0x20] sm:$0xff]
    %v4058 = vld [vmem:[#allocation3 + $0x28] sm:$0xff]
    %v4059 = vld [vmem:[#allocation3 + $0x30] sm:$0xff]
    %v4060 = vld [vmem:[#allocation3 + $0x38] sm:$0xff]
    %v4061 = vld [vmem:[#allocation3 + $0x40] sm:$0xff]
    %v4062 = vld [vmem:[#allocation3 + $0x48] sm:$0xff]
    %v4063 = vld [vmem:[#allocation3 + $0x50] sm:$0xff]
    %v4064 = vld [vmem:[#allocation3 + $0x58] sm:$0xff]
    %v4065 = vld [vmem:[#allocation3 + $0x60] sm:$0xff]
    %v4066 = vld [vmem:[#allocation3 + $0x68] sm:$0xff]
    %v4067 = vld [vmem:[#allocation3 + $0x70] sm:$0xff]
    %v4068 = vld [vmem:[#allocation3 + $0x78] sm:$0xff]
    %vm4069 = vcmp.gt.f32.partialorder %v3974, %v4053
    %vm4070 = vcmp.gt.f32.partialorder %v3977, %v4054
    %vm4071 = vcmp.gt.f32.partialorder %v3982, %v4055
    %vm4072 = vcmp.gt.f32.partialorder %v3985, %v4056
    %vm4073 = vcmp.gt.f32.partialorder %v3990, %v4057
    %vm4074 = vcmp.gt.f32.partialorder %v3993, %v4058
    %vm4075 = vcmp.gt.f32.partialorder %v3998, %v4059
    %vm4076 = vcmp.gt.f32.partialorder %v4001, %v4060
    %vm4077 = vcmp.gt.f32.partialorder %v4006, %v4061
    %vm4078 = vcmp.gt.f32.partialorder %v4009, %v4062
    %vm4079 = vcmp.gt.f32.partialorder %v4014, %v4063
    %vm4080 = vcmp.gt.f32.partialorder %v4017, %v4064
    %vm4081 = vcmp.gt.f32.partialorder %v4022, %v4065
    %vm4082 = vcmp.gt.f32.partialorder %v4025, %v4066
    %vm4083 = vcmp.gt.f32.partialorder %v4030, %v4067
    %vm4084 = vcmp.gt.f32.partialorder %v4033, %v4068
    %v4085 = vsel %vm4069, %v3974, %v4053
    %v4086 = vsel %vm4070, %v3977, %v4054
    %v4087 = vsel %vm4071, %v3982, %v4055
    %v4088 = vsel %vm4072, %v3985, %v4056
    %v4089 = vsel %vm4073, %v3990, %v4057
    %v4090 = vsel %vm4074, %v3993, %v4058
    %v4091 = vsel %vm4075, %v3998, %v4059
    %v4092 = vsel %vm4076, %v4001, %v4060
    %v4093 = vsel %vm4077, %v4006, %v4061
    %v4094 = vsel %vm4078, %v4009, %v4062
    %v4095 = vsel %vm4079, %v4014, %v4063
    %v4096 = vsel %vm4080, %v4017, %v4064
    %v4097 = vsel %vm4081, %v4022, %v4065
    %v4098 = vsel %vm4082, %v4025, %v4066
    %v4099 = vsel %vm4083, %v4030, %v4067
    %v4100 = vsel %vm4084, %v4033, %v4068
    %4101 = vst [vmem:[#allocation3] sm:$0xff] %v4085
    %4102 = vst [vmem:[#allocation3 + $0x8] sm:$0xff] %v4086
    %4103 = vst [vmem:[#allocation3 + $0x10] sm:$0xff] %v4087
    %4104 = vst [vmem:[#allocation3 + $0x18] sm:$0xff] %v4088
    %4105 = vst [vmem:[#allocation3 + $0x20] sm:$0xff] %v4089
    %4106 = vst [vmem:[#allocation3 + $0x28] sm:$0xff] %v4090
    %4107 = vst [vmem:[#allocation3 + $0x30] sm:$0xff] %v4091
    %4108 = vst [vmem:[#allocation3 + $0x38] sm:$0xff] %v4092
    %4109 = vst [vmem:[#allocation3 + $0x40] sm:$0xff] %v4093
    %4110 = vst [vmem:[#allocation3 + $0x48] sm:$0xff] %v4094
    %4111 = vst [vmem:[#allocation3 + $0x50] sm:$0xff] %v4095
    %4112 = vst [vmem:[#allocation3 + $0x58] sm:$0xff] %v4096
    %4113 = vst [vmem:[#allocation3 + $0x60] sm:$0xff] %v4097
    %4114 = vst [vmem:[#allocation3 + $0x68] sm:$0xff] %v4098
    %4115 = vst [vmem:[#allocation3 + $0x70] sm:$0xff] %v4099
    %4116 = vst [vmem:[#allocation3 + $0x78] sm:$0xff] %v4100
    %v4117 = vld [vmem:[#allocation4] sm:$0xff]
    %v4118 = vld [vmem:[#allocation4 + $0x8] sm:$0xff]
    %v4119 = vld [vmem:[#allocation4 + $0x10] sm:$0xff]
    %v4120 = vld [vmem:[#allocation4 + $0x18] sm:$0xff]
    %v4121 = vld [vmem:[#allocation4 + $0x20] sm:$0xff]
    %v4122 = vld [vmem:[#allocation4 + $0x28] sm:$0xff]
    %v4123 = vld [vmem:[#allocation4 + $0x30] sm:$0xff]
    %v4124 = vld [vmem:[#allocation4 + $0x38] sm:$0xff]
    %v4125 = vld [vmem:[#allocation4 + $0x40] sm:$0xff]
    %v4126 = vld [vmem:[#allocation4 + $0x48] sm:$0xff]
    %v4127 = vld [vmem:[#allocation4 + $0x50] sm:$0xff]
    %v4128 = vld [vmem:[#allocation4 + $0x58] sm:$0xff]
    %v4129 = vld [vmem:[#allocation4 + $0x60] sm:$0xff]
    %v4130 = vld [vmem:[#allocation4 + $0x68] sm:$0xff]
    %v4131 = vld [vmem:[#allocation4 + $0x70] sm:$0xff]
    %v4132 = vld [vmem:[#allocation4 + $0x78] sm:$0xff]
    %v4133 = vsel %vm4069, 3, %v4117
    %v4134 = vsel %vm4070, 3, %v4118
    %v4135 = vsel %vm4071, 3, %v4119
    %v4136 = vsel %vm4072, 3, %v4120
    %v4137 = vsel %vm4073, 3, %v4121
    %v4138 = vsel %vm4074, 3, %v4122
    %v4139 = vsel %vm4075, 3, %v4123
    %v4140 = vsel %vm4076, 3, %v4124
    %v4141 = vsel %vm4077, 3, %v4125
    %v4142 = vsel %vm4078, 3, %v4126
    %v4143 = vsel %vm4079, 3, %v4127
    %v4144 = vsel %vm4080, 3, %v4128
    %v4145 = vsel %vm4081, 3, %v4129
    %v4146 = vsel %vm4082, 3, %v4130
    %v4147 = vsel %vm4083, 3, %v4131
    %v4148 = vsel %vm4084, 3, %v4132
    %4149 = vst [vmem:[#allocation4] sm:$0xff] %v4133
    %4150 = vst [vmem:[#allocation4 + $0x8] sm:$0xff] %v4134
    %4151 = vst [vmem:[#allocation4 + $0x10] sm:$0xff] %v4135
    %4152 = vst [vmem:[#allocation4 + $0x18] sm:$0xff] %v4136
    %4153 = vst [vmem:[#allocation4 + $0x20] sm:$0xff] %v4137
    %4154 = vst [vmem:[#allocation4 + $0x28] sm:$0xff] %v4138
    %4155 = vst [vmem:[#allocation4 + $0x30] sm:$0xff] %v4139
    %4156 = vst [vmem:[#allocation4 + $0x38] sm:$0xff] %v4140
    %4157 = vst [vmem:[#allocation4 + $0x40] sm:$0xff] %v4141
    %4158 = vst [vmem:[#allocation4 + $0x48] sm:$0xff] %v4142
    %4159 = vst [vmem:[#allocation4 + $0x50] sm:$0xff] %v4143
    %4160 = vst [vmem:[#allocation4 + $0x58] sm:$0xff] %v4144
    %4161 = vst [vmem:[#allocation4 + $0x60] sm:$0xff] %v4145
    %4162 = vst [vmem:[#allocation4 + $0x68] sm:$0xff] %v4146
    %4163 = vst [vmem:[#allocation4 + $0x70] sm:$0xff] %v4147
    %4164 = vst [vmem:[#allocation4 + $0x78] sm:$0xff] %v4148
    %v4165 = vld [vmem:[%s565] sm:$0xff]
    %v4166 = vld [vmem:[%s565 + $0x8] sm:$0xff]
    %v4167 = vld [vmem:[%s565 + $0x10] sm:$0xff]
    %v4168 = vld [vmem:[%s565 + $0x18] sm:$0xff]
    %v4169 = vld [vmem:[%s565 + $0x20] sm:$0xff]
    %v4170 = vld [vmem:[%s565 + $0x28] sm:$0xff]
    %v4171 = vld [vmem:[%s565 + $0x30] sm:$0xff]
    %v4172 = vld [vmem:[%s565 + $0x38] sm:$0xff]
    %v4173 = vld [vmem:[%s565 + $0x40] sm:$0xff]
    %v4174 = vld [vmem:[%s565 + $0x48] sm:$0xff]
    %v4175 = vld [vmem:[%s565 + $0x50] sm:$0xff]
    %v4176 = vld [vmem:[%s565 + $0x58] sm:$0xff]
    %v4177 = vld [vmem:[%s565 + $0x60] sm:$0xff]
    %v4178 = vld [vmem:[%s565 + $0x68] sm:$0xff]
    %v4179 = vld [vmem:[%s565 + $0x70] sm:$0xff]
    %v4180 = vld [vmem:[%s565 + $0x78] sm:$0xff]
    %s4181 = scalar_lea.vmem [#allocation5], 384
    %v4182 = vld [vmem:[%s4181] sm:$0xf]
    %v4183 = vld [vmem:[%s4181 + $0x4] sm:$0xf]
    %v4184 = vld [vmem:[%s4181 + $0x8] sm:$0xf]
    %v4185 = vld [vmem:[%s4181 + $0xc] sm:$0xf]
    %v4186 = vld [vmem:[%s4181 + $0x10] sm:$0xf]
    %v4187 = vld [vmem:[%s4181 + $0x14] sm:$0xf]
    %v4188 = vld [vmem:[%s4181 + $0x18] sm:$0xf]
    %v4189 = vld [vmem:[%s4181 + $0x1c] sm:$0xf]
    %v4190 = vld [vmem:[%s4181 + $0x20] sm:$0xf]
    %v4191 = vld [vmem:[%s4181 + $0x24] sm:$0xf]
    %v4192 = vld [vmem:[%s4181 + $0x28] sm:$0xf]
    %v4193 = vld [vmem:[%s4181 + $0x2c] sm:$0xf]
    %v4194 = vld [vmem:[%s4181 + $0x30] sm:$0xf]
    %v4195 = vld [vmem:[%s4181 + $0x34] sm:$0xf]
    %v4196 = vld [vmem:[%s4181 + $0x38] sm:$0xf]
    %v4197 = vld [vmem:[%s4181 + $0x3c] sm:$0xf]
    %v4198 = vld [vmem:[%s4181 + $0x40] sm:$0xf]
    %v4199 = vld [vmem:[%s4181 + $0x44] sm:$0xf]
    %v4200 = vld [vmem:[%s4181 + $0x48] sm:$0xf]
    %v4201 = vld [vmem:[%s4181 + $0x4c] sm:$0xf]
    %v4202 = vld [vmem:[%s4181 + $0x50] sm:$0xf]
    %v4203 = vld [vmem:[%s4181 + $0x54] sm:$0xf]
    %v4204 = vld [vmem:[%s4181 + $0x58] sm:$0xf]
    %v4205 = vld [vmem:[%s4181 + $0x5c] sm:$0xf]
    %v4230 = vunpack.c.l.b16 %v4182
    %v4231 = vunpack.c.l.b16 %v4183
    %v4232 = vunpack.c.l.b16 %v4184
    %v4233 = vunpack.c.l.b16 %v4185
    %v4234 = vunpack.c.l.b16 %v4186
    %v4235 = vunpack.c.l.b16 %v4187
    %v4236 = vunpack.c.l.b16 %v4188
    %v4237 = vunpack.c.l.b16 %v4189
    %v4238 = vunpack.c.l.b16 %v4190
    %v4239 = vunpack.c.l.b16 %v4191
    %v4240 = vunpack.c.l.b16 %v4192
    %v4241 = vunpack.c.l.b16 %v4193
    %v4242 = vunpack.c.l.b16 %v4194
    %v4243 = vunpack.c.l.b16 %v4195
    %v4244 = vunpack.c.l.b16 %v4196
    %v4245 = vunpack.c.l.b16 %v4197
    %v4246 = vunpack.c.l.b16 %v4198
    %v4247 = vunpack.c.l.b16 %v4199
    %v4248 = vunpack.c.l.b16 %v4200
    %v4249 = vunpack.c.l.b16 %v4201
    %v4250 = vunpack.c.l.b16 %v4202
    %v4251 = vunpack.c.l.b16 %v4203
    %v4252 = vunpack.c.l.b16 %v4204
    %v4253 = vunpack.c.l.b16 %v4205
    %v4254 = vpack.c.b16 %v4231, %v4230
    %v4255 = vpack.c.b16 %v4233, %v4232
    %v4256 = vpack.c.b16 %v4235, %v4234
    %v4257 = vpack.c.b16 %v4237, %v4236
    %v4258 = vpack.c.b16 %v4239, %v4238
    %v4259 = vpack.c.b16 %v4241, %v4240
    %v4260 = vpack.c.b16 %v4243, %v4242
    %v4261 = vpack.c.b16 %v4245, %v4244
    %v4262 = vpack.c.b16 %v4247, %v4246
    %v4263 = vpack.c.b16 %v4249, %v4248
    %v4264 = vpack.c.b16 %v4251, %v4250
    %v4265 = vpack.c.b16 %v4253, %v4252
    %v4279 = vsel %vm532, %v4166, 0
    %v4282 = vsel %vm532, %v4168, 0
    %v4285 = vsel %vm532, %v4170, 0
    %v4288 = vsel %vm532, %v4172, 0
    %v4291 = vsel %vm532, %v4174, 0
    %v4294 = vsel %vm532, %v4176, 0
    %v4297 = vsel %vm532, %v4178, 0
    %v4300 = vsel %vm532, %v4180, 0
    %4302 = vmatprep.subr.bf16.mxu0 0
    %4303 = vmatpush1.bf16.msra.mxu0 %v4254
    %4304 = vmatprep.subr.bf16.mxu0 0
    %4305 = vmatpush1.bf16.msra.mxu0 %v4255
    %4306 = vmatprep.subr.bf16.mxu0 0
    %4307 = vmatpush1.bf16.msra.mxu0 %v4256
    %4308 = vmatprep.subr.bf16.mxu0 0
    %4309 = vmatpush1.bf16.msra.mxu0 %v4257
    %4310 = vmatprep.subr.bf16.mxu0 0
    %4311 = vmatpush1.bf16.msra.mxu0 %v4258
    %4312 = vmatprep.subr.bf16.mxu0 0
    %4313 = vmatpush1.bf16.msra.mxu0 %v4259
    %4314 = vmatprep.subr.bf16.mxu0 0
    %4315 = vmatpush1.bf16.msra.mxu0 %v4260
    %4316 = vmatprep.subr.bf16.mxu0 0
    %4317 = vmatpush1.bf16.msra.mxu0 %v4261
    %4318 = vmatprep.subr.bf16.mxu0 0
    %4319 = vmatpush1.bf16.msra.mxu0 %v4262
    %4320 = vmatprep.subr.bf16.mxu0 0
    %4321 = vmatpush1.bf16.msra.mxu0 %v4263
    %4322 = vmatprep.subr.bf16.mxu0 0
    %4323 = vmatpush1.bf16.msra.mxu0 %v4264
    %4324 = vmatprep.subr.bf16.mxu0 0
    %4325 = vmatpush1.bf16.msra.mxu0 %v4265
    %4326 = vmatprep.subr.bf16.mxu0 0
    %4327 = vmatpush1.bf16.msra.mxu0 0
    %4328 = vmatprep.subr.bf16.mxu0 0
    %4329 = vmatpush1.bf16.msra.mxu0 0
    %4330 = vmatprep.subr.bf16.mxu0 0
    %4331 = vmatpush1.bf16.msra.mxu0 0
    %4332 = vmatprep.subr.bf16.mxu0 0
    %4333 = vmatpush1.bf16.msra.mxu0 0
    %4334 = vmatprep.mubr.bf16.mxu0 %v4279
    %4335 = vmatmul.mubr.bf16.gmra.mrb[0].mxu0 %v4165
    %v4336 = vpop.f32.mrb[0].mxu0
    %v4337 = vadd.f32 0.0, %v4336
    %v4338 = vpop.f32.mrb[0].mxu0
    %v4339 = vpop.f32.mrb[0].mxu0
    %v4340 = vadd.f32 0.0, %v4339
    %v4341 = vpop.f32.mrb[0].mxu0
    %4342 = vmatprep.mubr.bf16.mxu0 %v4282
    %4343 = vmatmul.mubr.bf16.gmra.mrb[0].mxu0 %v4167
    %v4344 = vpop.f32.mrb[0].mxu0
    %v4345 = vadd.f32 0.0, %v4344
    %v4346 = vpop.f32.mrb[0].mxu0
    %v4347 = vpop.f32.mrb[0].mxu0
    %v4348 = vadd.f32 0.0, %v4347
    %v4349 = vpop.f32.mrb[0].mxu0
    %4350 = vmatprep.mubr.bf16.mxu0 %v4285
    %4351 = vmatmul.mubr.bf16.gmra.mrb[0].mxu0 %v4169
    %v4352 = vpop.f32.mrb[0].mxu0
    %v4353 = vadd.f32 0.0, %v4352
    %v4354 = vpop.f32.mrb[0].mxu0
    %v4355 = vpop.f32.mrb[0].mxu0
    %v4356 = vadd.f32 0.0, %v4355
    %v4357 = vpop.f32.mrb[0].mxu0
    %4358 = vmatprep.mubr.bf16.mxu0 %v4288
    %4359 = vmatmul.mubr.bf16.gmra.mrb[0].mxu0 %v4171
    %v4360 = vpop.f32.mrb[0].mxu0
    %v4361 = vadd.f32 0.0, %v4360
    %v4362 = vpop.f32.mrb[0].mxu0
    %v4363 = vpop.f32.mrb[0].mxu0
    %v4364 = vadd.f32 0.0, %v4363
    %v4365 = vpop.f32.mrb[0].mxu0
    %4366 = vmatprep.mubr.bf16.mxu0 %v4291
    %4367 = vmatmul.mubr.bf16.gmra.mrb[0].mxu0 %v4173
    %v4368 = vpop.f32.mrb[0].mxu0
    %v4369 = vadd.f32 0.0, %v4368
    %v4370 = vpop.f32.mrb[0].mxu0
    %v4371 = vpop.f32.mrb[0].mxu0
    %v4372 = vadd.f32 0.0, %v4371
    %v4373 = vpop.f32.mrb[0].mxu0
    %4374 = vmatprep.mubr.bf16.mxu0 %v4294
    %4375 = vmatmul.mubr.bf16.gmra.mrb[0].mxu0 %v4175
    %v4376 = vpop.f32.mrb[0].mxu0
    %v4377 = vadd.f32 0.0, %v4376
    %v4378 = vpop.f32.mrb[0].mxu0
    %v4379 = vpop.f32.mrb[0].mxu0
    %v4380 = vadd.f32 0.0, %v4379
    %v4381 = vpop.f32.mrb[0].mxu0
    %4382 = vmatprep.mubr.bf16.mxu0 %v4297
    %4383 = vmatmul.mubr.bf16.gmra.mrb[0].mxu0 %v4177
    %v4384 = vpop.f32.mrb[0].mxu0
    %v4385 = vadd.f32 0.0, %v4384
    %v4386 = vpop.f32.mrb[0].mxu0
    %v4387 = vpop.f32.mrb[0].mxu0
    %v4388 = vadd.f32 0.0, %v4387
    %v4389 = vpop.f32.mrb[0].mxu0
    %4390 = vmatprep.mubr.bf16.mxu0 %v4300
    %4391 = vmatmul.mubr.bf16.gmra.mrb[0].mxu0 %v4179
    %v4392 = vpop.f32.mrb[0].mxu0
    %v4393 = vadd.f32 0.0, %v4392
    %v4394 = vpop.f32.mrb[0].mxu0
    %v4395 = vpop.f32.mrb[0].mxu0
    %v4396 = vadd.f32 0.0, %v4395
    %v4397 = vpop.f32.mrb[0].mxu0
    %4398 = vdwg.mxu0
    %s4399 = scalar_lea.vmem [#allocation11], 512
    %4400 = vst [vmem:[%s4399] sm:$0xff] %v4337
    %4401 = vst [vmem:[%s4399 + $0x8] sm:$0xff] %v4340
    %4402 = vst [vmem:[%s4399 + $0x10] sm:$0xff] %v4345
    %4403 = vst [vmem:[%s4399 + $0x18] sm:$0xff] %v4348
    %4404 = vst [vmem:[%s4399 + $0x20] sm:$0xff] %v4353
    %4405 = vst [vmem:[%s4399 + $0x28] sm:$0xff] %v4356
    %4406 = vst [vmem:[%s4399 + $0x30] sm:$0xff] %v4361
    %4407 = vst [vmem:[%s4399 + $0x38] sm:$0xff] %v4364
    %4408 = vst [vmem:[%s4399 + $0x40] sm:$0xff] %v4369
    %4409 = vst [vmem:[%s4399 + $0x48] sm:$0xff] %v4372
    %4410 = vst [vmem:[%s4399 + $0x50] sm:$0xff] %v4377
    %4411 = vst [vmem:[%s4399 + $0x58] sm:$0xff] %v4380
    %4412 = vst [vmem:[%s4399 + $0x60] sm:$0xff] %v4385
    %4413 = vst [vmem:[%s4399 + $0x68] sm:$0xff] %v4388
    %4414 = vst [vmem:[%s4399 + $0x70] sm:$0xff] %v4393
    %4415 = vst [vmem:[%s4399 + $0x78] sm:$0xff] %v4396
    %v4416 = vld [vmem:[#allocation3] sm:$0xff]
    %v4417 = vld [vmem:[#allocation3 + $0x8] sm:$0xff]
    %v4418 = vld [vmem:[#allocation3 + $0x10] sm:$0xff]
    %v4419 = vld [vmem:[#allocation3 + $0x18] sm:$0xff]
    %v4420 = vld [vmem:[#allocation3 + $0x20] sm:$0xff]
    %v4421 = vld [vmem:[#allocation3 + $0x28] sm:$0xff]
    %v4422 = vld [vmem:[#allocation3 + $0x30] sm:$0xff]
    %v4423 = vld [vmem:[#allocation3 + $0x38] sm:$0xff]
    %v4424 = vld [vmem:[#allocation3 + $0x40] sm:$0xff]
    %v4425 = vld [vmem:[#allocation3 + $0x48] sm:$0xff]
    %v4426 = vld [vmem:[#allocation3 + $0x50] sm:$0xff]
    %v4427 = vld [vmem:[#allocation3 + $0x58] sm:$0xff]
    %v4428 = vld [vmem:[#allocation3 + $0x60] sm:$0xff]
    %v4429 = vld [vmem:[#allocation3 + $0x68] sm:$0xff]
    %v4430 = vld [vmem:[#allocation3 + $0x70] sm:$0xff]
    %v4431 = vld [vmem:[#allocation3 + $0x78] sm:$0xff]
    %vm4432 = vcmp.gt.f32.partialorder %v4337, %v4416
    %vm4433 = vcmp.gt.f32.partialorder %v4340, %v4417
    %vm4434 = vcmp.gt.f32.partialorder %v4345, %v4418
    %vm4435 = vcmp.gt.f32.partialorder %v4348, %v4419
    %vm4436 = vcmp.gt.f32.partialorder %v4353, %v4420
    %vm4437 = vcmp.gt.f32.partialorder %v4356, %v4421
    %vm4438 = vcmp.gt.f32.partialorder %v4361, %v4422
    %vm4439 = vcmp.gt.f32.partialorder %v4364, %v4423
    %vm4440 = vcmp.gt.f32.partialorder %v4369, %v4424
    %vm4441 = vcmp.gt.f32.partialorder %v4372, %v4425
    %vm4442 = vcmp.gt.f32.partialorder %v4377, %v4426
    %vm4443 = vcmp.gt.f32.partialorder %v4380, %v4427
    %vm4444 = vcmp.gt.f32.partialorder %v4385, %v4428
    %vm4445 = vcmp.gt.f32.partialorder %v4388, %v4429
    %vm4446 = vcmp.gt.f32.partialorder %v4393, %v4430
    %vm4447 = vcmp.gt.f32.partialorder %v4396, %v4431
    %v4448 = vsel %vm4432, %v4337, %v4416
    %v4449 = vsel %vm4433, %v4340, %v4417
    %v4450 = vsel %vm4434, %v4345, %v4418
    %v4451 = vsel %vm4435, %v4348, %v4419
    %v4452 = vsel %vm4436, %v4353, %v4420
    %v4453 = vsel %vm4437, %v4356, %v4421
    %v4454 = vsel %vm4438, %v4361, %v4422
    %v4455 = vsel %vm4439, %v4364, %v4423
    %v4456 = vsel %vm4440, %v4369, %v4424
    %v4457 = vsel %vm4441, %v4372, %v4425
    %v4458 = vsel %vm4442, %v4377, %v4426
    %v4459 = vsel %vm4443, %v4380, %v4427
    %v4460 = vsel %vm4444, %v4385, %v4428
    %v4461 = vsel %vm4445, %v4388, %v4429
    %v4462 = vsel %vm4446, %v4393, %v4430
    %v4463 = vsel %vm4447, %v4396, %v4431
    %4464 = vst [vmem:[#allocation3] sm:$0xff] %v4448
    %4465 = vst [vmem:[#allocation3 + $0x8] sm:$0xff] %v4449
    %4466 = vst [vmem:[#allocation3 + $0x10] sm:$0xff] %v4450
    %4467 = vst [vmem:[#allocation3 + $0x18] sm:$0xff] %v4451
    %4468 = vst [vmem:[#allocation3 + $0x20] sm:$0xff] %v4452
    %4469 = vst [vmem:[#allocation3 + $0x28] sm:$0xff] %v4453
    %4470 = vst [vmem:[#allocation3 + $0x30] sm:$0xff] %v4454
    %4471 = vst [vmem:[#allocation3 + $0x38] sm:$0xff] %v4455
    %4472 = vst [vmem:[#allocation3 + $0x40] sm:$0xff] %v4456
    %4473 = vst [vmem:[#allocation3 + $0x48] sm:$0xff] %v4457
    %4474 = vst [vmem:[#allocation3 + $0x50] sm:$0xff] %v4458
    %4475 = vst [vmem:[#allocation3 + $0x58] sm:$0xff] %v4459
    %4476 = vst [vmem:[#allocation3 + $0x60] sm:$0xff] %v4460
    %4477 = vst [vmem:[#allocation3 + $0x68] sm:$0xff] %v4461
    %4478 = vst [vmem:[#allocation3 + $0x70] sm:$0xff] %v4462
    %4479 = vst [vmem:[#allocation3 + $0x78] sm:$0xff] %v4463
    %v4480 = vld [vmem:[#allocation4] sm:$0xff]
    %v4481 = vld [vmem:[#allocation4 + $0x8] sm:$0xff]
    %v4482 = vld [vmem:[#allocation4 + $0x10] sm:$0xff]
    %v4483 = vld [vmem:[#allocation4 + $0x18] sm:$0xff]
    %v4484 = vld [vmem:[#allocation4 + $0x20] sm:$0xff]
    %v4485 = vld [vmem:[#allocation4 + $0x28] sm:$0xff]
    %v4486 = vld [vmem:[#allocation4 + $0x30] sm:$0xff]
    %v4487 = vld [vmem:[#allocation4 + $0x38] sm:$0xff]
    %v4488 = vld [vmem:[#allocation4 + $0x40] sm:$0xff]
    %v4489 = vld [vmem:[#allocation4 + $0x48] sm:$0xff]
    %v4490 = vld [vmem:[#allocation4 + $0x50] sm:$0xff]
    %v4491 = vld [vmem:[#allocation4 + $0x58] sm:$0xff]
    %v4492 = vld [vmem:[#allocation4 + $0x60] sm:$0xff]
    %v4493 = vld [vmem:[#allocation4 + $0x68] sm:$0xff]
    %v4494 = vld [vmem:[#allocation4 + $0x70] sm:$0xff]
    %v4495 = vld [vmem:[#allocation4 + $0x78] sm:$0xff]
    %v4496 = vsel %vm4432, 4, %v4480
    %v4497 = vsel %vm4433, 4, %v4481
    %v4498 = vsel %vm4434, 4, %v4482
    %v4499 = vsel %vm4435, 4, %v4483
    %v4500 = vsel %vm4436, 4, %v4484
    %v4501 = vsel %vm4437, 4, %v4485
    %v4502 = vsel %vm4438, 4, %v4486
    %v4503 = vsel %vm4439, 4, %v4487
    %v4504 = vsel %vm4440, 4, %v4488
    %v4505 = vsel %vm4441, 4, %v4489
    %v4506 = vsel %vm4442, 4, %v4490
    %v4507 = vsel %vm4443, 4, %v4491
    %v4508 = vsel %vm4444, 4, %v4492
    %v4509 = vsel %vm4445, 4, %v4493
    %v4510 = vsel %vm4446, 4, %v4494
    %v4511 = vsel %vm4447, 4, %v4495
    %4512 = vst [vmem:[#allocation4] sm:$0xff] %v4496
    %4513 = vst [vmem:[#allocation4 + $0x8] sm:$0xff] %v4497
    %4514 = vst [vmem:[#allocation4 + $0x10] sm:$0xff] %v4498
    %4515 = vst [vmem:[#allocation4 + $0x18] sm:$0xff] %v4499
    %4516 = vst [vmem:[#allocation4 + $0x20] sm:$0xff] %v4500
    %4517 = vst [vmem:[#allocation4 + $0x28] sm:$0xff] %v4501
    %4518 = vst [vmem:[#allocation4 + $0x30] sm:$0xff] %v4502
    %4519 = vst [vmem:[#allocation4 + $0x38] sm:$0xff] %v4503
    %4520 = vst [vmem:[#allocation4 + $0x40] sm:$0xff] %v4504
    %4521 = vst [vmem:[#allocation4 + $0x48] sm:$0xff] %v4505
    %4522 = vst [vmem:[#allocation4 + $0x50] sm:$0xff] %v4506
    %4523 = vst [vmem:[#allocation4 + $0x58] sm:$0xff] %v4507
    %4524 = vst [vmem:[#allocation4 + $0x60] sm:$0xff] %v4508
    %4525 = vst [vmem:[#allocation4 + $0x68] sm:$0xff] %v4509
    %4526 = vst [vmem:[#allocation4 + $0x70] sm:$0xff] %v4510
    %4527 = vst [vmem:[#allocation4 + $0x78] sm:$0xff] %v4511
    %v4528 = vld [vmem:[%s573] sm:$0xff]
    %v4529 = vld [vmem:[%s573 + $0x8] sm:$0xff]
    %v4530 = vld [vmem:[%s573 + $0x10] sm:$0xff]
    %v4531 = vld [vmem:[%s573 + $0x18] sm:$0xff]
    %v4532 = vld [vmem:[%s573 + $0x20] sm:$0xff]
    %v4533 = vld [vmem:[%s573 + $0x28] sm:$0xff]
    %v4534 = vld [vmem:[%s573 + $0x30] sm:$0xff]
    %v4535 = vld [vmem:[%s573 + $0x38] sm:$0xff]
    %v4536 = vld [vmem:[%s573 + $0x40] sm:$0xff]
    %v4537 = vld [vmem:[%s573 + $0x48] sm:$0xff]
    %v4538 = vld [vmem:[%s573 + $0x50] sm:$0xff]
    %v4539 = vld [vmem:[%s573 + $0x58] sm:$0xff]
    %v4540 = vld [vmem:[%s573 + $0x60] sm:$0xff]
    %v4541 = vld [vmem:[%s573 + $0x68] sm:$0xff]
    %v4542 = vld [vmem:[%s573 + $0x70] sm:$0xff]
    %v4543 = vld [vmem:[%s573 + $0x78] sm:$0xff]
    %s4544 = scalar_lea.vmem [#allocation5], 480
    %v4545 = vld [vmem:[%s4544] sm:$0xf]
    %v4546 = vld [vmem:[%s4544 + $0x4] sm:$0xf]
    %v4547 = vld [vmem:[%s4544 + $0x8] sm:$0xf]
    %v4548 = vld [vmem:[%s4544 + $0xc] sm:$0xf]
    %v4549 = vld [vmem:[%s4544 + $0x10] sm:$0xf]
    %v4550 = vld [vmem:[%s4544 + $0x14] sm:$0xf]
    %v4551 = vld [vmem:[%s4544 + $0x18] sm:$0xf]
    %v4552 = vld [vmem:[%s4544 + $0x1c] sm:$0xf]
    %v4553 = vld [vmem:[%s4544 + $0x20] sm:$0xf]
    %v4554 = vld [vmem:[%s4544 + $0x24] sm:$0xf]
    %v4555 = vld [vmem:[%s4544 + $0x28] sm:$0xf]
    %v4556 = vld [vmem:[%s4544 + $0x2c] sm:$0xf]
    %v4557 = vld [vmem:[%s4544 + $0x30] sm:$0xf]
    %v4558 = vld [vmem:[%s4544 + $0x34] sm:$0xf]
    %v4559 = vld [vmem:[%s4544 + $0x38] sm:$0xf]
    %v4560 = vld [vmem:[%s4544 + $0x3c] sm:$0xf]
    %v4561 = vld [vmem:[%s4544 + $0x40] sm:$0xf]
    %v4562 = vld [vmem:[%s4544 + $0x44] sm:$0xf]
    %v4563 = vld [vmem:[%s4544 + $0x48] sm:$0xf]
    %v4564 = vld [vmem:[%s4544 + $0x4c] sm:$0xf]
    %v4565 = vld [vmem:[%s4544 + $0x50] sm:$0xf]
    %v4566 = vld [vmem:[%s4544 + $0x54] sm:$0xf]
    %v4567 = vld [vmem:[%s4544 + $0x58] sm:$0xf]
    %v4568 = vld [vmem:[%s4544 + $0x5c] sm:$0xf]
    %v4593 = vunpack.c.l.b16 %v4545
    %v4594 = vunpack.c.l.b16 %v4546
    %v4595 = vunpack.c.l.b16 %v4547
    %v4596 = vunpack.c.l.b16 %v4548
    %v4597 = vunpack.c.l.b16 %v4549
    %v4598 = vunpack.c.l.b16 %v4550
    %v4599 = vunpack.c.l.b16 %v4551
    %v4600 = vunpack.c.l.b16 %v4552
    %v4601 = vunpack.c.l.b16 %v4553
    %v4602 = vunpack.c.l.b16 %v4554
    %v4603 = vunpack.c.l.b16 %v4555
    %v4604 = vunpack.c.l.b16 %v4556
    %v4605 = vunpack.c.l.b16 %v4557
    %v4606 = vunpack.c.l.b16 %v4558
    %v4607 = vunpack.c.l.b16 %v4559
    %v4608 = vunpack.c.l.b16 %v4560
    %v4609 = vunpack.c.l.b16 %v4561
    %v4610 = vunpack.c.l.b16 %v4562
    %v4611 = vunpack.c.l.b16 %v4563
    %v4612 = vunpack.c.l.b16 %v4564
    %v4613 = vunpack.c.l.b16 %v4565
    %v4614 = vunpack.c.l.b16 %v4566
    %v4615 = vunpack.c.l.b16 %v4567
    %v4616 = vunpack.c.l.b16 %v4568
    %v4617 = vpack.c.b16 %v4594, %v4593
    %v4618 = vpack.c.b16 %v4596, %v4595
    %v4619 = vpack.c.b16 %v4598, %v4597
    %v4620 = vpack.c.b16 %v4600, %v4599
    %v4621 = vpack.c.b16 %v4602, %v4601
    %v4622 = vpack.c.b16 %v4604, %v4603
    %v4623 = vpack.c.b16 %v4606, %v4605
    %v4624 = vpack.c.b16 %v4608, %v4607
    %v4625 = vpack.c.b16 %v4610, %v4609
    %v4626 = vpack.c.b16 %v4612, %v4611
    %v4627 = vpack.c.b16 %v4614, %v4613
    %v4628 = vpack.c.b16 %v4616, %v4615
    %v4642 = vsel %vm532, %v4529, 0
    %v4645 = vsel %vm532, %v4531, 0
    %v4648 = vsel %vm532, %v4533, 0
    %v4651 = vsel %vm532, %v4535, 0
    %v4654 = vsel %vm532, %v4537, 0
    %v4657 = vsel %vm532, %v4539, 0
    %v4660 = vsel %vm532, %v4541, 0
    %v4663 = vsel %vm532, %v4543, 0
    %4665 = vmatprep.subr.bf16.mxu0 0
    %4666 = vmatpush1.bf16.msra.mxu0 %v4617
    %4667 = vmatprep.subr.bf16.mxu0 0
    %4668 = vmatpush1.bf16.msra.mxu0 %v4618
    %4669 = vmatprep.subr.bf16.mxu0 0
    %4670 = vmatpush1.bf16.msra.mxu0 %v4619
    %4671 = vmatprep.subr.bf16.mxu0 0
    %4672 = vmatpush1.bf16.msra.mxu0 %v4620
    %4673 = vmatprep.subr.bf16.mxu0 0
    %4674 = vmatpush1.bf16.msra.mxu0 %v4621
    %4675 = vmatprep.subr.bf16.mxu0 0
    %4676 = vmatpush1.bf16.msra.mxu0 %v4622
    %4677 = vmatprep.subr.bf16.mxu0 0
    %4678 = vmatpush1.bf16.msra.mxu0 %v4623
    %4679 = vmatprep.subr.bf16.mxu0 0
    %4680 = vmatpush1.bf16.msra.mxu0 %v4624
    %4681 = vmatprep.subr.bf16.mxu0 0
    %4682 = vmatpush1.bf16.msra.mxu0 %v4625
    %4683 = vmatprep.subr.bf16.mxu0 0
    %4684 = vmatpush1.bf16.msra.mxu0 %v4626
    %4685 = vmatprep.subr.bf16.mxu0 0
    %4686 = vmatpush1.bf16.msra.mxu0 %v4627
    %4687 = vmatprep.subr.bf16.mxu0 0
    %4688 = vmatpush1.bf16.msra.mxu0 %v4628
    %4689 = vmatprep.subr.bf16.mxu0 0
    %4690 = vmatpush1.bf16.msra.mxu0 0
    %4691 = vmatprep.subr.bf16.mxu0 0
    %4692 = vmatpush1.bf16.msra.mxu0 0
    %4693 = vmatprep.subr.bf16.mxu0 0
    %4694 = vmatpush1.bf16.msra.mxu0 0
    %4695 = vmatprep.subr.bf16.mxu0 0
    %4696 = vmatpush1.bf16.msra.mxu0 0
    %4697 = vmatprep.mubr.bf16.mxu0 %v4642
    %4698 = vmatmul.mubr.bf16.gmra.mrb[0].mxu0 %v4528
    %v4699 = vpop.f32.mrb[0].mxu0
    %v4700 = vadd.f32 0.0, %v4699
    %v4701 = vpop.f32.mrb[0].mxu0
    %v4702 = vpop.f32.mrb[0].mxu0
    %v4703 = vadd.f32 0.0, %v4702
    %v4704 = vpop.f32.mrb[0].mxu0
    %4705 = vmatprep.mubr.bf16.mxu0 %v4645
    %4706 = vmatmul.mubr.bf16.gmra.mrb[0].mxu0 %v4530
    %v4707 = vpop.f32.mrb[0].mxu0
    %v4708 = vadd.f32 0.0, %v4707
    %v4709 = vpop.f32.mrb[0].mxu0
    %v4710 = vpop.f32.mrb[0].mxu0
    %v4711 = vadd.f32 0.0, %v4710
    %v4712 = vpop.f32.mrb[0].mxu0
    %4713 = vmatprep.mubr.bf16.mxu0 %v4648
    %4714 = vmatmul.mubr.bf16.gmra.mrb[0].mxu0 %v4532
    %v4715 = vpop.f32.mrb[0].mxu0
    %v4716 = vadd.f32 0.0, %v4715
    %v4717 = vpop.f32.mrb[0].mxu0
    %v4718 = vpop.f32.mrb[0].mxu0
    %v4719 = vadd.f32 0.0, %v4718
    %v4720 = vpop.f32.mrb[0].mxu0
    %4721 = vmatprep.mubr.bf16.mxu0 %v4651
    %4722 = vmatmul.mubr.bf16.gmra.mrb[0].mxu0 %v4534
    %v4723 = vpop.f32.mrb[0].mxu0
    %v4724 = vadd.f32 0.0, %v4723
    %v4725 = vpop.f32.mrb[0].mxu0
    %v4726 = vpop.f32.mrb[0].mxu0
    %v4727 = vadd.f32 0.0, %v4726
    %v4728 = vpop.f32.mrb[0].mxu0
    %4729 = vmatprep.mubr.bf16.mxu0 %v4654
    %4730 = vmatmul.mubr.bf16.gmra.mrb[0].mxu0 %v4536
    %v4731 = vpop.f32.mrb[0].mxu0
    %v4732 = vadd.f32 0.0, %v4731
    %v4733 = vpop.f32.mrb[0].mxu0
    %v4734 = vpop.f32.mrb[0].mxu0
    %v4735 = vadd.f32 0.0, %v4734
    %v4736 = vpop.f32.mrb[0].mxu0
    %4737 = vmatprep.mubr.bf16.mxu0 %v4657
    %4738 = vmatmul.mubr.bf16.gmra.mrb[0].mxu0 %v4538
    %v4739 = vpop.f32.mrb[0].mxu0
    %v4740 = vadd.f32 0.0, %v4739
    %v4741 = vpop.f32.mrb[0].mxu0
    %v4742 = vpop.f32.mrb[0].mxu0
    %v4743 = vadd.f32 0.0, %v4742
    %v4744 = vpop.f32.mrb[0].mxu0
    %4745 = vmatprep.mubr.bf16.mxu0 %v4660
    %4746 = vmatmul.mubr.bf16.gmra.mrb[0].mxu0 %v4540
    %v4747 = vpop.f32.mrb[0].mxu0
    %v4748 = vadd.f32 0.0, %v4747
    %v4749 = vpop.f32.mrb[0].mxu0
    %v4750 = vpop.f32.mrb[0].mxu0
    %v4751 = vadd.f32 0.0, %v4750
    %v4752 = vpop.f32.mrb[0].mxu0
    %4753 = vmatprep.mubr.bf16.mxu0 %v4663
    %4754 = vmatmul.mubr.bf16.gmra.mrb[0].mxu0 %v4542
    %v4755 = vpop.f32.mrb[0].mxu0
    %v4756 = vadd.f32 0.0, %v4755
    %v4757 = vpop.f32.mrb[0].mxu0
    %v4758 = vpop.f32.mrb[0].mxu0
    %v4759 = vadd.f32 0.0, %v4758
    %v4760 = vpop.f32.mrb[0].mxu0
    %4761 = vdwg.mxu0
    %s4762 = scalar_lea.vmem [#allocation11], 640
    %4763 = vst [vmem:[%s4762] sm:$0xff] %v4700
    %4764 = vst [vmem:[%s4762 + $0x8] sm:$0xff] %v4703
    %4765 = vst [vmem:[%s4762 + $0x10] sm:$0xff] %v4708
    %4766 = vst [vmem:[%s4762 + $0x18] sm:$0xff] %v4711
    %4767 = vst [vmem:[%s4762 + $0x20] sm:$0xff] %v4716
    %4768 = vst [vmem:[%s4762 + $0x28] sm:$0xff] %v4719
    %4769 = vst [vmem:[%s4762 + $0x30] sm:$0xff] %v4724
    %4770 = vst [vmem:[%s4762 + $0x38] sm:$0xff] %v4727
    %4771 = vst [vmem:[%s4762 + $0x40] sm:$0xff] %v4732
    %4772 = vst [vmem:[%s4762 + $0x48] sm:$0xff] %v4735
    %4773 = vst [vmem:[%s4762 + $0x50] sm:$0xff] %v4740
    %4774 = vst [vmem:[%s4762 + $0x58] sm:$0xff] %v4743
    %4775 = vst [vmem:[%s4762 + $0x60] sm:$0xff] %v4748
    %4776 = vst [vmem:[%s4762 + $0x68] sm:$0xff] %v4751
    %4777 = vst [vmem:[%s4762 + $0x70] sm:$0xff] %v4756
    %4778 = vst [vmem:[%s4762 + $0x78] sm:$0xff] %v4759
    %v4779 = vld [vmem:[#allocation3] sm:$0xff]
    %v4780 = vld [vmem:[#allocation3 + $0x8] sm:$0xff]
    %v4781 = vld [vmem:[#allocation3 + $0x10] sm:$0xff]
    %v4782 = vld [vmem:[#allocation3 + $0x18] sm:$0xff]
    %v4783 = vld [vmem:[#allocation3 + $0x20] sm:$0xff]
    %v4784 = vld [vmem:[#allocation3 + $0x28] sm:$0xff]
    %v4785 = vld [vmem:[#allocation3 + $0x30] sm:$0xff]
    %v4786 = vld [vmem:[#allocation3 + $0x38] sm:$0xff]
    %v4787 = vld [vmem:[#allocation3 + $0x40] sm:$0xff]
    %v4788 = vld [vmem:[#allocation3 + $0x48] sm:$0xff]
    %v4789 = vld [vmem:[#allocation3 + $0x50] sm:$0xff]
    %v4790 = vld [vmem:[#allocation3 + $0x58] sm:$0xff]
    %v4791 = vld [vmem:[#allocation3 + $0x60] sm:$0xff]
    %v4792 = vld [vmem:[#allocation3 + $0x68] sm:$0xff]
    %v4793 = vld [vmem:[#allocation3 + $0x70] sm:$0xff]
    %v4794 = vld [vmem:[#allocation3 + $0x78] sm:$0xff]
    %vm4795 = vcmp.gt.f32.partialorder %v4700, %v4779
    %vm4796 = vcmp.gt.f32.partialorder %v4703, %v4780
    %vm4797 = vcmp.gt.f32.partialorder %v4708, %v4781
    %vm4798 = vcmp.gt.f32.partialorder %v4711, %v4782
    %vm4799 = vcmp.gt.f32.partialorder %v4716, %v4783
    %vm4800 = vcmp.gt.f32.partialorder %v4719, %v4784
    %vm4801 = vcmp.gt.f32.partialorder %v4724, %v4785
    %vm4802 = vcmp.gt.f32.partialorder %v4727, %v4786
    %vm4803 = vcmp.gt.f32.partialorder %v4732, %v4787
    %vm4804 = vcmp.gt.f32.partialorder %v4735, %v4788
    %vm4805 = vcmp.gt.f32.partialorder %v4740, %v4789
    %vm4806 = vcmp.gt.f32.partialorder %v4743, %v4790
    %vm4807 = vcmp.gt.f32.partialorder %v4748, %v4791
    %vm4808 = vcmp.gt.f32.partialorder %v4751, %v4792
    %vm4809 = vcmp.gt.f32.partialorder %v4756, %v4793
    %vm4810 = vcmp.gt.f32.partialorder %v4759, %v4794
    %v4811 = vsel %vm4795, %v4700, %v4779
    %v4812 = vsel %vm4796, %v4703, %v4780
    %v4813 = vsel %vm4797, %v4708, %v4781
    %v4814 = vsel %vm4798, %v4711, %v4782
    %v4815 = vsel %vm4799, %v4716, %v4783
    %v4816 = vsel %vm4800, %v4719, %v4784
    %v4817 = vsel %vm4801, %v4724, %v4785
    %v4818 = vsel %vm4802, %v4727, %v4786
    %v4819 = vsel %vm4803, %v4732, %v4787
    %v4820 = vsel %vm4804, %v4735, %v4788
    %v4821 = vsel %vm4805, %v4740, %v4789
    %v4822 = vsel %vm4806, %v4743, %v4790
    %v4823 = vsel %vm4807, %v4748, %v4791
    %v4824 = vsel %vm4808, %v4751, %v4792
    %v4825 = vsel %vm4809, %v4756, %v4793
    %v4826 = vsel %vm4810, %v4759, %v4794
    %4827 = vst [vmem:[#allocation3] sm:$0xff] %v4811
    %4828 = vst [vmem:[#allocation3 + $0x8] sm:$0xff] %v4812
    %4829 = vst [vmem:[#allocation3 + $0x10] sm:$0xff] %v4813
    %4830 = vst [vmem:[#allocation3 + $0x18] sm:$0xff] %v4814
    %4831 = vst [vmem:[#allocation3 + $0x20] sm:$0xff] %v4815
    %4832 = vst [vmem:[#allocation3 + $0x28] sm:$0xff] %v4816
    %4833 = vst [vmem:[#allocation3 + $0x30] sm:$0xff] %v4817
    %4834 = vst [vmem:[#allocation3 + $0x38] sm:$0xff] %v4818
    %4835 = vst [vmem:[#allocation3 + $0x40] sm:$0xff] %v4819
    %4836 = vst [vmem:[#allocation3 + $0x48] sm:$0xff] %v4820
    %4837 = vst [vmem:[#allocation3 + $0x50] sm:$0xff] %v4821
    %4838 = vst [vmem:[#allocation3 + $0x58] sm:$0xff] %v4822
    %4839 = vst [vmem:[#allocation3 + $0x60] sm:$0xff] %v4823
    %4840 = vst [vmem:[#allocation3 + $0x68] sm:$0xff] %v4824
    %4841 = vst [vmem:[#allocation3 + $0x70] sm:$0xff] %v4825
    %4842 = vst [vmem:[#allocation3 + $0x78] sm:$0xff] %v4826
    %v4843 = vld [vmem:[#allocation4] sm:$0xff]
    %v4844 = vld [vmem:[#allocation4 + $0x8] sm:$0xff]
    %v4845 = vld [vmem:[#allocation4 + $0x10] sm:$0xff]
    %v4846 = vld [vmem:[#allocation4 + $0x18] sm:$0xff]
    %v4847 = vld [vmem:[#allocation4 + $0x20] sm:$0xff]
    %v4848 = vld [vmem:[#allocation4 + $0x28] sm:$0xff]
    %v4849 = vld [vmem:[#allocation4 + $0x30] sm:$0xff]
    %v4850 = vld [vmem:[#allocation4 + $0x38] sm:$0xff]
    %v4851 = vld [vmem:[#allocation4 + $0x40] sm:$0xff]
    %v4852 = vld [vmem:[#allocation4 + $0x48] sm:$0xff]
    %v4853 = vld [vmem:[#allocation4 + $0x50] sm:$0xff]
    %v4854 = vld [vmem:[#allocation4 + $0x58] sm:$0xff]
    %v4855 = vld [vmem:[#allocation4 + $0x60] sm:$0xff]
    %v4856 = vld [vmem:[#allocation4 + $0x68] sm:$0xff]
    %v4857 = vld [vmem:[#allocation4 + $0x70] sm:$0xff]
    %v4858 = vld [vmem:[#allocation4 + $0x78] sm:$0xff]
    %v4859 = vsel %vm4795, 5, %v4843
    %v4860 = vsel %vm4796, 5, %v4844
    %v4861 = vsel %vm4797, 5, %v4845
    %v4862 = vsel %vm4798, 5, %v4846
    %v4863 = vsel %vm4799, 5, %v4847
    %v4864 = vsel %vm4800, 5, %v4848
    %v4865 = vsel %vm4801, 5, %v4849
    %v4866 = vsel %vm4802, 5, %v4850
    %v4867 = vsel %vm4803, 5, %v4851
    %v4868 = vsel %vm4804, 5, %v4852
    %v4869 = vsel %vm4805, 5, %v4853
    %v4870 = vsel %vm4806, 5, %v4854
    %v4871 = vsel %vm4807, 5, %v4855
    %v4872 = vsel %vm4808, 5, %v4856
    %v4873 = vsel %vm4809, 5, %v4857
    %v4874 = vsel %vm4810, 5, %v4858
    %4875 = vst [vmem:[#allocation4] sm:$0xff] %v4859
    %4876 = vst [vmem:[#allocation4 + $0x8] sm:$0xff] %v4860
    %4877 = vst [vmem:[#allocation4 + $0x10] sm:$0xff] %v4861
    %4878 = vst [vmem:[#allocation4 + $0x18] sm:$0xff] %v4862
    %4879 = vst [vmem:[#allocation4 + $0x20] sm:$0xff] %v4863
    %4880 = vst [vmem:[#allocation4 + $0x28] sm:$0xff] %v4864
    %4881 = vst [vmem:[#allocation4 + $0x30] sm:$0xff] %v4865
    %4882 = vst [vmem:[#allocation4 + $0x38] sm:$0xff] %v4866
    %4883 = vst [vmem:[#allocation4 + $0x40] sm:$0xff] %v4867
    %4884 = vst [vmem:[#allocation4 + $0x48] sm:$0xff] %v4868
    %4885 = vst [vmem:[#allocation4 + $0x50] sm:$0xff] %v4869
    %4886 = vst [vmem:[#allocation4 + $0x58] sm:$0xff] %v4870
    %4887 = vst [vmem:[#allocation4 + $0x60] sm:$0xff] %v4871
    %4888 = vst [vmem:[#allocation4 + $0x68] sm:$0xff] %v4872
    %4889 = vst [vmem:[#allocation4 + $0x70] sm:$0xff] %v4873
    %4890 = vst [vmem:[#allocation4 + $0x78] sm:$0xff] %v4874
    %v4891 = vld [vmem:[%s581] sm:$0xff]
    %v4892 = vld [vmem:[%s581 + $0x8] sm:$0xff]
    %v4893 = vld [vmem:[%s581 + $0x10] sm:$0xff]
    %v4894 = vld [vmem:[%s581 + $0x18] sm:$0xff]
    %v4895 = vld [vmem:[%s581 + $0x20] sm:$0xff]
    %v4896 = vld [vmem:[%s581 + $0x28] sm:$0xff]
    %v4897 = vld [vmem:[%s581 + $0x30] sm:$0xff]
    %v4898 = vld [vmem:[%s581 + $0x38] sm:$0xff]
    %v4899 = vld [vmem:[%s581 + $0x40] sm:$0xff]
    %v4900 = vld [vmem:[%s581 + $0x48] sm:$0xff]
    %v4901 = vld [vmem:[%s581 + $0x50] sm:$0xff]
    %v4902 = vld [vmem:[%s581 + $0x58] sm:$0xff]
    %v4903 = vld [vmem:[%s581 + $0x60] sm:$0xff]
    %v4904 = vld [vmem:[%s581 + $0x68] sm:$0xff]
    %v4905 = vld [vmem:[%s581 + $0x70] sm:$0xff]
    %v4906 = vld [vmem:[%s581 + $0x78] sm:$0xff]
    %s4907 = scalar_lea.vmem [#allocation5], 576
    %v4908 = vld [vmem:[%s4907] sm:$0xf]
    %v4909 = vld [vmem:[%s4907 + $0x4] sm:$0xf]
    %v4910 = vld [vmem:[%s4907 + $0x8] sm:$0xf]
    %v4911 = vld [vmem:[%s4907 + $0xc] sm:$0xf]
    %v4912 = vld [vmem:[%s4907 + $0x10] sm:$0xf]
    %v4913 = vld [vmem:[%s4907 + $0x14] sm:$0xf]
    %v4914 = vld [vmem:[%s4907 + $0x18] sm:$0xf]
    %v4915 = vld [vmem:[%s4907 + $0x1c] sm:$0xf]
    %v4916 = vld [vmem:[%s4907 + $0x20] sm:$0xf]
    %v4917 = vld [vmem:[%s4907 + $0x24] sm:$0xf]
    %v4918 = vld [vmem:[%s4907 + $0x28] sm:$0xf]
    %v4919 = vld [vmem:[%s4907 + $0x2c] sm:$0xf]
    %v4920 = vld [vmem:[%s4907 + $0x30] sm:$0xf]
    %v4921 = vld [vmem:[%s4907 + $0x34] sm:$0xf]
    %v4922 = vld [vmem:[%s4907 + $0x38] sm:$0xf]
    %v4923 = vld [vmem:[%s4907 + $0x3c] sm:$0xf]
    %v4924 = vld [vmem:[%s4907 + $0x40] sm:$0xf]
    %v4925 = vld [vmem:[%s4907 + $0x44] sm:$0xf]
    %v4926 = vld [vmem:[%s4907 + $0x48] sm:$0xf]
    %v4927 = vld [vmem:[%s4907 + $0x4c] sm:$0xf]
    %v4928 = vld [vmem:[%s4907 + $0x50] sm:$0xf]
    %v4929 = vld [vmem:[%s4907 + $0x54] sm:$0xf]
    %v4930 = vld [vmem:[%s4907 + $0x58] sm:$0xf]
    %v4931 = vld [vmem:[%s4907 + $0x5c] sm:$0xf]
    %v4956 = vunpack.c.l.b16 %v4908
    %v4957 = vunpack.c.l.b16 %v4909
    %v4958 = vunpack.c.l.b16 %v4910
    %v4959 = vunpack.c.l.b16 %v4911
    %v4960 = vunpack.c.l.b16 %v4912
    %v4961 = vunpack.c.l.b16 %v4913
    %v4962 = vunpack.c.l.b16 %v4914
    %v4963 = vunpack.c.l.b16 %v4915
    %v4964 = vunpack.c.l.b16 %v4916
    %v4965 = vunpack.c.l.b16 %v4917
    %v4966 = vunpack.c.l.b16 %v4918
    %v4967 = vunpack.c.l.b16 %v4919
    %v4968 = vunpack.c.l.b16 %v4920
    %v4969 = vunpack.c.l.b16 %v4921
    %v4970 = vunpack.c.l.b16 %v4922
    %v4971 = vunpack.c.l.b16 %v4923
    %v4972 = vunpack.c.l.b16 %v4924
    %v4973 = vunpack.c.l.b16 %v4925
    %v4974 = vunpack.c.l.b16 %v4926
    %v4975 = vunpack.c.l.b16 %v4927
    %v4976 = vunpack.c.l.b16 %v4928
    %v4977 = vunpack.c.l.b16 %v4929
    %v4978 = vunpack.c.l.b16 %v4930
    %v4979 = vunpack.c.l.b16 %v4931
    %v4980 = vpack.c.b16 %v4957, %v4956
    %v4981 = vpack.c.b16 %v4959, %v4958
    %v4982 = vpack.c.b16 %v4961, %v4960
    %v4983 = vpack.c.b16 %v4963, %v4962
    %v4984 = vpack.c.b16 %v4965, %v4964
    %v4985 = vpack.c.b16 %v4967, %v4966
    %v4986 = vpack.c.b16 %v4969, %v4968
    %v4987 = vpack.c.b16 %v4971, %v4970
    %v4988 = vpack.c.b16 %v4973, %v4972
    %v4989 = vpack.c.b16 %v4975, %v4974
    %v4990 = vpack.c.b16 %v4977, %v4976
    %v4991 = vpack.c.b16 %v4979, %v4978
    %v5005 = vsel %vm532, %v4892, 0
    %v5008 = vsel %vm532, %v4894, 0
    %v5011 = vsel %vm532, %v4896, 0
    %v5014 = vsel %vm532, %v4898, 0
    %v5017 = vsel %vm532, %v4900, 0
    %v5020 = vsel %vm532, %v4902, 0
    %v5023 = vsel %vm532, %v4904, 0
    %v5026 = vsel %vm532, %v4906, 0
    %5028 = vmatprep.subr.bf16.mxu0 0
    %5029 = vmatpush1.bf16.msra.mxu0 %v4980
    %5030 = vmatprep.subr.bf16.mxu0 0
    %5031 = vmatpush1.bf16.msra.mxu0 %v4981
    %5032 = vmatprep.subr.bf16.mxu0 0
    %5033 = vmatpush1.bf16.msra.mxu0 %v4982
    %5034 = vmatprep.subr.bf16.mxu0 0
    %5035 = vmatpush1.bf16.msra.mxu0 %v4983
    %5036 = vmatprep.subr.bf16.mxu0 0
    %5037 = vmatpush1.bf16.msra.mxu0 %v4984
    %5038 = vmatprep.subr.bf16.mxu0 0
    %5039 = vmatpush1.bf16.msra.mxu0 %v4985
    %5040 = vmatprep.subr.bf16.mxu0 0
    %5041 = vmatpush1.bf16.msra.mxu0 %v4986
    %5042 = vmatprep.subr.bf16.mxu0 0
    %5043 = vmatpush1.bf16.msra.mxu0 %v4987
    %5044 = vmatprep.subr.bf16.mxu0 0
    %5045 = vmatpush1.bf16.msra.mxu0 %v4988
    %5046 = vmatprep.subr.bf16.mxu0 0
    %5047 = vmatpush1.bf16.msra.mxu0 %v4989
    %5048 = vmatprep.subr.bf16.mxu0 0
    %5049 = vmatpush1.bf16.msra.mxu0 %v4990
    %5050 = vmatprep.subr.bf16.mxu0 0
    %5051 = vmatpush1.bf16.msra.mxu0 %v4991
    %5052 = vmatprep.subr.bf16.mxu0 0
    %5053 = vmatpush1.bf16.msra.mxu0 0
    %5054 = vmatprep.subr.bf16.mxu0 0
    %5055 = vmatpush1.bf16.msra.mxu0 0
    %5056 = vmatprep.subr.bf16.mxu0 0
    %5057 = vmatpush1.bf16.msra.mxu0 0
    %5058 = vmatprep.subr.bf16.mxu0 0
    %5059 = vmatpush1.bf16.msra.mxu0 0
    %5060 = vmatprep.mubr.bf16.mxu0 %v5005
    %5061 = vmatmul.mubr.bf16.gmra.mrb[0].mxu0 %v4891
    %v5062 = vpop.f32.mrb[0].mxu0
    %v5063 = vadd.f32 0.0, %v5062
    %v5064 = vpop.f32.mrb[0].mxu0
    %v5065 = vpop.f32.mrb[0].mxu0
    %v5066 = vadd.f32 0.0, %v5065
    %v5067 = vpop.f32.mrb[0].mxu0
    %5068 = vmatprep.mubr.bf16.mxu0 %v5008
    %5069 = vmatmul.mubr.bf16.gmra.mrb[0].mxu0 %v4893
    %v5070 = vpop.f32.mrb[0].mxu0
    %v5071 = vadd.f32 0.0, %v5070
    %v5072 = vpop.f32.mrb[0].mxu0
    %v5073 = vpop.f32.mrb[0].mxu0
    %v5074 = vadd.f32 0.0, %v5073
    %v5075 = vpop.f32.mrb[0].mxu0
    %5076 = vmatprep.mubr.bf16.mxu0 %v5011
    %5077 = vmatmul.mubr.bf16.gmra.mrb[0].mxu0 %v4895
    %v5078 = vpop.f32.mrb[0].mxu0
    %v5079 = vadd.f32 0.0, %v5078
    %v5080 = vpop.f32.mrb[0].mxu0
    %v5081 = vpop.f32.mrb[0].mxu0
    %v5082 = vadd.f32 0.0, %v5081
    %v5083 = vpop.f32.mrb[0].mxu0
    %5084 = vmatprep.mubr.bf16.mxu0 %v5014
    %5085 = vmatmul.mubr.bf16.gmra.mrb[0].mxu0 %v4897
    %v5086 = vpop.f32.mrb[0].mxu0
    %v5087 = vadd.f32 0.0, %v5086
    %v5088 = vpop.f32.mrb[0].mxu0
    %v5089 = vpop.f32.mrb[0].mxu0
    %v5090 = vadd.f32 0.0, %v5089
    %v5091 = vpop.f32.mrb[0].mxu0
    %5092 = vmatprep.mubr.bf16.mxu0 %v5017
    %5093 = vmatmul.mubr.bf16.gmra.mrb[0].mxu0 %v4899
    %v5094 = vpop.f32.mrb[0].mxu0
    %v5095 = vadd.f32 0.0, %v5094
    %v5096 = vpop.f32.mrb[0].mxu0
    %v5097 = vpop.f32.mrb[0].mxu0
    %v5098 = vadd.f32 0.0, %v5097
    %v5099 = vpop.f32.mrb[0].mxu0
    %5100 = vmatprep.mubr.bf16.mxu0 %v5020
    %5101 = vmatmul.mubr.bf16.gmra.mrb[0].mxu0 %v4901
    %v5102 = vpop.f32.mrb[0].mxu0
    %v5103 = vadd.f32 0.0, %v5102
    %v5104 = vpop.f32.mrb[0].mxu0
    %v5105 = vpop.f32.mrb[0].mxu0
    %v5106 = vadd.f32 0.0, %v5105
    %v5107 = vpop.f32.mrb[0].mxu0
    %5108 = vmatprep.mubr.bf16.mxu0 %v5023
    %5109 = vmatmul.mubr.bf16.gmra.mrb[0].mxu0 %v4903
    %v5110 = vpop.f32.mrb[0].mxu0
    %v5111 = vadd.f32 0.0, %v5110
    %v5112 = vpop.f32.mrb[0].mxu0
    %v5113 = vpop.f32.mrb[0].mxu0
    %v5114 = vadd.f32 0.0, %v5113
    %v5115 = vpop.f32.mrb[0].mxu0
    %5116 = vmatprep.mubr.bf16.mxu0 %v5026
    %5117 = vmatmul.mubr.bf16.gmra.mrb[0].mxu0 %v4905
    %v5118 = vpop.f32.mrb[0].mxu0
    %v5119 = vadd.f32 0.0, %v5118
    %v5120 = vpop.f32.mrb[0].mxu0
    %v5121 = vpop.f32.mrb[0].mxu0
    %v5122 = vadd.f32 0.0, %v5121
    %v5123 = vpop.f32.mrb[0].mxu0
    %5124 = vdwg.mxu0
    %s5125 = scalar_lea.vmem [#allocation11], 768
    %5126 = vst [vmem:[%s5125] sm:$0xff] %v5063
    %5127 = vst [vmem:[%s5125 + $0x8] sm:$0xff] %v5066
    %5128 = vst [vmem:[%s5125 + $0x10] sm:$0xff] %v5071
    %5129 = vst [vmem:[%s5125 + $0x18] sm:$0xff] %v5074
    %5130 = vst [vmem:[%s5125 + $0x20] sm:$0xff] %v5079
    %5131 = vst [vmem:[%s5125 + $0x28] sm:$0xff] %v5082
    %5132 = vst [vmem:[%s5125 + $0x30] sm:$0xff] %v5087
    %5133 = vst [vmem:[%s5125 + $0x38] sm:$0xff] %v5090
    %5134 = vst [vmem:[%s5125 + $0x40] sm:$0xff] %v5095
    %5135 = vst [vmem:[%s5125 + $0x48] sm:$0xff] %v5098
    %5136 = vst [vmem:[%s5125 + $0x50] sm:$0xff] %v5103
    %5137 = vst [vmem:[%s5125 + $0x58] sm:$0xff] %v5106
    %5138 = vst [vmem:[%s5125 + $0x60] sm:$0xff] %v5111
    %5139 = vst [vmem:[%s5125 + $0x68] sm:$0xff] %v5114
    %5140 = vst [vmem:[%s5125 + $0x70] sm:$0xff] %v5119
    %5141 = vst [vmem:[%s5125 + $0x78] sm:$0xff] %v5122
    %v5142 = vld [vmem:[#allocation3] sm:$0xff]
    %v5143 = vld [vmem:[#allocation3 + $0x8] sm:$0xff]
    %v5144 = vld [vmem:[#allocation3 + $0x10] sm:$0xff]
    %v5145 = vld [vmem:[#allocation3 + $0x18] sm:$0xff]
    %v5146 = vld [vmem:[#allocation3 + $0x20] sm:$0xff]
    %v5147 = vld [vmem:[#allocation3 + $0x28] sm:$0xff]
    %v5148 = vld [vmem:[#allocation3 + $0x30] sm:$0xff]
    %v5149 = vld [vmem:[#allocation3 + $0x38] sm:$0xff]
    %v5150 = vld [vmem:[#allocation3 + $0x40] sm:$0xff]
    %v5151 = vld [vmem:[#allocation3 + $0x48] sm:$0xff]
    %v5152 = vld [vmem:[#allocation3 + $0x50] sm:$0xff]
    %v5153 = vld [vmem:[#allocation3 + $0x58] sm:$0xff]
    %v5154 = vld [vmem:[#allocation3 + $0x60] sm:$0xff]
    %v5155 = vld [vmem:[#allocation3 + $0x68] sm:$0xff]
    %v5156 = vld [vmem:[#allocation3 + $0x70] sm:$0xff]
    %v5157 = vld [vmem:[#allocation3 + $0x78] sm:$0xff]
    %vm5158 = vcmp.gt.f32.partialorder %v5063, %v5142
    %vm5159 = vcmp.gt.f32.partialorder %v5066, %v5143
    %vm5160 = vcmp.gt.f32.partialorder %v5071, %v5144
    %vm5161 = vcmp.gt.f32.partialorder %v5074, %v5145
    %vm5162 = vcmp.gt.f32.partialorder %v5079, %v5146
    %vm5163 = vcmp.gt.f32.partialorder %v5082, %v5147
    %vm5164 = vcmp.gt.f32.partialorder %v5087, %v5148
    %vm5165 = vcmp.gt.f32.partialorder %v5090, %v5149
    %vm5166 = vcmp.gt.f32.partialorder %v5095, %v5150
    %vm5167 = vcmp.gt.f32.partialorder %v5098, %v5151
    %vm5168 = vcmp.gt.f32.partialorder %v5103, %v5152
    %vm5169 = vcmp.gt.f32.partialorder %v5106, %v5153
    %vm5170 = vcmp.gt.f32.partialorder %v5111, %v5154
    %vm5171 = vcmp.gt.f32.partialorder %v5114, %v5155
    %vm5172 = vcmp.gt.f32.partialorder %v5119, %v5156
    %vm5173 = vcmp.gt.f32.partialorder %v5122, %v5157
    %v5174 = vsel %vm5158, %v5063, %v5142
    %v5175 = vsel %vm5159, %v5066, %v5143
    %v5176 = vsel %vm5160, %v5071, %v5144
    %v5177 = vsel %vm5161, %v5074, %v5145
    %v5178 = vsel %vm5162, %v5079, %v5146
    %v5179 = vsel %vm5163, %v5082, %v5147
    %v5180 = vsel %vm5164, %v5087, %v5148
    %v5181 = vsel %vm5165, %v5090, %v5149
    %v5182 = vsel %vm5166, %v5095, %v5150
    %v5183 = vsel %vm5167, %v5098, %v5151
    %v5184 = vsel %vm5168, %v5103, %v5152
    %v5185 = vsel %vm5169, %v5106, %v5153
    %v5186 = vsel %vm5170, %v5111, %v5154
    %v5187 = vsel %vm5171, %v5114, %v5155
    %v5188 = vsel %vm5172, %v5119, %v5156
    %v5189 = vsel %vm5173, %v5122, %v5157
    %5190 = vst [vmem:[#allocation3] sm:$0xff] %v5174
    %5191 = vst [vmem:[#allocation3 + $0x8] sm:$0xff] %v5175
    %5192 = vst [vmem:[#allocation3 + $0x10] sm:$0xff] %v5176
    %5193 = vst [vmem:[#allocation3 + $0x18] sm:$0xff] %v5177
    %5194 = vst [vmem:[#allocation3 + $0x20] sm:$0xff] %v5178
    %5195 = vst [vmem:[#allocation3 + $0x28] sm:$0xff] %v5179
    %5196 = vst [vmem:[#allocation3 + $0x30] sm:$0xff] %v5180
    %5197 = vst [vmem:[#allocation3 + $0x38] sm:$0xff] %v5181
    %5198 = vst [vmem:[#allocation3 + $0x40] sm:$0xff] %v5182
    %5199 = vst [vmem:[#allocation3 + $0x48] sm:$0xff] %v5183
    %5200 = vst [vmem:[#allocation3 + $0x50] sm:$0xff] %v5184
    %5201 = vst [vmem:[#allocation3 + $0x58] sm:$0xff] %v5185
    %5202 = vst [vmem:[#allocation3 + $0x60] sm:$0xff] %v5186
    %5203 = vst [vmem:[#allocation3 + $0x68] sm:$0xff] %v5187
    %5204 = vst [vmem:[#allocation3 + $0x70] sm:$0xff] %v5188
    %5205 = vst [vmem:[#allocation3 + $0x78] sm:$0xff] %v5189
    %v5206 = vld [vmem:[#allocation4] sm:$0xff]
    %v5207 = vld [vmem:[#allocation4 + $0x8] sm:$0xff]
    %v5208 = vld [vmem:[#allocation4 + $0x10] sm:$0xff]
    %v5209 = vld [vmem:[#allocation4 + $0x18] sm:$0xff]
    %v5210 = vld [vmem:[#allocation4 + $0x20] sm:$0xff]
    %v5211 = vld [vmem:[#allocation4 + $0x28] sm:$0xff]
    %v5212 = vld [vmem:[#allocation4 + $0x30] sm:$0xff]
    %v5213 = vld [vmem:[#allocation4 + $0x38] sm:$0xff]
    %v5214 = vld [vmem:[#allocation4 + $0x40] sm:$0xff]
    %v5215 = vld [vmem:[#allocation4 + $0x48] sm:$0xff]
    %v5216 = vld [vmem:[#allocation4 + $0x50] sm:$0xff]
    %v5217 = vld [vmem:[#allocation4 + $0x58] sm:$0xff]
    %v5218 = vld [vmem:[#allocation4 + $0x60] sm:$0xff]
    %v5219 = vld [vmem:[#allocation4 + $0x68] sm:$0xff]
    %v5220 = vld [vmem:[#allocation4 + $0x70] sm:$0xff]
    %v5221 = vld [vmem:[#allocation4 + $0x78] sm:$0xff]
    %v5222 = vsel %vm5158, 6, %v5206
    %v5223 = vsel %vm5159, 6, %v5207
    %v5224 = vsel %vm5160, 6, %v5208
    %v5225 = vsel %vm5161, 6, %v5209
    %v5226 = vsel %vm5162, 6, %v5210
    %v5227 = vsel %vm5163, 6, %v5211
    %v5228 = vsel %vm5164, 6, %v5212
    %v5229 = vsel %vm5165, 6, %v5213
    %v5230 = vsel %vm5166, 6, %v5214
    %v5231 = vsel %vm5167, 6, %v5215
    %v5232 = vsel %vm5168, 6, %v5216
    %v5233 = vsel %vm5169, 6, %v5217
    %v5234 = vsel %vm5170, 6, %v5218
    %v5235 = vsel %vm5171, 6, %v5219
    %v5236 = vsel %vm5172, 6, %v5220
    %v5237 = vsel %vm5173, 6, %v5221
    %5238 = vst [vmem:[#allocation4] sm:$0xff] %v5222
    %5239 = vst [vmem:[#allocation4 + $0x8] sm:$0xff] %v5223
    %5240 = vst [vmem:[#allocation4 + $0x10] sm:$0xff] %v5224
    %5241 = vst [vmem:[#allocation4 + $0x18] sm:$0xff] %v5225
    %5242 = vst [vmem:[#allocation4 + $0x20] sm:$0xff] %v5226
    %5243 = vst [vmem:[#allocation4 + $0x28] sm:$0xff] %v5227
    %5244 = vst [vmem:[#allocation4 + $0x30] sm:$0xff] %v5228
    %5245 = vst [vmem:[#allocation4 + $0x38] sm:$0xff] %v5229
    %5246 = vst [vmem:[#allocation4 + $0x40] sm:$0xff] %v5230
    %5247 = vst [vmem:[#allocation4 + $0x48] sm:$0xff] %v5231
    %5248 = vst [vmem:[#allocation4 + $0x50] sm:$0xff] %v5232
    %5249 = vst [vmem:[#allocation4 + $0x58] sm:$0xff] %v5233
    %5250 = vst [vmem:[#allocation4 + $0x60] sm:$0xff] %v5234
    %5251 = vst [vmem:[#allocation4 + $0x68] sm:$0xff] %v5235
    %5252 = vst [vmem:[#allocation4 + $0x70] sm:$0xff] %v5236
    %5253 = vst [vmem:[#allocation4 + $0x78] sm:$0xff] %v5237
    %v5254 = vld [vmem:[%s589] sm:$0xff]
    %v5255 = vld [vmem:[%s589 + $0x8] sm:$0xff]
    %v5256 = vld [vmem:[%s589 + $0x10] sm:$0xff]
    %v5257 = vld [vmem:[%s589 + $0x18] sm:$0xff]
    %v5258 = vld [vmem:[%s589 + $0x20] sm:$0xff]
    %v5259 = vld [vmem:[%s589 + $0x28] sm:$0xff]
    %v5260 = vld [vmem:[%s589 + $0x30] sm:$0xff]
    %v5261 = vld [vmem:[%s589 + $0x38] sm:$0xff]
    %v5262 = vld [vmem:[%s589 + $0x40] sm:$0xff]
    %v5263 = vld [vmem:[%s589 + $0x48] sm:$0xff]
    %v5264 = vld [vmem:[%s589 + $0x50] sm:$0xff]
    %v5265 = vld [vmem:[%s589 + $0x58] sm:$0xff]
    %v5266 = vld [vmem:[%s589 + $0x60] sm:$0xff]
    %v5267 = vld [vmem:[%s589 + $0x68] sm:$0xff]
    %v5268 = vld [vmem:[%s589 + $0x70] sm:$0xff]
    %v5269 = vld [vmem:[%s589 + $0x78] sm:$0xff]
    %s5270 = scalar_lea.vmem [#allocation5], 672
    %v5271 = vld [vmem:[%s5270] sm:$0xf]
    %v5272 = vld [vmem:[%s5270 + $0x4] sm:$0xf]
    %v5273 = vld [vmem:[%s5270 + $0x8] sm:$0xf]
    %v5274 = vld [vmem:[%s5270 + $0xc] sm:$0xf]
    %v5275 = vld [vmem:[%s5270 + $0x10] sm:$0xf]
    %v5276 = vld [vmem:[%s5270 + $0x14] sm:$0xf]
    %v5277 = vld [vmem:[%s5270 + $0x18] sm:$0xf]
    %v5278 = vld [vmem:[%s5270 + $0x1c] sm:$0xf]
    %v5279 = vld [vmem:[%s5270 + $0x20] sm:$0xf]
    %v5280 = vld [vmem:[%s5270 + $0x24] sm:$0xf]
    %v5281 = vld [vmem:[%s5270 + $0x28] sm:$0xf]
    %v5282 = vld [vmem:[%s5270 + $0x2c] sm:$0xf]
    %v5283 = vld [vmem:[%s5270 + $0x30] sm:$0xf]
    %v5284 = vld [vmem:[%s5270 + $0x34] sm:$0xf]
    %v5285 = vld [vmem:[%s5270 + $0x38] sm:$0xf]
    %v5286 = vld [vmem:[%s5270 + $0x3c] sm:$0xf]
    %v5287 = vld [vmem:[%s5270 + $0x40] sm:$0xf]
    %v5288 = vld [vmem:[%s5270 + $0x44] sm:$0xf]
    %v5289 = vld [vmem:[%s5270 + $0x48] sm:$0xf]
    %v5290 = vld [vmem:[%s5270 + $0x4c] sm:$0xf]
    %v5291 = vld [vmem:[%s5270 + $0x50] sm:$0xf]
    %v5292 = vld [vmem:[%s5270 + $0x54] sm:$0xf]
    %v5293 = vld [vmem:[%s5270 + $0x58] sm:$0xf]
    %v5294 = vld [vmem:[%s5270 + $0x5c] sm:$0xf]
    %v5319 = vunpack.c.l.b16 %v5271
    %v5320 = vunpack.c.l.b16 %v5272
    %v5321 = vunpack.c.l.b16 %v5273
    %v5322 = vunpack.c.l.b16 %v5274
    %v5323 = vunpack.c.l.b16 %v5275
    %v5324 = vunpack.c.l.b16 %v5276
    %v5325 = vunpack.c.l.b16 %v5277
    %v5326 = vunpack.c.l.b16 %v5278
    %v5327 = vunpack.c.l.b16 %v5279
    %v5328 = vunpack.c.l.b16 %v5280
    %v5329 = vunpack.c.l.b16 %v5281
    %v5330 = vunpack.c.l.b16 %v5282
    %v5331 = vunpack.c.l.b16 %v5283
    %v5332 = vunpack.c.l.b16 %v5284
    %v5333 = vunpack.c.l.b16 %v5285
    %v5334 = vunpack.c.l.b16 %v5286
    %v5335 = vunpack.c.l.b16 %v5287
    %v5336 = vunpack.c.l.b16 %v5288
    %v5337 = vunpack.c.l.b16 %v5289
    %v5338 = vunpack.c.l.b16 %v5290
    %v5339 = vunpack.c.l.b16 %v5291
    %v5340 = vunpack.c.l.b16 %v5292
    %v5341 = vunpack.c.l.b16 %v5293
    %v5342 = vunpack.c.l.b16 %v5294
    %v5343 = vpack.c.b16 %v5320, %v5319
    %v5344 = vpack.c.b16 %v5322, %v5321
    %v5345 = vpack.c.b16 %v5324, %v5323
    %v5346 = vpack.c.b16 %v5326, %v5325
    %v5347 = vpack.c.b16 %v5328, %v5327
    %v5348 = vpack.c.b16 %v5330, %v5329
    %v5349 = vpack.c.b16 %v5332, %v5331
    %v5350 = vpack.c.b16 %v5334, %v5333
    %v5351 = vpack.c.b16 %v5336, %v5335
    %v5352 = vpack.c.b16 %v5338, %v5337
    %v5353 = vpack.c.b16 %v5340, %v5339
    %v5354 = vpack.c.b16 %v5342, %v5341
    %v5368 = vsel %vm532, %v5255, 0
    %v5371 = vsel %vm532, %v5257, 0
    %v5374 = vsel %vm532, %v5259, 0
    %v5377 = vsel %vm532, %v5261, 0
    %v5380 = vsel %vm532, %v5263, 0
    %v5383 = vsel %vm532, %v5265, 0
    %v5386 = vsel %vm532, %v5267, 0
    %v5389 = vsel %vm532, %v5269, 0
    %5391 = vmatprep.subr.bf16.mxu0 0
    %5392 = vmatpush1.bf16.msra.mxu0 %v5343
    %5393 = vmatprep.subr.bf16.mxu0 0
    %5394 = vmatpush1.bf16.msra.mxu0 %v5344
    %5395 = vmatprep.subr.bf16.mxu0 0
    %5396 = vmatpush1.bf16.msra.mxu0 %v5345
    %5397 = vmatprep.subr.bf16.mxu0 0
    %5398 = vmatpush1.bf16.msra.mxu0 %v5346
    %5399 = vmatprep.subr.bf16.mxu0 0
    %5400 = vmatpush1.bf16.msra.mxu0 %v5347
    %5401 = vmatprep.subr.bf16.mxu0 0
    %5402 = vmatpush1.bf16.msra.mxu0 %v5348
    %5403 = vmatprep.subr.bf16.mxu0 0
    %5404 = vmatpush1.bf16.msra.mxu0 %v5349
    %5405 = vmatprep.subr.bf16.mxu0 0
    %5406 = vmatpush1.bf16.msra.mxu0 %v5350
    %5407 = vmatprep.subr.bf16.mxu0 0
    %5408 = vmatpush1.bf16.msra.mxu0 %v5351
    %5409 = vmatprep.subr.bf16.mxu0 0
    %5410 = vmatpush1.bf16.msra.mxu0 %v5352
    %5411 = vmatprep.subr.bf16.mxu0 0
    %5412 = vmatpush1.bf16.msra.mxu0 %v5353
    %5413 = vmatprep.subr.bf16.mxu0 0
    %5414 = vmatpush1.bf16.msra.mxu0 %v5354
    %5415 = vmatprep.subr.bf16.mxu0 0
    %5416 = vmatpush1.bf16.msra.mxu0 0
    %5417 = vmatprep.subr.bf16.mxu0 0
    %5418 = vmatpush1.bf16.msra.mxu0 0
    %5419 = vmatprep.subr.bf16.mxu0 0
    %5420 = vmatpush1.bf16.msra.mxu0 0
    %5421 = vmatprep.subr.bf16.mxu0 0
    %5422 = vmatpush1.bf16.msra.mxu0 0
    %5423 = vmatprep.mubr.bf16.mxu0 %v5368
    %5424 = vmatmul.mubr.bf16.gmra.mrb[0].mxu0 %v5254
    %v5425 = vpop.f32.mrb[0].mxu0
    %v5426 = vadd.f32 0.0, %v5425
    %v5427 = vpop.f32.mrb[0].mxu0
    %v5428 = vpop.f32.mrb[0].mxu0
    %v5429 = vadd.f32 0.0, %v5428
    %v5430 = vpop.f32.mrb[0].mxu0
    %5431 = vmatprep.mubr.bf16.mxu0 %v5371
    %5432 = vmatmul.mubr.bf16.gmra.mrb[0].mxu0 %v5256
    %v5433 = vpop.f32.mrb[0].mxu0
    %v5434 = vadd.f32 0.0, %v5433
    %v5435 = vpop.f32.mrb[0].mxu0
    %v5436 = vpop.f32.mrb[0].mxu0
    %v5437 = vadd.f32 0.0, %v5436
    %v5438 = vpop.f32.mrb[0].mxu0
    %5439 = vmatprep.mubr.bf16.mxu0 %v5374
    %5440 = vmatmul.mubr.bf16.gmra.mrb[0].mxu0 %v5258
    %v5441 = vpop.f32.mrb[0].mxu0
    %v5442 = vadd.f32 0.0, %v5441
    %v5443 = vpop.f32.mrb[0].mxu0
    %v5444 = vpop.f32.mrb[0].mxu0
    %v5445 = vadd.f32 0.0, %v5444
    %v5446 = vpop.f32.mrb[0].mxu0
    %5447 = vmatprep.mubr.bf16.mxu0 %v5377
    %5448 = vmatmul.mubr.bf16.gmra.mrb[0].mxu0 %v5260
    %v5449 = vpop.f32.mrb[0].mxu0
    %v5450 = vadd.f32 0.0, %v5449
    %v5451 = vpop.f32.mrb[0].mxu0
    %v5452 = vpop.f32.mrb[0].mxu0
    %v5453 = vadd.f32 0.0, %v5452
    %v5454 = vpop.f32.mrb[0].mxu0
    %5455 = vmatprep.mubr.bf16.mxu0 %v5380
    %5456 = vmatmul.mubr.bf16.gmra.mrb[0].mxu0 %v5262
    %v5457 = vpop.f32.mrb[0].mxu0
    %v5458 = vadd.f32 0.0, %v5457
    %v5459 = vpop.f32.mrb[0].mxu0
    %v5460 = vpop.f32.mrb[0].mxu0
    %v5461 = vadd.f32 0.0, %v5460
    %v5462 = vpop.f32.mrb[0].mxu0
    %5463 = vmatprep.mubr.bf16.mxu0 %v5383
    %5464 = vmatmul.mubr.bf16.gmra.mrb[0].mxu0 %v5264
    %v5465 = vpop.f32.mrb[0].mxu0
    %v5466 = vadd.f32 0.0, %v5465
    %v5467 = vpop.f32.mrb[0].mxu0
    %v5468 = vpop.f32.mrb[0].mxu0
    %v5469 = vadd.f32 0.0, %v5468
    %v5470 = vpop.f32.mrb[0].mxu0
    %5471 = vmatprep.mubr.bf16.mxu0 %v5386
    %5472 = vmatmul.mubr.bf16.gmra.mrb[0].mxu0 %v5266
    %v5473 = vpop.f32.mrb[0].mxu0
    %v5474 = vadd.f32 0.0, %v5473
    %v5475 = vpop.f32.mrb[0].mxu0
    %v5476 = vpop.f32.mrb[0].mxu0
    %v5477 = vadd.f32 0.0, %v5476
    %v5478 = vpop.f32.mrb[0].mxu0
    %5479 = vmatprep.mubr.bf16.mxu0 %v5389
    %5480 = vmatmul.mubr.bf16.gmra.mrb[0].mxu0 %v5268
    %v5481 = vpop.f32.mrb[0].mxu0
    %v5482 = vadd.f32 0.0, %v5481
    %v5483 = vpop.f32.mrb[0].mxu0
    %v5484 = vpop.f32.mrb[0].mxu0
    %v5485 = vadd.f32 0.0, %v5484
    %v5486 = vpop.f32.mrb[0].mxu0
    %5487 = vdwg.mxu0
    %s5488 = scalar_lea.vmem [#allocation11], 896
    %5489 = vst [vmem:[%s5488] sm:$0xff] %v5426
    %5490 = vst [vmem:[%s5488 + $0x8] sm:$0xff] %v5429
    %5491 = vst [vmem:[%s5488 + $0x10] sm:$0xff] %v5434
    %5492 = vst [vmem:[%s5488 + $0x18] sm:$0xff] %v5437
    %5493 = vst [vmem:[%s5488 + $0x20] sm:$0xff] %v5442
    %5494 = vst [vmem:[%s5488 + $0x28] sm:$0xff] %v5445
    %5495 = vst [vmem:[%s5488 + $0x30] sm:$0xff] %v5450
    %5496 = vst [vmem:[%s5488 + $0x38] sm:$0xff] %v5453
    %5497 = vst [vmem:[%s5488 + $0x40] sm:$0xff] %v5458
    %5498 = vst [vmem:[%s5488 + $0x48] sm:$0xff] %v5461
    %5499 = vst [vmem:[%s5488 + $0x50] sm:$0xff] %v5466
    %5500 = vst [vmem:[%s5488 + $0x58] sm:$0xff] %v5469
    %5501 = vst [vmem:[%s5488 + $0x60] sm:$0xff] %v5474
    %5502 = vst [vmem:[%s5488 + $0x68] sm:$0xff] %v5477
    %5503 = vst [vmem:[%s5488 + $0x70] sm:$0xff] %v5482
    %5504 = vst [vmem:[%s5488 + $0x78] sm:$0xff] %v5485
    %v5505 = vld [vmem:[#allocation3] sm:$0xff]
    %v5506 = vld [vmem:[#allocation3 + $0x8] sm:$0xff]
    %v5507 = vld [vmem:[#allocation3 + $0x10] sm:$0xff]
    %v5508 = vld [vmem:[#allocation3 + $0x18] sm:$0xff]
    %v5509 = vld [vmem:[#allocation3 + $0x20] sm:$0xff]
    %v5510 = vld [vmem:[#allocation3 + $0x28] sm:$0xff]
    %v5511 = vld [vmem:[#allocation3 + $0x30] sm:$0xff]
    %v5512 = vld [vmem:[#allocation3 + $0x38] sm:$0xff]
    %v5513 = vld [vmem:[#allocation3 + $0x40] sm:$0xff]
    %v5514 = vld [vmem:[#allocation3 + $0x48] sm:$0xff]
    %v5515 = vld [vmem:[#allocation3 + $0x50] sm:$0xff]
    %v5516 = vld [vmem:[#allocation3 + $0x58] sm:$0xff]
    %v5517 = vld [vmem:[#allocation3 + $0x60] sm:$0xff]
    %v5518 = vld [vmem:[#allocation3 + $0x68] sm:$0xff]
    %v5519 = vld [vmem:[#allocation3 + $0x70] sm:$0xff]
    %v5520 = vld [vmem:[#allocation3 + $0x78] sm:$0xff]
    %vm5521 = vcmp.gt.f32.partialorder %v5426, %v5505
    %vm5522 = vcmp.gt.f32.partialorder %v5429, %v5506
    %vm5523 = vcmp.gt.f32.partialorder %v5434, %v5507
    %vm5524 = vcmp.gt.f32.partialorder %v5437, %v5508
    %vm5525 = vcmp.gt.f32.partialorder %v5442, %v5509
    %vm5526 = vcmp.gt.f32.partialorder %v5445, %v5510
    %vm5527 = vcmp.gt.f32.partialorder %v5450, %v5511
    %vm5528 = vcmp.gt.f32.partialorder %v5453, %v5512
    %vm5529 = vcmp.gt.f32.partialorder %v5458, %v5513
    %vm5530 = vcmp.gt.f32.partialorder %v5461, %v5514
    %vm5531 = vcmp.gt.f32.partialorder %v5466, %v5515
    %vm5532 = vcmp.gt.f32.partialorder %v5469, %v5516
    %vm5533 = vcmp.gt.f32.partialorder %v5474, %v5517
    %vm5534 = vcmp.gt.f32.partialorder %v5477, %v5518
    %vm5535 = vcmp.gt.f32.partialorder %v5482, %v5519
    %vm5536 = vcmp.gt.f32.partialorder %v5485, %v5520
    %v5537 = vsel %vm5521, %v5426, %v5505
    %v5538 = vsel %vm5522, %v5429, %v5506
    %v5539 = vsel %vm5523, %v5434, %v5507
    %v5540 = vsel %vm5524, %v5437, %v5508
    %v5541 = vsel %vm5525, %v5442, %v5509
    %v5542 = vsel %vm5526, %v5445, %v5510
    %v5543 = vsel %vm5527, %v5450, %v5511
    %v5544 = vsel %vm5528, %v5453, %v5512
    %v5545 = vsel %vm5529, %v5458, %v5513
    %v5546 = vsel %vm5530, %v5461, %v5514
    %v5547 = vsel %vm5531, %v5466, %v5515
    %v5548 = vsel %vm5532, %v5469, %v5516
    %v5549 = vsel %vm5533, %v5474, %v5517
    %v5550 = vsel %vm5534, %v5477, %v5518
    %v5551 = vsel %vm5535, %v5482, %v5519
    %v5552 = vsel %vm5536, %v5485, %v5520
    %5553 = vst [vmem:[#allocation3] sm:$0xff] %v5537
    %5554 = vst [vmem:[#allocation3 + $0x8] sm:$0xff] %v5538
    %5555 = vst [vmem:[#allocation3 + $0x10] sm:$0xff] %v5539
    %5556 = vst [vmem:[#allocation3 + $0x18] sm:$0xff] %v5540
    %5557 = vst [vmem:[#allocation3 + $0x20] sm:$0xff] %v5541
    %5558 = vst [vmem:[#allocation3 + $0x28] sm:$0xff] %v5542
    %5559 = vst [vmem:[#allocation3 + $0x30] sm:$0xff] %v5543
    %5560 = vst [vmem:[#allocation3 + $0x38] sm:$0xff] %v5544
    %5561 = vst [vmem:[#allocation3 + $0x40] sm:$0xff] %v5545
    %5562 = vst [vmem:[#allocation3 + $0x48] sm:$0xff] %v5546
    %5563 = vst [vmem:[#allocation3 + $0x50] sm:$0xff] %v5547
    %5564 = vst [vmem:[#allocation3 + $0x58] sm:$0xff] %v5548
    %5565 = vst [vmem:[#allocation3 + $0x60] sm:$0xff] %v5549
    %5566 = vst [vmem:[#allocation3 + $0x68] sm:$0xff] %v5550
    %5567 = vst [vmem:[#allocation3 + $0x70] sm:$0xff] %v5551
    %5568 = vst [vmem:[#allocation3 + $0x78] sm:$0xff] %v5552
    %v5569 = vld [vmem:[#allocation4] sm:$0xff]
    %v5570 = vld [vmem:[#allocation4 + $0x8] sm:$0xff]
    %v5571 = vld [vmem:[#allocation4 + $0x10] sm:$0xff]
    %v5572 = vld [vmem:[#allocation4 + $0x18] sm:$0xff]
    %v5573 = vld [vmem:[#allocation4 + $0x20] sm:$0xff]
    %v5574 = vld [vmem:[#allocation4 + $0x28] sm:$0xff]
    %v5575 = vld [vmem:[#allocation4 + $0x30] sm:$0xff]
    %v5576 = vld [vmem:[#allocation4 + $0x38] sm:$0xff]
    %v5577 = vld [vmem:[#allocation4 + $0x40] sm:$0xff]
    %v5578 = vld [vmem:[#allocation4 + $0x48] sm:$0xff]
    %v5579 = vld [vmem:[#allocation4 + $0x50] sm:$0xff]
    %v5580 = vld [vmem:[#allocation4 + $0x58] sm:$0xff]
    %v5581 = vld [vmem:[#allocation4 + $0x60] sm:$0xff]
    %v5582 = vld [vmem:[#allocation4 + $0x68] sm:$0xff]
    %v5583 = vld [vmem:[#allocation4 + $0x70] sm:$0xff]
    %v5584 = vld [vmem:[#allocation4 + $0x78] sm:$0xff]
    %v5585 = vsel %vm5521, 7, %v5569
    %v5586 = vsel %vm5522, 7, %v5570
    %v5587 = vsel %vm5523, 7, %v5571
    %v5588 = vsel %vm5524, 7, %v5572
    %v5589 = vsel %vm5525, 7, %v5573
    %v5590 = vsel %vm5526, 7, %v5574
    %v5591 = vsel %vm5527, 7, %v5575
    %v5592 = vsel %vm5528, 7, %v5576
    %v5593 = vsel %vm5529, 7, %v5577
    %v5594 = vsel %vm5530, 7, %v5578
    %v5595 = vsel %vm5531, 7, %v5579
    %v5596 = vsel %vm5532, 7, %v5580
    %v5597 = vsel %vm5533, 7, %v5581
    %v5598 = vsel %vm5534, 7, %v5582
    %v5599 = vsel %vm5535, 7, %v5583
    %v5600 = vsel %vm5536, 7, %v5584
    %5601 = vst [vmem:[#allocation4] sm:$0xff] %v5585
    %5602 = vst [vmem:[#allocation4 + $0x8] sm:$0xff] %v5586
    %5603 = vst [vmem:[#allocation4 + $0x10] sm:$0xff] %v5587
    %5604 = vst [vmem:[#allocation4 + $0x18] sm:$0xff] %v5588
    %5605 = vst [vmem:[#allocation4 + $0x20] sm:$0xff] %v5589
    %5606 = vst [vmem:[#allocation4 + $0x28] sm:$0xff] %v5590
    %5607 = vst [vmem:[#allocation4 + $0x30] sm:$0xff] %v5591
    %5608 = vst [vmem:[#allocation4 + $0x38] sm:$0xff] %v5592
    %5609 = vst [vmem:[#allocation4 + $0x40] sm:$0xff] %v5593
    %5610 = vst [vmem:[#allocation4 + $0x48] sm:$0xff] %v5594
    %5611 = vst [vmem:[#allocation4 + $0x50] sm:$0xff] %v5595
    %5612 = vst [vmem:[#allocation4 + $0x58] sm:$0xff] %v5596
    %5613 = vst [vmem:[#allocation4 + $0x60] sm:$0xff] %v5597
    %5614 = vst [vmem:[#allocation4 + $0x68] sm:$0xff] %v5598
    %5615 = vst [vmem:[#allocation4 + $0x70] sm:$0xff] %v5599
    %5616 = vst [vmem:[#allocation4 + $0x78] sm:$0xff] %v5600
    %v5617 = vld [vmem:[#allocation3] sm:$0xff]
    %v5618 = vld [vmem:[#allocation3 + $0x8] sm:$0xff]
    %v5619 = vld [vmem:[#allocation3 + $0x10] sm:$0xff]
    %v5620 = vld [vmem:[#allocation3 + $0x18] sm:$0xff]
    %v5621 = vld [vmem:[#allocation3 + $0x20] sm:$0xff]
    %v5622 = vld [vmem:[#allocation3 + $0x28] sm:$0xff]
    %v5623 = vld [vmem:[#allocation3 + $0x30] sm:$0xff]
    %v5624 = vld [vmem:[#allocation3 + $0x38] sm:$0xff]
    %v5625 = vld [vmem:[#allocation3 + $0x40] sm:$0xff]
    %v5626 = vld [vmem:[#allocation3 + $0x48] sm:$0xff]
    %v5627 = vld [vmem:[#allocation3 + $0x50] sm:$0xff]
    %v5628 = vld [vmem:[#allocation3 + $0x58] sm:$0xff]
    %v5629 = vld [vmem:[#allocation3 + $0x60] sm:$0xff]
    %v5630 = vld [vmem:[#allocation3 + $0x68] sm:$0xff]
    %v5631 = vld [vmem:[#allocation3 + $0x70] sm:$0xff]
    %v5632 = vld [vmem:[#allocation3 + $0x78] sm:$0xff]
    %v5633 = vmax.f32 %v5617, 0.0
    %v5634 = vmax.f32 %v5618, 0.0
    %v5635 = vmax.f32 %v5619, 0.0
    %v5636 = vmax.f32 %v5620, 0.0
    %v5637 = vmax.f32 %v5621, 0.0
    %v5638 = vmax.f32 %v5622, 0.0
    %v5639 = vmax.f32 %v5623, 0.0
    %v5640 = vmax.f32 %v5624, 0.0
    %v5641 = vmax.f32 %v5625, 0.0
    %v5642 = vmax.f32 %v5626, 0.0
    %v5643 = vmax.f32 %v5627, 0.0
    %v5644 = vmax.f32 %v5628, 0.0
    %v5645 = vmax.f32 %v5629, 0.0
    %v5646 = vmax.f32 %v5630, 0.0
    %v5647 = vmax.f32 %v5631, 0.0
    %v5648 = vmax.f32 %v5632, 0.0
    %v5649 = vld [vmem:[#allocation4] sm:$0xff]
    %v5650 = vld [vmem:[#allocation4 + $0x8] sm:$0xff]
    %v5651 = vld [vmem:[#allocation4 + $0x10] sm:$0xff]
    %v5652 = vld [vmem:[#allocation4 + $0x18] sm:$0xff]
    %v5653 = vld [vmem:[#allocation4 + $0x20] sm:$0xff]
    %v5654 = vld [vmem:[#allocation4 + $0x28] sm:$0xff]
    %v5655 = vld [vmem:[#allocation4 + $0x30] sm:$0xff]
    %v5656 = vld [vmem:[#allocation4 + $0x38] sm:$0xff]
    %v5657 = vld [vmem:[#allocation4 + $0x40] sm:$0xff]
    %v5658 = vld [vmem:[#allocation4 + $0x48] sm:$0xff]
    %v5659 = vld [vmem:[#allocation4 + $0x50] sm:$0xff]
    %v5660 = vld [vmem:[#allocation4 + $0x58] sm:$0xff]
    %v5661 = vld [vmem:[#allocation4 + $0x60] sm:$0xff]
    %v5662 = vld [vmem:[#allocation4 + $0x68] sm:$0xff]
    %v5663 = vld [vmem:[#allocation4 + $0x70] sm:$0xff]
    %v5664 = vld [vmem:[#allocation4 + $0x78] sm:$0xff]
    %vm5665 = vcmp.eq.s32.totalorder %v5649, 1
    %vm5666 = vcmp.eq.s32.totalorder %v5650, 1
    %vm5667 = vcmp.eq.s32.totalorder %v5651, 1
    %vm5668 = vcmp.eq.s32.totalorder %v5652, 1
    %vm5669 = vcmp.eq.s32.totalorder %v5653, 1
    %vm5670 = vcmp.eq.s32.totalorder %v5654, 1
    %vm5671 = vcmp.eq.s32.totalorder %v5655, 1
    %vm5672 = vcmp.eq.s32.totalorder %v5656, 1
    %vm5673 = vcmp.eq.s32.totalorder %v5657, 1
    %vm5674 = vcmp.eq.s32.totalorder %v5658, 1
    %vm5675 = vcmp.eq.s32.totalorder %v5659, 1
    %vm5676 = vcmp.eq.s32.totalorder %v5660, 1
    %vm5677 = vcmp.eq.s32.totalorder %v5661, 1
    %vm5678 = vcmp.eq.s32.totalorder %v5662, 1
    %vm5679 = vcmp.eq.s32.totalorder %v5663, 1
    %vm5680 = vcmp.eq.s32.totalorder %v5664, 1
    %v5681 = vsel %vm5665, 0.6234898, 0.36534104
    %v5682 = vsel %vm5666, 0.6234898, 0.36534104
    %v5683 = vsel %vm5667, 0.6234898, 0.36534104
    %v5684 = vsel %vm5668, 0.6234898, 0.36534104
    %v5685 = vsel %vm5669, 0.6234898, 0.36534104
    %v5686 = vsel %vm5670, 0.6234898, 0.36534104
    %v5687 = vsel %vm5671, 0.6234898, 0.36534104
    %v5688 = vsel %vm5672, 0.6234898, 0.36534104
    %v5689 = vsel %vm5673, 0.6234898, 0.36534104
    %v5690 = vsel %vm5674, 0.6234898, 0.36534104
    %v5691 = vsel %vm5675, 0.6234898, 0.36534104
    %v5692 = vsel %vm5676, 0.6234898, 0.36534104
    %v5693 = vsel %vm5677, 0.6234898, 0.36534104
    %v5694 = vsel %vm5678, 0.6234898, 0.36534104
    %v5695 = vsel %vm5679, 0.6234898, 0.36534104
    %v5696 = vsel %vm5680, 0.6234898, 0.36534104
    %v5697 = vsel %vm5665, -0.7818315, -0.93087375
    %v5698 = vsel %vm5666, -0.7818315, -0.93087375
    %v5699 = vsel %vm5667, -0.7818315, -0.93087375
    %v5700 = vsel %vm5668, -0.7818315, -0.93087375
    %v5701 = vsel %vm5669, -0.7818315, -0.93087375
    %v5702 = vsel %vm5670, -0.7818315, -0.93087375
    %v5703 = vsel %vm5671, -0.7818315, -0.93087375
    %v5704 = vsel %vm5672, -0.7818315, -0.93087375
    %v5705 = vsel %vm5673, -0.7818315, -0.93087375
    %v5706 = vsel %vm5674, -0.7818315, -0.93087375
    %v5707 = vsel %vm5675, -0.7818315, -0.93087375
    %v5708 = vsel %vm5676, -0.7818315, -0.93087375
    %v5709 = vsel %vm5677, -0.7818315, -0.93087375
    %v5710 = vsel %vm5678, -0.7818315, -0.93087375
    %v5711 = vsel %vm5679, -0.7818315, -0.93087375
    %v5712 = vsel %vm5680, -0.7818315, -0.93087375
    %vm5713 = vcmp.eq.s32.totalorder %v5649, 2
    %vm5714 = vcmp.eq.s32.totalorder %v5650, 2
    %vm5715 = vcmp.eq.s32.totalorder %v5651, 2
    %vm5716 = vcmp.eq.s32.totalorder %v5652, 2
    %vm5717 = vcmp.eq.s32.totalorder %v5653, 2
    %vm5718 = vcmp.eq.s32.totalorder %v5654, 2
    %vm5719 = vcmp.eq.s32.totalorder %v5655, 2
    %vm5720 = vcmp.eq.s32.totalorder %v5656, 2
    %vm5721 = vcmp.eq.s32.totalorder %v5657, 2
    %vm5722 = vcmp.eq.s32.totalorder %v5658, 2
    %vm5723 = vcmp.eq.s32.totalorder %v5659, 2
    %vm5724 = vcmp.eq.s32.totalorder %v5660, 2
    %vm5725 = vcmp.eq.s32.totalorder %v5661, 2
    %vm5726 = vcmp.eq.s32.totalorder %v5662, 2
    %vm5727 = vcmp.eq.s32.totalorder %v5663, 2
    %vm5728 = vcmp.eq.s32.totalorder %v5664, 2
    %v5729 = vsel %vm5713, 0.82623875, %v5681
    %v5730 = vsel %vm5714, 0.82623875, %v5682
    %v5731 = vsel %vm5715, 0.82623875, %v5683
    %v5732 = vsel %vm5716, 0.82623875, %v5684
    %v5733 = vsel %vm5717, 0.82623875, %v5685
    %v5734 = vsel %vm5718, 0.82623875, %v5686
    %v5735 = vsel %vm5719, 0.82623875, %v5687
    %v5736 = vsel %vm5720, 0.82623875, %v5688
    %v5737 = vsel %vm5721, 0.82623875, %v5689
    %v5738 = vsel %vm5722, 0.82623875, %v5690
    %v5739 = vsel %vm5723, 0.82623875, %v5691
    %v5740 = vsel %vm5724, 0.82623875, %v5692
    %v5741 = vsel %vm5725, 0.82623875, %v5693
    %v5742 = vsel %vm5726, 0.82623875, %v5694
    %v5743 = vsel %vm5727, 0.82623875, %v5695
    %v5744 = vsel %vm5728, 0.82623875, %v5696
    %v5745 = vsel %vm5713, -0.56332004, %v5697
    %v5746 = vsel %vm5714, -0.56332004, %v5698
    %v5747 = vsel %vm5715, -0.56332004, %v5699
    %v5748 = vsel %vm5716, -0.56332004, %v5700
    %v5749 = vsel %vm5717, -0.56332004, %v5701
    %v5750 = vsel %vm5718, -0.56332004, %v5702
    %v5751 = vsel %vm5719, -0.56332004, %v5703
    %v5752 = vsel %vm5720, -0.56332004, %v5704
    %v5753 = vsel %vm5721, -0.56332004, %v5705
    %v5754 = vsel %vm5722, -0.56332004, %v5706
    %v5755 = vsel %vm5723, -0.56332004, %v5707
    %v5756 = vsel %vm5724, -0.56332004, %v5708
    %v5757 = vsel %vm5725, -0.56332004, %v5709
    %v5758 = vsel %vm5726, -0.56332004, %v5710
    %v5759 = vsel %vm5727, -0.56332004, %v5711
    %v5760 = vsel %vm5728, -0.56332004, %v5712
    %vm5761 = vcmp.eq.s32.totalorder %v5649, 3
    %vm5762 = vcmp.eq.s32.totalorder %v5650, 3
    %vm5763 = vcmp.eq.s32.totalorder %v5651, 3
    %vm5764 = vcmp.eq.s32.totalorder %v5652, 3
    %vm5765 = vcmp.eq.s32.totalorder %v5653, 3
    %vm5766 = vcmp.eq.s32.totalorder %v5654, 3
    %vm5767 = vcmp.eq.s32.totalorder %v5655, 3
    %vm5768 = vcmp.eq.s32.totalorder %v5656, 3
    %vm5769 = vcmp.eq.s32.totalorder %v5657, 3
    %vm5770 = vcmp.eq.s32.totalorder %v5658, 3
    %vm5771 = vcmp.eq.s32.totalorder %v5659, 3
    %vm5772 = vcmp.eq.s32.totalorder %v5660, 3
    %vm5773 = vcmp.eq.s32.totalorder %v5661, 3
    %vm5774 = vcmp.eq.s32.totalorder %v5662, 3
    %vm5775 = vcmp.eq.s32.totalorder %v5663, 3
    %vm5776 = vcmp.eq.s32.totalorder %v5664, 3
    %v5777 = vsel %vm5761, 0.9555728, %v5729
    %v5778 = vsel %vm5762, 0.9555728, %v5730
    %v5779 = vsel %vm5763, 0.9555728, %v5731
    %v5780 = vsel %vm5764, 0.9555728, %v5732
    %v5781 = vsel %vm5765, 0.9555728, %v5733
    %v5782 = vsel %vm5766, 0.9555728, %v5734
    %v5783 = vsel %vm5767, 0.9555728, %v5735
    %v5784 = vsel %vm5768, 0.9555728, %v5736
    %v5785 = vsel %vm5769, 0.9555728, %v5737
    %v5786 = vsel %vm5770, 0.9555728, %v5738
    %v5787 = vsel %vm5771, 0.9555728, %v5739
    %v5788 = vsel %vm5772, 0.9555728, %v5740
    %v5789 = vsel %vm5773, 0.9555728, %v5741
    %v5790 = vsel %vm5774, 0.9555728, %v5742
    %v5791 = vsel %vm5775, 0.9555728, %v5743
    %v5792 = vsel %vm5776, 0.9555728, %v5744
    %v5793 = vsel %vm5761, -0.29475516, %v5745
    %v5794 = vsel %vm5762, -0.29475516, %v5746
    %v5795 = vsel %vm5763, -0.29475516, %v5747
    %v5796 = vsel %vm5764, -0.29475516, %v5748
    %v5797 = vsel %vm5765, -0.29475516, %v5749
    %v5798 = vsel %vm5766, -0.29475516, %v5750
    %v5799 = vsel %vm5767, -0.29475516, %v5751
    %v5800 = vsel %vm5768, -0.29475516, %v5752
    %v5801 = vsel %vm5769, -0.29475516, %v5753
    %v5802 = vsel %vm5770, -0.29475516, %v5754
    %v5803 = vsel %vm5771, -0.29475516, %v5755
    %v5804 = vsel %vm5772, -0.29475516, %v5756
    %v5805 = vsel %vm5773, -0.29475516, %v5757
    %v5806 = vsel %vm5774, -0.29475516, %v5758
    %v5807 = vsel %vm5775, -0.29475516, %v5759
    %v5808 = vsel %vm5776, -0.29475516, %v5760
    %vm5809 = vcmp.eq.s32.totalorder %v5649, 4
    %vm5810 = vcmp.eq.s32.totalorder %v5650, 4
    %vm5811 = vcmp.eq.s32.totalorder %v5651, 4
    %vm5812 = vcmp.eq.s32.totalorder %v5652, 4
    %vm5813 = vcmp.eq.s32.totalorder %v5653, 4
    %vm5814 = vcmp.eq.s32.totalorder %v5654, 4
    %vm5815 = vcmp.eq.s32.totalorder %v5655, 4
    %vm5816 = vcmp.eq.s32.totalorder %v5656, 4
    %vm5817 = vcmp.eq.s32.totalorder %v5657, 4
    %vm5818 = vcmp.eq.s32.totalorder %v5658, 4
    %vm5819 = vcmp.eq.s32.totalorder %v5659, 4
    %vm5820 = vcmp.eq.s32.totalorder %v5660, 4
    %vm5821 = vcmp.eq.s32.totalorder %v5661, 4
    %vm5822 = vcmp.eq.s32.totalorder %v5662, 4
    %vm5823 = vcmp.eq.s32.totalorder %v5663, 4
    %vm5824 = vcmp.eq.s32.totalorder %v5664, 4
    %v5825 = vsel %vm5809, 1.0, %v5777
    %v5826 = vsel %vm5810, 1.0, %v5778
    %v5827 = vsel %vm5811, 1.0, %v5779
    %v5828 = vsel %vm5812, 1.0, %v5780
    %v5829 = vsel %vm5813, 1.0, %v5781
    %v5830 = vsel %vm5814, 1.0, %v5782
    %v5831 = vsel %vm5815, 1.0, %v5783
    %v5832 = vsel %vm5816, 1.0, %v5784
    %v5833 = vsel %vm5817, 1.0, %v5785
    %v5834 = vsel %vm5818, 1.0, %v5786
    %v5835 = vsel %vm5819, 1.0, %v5787
    %v5836 = vsel %vm5820, 1.0, %v5788
    %v5837 = vsel %vm5821, 1.0, %v5789
    %v5838 = vsel %vm5822, 1.0, %v5790
    %v5839 = vsel %vm5823, 1.0, %v5791
    %v5840 = vsel %vm5824, 1.0, %v5792
    %v5841 = vsel %vm5809, 0.0, %v5793
    %v5842 = vsel %vm5810, 0.0, %v5794
    %v5843 = vsel %vm5811, 0.0, %v5795
    %v5844 = vsel %vm5812, 0.0, %v5796
    %v5845 = vsel %vm5813, 0.0, %v5797
    %v5846 = vsel %vm5814, 0.0, %v5798
    %v5847 = vsel %vm5815, 0.0, %v5799
    %v5848 = vsel %vm5816, 0.0, %v5800
    %v5849 = vsel %vm5817, 0.0, %v5801
    %v5850 = vsel %vm5818, 0.0, %v5802
    %v5851 = vsel %vm5819, 0.0, %v5803
    %v5852 = vsel %vm5820, 0.0, %v5804
    %v5853 = vsel %vm5821, 0.0, %v5805
    %v5854 = vsel %vm5822, 0.0, %v5806
    %v5855 = vsel %vm5823, 0.0, %v5807
    %v5856 = vsel %vm5824, 0.0, %v5808
    %vm5857 = vcmp.eq.s32.totalorder %v5649, 5
    %vm5858 = vcmp.eq.s32.totalorder %v5650, 5
    %vm5859 = vcmp.eq.s32.totalorder %v5651, 5
    %vm5860 = vcmp.eq.s32.totalorder %v5652, 5
    %vm5861 = vcmp.eq.s32.totalorder %v5653, 5
    %vm5862 = vcmp.eq.s32.totalorder %v5654, 5
    %vm5863 = vcmp.eq.s32.totalorder %v5655, 5
    %vm5864 = vcmp.eq.s32.totalorder %v5656, 5
    %vm5865 = vcmp.eq.s32.totalorder %v5657, 5
    %vm5866 = vcmp.eq.s32.totalorder %v5658, 5
    %vm5867 = vcmp.eq.s32.totalorder %v5659, 5
    %vm5868 = vcmp.eq.s32.totalorder %v5660, 5
    %vm5869 = vcmp.eq.s32.totalorder %v5661, 5
    %vm5870 = vcmp.eq.s32.totalorder %v5662, 5
    %vm5871 = vcmp.eq.s32.totalorder %v5663, 5
    %vm5872 = vcmp.eq.s32.totalorder %v5664, 5
    %v5873 = vsel %vm5857, 0.9555728, %v5825
    %v5874 = vsel %vm5858, 0.9555728, %v5826
    %v5875 = vsel %vm5859, 0.9555728, %v5827
    %v5876 = vsel %vm5860, 0.9555728, %v5828
    %v5877 = vsel %vm5861, 0.9555728, %v5829
    %v5878 = vsel %vm5862, 0.9555728, %v5830
    %v5879 = vsel %vm5863, 0.9555728, %v5831
    %v5880 = vsel %vm5864, 0.9555728, %v5832
    %v5881 = vsel %vm5865, 0.9555728, %v5833
    %v5882 = vsel %vm5866, 0.9555728, %v5834
    %v5883 = vsel %vm5867, 0.9555728, %v5835
    %v5884 = vsel %vm5868, 0.9555728, %v5836
    %v5885 = vsel %vm5869, 0.9555728, %v5837
    %v5886 = vsel %vm5870, 0.9555728, %v5838
    %v5887 = vsel %vm5871, 0.9555728, %v5839
    %v5888 = vsel %vm5872, 0.9555728, %v5840
    %v5889 = vsel %vm5857, 0.29475516, %v5841
    %v5890 = vsel %vm5858, 0.29475516, %v5842
    %v5891 = vsel %vm5859, 0.29475516, %v5843
    %v5892 = vsel %vm5860, 0.29475516, %v5844
    %v5893 = vsel %vm5861, 0.29475516, %v5845
    %v5894 = vsel %vm5862, 0.29475516, %v5846
    %v5895 = vsel %vm5863, 0.29475516, %v5847
    %v5896 = vsel %vm5864, 0.29475516, %v5848
    %v5897 = vsel %vm5865, 0.29475516, %v5849
    %v5898 = vsel %vm5866, 0.29475516, %v5850
    %v5899 = vsel %vm5867, 0.29475516, %v5851
    %v5900 = vsel %vm5868, 0.29475516, %v5852
    %v5901 = vsel %vm5869, 0.29475516, %v5853
    %v5902 = vsel %vm5870, 0.29475516, %v5854
    %v5903 = vsel %vm5871, 0.29475516, %v5855
    %v5904 = vsel %vm5872, 0.29475516, %v5856
    %vm5905 = vcmp.eq.s32.totalorder %v5649, 6
    %vm5906 = vcmp.eq.s32.totalorder %v5650, 6
    %vm5907 = vcmp.eq.s32.totalorder %v5651, 6
    %vm5908 = vcmp.eq.s32.totalorder %v5652, 6
    %vm5909 = vcmp.eq.s32.totalorder %v5653, 6
    %vm5910 = vcmp.eq.s32.totalorder %v5654, 6
    %vm5911 = vcmp.eq.s32.totalorder %v5655, 6
    %vm5912 = vcmp.eq.s32.totalorder %v5656, 6
    %vm5913 = vcmp.eq.s32.totalorder %v5657, 6
    %vm5914 = vcmp.eq.s32.totalorder %v5658, 6
    %vm5915 = vcmp.eq.s32.totalorder %v5659, 6
    %vm5916 = vcmp.eq.s32.totalorder %v5660, 6
    %vm5917 = vcmp.eq.s32.totalorder %v5661, 6
    %vm5918 = vcmp.eq.s32.totalorder %v5662, 6
    %vm5919 = vcmp.eq.s32.totalorder %v5663, 6
    %vm5920 = vcmp.eq.s32.totalorder %v5664, 6
    %v5921 = vsel %vm5905, 0.82623875, %v5873
    %v5922 = vsel %vm5906, 0.82623875, %v5874
    %v5923 = vsel %vm5907, 0.82623875, %v5875
    %v5924 = vsel %vm5908, 0.82623875, %v5876
    %v5925 = vsel %vm5909, 0.82623875, %v5877
    %v5926 = vsel %vm5910, 0.82623875, %v5878
    %v5927 = vsel %vm5911, 0.82623875, %v5879
    %v5928 = vsel %vm5912, 0.82623875, %v5880
    %v5929 = vsel %vm5913, 0.82623875, %v5881
    %v5930 = vsel %vm5914, 0.82623875, %v5882
    %v5931 = vsel %vm5915, 0.82623875, %v5883
    %v5932 = vsel %vm5916, 0.82623875, %v5884
    %v5933 = vsel %vm5917, 0.82623875, %v5885
    %v5934 = vsel %vm5918, 0.82623875, %v5886
    %v5935 = vsel %vm5919, 0.82623875, %v5887
    %v5936 = vsel %vm5920, 0.82623875, %v5888
    %v5937 = vsel %vm5905, 0.56332004, %v5889
    %v5938 = vsel %vm5906, 0.56332004, %v5890
    %v5939 = vsel %vm5907, 0.56332004, %v5891
    %v5940 = vsel %vm5908, 0.56332004, %v5892
    %v5941 = vsel %vm5909, 0.56332004, %v5893
    %v5942 = vsel %vm5910, 0.56332004, %v5894
    %v5943 = vsel %vm5911, 0.56332004, %v5895
    %v5944 = vsel %vm5912, 0.56332004, %v5896
    %v5945 = vsel %vm5913, 0.56332004, %v5897
    %v5946 = vsel %vm5914, 0.56332004, %v5898
    %v5947 = vsel %vm5915, 0.56332004, %v5899
    %v5948 = vsel %vm5916, 0.56332004, %v5900
    %v5949 = vsel %vm5917, 0.56332004, %v5901
    %v5950 = vsel %vm5918, 0.56332004, %v5902
    %v5951 = vsel %vm5919, 0.56332004, %v5903
    %v5952 = vsel %vm5920, 0.56332004, %v5904
    %vm5953 = vcmp.eq.s32.totalorder %v5649, 7
    %vm5954 = vcmp.eq.s32.totalorder %v5650, 7
    %vm5955 = vcmp.eq.s32.totalorder %v5651, 7
    %vm5956 = vcmp.eq.s32.totalorder %v5652, 7
    %vm5957 = vcmp.eq.s32.totalorder %v5653, 7
    %vm5958 = vcmp.eq.s32.totalorder %v5654, 7
    %vm5959 = vcmp.eq.s32.totalorder %v5655, 7
    %vm5960 = vcmp.eq.s32.totalorder %v5656, 7
    %vm5961 = vcmp.eq.s32.totalorder %v5657, 7
    %vm5962 = vcmp.eq.s32.totalorder %v5658, 7
    %vm5963 = vcmp.eq.s32.totalorder %v5659, 7
    %vm5964 = vcmp.eq.s32.totalorder %v5660, 7
    %vm5965 = vcmp.eq.s32.totalorder %v5661, 7
    %vm5966 = vcmp.eq.s32.totalorder %v5662, 7
    %vm5967 = vcmp.eq.s32.totalorder %v5663, 7
    %vm5968 = vcmp.eq.s32.totalorder %v5664, 7
    %v5969 = vsel %vm5953, 0.6234898, %v5921
    %v5970 = vsel %vm5954, 0.6234898, %v5922
    %v5971 = vsel %vm5955, 0.6234898, %v5923
    %v5972 = vsel %vm5956, 0.6234898, %v5924
    %v5973 = vsel %vm5957, 0.6234898, %v5925
    %v5974 = vsel %vm5958, 0.6234898, %v5926
    %v5975 = vsel %vm5959, 0.6234898, %v5927
    %v5976 = vsel %vm5960, 0.6234898, %v5928
    %v5977 = vsel %vm5961, 0.6234898, %v5929
    %v5978 = vsel %vm5962, 0.6234898, %v5930
    %v5979 = vsel %vm5963, 0.6234898, %v5931
    %v5980 = vsel %vm5964, 0.6234898, %v5932
    %v5981 = vsel %vm5965, 0.6234898, %v5933
    %v5982 = vsel %vm5966, 0.6234898, %v5934
    %v5983 = vsel %vm5967, 0.6234898, %v5935
    %v5984 = vsel %vm5968, 0.6234898, %v5936
    %v5985 = vsel %vm5953, 0.7818315, %v5937
    %v5986 = vsel %vm5954, 0.7818315, %v5938
    %v5987 = vsel %vm5955, 0.7818315, %v5939
    %v5988 = vsel %vm5956, 0.7818315, %v5940
    %v5989 = vsel %vm5957, 0.7818315, %v5941
    %v5990 = vsel %vm5958, 0.7818315, %v5942
    %v5991 = vsel %vm5959, 0.7818315, %v5943
    %v5992 = vsel %vm5960, 0.7818315, %v5944
    %v5993 = vsel %vm5961, 0.7818315, %v5945
    %v5994 = vsel %vm5962, 0.7818315, %v5946
    %v5995 = vsel %vm5963, 0.7818315, %v5947
    %v5996 = vsel %vm5964, 0.7818315, %v5948
    %v5997 = vsel %vm5965, 0.7818315, %v5949
    %v5998 = vsel %vm5966, 0.7818315, %v5950
    %v5999 = vsel %vm5967, 0.7818315, %v5951
    %v6000 = vsel %vm5968, 0.7818315, %v5952
    %v6001 = vmul.f32 %v5633, %v5969
    %v6002 = vmul.f32 %v5634, %v5970
    %v6003 = vmul.f32 %v5635, %v5971
    %v6004 = vmul.f32 %v5636, %v5972
    %v6005 = vmul.f32 %v5637, %v5973
    %v6006 = vmul.f32 %v5638, %v5974
    %v6007 = vmul.f32 %v5639, %v5975
    %v6008 = vmul.f32 %v5640, %v5976
    %v6009 = vmul.f32 %v5641, %v5977
    %v6010 = vmul.f32 %v5642, %v5978
    %v6011 = vmul.f32 %v5643, %v5979
    %v6012 = vmul.f32 %v5644, %v5980
    %v6013 = vmul.f32 %v5645, %v5981
    %v6014 = vmul.f32 %v5646, %v5982
    %v6015 = vmul.f32 %v5647, %v5983
    %v6016 = vmul.f32 %v5648, %v5984
    %6017 = vst [vmem:[#allocation8] sm:$0xff] %v6001
    %6018 = vst [vmem:[#allocation8 + $0x8] sm:$0xff] %v6002
    %6019 = vst [vmem:[#allocation8 + $0x10] sm:$0xff] %v6003
    %6020 = vst [vmem:[#allocation8 + $0x18] sm:$0xff] %v6004
    %6021 = vst [vmem:[#allocation8 + $0x20] sm:$0xff] %v6005
    %6022 = vst [vmem:[#allocation8 + $0x28] sm:$0xff] %v6006
    %6023 = vst [vmem:[#allocation8 + $0x30] sm:$0xff] %v6007
    %6024 = vst [vmem:[#allocation8 + $0x38] sm:$0xff] %v6008
    %6025 = vst [vmem:[#allocation8 + $0x40] sm:$0xff] %v6009
    %6026 = vst [vmem:[#allocation8 + $0x48] sm:$0xff] %v6010
    %6027 = vst [vmem:[#allocation8 + $0x50] sm:$0xff] %v6011
    %6028 = vst [vmem:[#allocation8 + $0x58] sm:$0xff] %v6012
    %6029 = vst [vmem:[#allocation8 + $0x60] sm:$0xff] %v6013
    %6030 = vst [vmem:[#allocation8 + $0x68] sm:$0xff] %v6014
    %6031 = vst [vmem:[#allocation8 + $0x70] sm:$0xff] %v6015
    %6032 = vst [vmem:[#allocation8 + $0x78] sm:$0xff] %v6016
    %v6033 = vmul.f32 %v5633, %v5985
    %v6034 = vmul.f32 %v5634, %v5986
    %v6035 = vmul.f32 %v5635, %v5987
    %v6036 = vmul.f32 %v5636, %v5988
    %v6037 = vmul.f32 %v5637, %v5989
    %v6038 = vmul.f32 %v5638, %v5990
    %v6039 = vmul.f32 %v5639, %v5991
    %v6040 = vmul.f32 %v5640, %v5992
    %v6041 = vmul.f32 %v5641, %v5993
    %v6042 = vmul.f32 %v5642, %v5994
    %v6043 = vmul.f32 %v5643, %v5995
    %v6044 = vmul.f32 %v5644, %v5996
    %v6045 = vmul.f32 %v5645, %v5997
    %v6046 = vmul.f32 %v5646, %v5998
    %v6047 = vmul.f32 %v5647, %v5999
    %v6048 = vmul.f32 %v5648, %v6000
    %6049 = vst [vmem:[#allocation9] sm:$0xff] %v6033
    %6050 = vst [vmem:[#allocation9 + $0x8] sm:$0xff] %v6034
    %6051 = vst [vmem:[#allocation9 + $0x10] sm:$0xff] %v6035
    %6052 = vst [vmem:[#allocation9 + $0x18] sm:$0xff] %v6036
    %6053 = vst [vmem:[#allocation9 + $0x20] sm:$0xff] %v6037
    %6054 = vst [vmem:[#allocation9 + $0x28] sm:$0xff] %v6038
    %6055 = vst [vmem:[#allocation9 + $0x30] sm:$0xff] %v6039
    %6056 = vst [vmem:[#allocation9 + $0x38] sm:$0xff] %v6040
    %6057 = vst [vmem:[#allocation9 + $0x40] sm:$0xff] %v6041
    %6058 = vst [vmem:[#allocation9 + $0x48] sm:$0xff] %v6042
    %6059 = vst [vmem:[#allocation9 + $0x50] sm:$0xff] %v6043
    %6060 = vst [vmem:[#allocation9 + $0x58] sm:$0xff] %v6044
    %6061 = vst [vmem:[#allocation9 + $0x60] sm:$0xff] %v6045
    %6062 = vst [vmem:[#allocation9 + $0x68] sm:$0xff] %v6046
    %6063 = vst [vmem:[#allocation9 + $0x70] sm:$0xff] %v6047
    %6064 = vst [vmem:[#allocation9 + $0x78] sm:$0xff] %v6048
    // Predicated region
    $region18: #{tpu_custom_call.1} parent=1 // pred_check
      _
    $region19: #{tpu_custom_call.1} parent=1 // pred_check_branch
      %6066 = sbr.rel (0) target = $region21
    $region20: #{tpu_custom_call.1} parent=1 // pred_region
      %s6068 = ssub.s32 2048, 2048
      %6069 = vsyncadd [#allocation7], %s6068
      %s6070 = sshll.u32 [#allocation8], 4
      %s6071 = int_to_ptr.vmem [resolvable:$true] %s6070
      %6076 = dma.vmem_to_hbm [thread:$0]  %s6071, 2048, %s3, [#allocation7], 128, 128, 8
    $region21: #{tpu_custom_call.1} parent=1 // pred_fallthru
      _
    // Predicated region
    $region22: #{tpu_custom_call.1} parent=1 // pred_check
      _
    $region23: #{tpu_custom_call.1} parent=1 // pred_check_branch
      %6078 = sbr.rel (0) target = $region25
    $region24: #{tpu_custom_call.1} parent=1 // pred_region
      %s6080 = ssub.s32 2048, 2048
      %6081 = vsyncadd [#allocation10], %s6080
      %s6082 = sshll.u32 [#allocation9], 4
      %s6083 = int_to_ptr.vmem [resolvable:$true] %s6082
      %6088 = dma.vmem_to_hbm [thread:$0]  %s6083, 2048, %s4, [#allocation10], 128, 128, 8
    $region25: #{tpu_custom_call.1} parent=1 // pred_fallthru
      _
    // Predicated region
    $region26: #{tpu_custom_call.1} parent=1 // pred_check
      _
    $region27: #{tpu_custom_call.1} parent=1 // pred_check_branch
      %6090 = sbr.rel (0) target = $region29
    $region28: #{tpu_custom_call.1} parent=1 // pred_region
      %s6092 = ssub.s32 16384, 16384
      %6093 = vsyncadd [#allocation10], %s6092
      %s6094 = sshll.u32 [#allocation11], 4
      %s6095 = int_to_ptr.vmem [resolvable:$true] %s6094
      %6100 = dma.vmem_to_hbm [thread:$0]  %s6095, 16384, %s5, [#allocation10], 128, 128, 8
    $region29: #{tpu_custom_call.1} parent=1 // pred_fallthru
      _
    // Predicated region
    $region30: #{tpu_custom_call.1} parent=1 // pred_check
      _
    $region31: #{tpu_custom_call.1} parent=1 // pred_check_branch
      %6102 = sbr.rel (0) target = $region33
    $region32: #{tpu_custom_call.1} parent=1 // pred_region
      %6103 = dma.done [#allocation7], 2048
    $region33: #{tpu_custom_call.1} parent=1 // pred_fallthru
      _
    // Predicated region
    $region34: #{tpu_custom_call.1} parent=1 // pred_check
      _
    $region35: #{tpu_custom_call.1} parent=1 // pred_check_branch
      %6105 = sbr.rel (0) target = $region37
    $region36: #{tpu_custom_call.1} parent=1 // pred_region
      %6106 = dma.done [#allocation10], 2048
    $region37: #{tpu_custom_call.1} parent=1 // pred_fallthru
      _
    // Predicated region
    $region38: #{tpu_custom_call.1} parent=1 // pred_check
      _
    $region39: #{tpu_custom_call.1} parent=1 // pred_check_branch
      %6108 = sbr.rel (0) target = $region41
    $region40: #{tpu_custom_call.1} parent=1 // pred_region
      %6109 = dma.done [#allocation10], 16384
    $region41: #{tpu_custom_call.1} parent=1 // pred_fallthru
      _
    %6110 = vsyncpa [#allocation6], 1
    %6111 = vsyncpa [#allocation7], 1
    %6112 = vsyncpa [#allocation10], 1

</llo_original>
